<compile_context>
chip_gen: v7x
topology: tpu7x:2x2x1
jax: 0.10.0
libtpu: 0.0.40
codegen_flags: <defaults>
</compile_context>

<pallas_src>
import jax
import jax.numpy as jnp
from jax.experimental import pallas as pl
from jax.experimental.pallas import tpu as pltpu


# ----------------------------------------------------------------------------
# Kernel 1: single-K-step matmul + bias + ReLU (used by both convolutions via
# im2col).  bf16 inputs -> f32 MXU accumulate -> f32 bias/ReLU -> bf16 out.
# ----------------------------------------------------------------------------
def _conv_mm_kernel(a_ref, b_ref, bias_ref, o_ref):
    r = jnp.dot(a_ref[...], b_ref[...], preferred_element_type=jnp.float32)
    r = jnp.maximum(r + bias_ref[...], 0.0)
    o_ref[...] = r.astype(o_ref.dtype)


def matmul_bias_relu(a, b, bias2d, *, tm):
    """relu(a @ b + bias).  a: (M, K) bf16, b: (K, O) bf16, bias2d: (1, O) f32."""
    M, K = a.shape
    K2, O = b.shape
    assert K == K2 and M % tm == 0, (a.shape, b.shape, tm)
    return pl.pallas_call(
        _conv_mm_kernel,
        out_shape=jax.ShapeDtypeStruct((M, O), jnp.bfloat16),
        grid_spec=pltpu.PrefetchScalarGridSpec(
            num_scalar_prefetch=0,
            grid=(M // tm,),
            in_specs=[
                pl.BlockSpec((tm, K), lambda i: (i, 0)),
                pl.BlockSpec((K, O), lambda i: (0, 0)),
                pl.BlockSpec((1, O), lambda i: (0, 0)),
            ],
            out_specs=pl.BlockSpec((tm, O), lambda i: (i, 0)),
        ),
        compiler_params=pltpu.CompilerParams(
            dimension_semantics=("parallel",)),
    )(a, b, bias2d)


def _pick_tm(m, target):
    """Largest multiple of 16 that divides m and is <= target (else m)."""
    tm = m
    d = 16
    while d <= min(m, target):
        if m % d == 0:
            tm = d
        d += 16
    return tm


# ----------------------------------------------------------------------------
# Kernel 2: 2x2 / stride-2 max pool.  The wrapper reshapes NHWC (free,
# row-major) to (N, H/2, 2, W/2, 2*C); in-kernel the H pair is a leading-dim
# index and the W pair is a static lane slice -> one read, one write.
# ----------------------------------------------------------------------------
def _maxpool_kernel(x_ref, o_ref):
    x = x_ref[...]                                    # (1, OH, 2, OW, 2C)
    h = jnp.maximum(x[:, :, 0], x[:, :, 1])           # max over H pair
    c = o_ref.shape[-1]
    o_ref[...] = jnp.maximum(h[..., :c], h[..., c:])  # max over W pair


def maxpool2x2(x):
    """x: (N, H, W, C) -> (N, H//2, W//2, C), same dtype."""
    N, H, W, C = x.shape
    OH, OW = H // 2, W // 2
    xr = x.reshape(N, OH, 2, OW, 2 * C)               # free row-major reshape
    return pl.pallas_call(
        _maxpool_kernel,
        out_shape=jax.ShapeDtypeStruct((N, OH, OW, C), x.dtype),
        grid=(N,),
        in_specs=[pl.BlockSpec((1, OH, 2, OW, 2 * C),
                               lambda n: (n, 0, 0, 0, 0))],
        out_specs=pl.BlockSpec((1, OH, OW, C), lambda n: (n, 0, 0, 0)),
        compiler_params=pltpu.CompilerParams(
            dimension_semantics=("parallel",)),
    )(xr)


# ----------------------------------------------------------------------------
# Kernel 3: fused fc1 -> relu -> fc2 -> relu -> fc3.  fc1 is K-tiled over the
# grid with an f32 VMEM accumulator; fc2/fc3 (+biases) are tiny resident VMEM
# blocks applied in the last-K epilogue.
# ----------------------------------------------------------------------------
def _fused_fc_kernel(a_ref, w1_ref, b1_ref, w2_ref, b2_ref, w3_ref, b3_ref,
                     o_ref, acc_ref):
    k = pl.program_id(0)

    @pl.when(k == 0)
    def _():
        acc_ref[...] = jnp.zeros_like(acc_ref)

    acc_ref[...] += jnp.dot(a_ref[...], w1_ref[...],
                            preferred_element_type=jnp.float32)

    @pl.when(k == pl.num_programs(0) - 1)
    def _():
        h1 = jnp.maximum(acc_ref[...] + b1_ref[...], 0.0)          # (M,128) f32
        h2 = jnp.dot(h1.astype(w2_ref.dtype), w2_ref[...],
                     preferred_element_type=jnp.float32)
        h2 = jnp.maximum(h2 + b2_ref[...], 0.0)                    # (M, 64) f32
        h3 = jnp.dot(h2.astype(w3_ref.dtype), w3_ref[...],
                     preferred_element_type=jnp.float32)
        o_ref[...] = (h3 + b3_ref[...]).astype(o_ref.dtype)        # (M, 2)


def fused_fc(a, w1, b1, w2, b2, w3, b3, *, tk=3584):
    M, K = a.shape
    assert w1.shape[0] == K
    if K % tk != 0:
        tk = K
    H1, H2, OUT = w1.shape[1], w2.shape[1], w3.shape[1]
    return pl.pallas_call(
        _fused_fc_kernel,
        out_shape=jax.ShapeDtypeStruct((M, OUT), jnp.float32),
        grid_spec=pltpu.PrefetchScalarGridSpec(
            num_scalar_prefetch=0,
            grid=(K // tk,),
            in_specs=[
                pl.BlockSpec((M, tk), lambda k: (0, k)),
                pl.BlockSpec((tk, H1), lambda k: (k, 0)),
                pl.BlockSpec((1, H1), lambda k: (0, 0)),
                pl.BlockSpec((H1, H2), lambda k: (0, 0)),
                pl.BlockSpec((1, H2), lambda k: (0, 0)),
                pl.BlockSpec((H2, OUT), lambda k: (0, 0)),
                pl.BlockSpec((1, OUT), lambda k: (0, 0)),
            ],
            out_specs=pl.BlockSpec((M, OUT), lambda k: (0, 0)),
            scratch_shapes=[pltpu.VMEM((M, H1), jnp.float32)],
        ),
        compiler_params=pltpu.CompilerParams(
            dimension_semantics=("arbitrary",)),
    )(a, w1, b1, w2, b2, w3, b3)


# ----------------------------------------------------------------------------
# Conv2d (valid, stride 1) = im2col (XLA glue, bf16, aligned C) + kernel 1.
# ----------------------------------------------------------------------------
def _im2col(x, k):
    N, H, W, C = x.shape
    OH, OW = H - k + 1, W - k + 1
    cols = [x[:, dy:dy + OH, dx:dx + OW, :]
            for dy in range(k) for dx in range(k)]
    p = jnp.stack(cols, axis=3)                        # (N, OH, OW, k*k, C)
    return p.reshape(N * OH * OW, k * k * C), (N, OH, OW)


def conv2d_bias_relu(x, w2d, bias2d, *, ksize, target_tm):
    """x: (N,H,W,C) bf16; w2d: (k*k*C, O) bf16; bias2d: (1, O) f32."""
    patches, (N, OH, OW) = _im2col(x, ksize)
    tm = _pick_tm(patches.shape[0], target_tm)
    y = matmul_bias_relu(patches, w2d, bias2d, tm=tm)
    return y.reshape(N, OH, OW, w2d.shape[1])


# ----------------------------------------------------------------------------
# Full forward pass (matches MyConvNet.forward; torch's print()s omitted).
# ----------------------------------------------------------------------------
def forward(x_nchw, p):
    n = x_nchw.shape[0]
    x = jnp.transpose(x_nchw, (0, 2, 3, 1))              # NCHW -> NHWC
    x = jnp.pad(x, ((0, 0), (0, 0), (0, 0), (0, 5)))     # C: 3 -> 8 (aligned K)
    x = x.astype(jnp.bfloat16)
    x = conv2d_bias_relu(x, p["conv1_w"], p["conv1_b"], ksize=5, target_tm=1200)
    x = maxpool2x2(x)                                     # (N, 30, 30, 64)
    x = conv2d_bias_relu(x, p["conv2_w"], p["conv2_b"], ksize=3, target_tm=784)
    x = maxpool2x2(x)                                     # (N, 14, 14, 128)
    # NHWC flatten is free; fc1_w rows were pre-permuted to NHWC order so this
    # is numerically equal to torch's view(-1, 14*14*128) on the NCHW tensor.
    x = x.reshape(n, -1)                                  # (N, 25088) bf16
    return fused_fc(x, p["fc1_w"], p["fc1_b"], p["fc2_w"], p["fc2_b"],
                    p["fc3_w"], p["fc3_b"], tk=3584)      # (N, 2) f32


# ----------------------------------------------------------------------------
# Deterministic torch-layout init + one-time kernel-layout weight prep.
# ----------------------------------------------------------------------------
def init_params(key):
    ks = jax.random.split(key, 10)

    def u(k, shape, fan_in):
        bound = 1.0 / (fan_in ** 0.5)
        return jax.random.uniform(k, shape, jnp.float32, -bound, bound)

    return {
        "conv1_w": u(ks[0], (64, 3, 5, 5), 3 * 5 * 5),
        "conv1_b": u(ks[1], (64,), 3 * 5 * 5),
        "conv2_w": u(ks[2], (128, 64, 3, 3), 64 * 3 * 3),
        "conv2_b": u(ks[3], (128,), 64 * 3 * 3),
        "fc1_w": u(ks[4], (14 * 14 * 128, 128), 14 * 14 * 128),
        "fc1_b": u(ks[5], (128,), 14 * 14 * 128),
        "fc2_w": u(ks[6], (128, 64), 128),
        "fc2_b": u(ks[7], (64,), 128),
        "fc3_w": u(ks[8], (64, 2), 64),
        "fc3_b": u(ks[9], (2,), 64),
    }


def prepare_params(p):
    """bf16 MXU weights, matmul layouts, aligned conv1 K, NHWC-ordered fc1."""
    # conv1: (64,3,5,5) -> (5,5,3,64) -> pad C 3->8 -> (200, 64)
    w1 = jnp.transpose(p["conv1_w"], (2, 3, 1, 0))
    w1 = jnp.pad(w1, ((0, 0), (0, 0), (0, 5), (0, 0))).reshape(5 * 5 * 8, 64)
    # conv2: (128,64,3,3) -> (3,3,64,128) -> (576, 128)
    w2 = jnp.transpose(p["conv2_w"], (2, 3, 1, 0)).reshape(3 * 3 * 64, 128)
    # fc1 rows: torch NCHW-flatten order (c,h,w) -> NHWC-flatten order (h,w,c)
    f1 = p["fc1_w"].reshape(128, 14, 14, 128)
    f1 = jnp.transpose(f1, (1, 2, 0, 3)).reshape(14 * 14 * 128, 128)
    bf = jnp.bfloat16
    return {
        "conv1_w": w1.astype(bf), "conv1_b": p["conv1_b"].reshape(1, -1),
        "conv2_w": w2.astype(bf), "conv2_b": p["conv2_b"].reshape(1, -1),
        "fc1_w": f1.astype(bf),   "fc1_b": p["fc1_b"].reshape(1, -1),
        "fc2_w": p["fc2_w"].astype(bf), "fc2_b": p["fc2_b"].reshape(1, -1),
        "fc3_w": p["fc3_w"].astype(bf), "fc3_b": p["fc3_b"].reshape(1, -1),
    }


if __name__ == "__main__":
    key = jax.random.PRNGKey(0)
    kx, kp = jax.random.split(key)
    # 64x64 spatial size is dictated by fc1's 14*14*128 input dimension.
    x = jax.random.normal(kx, (2, 3, 64, 64), jnp.float32)
    params = prepare_params(init_params(kp))

    out = jax.jit(forward)(x, params)
    out = jax.block_until_ready(out)
    assert out.shape == (2, 2) and out.dtype == jnp.float32
    print("KERNEL_OK")
</pallas_src>

<mosaic_0001>
module attributes {stable_mosaic.version = 11 : i64} {
  func.func @_conv_mm_kernel(%arg0: i32, %arg1: memref<1200x200xbf16, #tpu.memory_space<vmem>>, %arg2: memref<200x64xbf16, #tpu.memory_space<vmem>>, %arg3: memref<1x64xf32, #tpu.memory_space<vmem>>, %arg4: memref<1200x64xbf16, #tpu.memory_space<vmem>>) attributes {dimension_semantics = [#tpu.dimension_semantics<parallel>], iteration_bounds = array<i64: 6>, scalar_prefetch = 0 : i64, scratch_operands = 0 : i64, tpu.core_type = #tpu.core_type<tc>, window_params = [{transform_indices = @transform_0, window_bounds = array<i64: 1200, 200>}, {pipeline_mode = #tpu.pipeline_mode<synchronous>, transform_indices = @transform_1, window_bounds = array<i64: 200, 64>}, {pipeline_mode = #tpu.pipeline_mode<synchronous>, transform_indices = @transform_2, window_bounds = array<i64: 1, 64>}, {transform_indices = @transform_3, window_bounds = array<i64: 1200, 64>}]} {
    %c0 = arith.constant 0 : index
    %c0_0 = arith.constant 0 : index
    %0 = vector.load %arg1[%c0, %c0_0] : memref<1200x200xbf16, #tpu.memory_space<vmem>>, vector<1200x200xbf16>
    %c0_1 = arith.constant 0 : index
    %c0_2 = arith.constant 0 : index
    %1 = vector.load %arg2[%c0_1, %c0_2] : memref<200x64xbf16, #tpu.memory_space<vmem>>, vector<200x64xbf16>
    %cst = arith.constant dense<0.000000e+00> : vector<1200x64xf32>
    %2 = tpu.matmul %0, %1, %cst {dimension_numbers = #tpu.dot_dimension_numbers<[1], [0], [0], [1], [0, 0, 1, 1], [], []>} : vector<1200x200xbf16>, vector<200x64xbf16>, vector<1200x64xf32> -> vector<1200x64xf32>
    %c0_3 = arith.constant 0 : index
    %c0_4 = arith.constant 0 : index
    %3 = vector.load %arg3[%c0_3, %c0_4] : memref<1x64xf32, #tpu.memory_space<vmem>>, vector<1x64xf32>
    %4 = vector.broadcast %3 : vector<1x64xf32> to vector<1200x64xf32>
    %5 = arith.addf %2, %4 : vector<1200x64xf32>
    %cst_5 = arith.constant 0.000000e+00 : f32
    %6 = vector.broadcast %cst_5 : f32 to vector<1200x64xf32>
    %7 = arith.maximumf %5, %6 : vector<1200x64xf32>
    %8 = arith.truncf %7 : vector<1200x64xf32> to vector<1200x64xbf16>
    %c0_6 = arith.constant 0 : index
    %c0_7 = arith.constant 0 : index
    %9 = vector.load %arg4[%c0_6, %c0_7] : memref<1200x64xbf16, #tpu.memory_space<vmem>>, vector<1200x64xbf16>
    tpu.vector_store %arg4[%c0_6, %c0_7], %8 {strides = array<i32>} : memref<1200x64xbf16, #tpu.memory_space<vmem>>, vector<1200x64xbf16>,
    return
  }
  func.func @transform_0(%arg0: i32) -> (i32, i32) {
    %c0_i32 = arith.constant 0 : i32
    %c0_i32_0 = arith.constant 0 : i32
    return %arg0, %c0_i32 : i32, i32
  }
  func.func @transform_1(%arg0: i32) -> (i32, i32) {
    %c0_i32 = arith.constant 0 : i32
    %c0_i32_0 = arith.constant 0 : i32
    %c0_i32_1 = arith.constant 0 : i32
    return %c0_i32, %c0_i32_0 : i32, i32
  }
  func.func @transform_2(%arg0: i32) -> (i32, i32) {
    %c0_i32 = arith.constant 0 : i32
    %c0_i32_0 = arith.constant 0 : i32
    %c0_i32_1 = arith.constant 0 : i32
    return %c0_i32, %c0_i32_0 : i32, i32
  }
  func.func @transform_3(%arg0: i32) -> (i32, i32) {
    %c0_i32 = arith.constant 0 : i32
    %c0_i32_0 = arith.constant 0 : i32
    return %arg0, %c0_i32 : i32, i32
  }
}

module attributes {stable_mosaic.version = 11 : i64} {
  func.func @_maxpool_kernel(%arg0: i32, %arg1: memref<1x30x2x30x128xbf16, #tpu.memory_space<vmem>>, %arg2: memref<1x30x30x64xbf16, #tpu.memory_space<vmem>>) attributes {dimension_semantics = [#tpu.dimension_semantics<parallel>], iteration_bounds = array<i64: 2>, scalar_prefetch = 0 : i64, scratch_operands = 0 : i64, tpu.core_type = #tpu.core_type<tc>, window_params = [{transform_indices = @transform_0, window_bounds = array<i64: 1, 30, 2, 30, 128>}, {transform_indices = @transform_1, window_bounds = array<i64: 1, 30, 30, 64>}]} {
    %c0 = arith.constant 0 : index
    %c0_0 = arith.constant 0 : index
    %c0_1 = arith.constant 0 : index
    %c0_2 = arith.constant 0 : index
    %c0_3 = arith.constant 0 : index
    %0 = vector.load %arg1[%c0, %c0_0, %c0_1, %c0_2, %c0_3] : memref<1x30x2x30x128xbf16, #tpu.memory_space<vmem>>, vector<1x30x2x30x128xbf16>
    %1 = vector.extract_strided_slice %0 {offsets = [0, 0, 0, 0, 0], sizes = [1, 30, 1, 30, 128], strides = [1, 1, 1, 1, 1]} : vector<1x30x2x30x128xbf16> to vector<1x30x1x30x128xbf16>
    %2 = vector.shape_cast %1 : vector<1x30x1x30x128xbf16> to vector<1x30x30x128xbf16>
    %3 = vector.extract_strided_slice %0 {offsets = [0, 0, 1, 0, 0], sizes = [1, 30, 1, 30, 128], strides = [1, 1, 1, 1, 1]} : vector<1x30x2x30x128xbf16> to vector<1x30x1x30x128xbf16>
    %4 = vector.shape_cast %3 : vector<1x30x1x30x128xbf16> to vector<1x30x30x128xbf16>
    %5 = arith.maximumf %2, %4 : vector<1x30x30x128xbf16>
    %6 = vector.extract_strided_slice %5 {offsets = [0, 0, 0, 0], sizes = [1, 30, 30, 64], strides = [1, 1, 1, 1]} : vector<1x30x30x128xbf16> to vector<1x30x30x64xbf16>
    %7 = vector.extract_strided_slice %5 {offsets = [0, 0, 0, 64], sizes = [1, 30, 30, 64], strides = [1, 1, 1, 1]} : vector<1x30x30x128xbf16> to vector<1x30x30x64xbf16>
    %8 = arith.maximumf %6, %7 : vector<1x30x30x64xbf16>
    %c0_4 = arith.constant 0 : index
    %c0_5 = arith.constant 0 : index
    %c0_6 = arith.constant 0 : index
    %c0_7 = arith.constant 0 : index
    %9 = vector.load %arg2[%c0_4, %c0_5, %c0_6, %c0_7] : memref<1x30x30x64xbf16, #tpu.memory_space<vmem>>, vector<1x30x30x64xbf16>
    tpu.vector_store %arg2[%c0_4, %c0_5, %c0_6, %c0_7], %8 {strides = array<i32>} : memref<1x30x30x64xbf16, #tpu.memory_space<vmem>>, vector<1x30x30x64xbf16>,
    return
  }
  func.func @transform_0(%arg0: i32) -> (i32, i32, i32, i32, i32) {
    %c0_i32 = arith.constant 0 : i32
    %c0_i32_0 = arith.constant 0 : i32
    %c0_i32_1 = arith.constant 0 : i32
    %c0_i32_2 = arith.constant 0 : i32
    %c0_i32_3 = arith.constant 0 : i32
    return %arg0, %c0_i32, %c0_i32_0, %c0_i32_1, %c0_i32_2 : i32, i32, i32, i32, i32
  }
  func.func @transform_1(%arg0: i32) -> (i32, i32, i32, i32) {
    %c0_i32 = arith.constant 0 : i32
    %c0_i32_0 = arith.constant 0 : i32
    %c0_i32_1 = arith.constant 0 : i32
    %c0_i32_2 = arith.constant 0 : i32
    return %arg0, %c0_i32, %c0_i32_0, %c0_i32_1 : i32, i32, i32, i32
  }
}

module attributes {stable_mosaic.version = 11 : i64} {
  func.func @_conv_mm_kernel(%arg0: i32, %arg1: memref<784x576xbf16, #tpu.memory_space<vmem>>, %arg2: memref<576x128xbf16, #tpu.memory_space<vmem>>, %arg3: memref<1x128xf32, #tpu.memory_space<vmem>>, %arg4: memref<784x128xbf16, #tpu.memory_space<vmem>>) attributes {dimension_semantics = [#tpu.dimension_semantics<parallel>], iteration_bounds = array<i64: 2>, scalar_prefetch = 0 : i64, scratch_operands = 0 : i64, tpu.core_type = #tpu.core_type<tc>, window_params = [{transform_indices = @transform_0, window_bounds = array<i64: 784, 576>}, {pipeline_mode = #tpu.pipeline_mode<synchronous>, transform_indices = @transform_1, window_bounds = array<i64: 576, 128>}, {pipeline_mode = #tpu.pipeline_mode<synchronous>, transform_indices = @transform_2, window_bounds = array<i64: 1, 128>}, {transform_indices = @transform_3, window_bounds = array<i64: 784, 128>}]} {
    %c0 = arith.constant 0 : index
    %c0_0 = arith.constant 0 : index
    %0 = vector.load %arg1[%c0, %c0_0] : memref<784x576xbf16, #tpu.memory_space<vmem>>, vector<784x576xbf16>
    %c0_1 = arith.constant 0 : index
    %c0_2 = arith.constant 0 : index
    %1 = vector.load %arg2[%c0_1, %c0_2] : memref<576x128xbf16, #tpu.memory_space<vmem>>, vector<576x128xbf16>
    %cst = arith.constant dense<0.000000e+00> : vector<784x128xf32>
    %2 = tpu.matmul %0, %1, %cst {dimension_numbers = #tpu.dot_dimension_numbers<[1], [0], [0], [1], [0, 0, 1, 1], [], []>} : vector<784x576xbf16>, vector<576x128xbf16>, vector<784x128xf32> -> vector<784x128xf32>
    %c0_3 = arith.constant 0 : index
    %c0_4 = arith.constant 0 : index
    %3 = vector.load %arg3[%c0_3, %c0_4] : memref<1x128xf32, #tpu.memory_space<vmem>>, vector<1x128xf32>
    %4 = vector.broadcast %3 : vector<1x128xf32> to vector<784x128xf32>
    %5 = arith.addf %2, %4 : vector<784x128xf32>
    %cst_5 = arith.constant 0.000000e+00 : f32
    %6 = vector.broadcast %cst_5 : f32 to vector<784x128xf32>
    %7 = arith.maximumf %5, %6 : vector<784x128xf32>
    %8 = arith.truncf %7 : vector<784x128xf32> to vector<784x128xbf16>
    %c0_6 = arith.constant 0 : index
    %c0_7 = arith.constant 0 : index
    %9 = vector.load %arg4[%c0_6, %c0_7] : memref<784x128xbf16, #tpu.memory_space<vmem>>, vector<784x128xbf16>
    tpu.vector_store %arg4[%c0_6, %c0_7], %8 {strides = array<i32>} : memref<784x128xbf16, #tpu.memory_space<vmem>>, vector<784x128xbf16>,
    return
  }
  func.func @transform_0(%arg0: i32) -> (i32, i32) {
    %c0_i32 = arith.constant 0 : i32
    %c0_i32_0 = arith.constant 0 : i32
    return %arg0, %c0_i32 : i32, i32
  }
  func.func @transform_1(%arg0: i32) -> (i32, i32) {
    %c0_i32 = arith.constant 0 : i32
    %c0_i32_0 = arith.constant 0 : i32
    %c0_i32_1 = arith.constant 0 : i32
    return %c0_i32, %c0_i32_0 : i32, i32
  }
  func.func @transform_2(%arg0: i32) -> (i32, i32) {
    %c0_i32 = arith.constant 0 : i32
    %c0_i32_0 = arith.constant 0 : i32
    %c0_i32_1 = arith.constant 0 : i32
    return %c0_i32, %c0_i32_0 : i32, i32
  }
  func.func @transform_3(%arg0: i32) -> (i32, i32) {
    %c0_i32 = arith.constant 0 : i32
    %c0_i32_0 = arith.constant 0 : i32
    return %arg0, %c0_i32 : i32, i32
  }
}

module attributes {stable_mosaic.version = 11 : i64} {
  func.func @_maxpool_kernel(%arg0: i32, %arg1: memref<1x14x2x14x256xbf16, #tpu.memory_space<vmem>>, %arg2: memref<1x14x14x128xbf16, #tpu.memory_space<vmem>>) attributes {dimension_semantics = [#tpu.dimension_semantics<parallel>], iteration_bounds = array<i64: 2>, scalar_prefetch = 0 : i64, scratch_operands = 0 : i64, tpu.core_type = #tpu.core_type<tc>, window_params = [{transform_indices = @transform_0, window_bounds = array<i64: 1, 14, 2, 14, 256>}, {transform_indices = @transform_1, window_bounds = array<i64: 1, 14, 14, 128>}]} {
    %c0 = arith.constant 0 : index
    %c0_0 = arith.constant 0 : index
    %c0_1 = arith.constant 0 : index
    %c0_2 = arith.constant 0 : index
    %c0_3 = arith.constant 0 : index
    %0 = vector.load %arg1[%c0, %c0_0, %c0_1, %c0_2, %c0_3] : memref<1x14x2x14x256xbf16, #tpu.memory_space<vmem>>, vector<1x14x2x14x256xbf16>
    %1 = vector.extract_strided_slice %0 {offsets = [0, 0, 0, 0, 0], sizes = [1, 14, 1, 14, 256], strides = [1, 1, 1, 1, 1]} : vector<1x14x2x14x256xbf16> to vector<1x14x1x14x256xbf16>
    %2 = vector.shape_cast %1 : vector<1x14x1x14x256xbf16> to vector<1x14x14x256xbf16>
    %3 = vector.extract_strided_slice %0 {offsets = [0, 0, 1, 0, 0], sizes = [1, 14, 1, 14, 256], strides = [1, 1, 1, 1, 1]} : vector<1x14x2x14x256xbf16> to vector<1x14x1x14x256xbf16>
    %4 = vector.shape_cast %3 : vector<1x14x1x14x256xbf16> to vector<1x14x14x256xbf16>
    %5 = arith.maximumf %2, %4 : vector<1x14x14x256xbf16>
    %6 = vector.extract_strided_slice %5 {offsets = [0, 0, 0, 0], sizes = [1, 14, 14, 128], strides = [1, 1, 1, 1]} : vector<1x14x14x256xbf16> to vector<1x14x14x128xbf16>
    %7 = vector.extract_strided_slice %5 {offsets = [0, 0, 0, 128], sizes = [1, 14, 14, 128], strides = [1, 1, 1, 1]} : vector<1x14x14x256xbf16> to vector<1x14x14x128xbf16>
    %8 = arith.maximumf %6, %7 : vector<1x14x14x128xbf16>
    %c0_4 = arith.constant 0 : index
    %c0_5 = arith.constant 0 : index
    %c0_6 = arith.constant 0 : index
    %c0_7 = arith.constant 0 : index
    %9 = vector.load %arg2[%c0_4, %c0_5, %c0_6, %c0_7] : memref<1x14x14x128xbf16, #tpu.memory_space<vmem>>, vector<1x14x14x128xbf16>
    tpu.vector_store %arg2[%c0_4, %c0_5, %c0_6, %c0_7], %8 {strides = array<i32>} : memref<1x14x14x128xbf16, #tpu.memory_space<vmem>>, vector<1x14x14x128xbf16>,
    return
  }
  func.func @transform_0(%arg0: i32) -> (i32, i32, i32, i32, i32) {
    %c0_i32 = arith.constant 0 : i32
    %c0_i32_0 = arith.constant 0 : i32
    %c0_i32_1 = arith.constant 0 : i32
    %c0_i32_2 = arith.constant 0 : i32
    %c0_i32_3 = arith.constant 0 : i32
    return %arg0, %c0_i32, %c0_i32_0, %c0_i32_1, %c0_i32_2 : i32, i32, i32, i32, i32
  }
  func.func @transform_1(%arg0: i32) -> (i32, i32, i32, i32) {
    %c0_i32 = arith.constant 0 : i32
    %c0_i32_0 = arith.constant 0 : i32
    %c0_i32_1 = arith.constant 0 : i32
    %c0_i32_2 = arith.constant 0 : i32
    return %arg0, %c0_i32, %c0_i32_0, %c0_i32_1 : i32, i32, i32, i32
  }
}

module attributes {stable_mosaic.version = 11 : i64} {
  func.func @_fused_fc_kernel(%arg0: i32, %arg1: memref<2x3584xbf16, #tpu.memory_space<vmem>>, %arg2: memref<3584x128xbf16, #tpu.memory_space<vmem>>, %arg3: memref<1x128xf32, #tpu.memory_space<vmem>>, %arg4: memref<128x64xbf16, #tpu.memory_space<vmem>>, %arg5: memref<1x64xf32, #tpu.memory_space<vmem>>, %arg6: memref<64x2xbf16, #tpu.memory_space<vmem>>, %arg7: memref<1x2xf32, #tpu.memory_space<vmem>>, %arg8: memref<2x2xf32, #tpu.memory_space<vmem>>, %arg9: memref<2x128xf32, #tpu.memory_space<vmem>>) attributes {dimension_semantics = [#tpu.dimension_semantics<arbitrary>], iteration_bounds = array<i64: 7>, scalar_prefetch = 0 : i64, scratch_operands = 1 : i64, tpu.core_type = #tpu.core_type<tc>, window_params = [{transform_indices = @transform_0, window_bounds = array<i64: 2, 3584>}, {transform_indices = @transform_1, window_bounds = array<i64: 3584, 128>}, {pipeline_mode = #tpu.pipeline_mode<synchronous>, transform_indices = @transform_2, window_bounds = array<i64: 1, 128>}, {pipeline_mode = #tpu.pipeline_mode<synchronous>, transform_indices = @transform_3, window_bounds = array<i64: 128, 64>}, {pipeline_mode = #tpu.pipeline_mode<synchronous>, transform_indices = @transform_4, window_bounds = array<i64: 1, 64>}, {pipeline_mode = #tpu.pipeline_mode<synchronous>, transform_indices = @transform_5, window_bounds = array<i64: 64, 2>}, {pipeline_mode = #tpu.pipeline_mode<synchronous>, transform_indices = @transform_6, window_bounds = array<i64: 1, 2>}, {pipeline_mode = #tpu.pipeline_mode<synchronous>, transform_indices = @transform_7, window_bounds = array<i64: 2, 2>}]} {
    %c0_i32 = arith.constant 0 : i32
    %0 = arith.cmpi eq, %arg0, %c0_i32 : i32
    %1 = arith.extui %0 : i1 to i32
    %c0_i32_0 = arith.constant 0 : i32
    %2 = arith.cmpi ne, %1, %c0_i32_0 : i32
    scf.if %2 {
      %cst_9 = arith.constant 0.000000e+00 : f32
      %12 = vector.broadcast %cst_9 : f32 to vector<2x128xf32>
      %c0_10 = arith.constant 0 : index
      %c0_11 = arith.constant 0 : index
      %13 = vector.load %arg9[%c0_10, %c0_11] : memref<2x128xf32, #tpu.memory_space<vmem>>, vector<2x128xf32>
      tpu.vector_store %arg9[%c0_10, %c0_11], %12 {strides = array<i32>} : memref<2x128xf32, #tpu.memory_space<vmem>>, vector<2x128xf32>,
    } else {
    }
    %c0 = arith.constant 0 : index
    %c0_1 = arith.constant 0 : index
    %3 = vector.load %arg9[%c0, %c0_1] : memref<2x128xf32, #tpu.memory_space<vmem>>, vector<2x128xf32>
    %c0_2 = arith.constant 0 : index
    %c0_3 = arith.constant 0 : index
    %4 = vector.load %arg1[%c0_2, %c0_3] : memref<2x3584xbf16, #tpu.memory_space<vmem>>, vector<2x3584xbf16>
    %c0_4 = arith.constant 0 : index
    %c0_5 = arith.constant 0 : index
    %5 = vector.load %arg2[%c0_4, %c0_5] : memref<3584x128xbf16, #tpu.memory_space<vmem>>, vector<3584x128xbf16>
    %cst = arith.constant dense<0.000000e+00> : vector<2x128xf32>
    %6 = tpu.matmul %4, %5, %cst {dimension_numbers = #tpu.dot_dimension_numbers<[1], [0], [0], [1], [0, 0, 1, 1], [], []>} : vector<2x3584xbf16>, vector<3584x128xbf16>, vector<2x128xf32> -> vector<2x128xf32>
    %7 = arith.addf %3, %6 : vector<2x128xf32>
    %c0_6 = arith.constant 0 : index
    %c0_7 = arith.constant 0 : index
    %8 = vector.load %arg9[%c0_6, %c0_7] : memref<2x128xf32, #tpu.memory_space<vmem>>, vector<2x128xf32>
    tpu.vector_store %arg9[%c0_6, %c0_7], %7 {strides = array<i32>} : memref<2x128xf32, #tpu.memory_space<vmem>>, vector<2x128xf32>,
    %c6_i32 = arith.constant 6 : i32
    %9 = arith.cmpi eq, %arg0, %c6_i32 : i32
    %10 = arith.extui %9 : i1 to i32
    %c0_i32_8 = arith.constant 0 : i32
    %11 = arith.cmpi ne, %10, %c0_i32_8 : i32
    scf.if %11 {
      %c0_9 = arith.constant 0 : index
      %c0_10 = arith.constant 0 : index
      %12 = vector.load %arg9[%c0_9, %c0_10] : memref<2x128xf32, #tpu.memory_space<vmem>>, vector<2x128xf32>
      %c0_11 = arith.constant 0 : index
      %c0_12 = arith.constant 0 : index
      %13 = vector.load %arg3[%c0_11, %c0_12] : memref<1x128xf32, #tpu.memory_space<vmem>>, vector<1x128xf32>
      %14 = vector.broadcast %13 : vector<1x128xf32> to vector<2x128xf32>
      %15 = arith.addf %12, %14 : vector<2x128xf32>
      %cst_13 = arith.constant 0.000000e+00 : f32
      %16 = vector.broadcast %cst_13 : f32 to vector<2x128xf32>
      %17 = arith.maximumf %15, %16 : vector<2x128xf32>
      %18 = arith.truncf %17 : vector<2x128xf32> to vector<2x128xbf16>
      %c0_14 = arith.constant 0 : index
      %c0_15 = arith.constant 0 : index
      %19 = vector.load %arg4[%c0_14, %c0_15] : memref<128x64xbf16, #tpu.memory_space<vmem>>, vector<128x64xbf16>
      %cst_16 = arith.constant dense<0.000000e+00> : vector<2x64xf32>
      %20 = tpu.matmul %18, %19, %cst_16 {dimension_numbers = #tpu.dot_dimension_numbers<[1], [0], [0], [1], [0, 0, 1, 1], [], []>} : vector<2x128xbf16>, vector<128x64xbf16>, vector<2x64xf32> -> vector<2x64xf32>
      %c0_17 = arith.constant 0 : index
      %c0_18 = arith.constant 0 : index
      %21 = vector.load %arg5[%c0_17, %c0_18] : memref<1x64xf32, #tpu.memory_space<vmem>>, vector<1x64xf32>
      %22 = vector.broadcast %21 : vector<1x64xf32> to vector<2x64xf32>
      %23 = arith.addf %20, %22 : vector<2x64xf32>
      %cst_19 = arith.constant 0.000000e+00 : f32
      %24 = vector.broadcast %cst_19 : f32 to vector<2x64xf32>
      %25 = arith.maximumf %23, %24 : vector<2x64xf32>
      %26 = arith.truncf %25 : vector<2x64xf32> to vector<2x64xbf16>
      %c0_20 = arith.constant 0 : index
      %c0_21 = arith.constant 0 : index
      %27 = vector.load %arg6[%c0_20, %c0_21] : memref<64x2xbf16, #tpu.memory_space<vmem>>, vector<64x2xbf16>
      %cst_22 = arith.constant dense<0.000000e+00> : vector<2x2xf32>
      %28 = tpu.matmul %26, %27, %cst_22 {dimension_numbers = #tpu.dot_dimension_numbers<[1], [0], [0], [1], [0, 0, 1, 1], [], []>} : vector<2x64xbf16>, vector<64x2xbf16>, vector<2x2xf32> -> vector<2x2xf32>
      %c0_23 = arith.constant 0 : index
      %c0_24 = arith.constant 0 : index
      %29 = vector.load %arg7[%c0_23, %c0_24] : memref<1x2xf32, #tpu.memory_space<vmem>>, vector<1x2xf32>
      %30 = vector.broadcast %29 : vector<1x2xf32> to vector<2x2xf32>
      %31 = arith.addf %28, %30 : vector<2x2xf32>
      %c0_25 = arith.constant 0 : index
      %c0_26 = arith.constant 0 : index
      %32 = vector.load %arg8[%c0_25, %c0_26] : memref<2x2xf32, #tpu.memory_space<vmem>>, vector<2x2xf32>
      tpu.vector_store %arg8[%c0_25, %c0_26], %31 {strides = array<i32>} : memref<2x2xf32, #tpu.memory_space<vmem>>, vector<2x2xf32>,
    } else {
    }
    return
  }
  func.func @transform_0(%arg0: i32) -> (i32, i32) {
    %c0_i32 = arith.constant 0 : i32
    %c0_i32_0 = arith.constant 0 : i32
    return %c0_i32, %arg0 : i32, i32
  }
  func.func @transform_1(%arg0: i32) -> (i32, i32) {
    %c0_i32 = arith.constant 0 : i32
    %c0_i32_0 = arith.constant 0 : i32
    return %arg0, %c0_i32 : i32, i32
  }
  func.func @transform_2(%arg0: i32) -> (i32, i32) {
    %c0_i32 = arith.constant 0 : i32
    %c0_i32_0 = arith.constant 0 : i32
    %c0_i32_1 = arith.constant 0 : i32
    return %c0_i32, %c0_i32_0 : i32, i32
  }
  func.func @transform_3(%arg0: i32) -> (i32, i32) {
    %c0_i32 = arith.constant 0 : i32
    %c0_i32_0 = arith.constant 0 : i32
    %c0_i32_1 = arith.constant 0 : i32
    return %c0_i32, %c0_i32_0 : i32, i32
  }
  func.func @transform_4(%arg0: i32) -> (i32, i32) {
    %c0_i32 = arith.constant 0 : i32
    %c0_i32_0 = arith.constant 0 : i32
    %c0_i32_1 = arith.constant 0 : i32
    return %c0_i32, %c0_i32_0 : i32, i32
  }
  func.func @transform_5(%arg0: i32) -> (i32, i32) {
    %c0_i32 = arith.constant 0 : i32
    %c0_i32_0 = arith.constant 0 : i32
    %c0_i32_1 = arith.constant 0 : i32
    return %c0_i32, %c0_i32_0 : i32, i32
  }
  func.func @transform_6(%arg0: i32) -> (i32, i32) {
    %c0_i32 = arith.constant 0 : i32
    %c0_i32_0 = arith.constant 0 : i32
    %c0_i32_1 = arith.constant 0 : i32
    return %c0_i32, %c0_i32_0 : i32, i32
  }
  func.func @transform_7(%arg0: i32) -> (i32, i32) {
    %c0_i32 = arith.constant 0 : i32
    %c0_i32_0 = arith.constant 0 : i32
    %c0_i32_1 = arith.constant 0 : i32
    return %c0_i32, %c0_i32_0 : i32, i32
  }
}

</mosaic_0001>

<llo_original>
// kernel: forward.5
$region0: #{forward.5}
  #allocation0 [shape = 'u32[]', space=smem, size = 0x4, offset = 0x4, fixed_abs, tag = 'smem constant byte address 0x4 - core index']
  #allocation1 [shape = 'u32[144,128]{1,0:T(1,128)}', space=vmem, size = 0x12000, scoped, tag = 'internal scratch']
  %s0 = inlined_call_operand.vmem [shape: bf16[7200,200], index: 0, kind: input, shape index: {}]
  %s1 = inlined_call_operand.vmem [shape: bf16[200,64], index: 1, kind: input, shape index: {}]
  %s2 = inlined_call_operand.vmem [shape: f32[1,64], index: 2, kind: input, shape index: {}]
  %s3 = inlined_call_operand.vmem [shape: bf16[7200,64], index: 3, kind: output, shape index: {}]
  %s4 = sld [smem:[#allocation0]]
  $region45: #{forward.5} parent=0
    _
  %s6 = ssub.s32 1, %s4
  %s7 = scalar_select 0, %s6, %s4
  loop: start=0, step=1, limit=8
  $region2: #{forward.5} parent=0 // loop_pre_header
    _
  $region3: #{forward.5} parent=0 // loop_header
    %s9 = sphi 0, %s13
    %p10 = scmp.ge.s32.totalorder %s9, 8
    %s19 = sphi 0, %s21
    %s22 = sphi 0, %s19
    %s23 = sphi 0, %s22
    %s39 = sphi 0, %s23
    %s43 = sphi 0, %s43
    %s45 = sphi 0, %s43
    %s46 = sphi 0, %s45
    %s60 = sphi 0, %s46
    %s64 = sphi 0, %s64
    %s66 = sphi 0, %s64
    %s67 = sphi 0, %s66
    %s81 = sphi 0, %s67
    %s87 = sphi 0, %s89
    %s90 = sphi 0, %s87
    %s91 = sphi 0, %s90
    %s107 = sphi 0, %s91
  $region4: #{forward.5} parent=0 // loop_header_branch
    %12 = sbr.rel (%p10) target = $region8
  $region5: #{forward.5} parent=0 // loop_body
    %s14 = ssub.s32 %s9, 1
    %s15 = ssub.s32 %s9, 2
    %s16 = sadd.s32 %s9, 1
    %s17 = ssub.s32 %s9, %s16
    %p18 = scmp.eq.s32.totalorder %s17, 0
    %s20 = sadd.s32 %s19, 1
    %s21 = scalar_select %p18, %s19, %s20
    %p24 = pneg %p18
    %p25 = scmp.eq.s32.totalorder %s9, 5
    %p26 = por %p24, %p25
    %p27 = scmp.ne.s32.totalorder %s19, %s22
    %p28 = scmp.eq.s32.totalorder %s9, 0
    %p29 = por %p27, %p28
    %p30 = scmp.ne.s32.totalorder %s19, %s22
    %p31 = scmp.eq.s32.totalorder %s14, 5
    %p32 = por %p30, %p31
    %p33 = scmp.ne.s32.totalorder %s22, %s23
    %p34 = scmp.eq.s32.totalorder %s14, 0
    %p35 = por %p33, %p34
    %p36 = scmp.ne.s32.totalorder %s22, %s23
    %p37 = scmp.eq.s32.totalorder %s15, 5
    %p38 = por %p36, %p37
    %p40 = scmp.ne.s32.totalorder %s23, %s39
    %p41 = scmp.eq.s32.totalorder %s15, 0
    %p42 = por %p40, %p41
    %s44 = sadd.s32 %s43, 1
    %p47 = scmp.eq.s32.totalorder %s9, 5
    %p48 = scmp.ne.s32.totalorder %s43, %s45
    %p49 = scmp.eq.s32.totalorder %s9, 0
    %p50 = por %p48, %p49
    %p51 = scmp.ne.s32.totalorder %s43, %s45
    %p52 = scmp.eq.s32.totalorder %s14, 5
    %p53 = por %p51, %p52
    %p54 = scmp.ne.s32.totalorder %s45, %s46
    %p55 = scmp.eq.s32.totalorder %s14, 0
    %p56 = por %p54, %p55
    %p57 = scmp.ne.s32.totalorder %s45, %s46
    %p58 = scmp.eq.s32.totalorder %s15, 5
    %p59 = por %p57, %p58
    %p61 = scmp.ne.s32.totalorder %s46, %s60
    %p62 = scmp.eq.s32.totalorder %s15, 0
    %p63 = por %p61, %p62
    %s65 = sadd.s32 %s64, 1
    %p68 = scmp.eq.s32.totalorder %s9, 5
    %p69 = scmp.ne.s32.totalorder %s64, %s66
    %p70 = scmp.eq.s32.totalorder %s9, 0
    %p71 = por %p69, %p70
    %p72 = scmp.ne.s32.totalorder %s64, %s66
    %p73 = scmp.eq.s32.totalorder %s14, 5
    %p74 = por %p72, %p73
    %p75 = scmp.ne.s32.totalorder %s66, %s67
    %p76 = scmp.eq.s32.totalorder %s14, 0
    %p77 = por %p75, %p76
    %p78 = scmp.ne.s32.totalorder %s66, %s67
    %p79 = scmp.eq.s32.totalorder %s15, 5
    %p80 = por %p78, %p79
    %p82 = scmp.ne.s32.totalorder %s67, %s81
    %p83 = scmp.eq.s32.totalorder %s15, 0
    %p84 = por %p82, %p83
    %s85 = ssub.s32 %s9, %s16
    %p86 = scmp.eq.s32.totalorder %s85, 0
    %s88 = sadd.s32 %s87, 1
    %s89 = scalar_select %p86, %s87, %s88
    %p92 = pneg %p86
    %p93 = scmp.eq.s32.totalorder %s9, 5
    %p94 = por %p92, %p93
    %p95 = scmp.ne.s32.totalorder %s87, %s90
    %p96 = scmp.eq.s32.totalorder %s9, 0
    %p97 = por %p95, %p96
    %p98 = scmp.ne.s32.totalorder %s87, %s90
    %p99 = scmp.eq.s32.totalorder %s14, 5
    %p100 = por %p98, %p99
    %p101 = scmp.ne.s32.totalorder %s90, %s91
    %p102 = scmp.eq.s32.totalorder %s14, 0
    %p103 = por %p101, %p102
    %p104 = scmp.ne.s32.totalorder %s90, %s91
    %p105 = scmp.eq.s32.totalorder %s15, 5
    %p106 = por %p104, %p105
    %p108 = scmp.ne.s32.totalorder %s91, %s107
    %p109 = scmp.eq.s32.totalorder %s15, 0
    %p110 = por %p108, %p109
    %p111 = scmp.le.s32.totalorder 1, %s9
    %p112 = scmp.lt.s32.totalorder %s9, 7
    %p113 = pnand %p111, %p112
    %p114 = pneg %p113
    // Predicated region
    $region9: #{forward.5} parent=5 // pred_check
      _
    $region10: #{forward.5} parent=5 // pred_check_branch
      %116 = sbr.rel (%p113) target = $region12
    $region11: #{forward.5} parent=5 // pred_region
      %s117 = ssub.s32 %s9, 1
      // Predicated region
      $region13: #{forward.5} parent=11 // pred_check
        %p118 = pneg %p56
      $region14: #{forward.5} parent=11 // pred_check_branch
        %120 = sbr.rel (%p118) target = $region16
      $region15: #{forward.5} parent=11 // pred_region
        _
      $region16: #{forward.5} parent=11 // pred_fallthru
        _
      // Predicated region
      $region17: #{forward.5} parent=11 // pred_check
        %p121 = pneg %p77
      $region18: #{forward.5} parent=11 // pred_check_branch
        %123 = sbr.rel (%p121) target = $region20
      $region19: #{forward.5} parent=11 // pred_region
        _
      $region20: #{forward.5} parent=11 // pred_fallthru
        _
    $region12: #{forward.5} parent=5 // pred_fallthru
      _
    %p124 = scmp.lt.s32.totalorder %s9, 6
    // Predicated region
    $region21: #{forward.5} parent=5 // pred_check
      %p125 = pneg %p124
    $region22: #{forward.5} parent=5 // pred_check_branch
      %127 = sbr.rel (%p125) target = $region24
    $region23: #{forward.5} parent=5 // pred_region
      // Predicated region
      $region25: #{forward.5} parent=23 // pred_check
        %p128 = pneg %p29
      $region26: #{forward.5} parent=23 // pred_check_branch
        %130 = sbr.rel (%p128) target = $region28
      $region27: #{forward.5} parent=23 // pred_region
        %s131 = smul.u32 150, %s9
        %p132 = scmp.lt.s32.totalorder %s131, 899
        %s133 = scalar_select %p132, %s131, 899
        %s134 = smul.addr %s133, 2
        %s135 = smul.addr %s134, 4
        %s136 = scalar_lea.vmem %s0, %s135
        %s137 = smul.u32 150, %s9
      $region28: #{forward.5} parent=23 // pred_fallthru
        _
    $region24: #{forward.5} parent=5 // pred_fallthru
      _
    %p138 = scmp.le.s32.totalorder 1, %s9
    %p139 = scmp.lt.s32.totalorder %s9, 7
    %p140 = pnand %p138, %p139
    %p141 = pneg %p140
    // Predicated region
    $region29: #{forward.5} parent=5 // pred_check
      _
    $region30: #{forward.5} parent=5 // pred_check_branch
      %143 = sbr.rel (%p140) target = $region32
    $region31: #{forward.5} parent=5 // pred_region
      %s144 = ssub.s32 %s9, 1
      %s145 = smul.u32 150, %s14
      %p146 = scmp.lt.s32.totalorder %s145, 899
      %s147 = scalar_select %p146, %s145, 899
      %s148 = smul.addr %s147, 2
      %s149 = smul.addr %s148, 4
      %s150 = scalar_lea.vmem %s0, %s149
      %p151 = pneg %p35
      %p152 = pneg %p32
      %p153 = pneg %p56
      %p154 = pneg %p53
      %p155 = pneg %p77
      %p156 = pneg %p74
      %p157 = pneg %p103
      %p158 = pneg %p100
      %s159 = smul.u32 150, %s14
      %p160 = scmp.lt.s32.totalorder %s159, 899
      %s161 = scalar_select %p160, %s159, 899
      %s162 = smul.addr %s161, 4
      %s163 = scalar_lea.vmem %s3, %s162
      %s164 = smul.u32 150, %s14
      %p165 = scmp.lt.s32.totalorder %s164, 899
      %s166 = scalar_select %p165, %s164, 899
      %s167 = smul.addr %s166, 2
      %s168 = smul.addr %s167, 4
      %s169 = scalar_lea.vmem %s0, %s168
      %s170 = smul.u32 150, %s14
      %s171 = smul.u32 150, %s14
      %p172 = scmp.lt.s32.totalorder %s171, 899
      %s173 = scalar_select %p172, %s171, 899
      %s174 = smul.addr %s173, 4
      %s175 = scalar_lea.vmem %s3, %s174
      %s176 = smul.u32 150, %s14
      %v178 = vld [vmem:[%s169] sm:$0xff]
      %v179 = vld [vmem:[%s169 + $0x8] sm:$0xff]
      %v180 = vld [vmem:[%s169 + $0x10] sm:$0xff]
      %v181 = vld [vmem:[%s169 + $0x18] sm:$0xff]
      %v182 = vld [vmem:[%s169 + $0x20] sm:$0xff]
      %v183 = vld [vmem:[%s169 + $0x28] sm:$0xff]
      %v184 = vld [vmem:[%s169 + $0x30] sm:$0xff]
      %v185 = vld [vmem:[%s169 + $0x38] sm:$0xff]
      %v186 = vld [vmem:[%s169 + $0x40] sm:$0xff]
      %v187 = vld [vmem:[%s169 + $0x48] sm:$0xff]
      %v188 = vld [vmem:[%s169 + $0x50] sm:$0xff]
      %v189 = vld [vmem:[%s169 + $0x58] sm:$0xff]
      %v190 = vld [vmem:[%s169 + $0x60] sm:$0xff]
      %v191 = vld [vmem:[%s169 + $0x68] sm:$0xff]
      %v192 = vld [vmem:[%s169 + $0x70] sm:$0xff]
      %v193 = vld [vmem:[%s169 + $0x78] sm:$0xff]
      %v194 = vld [vmem:[%s169 + $0x80] sm:$0xff]
      %v195 = vld [vmem:[%s169 + $0x88] sm:$0xff]
      %v196 = vld [vmem:[%s169 + $0x90] sm:$0xff]
      %v197 = vld [vmem:[%s169 + $0x98] sm:$0xff]
      %v198 = vld [vmem:[%s169 + $0xa0] sm:$0xff]
      %v199 = vld [vmem:[%s169 + $0xa8] sm:$0xff]
      %v200 = vld [vmem:[%s169 + $0xb0] sm:$0xff]
      %v201 = vld [vmem:[%s169 + $0xb8] sm:$0xff]
      %v202 = vld [vmem:[%s169 + $0xc0] sm:$0xff]
      %v203 = vld [vmem:[%s169 + $0xc8] sm:$0xff]
      %v204 = vld [vmem:[%s169 + $0xd0] sm:$0xff]
      %v205 = vld [vmem:[%s169 + $0xd8] sm:$0xff]
      %v206 = vld [vmem:[%s169 + $0xe0] sm:$0xff]
      %v207 = vld [vmem:[%s169 + $0xe8] sm:$0xff]
      %v208 = vld [vmem:[%s169 + $0xf0] sm:$0xff]
      %v209 = vld [vmem:[%s169 + $0xf8] sm:$0xff]
      %v210 = vld [vmem:[%s169 + $0x100] sm:$0xff]
      %v211 = vld [vmem:[%s169 + $0x108] sm:$0xff]
      %v212 = vld [vmem:[%s169 + $0x110] sm:$0xff]
      %v213 = vld [vmem:[%s169 + $0x118] sm:$0xff]
      %v214 = vld [vmem:[%s169 + $0x120] sm:$0xff]
      %v215 = vld [vmem:[%s169 + $0x128] sm:$0xff]
      %v216 = vld [vmem:[%s169 + $0x130] sm:$0xff]
      %v217 = vld [vmem:[%s169 + $0x138] sm:$0xff]
      %v218 = vld [vmem:[%s169 + $0x140] sm:$0xff]
      %v219 = vld [vmem:[%s169 + $0x148] sm:$0xff]
      %v220 = vld [vmem:[%s169 + $0x150] sm:$0xff]
      %v221 = vld [vmem:[%s169 + $0x158] sm:$0xff]
      %v222 = vld [vmem:[%s169 + $0x160] sm:$0xff]
      %v223 = vld [vmem:[%s169 + $0x168] sm:$0xff]
      %v224 = vld [vmem:[%s169 + $0x170] sm:$0xff]
      %v225 = vld [vmem:[%s169 + $0x178] sm:$0xff]
      %v226 = vld [vmem:[%s169 + $0x180] sm:$0xff]
      %v227 = vld [vmem:[%s169 + $0x188] sm:$0xff]
      %v228 = vld [vmem:[%s169 + $0x190] sm:$0xff]
      %v229 = vld [vmem:[%s169 + $0x198] sm:$0xff]
      %v230 = vld [vmem:[%s169 + $0x1a0] sm:$0xff]
      %v231 = vld [vmem:[%s169 + $0x1a8] sm:$0xff]
      %v232 = vld [vmem:[%s169 + $0x1b0] sm:$0xff]
      %v233 = vld [vmem:[%s169 + $0x1b8] sm:$0xff]
      %v234 = vld [vmem:[%s169 + $0x1c0] sm:$0xff]
      %v235 = vld [vmem:[%s169 + $0x1c8] sm:$0xff]
      %v236 = vld [vmem:[%s169 + $0x1d0] sm:$0xff]
      %v237 = vld [vmem:[%s169 + $0x1d8] sm:$0xff]
      %v238 = vld [vmem:[%s169 + $0x1e0] sm:$0xff]
      %v239 = vld [vmem:[%s169 + $0x1e8] sm:$0xff]
      %v240 = vld [vmem:[%s169 + $0x1f0] sm:$0xff]
      %v241 = vld [vmem:[%s169 + $0x1f8] sm:$0xff]
      %v242 = vld [vmem:[%s169 + $0x200] sm:$0xff]
      %v243 = vld [vmem:[%s169 + $0x208] sm:$0xff]
      %v244 = vld [vmem:[%s169 + $0x210] sm:$0xff]
      %v245 = vld [vmem:[%s169 + $0x218] sm:$0xff]
      %v246 = vld [vmem:[%s169 + $0x220] sm:$0xff]
      %v247 = vld [vmem:[%s169 + $0x228] sm:$0xff]
      %v248 = vld [vmem:[%s169 + $0x230] sm:$0xff]
      %v249 = vld [vmem:[%s169 + $0x238] sm:$0xff]
      %v250 = vld [vmem:[%s169 + $0x240] sm:$0xff]
      %v251 = vld [vmem:[%s169 + $0x248] sm:$0xff]
      %v252 = vld [vmem:[%s169 + $0x250] sm:$0xff]
      %v253 = vld [vmem:[%s169 + $0x258] sm:$0xff]
      %v254 = vld [vmem:[%s169 + $0x260] sm:$0xff]
      %v255 = vld [vmem:[%s169 + $0x268] sm:$0xff]
      %v256 = vld [vmem:[%s169 + $0x270] sm:$0xff]
      %v257 = vld [vmem:[%s169 + $0x278] sm:$0xff]
      %v258 = vld [vmem:[%s169 + $0x280] sm:$0xff]
      %v259 = vld [vmem:[%s169 + $0x288] sm:$0xff]
      %v260 = vld [vmem:[%s169 + $0x290] sm:$0xff]
      %v261 = vld [vmem:[%s169 + $0x298] sm:$0xff]
      %v262 = vld [vmem:[%s169 + $0x2a0] sm:$0xff]
      %v263 = vld [vmem:[%s169 + $0x2a8] sm:$0xff]
      %v264 = vld [vmem:[%s169 + $0x2b0] sm:$0xff]
      %v265 = vld [vmem:[%s169 + $0x2b8] sm:$0xff]
      %v266 = vld [vmem:[%s169 + $0x2c0] sm:$0xff]
      %v267 = vld [vmem:[%s169 + $0x2c8] sm:$0xff]
      %v268 = vld [vmem:[%s169 + $0x2d0] sm:$0xff]
      %v269 = vld [vmem:[%s169 + $0x2d8] sm:$0xff]
      %v270 = vld [vmem:[%s169 + $0x2e0] sm:$0xff]
      %v271 = vld [vmem:[%s169 + $0x2e8] sm:$0xff]
      %v272 = vld [vmem:[%s169 + $0x2f0] sm:$0xff]
      %v273 = vld [vmem:[%s169 + $0x2f8] sm:$0xff]
      %v274 = vld [vmem:[%s169 + $0x300] sm:$0xff]
      %v275 = vld [vmem:[%s169 + $0x308] sm:$0xff]
      %v276 = vld [vmem:[%s169 + $0x310] sm:$0xff]
      %v277 = vld [vmem:[%s169 + $0x318] sm:$0xff]
      %v278 = vld [vmem:[%s169 + $0x320] sm:$0xff]
      %v279 = vld [vmem:[%s169 + $0x328] sm:$0xff]
      %v280 = vld [vmem:[%s169 + $0x330] sm:$0xff]
      %v281 = vld [vmem:[%s169 + $0x338] sm:$0xff]
      %v282 = vld [vmem:[%s169 + $0x340] sm:$0xff]
      %v283 = vld [vmem:[%s169 + $0x348] sm:$0xff]
      %v284 = vld [vmem:[%s169 + $0x350] sm:$0xff]
      %v285 = vld [vmem:[%s169 + $0x358] sm:$0xff]
      %v286 = vld [vmem:[%s169 + $0x360] sm:$0xff]
      %v287 = vld [vmem:[%s169 + $0x368] sm:$0xff]
      %v288 = vld [vmem:[%s169 + $0x370] sm:$0xff]
      %v289 = vld [vmem:[%s169 + $0x378] sm:$0xff]
      %v290 = vld [vmem:[%s169 + $0x380] sm:$0xff]
      %v291 = vld [vmem:[%s169 + $0x388] sm:$0xff]
      %v292 = vld [vmem:[%s169 + $0x390] sm:$0xff]
      %v293 = vld [vmem:[%s169 + $0x398] sm:$0xff]
      %v294 = vld [vmem:[%s169 + $0x3a0] sm:$0xff]
      %v295 = vld [vmem:[%s169 + $0x3a8] sm:$0xff]
      %v296 = vld [vmem:[%s169 + $0x3b0] sm:$0xff]
      %v297 = vld [vmem:[%s169 + $0x3b8] sm:$0xff]
      %v298 = vld [vmem:[%s169 + $0x3c0] sm:$0xff]
      %v299 = vld [vmem:[%s169 + $0x3c8] sm:$0xff]
      %v300 = vld [vmem:[%s169 + $0x3d0] sm:$0xff]
      %v301 = vld [vmem:[%s169 + $0x3d8] sm:$0xff]
      %v302 = vld [vmem:[%s169 + $0x3e0] sm:$0xff]
      %v303 = vld [vmem:[%s169 + $0x3e8] sm:$0xff]
      %v304 = vld [vmem:[%s169 + $0x3f0] sm:$0xff]
      %v305 = vld [vmem:[%s169 + $0x3f8] sm:$0xff]
      %v306 = vld [vmem:[%s169 + $0x400] sm:$0xff]
      %v307 = vld [vmem:[%s169 + $0x408] sm:$0xff]
      %v308 = vld [vmem:[%s169 + $0x410] sm:$0xff]
      %v309 = vld [vmem:[%s169 + $0x418] sm:$0xff]
      %v310 = vld [vmem:[%s169 + $0x420] sm:$0xff]
      %v311 = vld [vmem:[%s169 + $0x428] sm:$0xff]
      %v312 = vld [vmem:[%s169 + $0x430] sm:$0xff]
      %v313 = vld [vmem:[%s169 + $0x438] sm:$0xff]
      %v314 = vld [vmem:[%s169 + $0x440] sm:$0xff]
      %v315 = vld [vmem:[%s169 + $0x448] sm:$0xff]
      %v316 = vld [vmem:[%s169 + $0x450] sm:$0xff]
      %v317 = vld [vmem:[%s169 + $0x458] sm:$0xff]
      %v318 = vld [vmem:[%s169 + $0x460] sm:$0xff]
      %v319 = vld [vmem:[%s169 + $0x468] sm:$0xff]
      %v320 = vld [vmem:[%s169 + $0x470] sm:$0xff]
      %v321 = vld [vmem:[%s169 + $0x478] sm:$0xff]
      %v322 = vld [vmem:[%s169 + $0x480] sm:$0xff]
      %v323 = vld [vmem:[%s169 + $0x488] sm:$0xff]
      %v324 = vld [vmem:[%s169 + $0x490] sm:$0xff]
      %v325 = vld [vmem:[%s169 + $0x498] sm:$0xff]
      %v326 = vld [vmem:[%s169 + $0x4a0] sm:$0xff]
      %v327 = vld [vmem:[%s169 + $0x4a8] sm:$0xff]
      %v328 = vld [vmem:[%s1] sm:$0xf]
      %v329 = vld [vmem:[%s1 + $0x4] sm:$0xf]
      %v330 = vld [vmem:[%s1 + $0x8] sm:$0xf]
      %v331 = vld [vmem:[%s1 + $0xc] sm:$0xf]
      %v332 = vld [vmem:[%s1 + $0x10] sm:$0xf]
      %v333 = vld [vmem:[%s1 + $0x14] sm:$0xf]
      %v334 = vld [vmem:[%s1 + $0x18] sm:$0xf]
      %v335 = vld [vmem:[%s1 + $0x1c] sm:$0xf]
      %v336 = vld [vmem:[%s1 + $0x20] sm:$0xf]
      %v337 = vld [vmem:[%s1 + $0x24] sm:$0xf]
      %v338 = vld [vmem:[%s1 + $0x28] sm:$0xf]
      %v339 = vld [vmem:[%s1 + $0x2c] sm:$0xf]
      %v340 = vld [vmem:[%s1 + $0x30] sm:$0xf]
      %v341 = vld [vmem:[%s1 + $0x34] sm:$0xf]
      %v342 = vld [vmem:[%s1 + $0x38] sm:$0xf]
      %v343 = vld [vmem:[%s1 + $0x3c] sm:$0xf]
      %v344 = vld [vmem:[%s1 + $0x40] sm:$0xf]
      %v345 = vld [vmem:[%s1 + $0x44] sm:$0xf]
      %v346 = vld [vmem:[%s1 + $0x48] sm:$0xf]
      %v347 = vld [vmem:[%s1 + $0x4c] sm:$0xf]
      %v348 = vld [vmem:[%s1 + $0x50] sm:$0xf]
      %v349 = vld [vmem:[%s1 + $0x54] sm:$0xf]
      %v350 = vld [vmem:[%s1 + $0x58] sm:$0xf]
      %v351 = vld [vmem:[%s1 + $0x5c] sm:$0xf]
      %v352 = vld [vmem:[%s1 + $0x60] sm:$0xf]
      %v353 = vld [vmem:[%s2] sm:$0x1]
      %v355 = vlaneseq
      %v356 = vshrl.u32 %v355, 7
      %v357 = vsub.s32 0, %v356
      %v358 = vrot.slane %v353, %v357
      %v510 = vunpack.c.l.b16 %v178
      %v511 = vunpack.c.h.b16 %v178
      %v512 = vunpack.c.l.b16 %v179
      %v513 = vunpack.c.h.b16 %v179
      %v514 = vunpack.c.l.b16 %v180
      %v515 = vunpack.c.h.b16 %v180
      %v516 = vunpack.c.l.b16 %v181
      %v517 = vunpack.c.h.b16 %v181
      %v518 = vunpack.c.l.b16 %v182
      %v519 = vunpack.c.h.b16 %v182
      %v520 = vunpack.c.l.b16 %v183
      %v521 = vunpack.c.h.b16 %v183
      %v522 = vunpack.c.l.b16 %v184
      %v523 = vunpack.c.h.b16 %v184
      %v524 = vunpack.c.l.b16 %v185
      %v525 = vunpack.c.h.b16 %v185
      %v526 = vunpack.c.l.b16 %v186
      %v527 = vunpack.c.h.b16 %v186
      %v528 = vunpack.c.l.b16 %v187
      %v529 = vunpack.c.h.b16 %v187
      %v530 = vunpack.c.l.b16 %v188
      %v531 = vunpack.c.h.b16 %v188
      %v532 = vunpack.c.l.b16 %v189
      %v533 = vunpack.c.h.b16 %v189
      %v534 = vunpack.c.l.b16 %v190
      %v535 = vunpack.c.h.b16 %v190
      %v536 = vunpack.c.l.b16 %v191
      %v537 = vunpack.c.h.b16 %v191
      %v538 = vunpack.c.l.b16 %v192
      %v539 = vunpack.c.h.b16 %v192
      %v540 = vunpack.c.l.b16 %v193
      %v541 = vunpack.c.h.b16 %v193
      %v542 = vunpack.c.l.b16 %v194
      %v543 = vunpack.c.h.b16 %v194
      %v544 = vunpack.c.l.b16 %v195
      %v545 = vunpack.c.h.b16 %v195
      %v546 = vunpack.c.l.b16 %v196
      %v547 = vunpack.c.h.b16 %v196
      %v548 = vunpack.c.l.b16 %v197
      %v549 = vunpack.c.h.b16 %v197
      %v550 = vunpack.c.l.b16 %v198
      %v551 = vunpack.c.h.b16 %v198
      %v552 = vunpack.c.l.b16 %v199
      %v553 = vunpack.c.h.b16 %v199
      %v554 = vunpack.c.l.b16 %v200
      %v555 = vunpack.c.h.b16 %v200
      %v556 = vunpack.c.l.b16 %v201
      %v557 = vunpack.c.h.b16 %v201
      %v558 = vunpack.c.l.b16 %v202
      %v559 = vunpack.c.h.b16 %v202
      %v560 = vunpack.c.l.b16 %v203
      %v561 = vunpack.c.h.b16 %v203
      %v562 = vunpack.c.l.b16 %v204
      %v563 = vunpack.c.h.b16 %v204
      %v564 = vunpack.c.l.b16 %v205
      %v565 = vunpack.c.h.b16 %v205
      %v566 = vunpack.c.l.b16 %v206
      %v567 = vunpack.c.h.b16 %v206
      %v568 = vunpack.c.l.b16 %v207
      %v569 = vunpack.c.h.b16 %v207
      %v570 = vunpack.c.l.b16 %v208
      %v571 = vunpack.c.h.b16 %v208
      %v572 = vunpack.c.l.b16 %v209
      %v573 = vunpack.c.h.b16 %v209
      %v574 = vunpack.c.l.b16 %v210
      %v575 = vunpack.c.h.b16 %v210
      %v576 = vunpack.c.l.b16 %v211
      %v577 = vunpack.c.h.b16 %v211
      %v578 = vunpack.c.l.b16 %v212
      %v579 = vunpack.c.h.b16 %v212
      %v580 = vunpack.c.l.b16 %v213
      %v581 = vunpack.c.h.b16 %v213
      %v582 = vunpack.c.l.b16 %v214
      %v583 = vunpack.c.h.b16 %v214
      %v584 = vunpack.c.l.b16 %v215
      %v585 = vunpack.c.h.b16 %v215
      %v586 = vunpack.c.l.b16 %v216
      %v587 = vunpack.c.h.b16 %v216
      %v588 = vunpack.c.l.b16 %v217
      %v589 = vunpack.c.h.b16 %v217
      %v590 = vunpack.c.l.b16 %v218
      %v591 = vunpack.c.h.b16 %v218
      %v592 = vunpack.c.l.b16 %v219
      %v593 = vunpack.c.h.b16 %v219
      %v594 = vunpack.c.l.b16 %v220
      %v595 = vunpack.c.h.b16 %v220
      %v596 = vunpack.c.l.b16 %v221
      %v597 = vunpack.c.h.b16 %v221
      %v598 = vunpack.c.l.b16 %v222
      %v599 = vunpack.c.h.b16 %v222
      %v600 = vunpack.c.l.b16 %v223
      %v601 = vunpack.c.h.b16 %v223
      %v602 = vunpack.c.l.b16 %v224
      %v603 = vunpack.c.h.b16 %v224
      %v604 = vunpack.c.l.b16 %v225
      %v605 = vunpack.c.h.b16 %v225
      %v606 = vunpack.c.l.b16 %v226
      %v607 = vunpack.c.h.b16 %v226
      %v608 = vunpack.c.l.b16 %v227
      %v609 = vunpack.c.h.b16 %v227
      %v610 = vunpack.c.l.b16 %v228
      %v611 = vunpack.c.h.b16 %v228
      %v612 = vunpack.c.l.b16 %v229
      %v613 = vunpack.c.h.b16 %v229
      %v614 = vunpack.c.l.b16 %v230
      %v615 = vunpack.c.h.b16 %v230
      %v616 = vunpack.c.l.b16 %v231
      %v617 = vunpack.c.h.b16 %v231
      %v618 = vunpack.c.l.b16 %v232
      %v619 = vunpack.c.h.b16 %v232
      %v620 = vunpack.c.l.b16 %v233
      %v621 = vunpack.c.h.b16 %v233
      %v622 = vunpack.c.l.b16 %v234
      %v623 = vunpack.c.h.b16 %v234
      %v624 = vunpack.c.l.b16 %v235
      %v625 = vunpack.c.h.b16 %v235
      %v626 = vunpack.c.l.b16 %v236
      %v627 = vunpack.c.h.b16 %v236
      %v628 = vunpack.c.l.b16 %v237
      %v629 = vunpack.c.h.b16 %v237
      %v630 = vunpack.c.l.b16 %v238
      %v631 = vunpack.c.h.b16 %v238
      %v632 = vunpack.c.l.b16 %v239
      %v633 = vunpack.c.h.b16 %v239
      %v634 = vunpack.c.l.b16 %v240
      %v635 = vunpack.c.h.b16 %v240
      %v636 = vunpack.c.l.b16 %v241
      %v637 = vunpack.c.h.b16 %v241
      %v638 = vunpack.c.l.b16 %v242
      %v639 = vunpack.c.h.b16 %v242
      %v640 = vunpack.c.l.b16 %v243
      %v641 = vunpack.c.h.b16 %v243
      %v642 = vunpack.c.l.b16 %v244
      %v643 = vunpack.c.h.b16 %v244
      %v644 = vunpack.c.l.b16 %v245
      %v645 = vunpack.c.h.b16 %v245
      %v646 = vunpack.c.l.b16 %v246
      %v647 = vunpack.c.h.b16 %v246
      %v648 = vunpack.c.l.b16 %v247
      %v649 = vunpack.c.h.b16 %v247
      %v650 = vunpack.c.l.b16 %v248
      %v651 = vunpack.c.h.b16 %v248
      %v652 = vunpack.c.l.b16 %v249
      %v653 = vunpack.c.h.b16 %v249
      %v654 = vunpack.c.l.b16 %v250
      %v655 = vunpack.c.h.b16 %v250
      %v656 = vunpack.c.l.b16 %v251
      %v657 = vunpack.c.h.b16 %v251
      %v658 = vunpack.c.l.b16 %v252
      %v659 = vunpack.c.h.b16 %v252
      %v660 = vunpack.c.l.b16 %v253
      %v661 = vunpack.c.h.b16 %v253
      %v662 = vunpack.c.l.b16 %v254
      %v663 = vunpack.c.h.b16 %v254
      %v664 = vunpack.c.l.b16 %v255
      %v665 = vunpack.c.h.b16 %v255
      %v666 = vunpack.c.l.b16 %v256
      %v667 = vunpack.c.h.b16 %v256
      %v668 = vunpack.c.l.b16 %v257
      %v669 = vunpack.c.h.b16 %v257
      %v670 = vunpack.c.l.b16 %v258
      %v671 = vunpack.c.h.b16 %v258
      %v672 = vunpack.c.l.b16 %v259
      %v673 = vunpack.c.h.b16 %v259
      %v674 = vunpack.c.l.b16 %v260
      %v675 = vunpack.c.h.b16 %v260
      %v676 = vunpack.c.l.b16 %v261
      %v677 = vunpack.c.h.b16 %v261
      %v678 = vunpack.c.l.b16 %v262
      %v679 = vunpack.c.h.b16 %v262
      %v680 = vunpack.c.l.b16 %v263
      %v681 = vunpack.c.h.b16 %v263
      %v682 = vunpack.c.l.b16 %v264
      %v683 = vunpack.c.h.b16 %v264
      %v684 = vunpack.c.l.b16 %v265
      %v685 = vunpack.c.h.b16 %v265
      %v686 = vunpack.c.l.b16 %v266
      %v687 = vunpack.c.h.b16 %v266
      %v688 = vunpack.c.l.b16 %v267
      %v689 = vunpack.c.h.b16 %v267
      %v690 = vunpack.c.l.b16 %v268
      %v691 = vunpack.c.h.b16 %v268
      %v692 = vunpack.c.l.b16 %v269
      %v693 = vunpack.c.h.b16 %v269
      %v694 = vunpack.c.l.b16 %v270
      %v695 = vunpack.c.h.b16 %v270
      %v696 = vunpack.c.l.b16 %v271
      %v697 = vunpack.c.h.b16 %v271
      %v698 = vunpack.c.l.b16 %v272
      %v699 = vunpack.c.h.b16 %v272
      %v700 = vunpack.c.l.b16 %v273
      %v701 = vunpack.c.h.b16 %v273
      %v702 = vunpack.c.l.b16 %v274
      %v703 = vunpack.c.h.b16 %v274
      %v704 = vunpack.c.l.b16 %v275
      %v705 = vunpack.c.h.b16 %v275
      %v706 = vunpack.c.l.b16 %v276
      %v707 = vunpack.c.h.b16 %v276
      %v708 = vunpack.c.l.b16 %v277
      %v709 = vunpack.c.h.b16 %v277
      %v710 = vunpack.c.l.b16 %v278
      %v711 = vunpack.c.h.b16 %v278
      %v712 = vunpack.c.l.b16 %v279
      %v713 = vunpack.c.h.b16 %v279
      %v714 = vunpack.c.l.b16 %v280
      %v715 = vunpack.c.h.b16 %v280
      %v716 = vunpack.c.l.b16 %v281
      %v717 = vunpack.c.h.b16 %v281
      %v718 = vunpack.c.l.b16 %v282
      %v719 = vunpack.c.h.b16 %v282
      %v720 = vunpack.c.l.b16 %v283
      %v721 = vunpack.c.h.b16 %v283
      %v722 = vunpack.c.l.b16 %v284
      %v723 = vunpack.c.h.b16 %v284
      %v724 = vunpack.c.l.b16 %v285
      %v725 = vunpack.c.h.b16 %v285
      %v726 = vunpack.c.l.b16 %v286
      %v727 = vunpack.c.h.b16 %v286
      %v728 = vunpack.c.l.b16 %v287
      %v729 = vunpack.c.h.b16 %v287
      %v730 = vunpack.c.l.b16 %v288
      %v731 = vunpack.c.h.b16 %v288
      %v732 = vunpack.c.l.b16 %v289
      %v733 = vunpack.c.h.b16 %v289
      %v734 = vunpack.c.l.b16 %v290
      %v735 = vunpack.c.h.b16 %v290
      %v736 = vunpack.c.l.b16 %v291
      %v737 = vunpack.c.h.b16 %v291
      %v738 = vunpack.c.l.b16 %v292
      %v739 = vunpack.c.h.b16 %v292
      %v740 = vunpack.c.l.b16 %v293
      %v741 = vunpack.c.h.b16 %v293
      %v742 = vunpack.c.l.b16 %v294
      %v743 = vunpack.c.h.b16 %v294
      %v744 = vunpack.c.l.b16 %v295
      %v745 = vunpack.c.h.b16 %v295
      %v746 = vunpack.c.l.b16 %v296
      %v747 = vunpack.c.h.b16 %v296
      %v748 = vunpack.c.l.b16 %v297
      %v749 = vunpack.c.h.b16 %v297
      %v750 = vunpack.c.l.b16 %v298
      %v751 = vunpack.c.h.b16 %v298
      %v752 = vunpack.c.l.b16 %v299
      %v753 = vunpack.c.h.b16 %v299
      %v754 = vunpack.c.l.b16 %v300
      %v755 = vunpack.c.h.b16 %v300
      %v756 = vunpack.c.l.b16 %v301
      %v757 = vunpack.c.h.b16 %v301
      %v758 = vunpack.c.l.b16 %v302
      %v759 = vunpack.c.h.b16 %v302
      %v760 = vunpack.c.l.b16 %v303
      %v761 = vunpack.c.h.b16 %v303
      %v762 = vunpack.c.l.b16 %v304
      %v763 = vunpack.c.h.b16 %v304
      %v764 = vunpack.c.l.b16 %v305
      %v765 = vunpack.c.h.b16 %v305
      %v766 = vunpack.c.l.b16 %v306
      %v767 = vunpack.c.h.b16 %v306
      %v768 = vunpack.c.l.b16 %v307
      %v769 = vunpack.c.h.b16 %v307
      %v770 = vunpack.c.l.b16 %v308
      %v771 = vunpack.c.h.b16 %v308
      %v772 = vunpack.c.l.b16 %v309
      %v773 = vunpack.c.h.b16 %v309
      %v774 = vunpack.c.l.b16 %v310
      %v775 = vunpack.c.h.b16 %v310
      %v776 = vunpack.c.l.b16 %v311
      %v777 = vunpack.c.h.b16 %v311
      %v778 = vunpack.c.l.b16 %v312
      %v779 = vunpack.c.h.b16 %v312
      %v780 = vunpack.c.l.b16 %v313
      %v781 = vunpack.c.h.b16 %v313
      %v782 = vunpack.c.l.b16 %v314
      %v783 = vunpack.c.h.b16 %v314
      %v784 = vunpack.c.l.b16 %v315
      %v785 = vunpack.c.h.b16 %v315
      %v786 = vunpack.c.l.b16 %v316
      %v787 = vunpack.c.h.b16 %v316
      %v788 = vunpack.c.l.b16 %v317
      %v789 = vunpack.c.h.b16 %v317
      %v790 = vunpack.c.l.b16 %v318
      %v791 = vunpack.c.h.b16 %v318
      %v792 = vunpack.c.l.b16 %v319
      %v793 = vunpack.c.h.b16 %v319
      %v794 = vunpack.c.l.b16 %v320
      %v795 = vunpack.c.h.b16 %v320
      %v796 = vunpack.c.l.b16 %v321
      %v797 = vunpack.c.h.b16 %v321
      %v798 = vunpack.c.l.b16 %v322
      %v799 = vunpack.c.h.b16 %v322
      %v800 = vunpack.c.l.b16 %v323
      %v801 = vunpack.c.h.b16 %v323
      %v802 = vunpack.c.l.b16 %v324
      %v803 = vunpack.c.h.b16 %v324
      %v804 = vunpack.c.l.b16 %v325
      %v805 = vunpack.c.h.b16 %v325
      %v806 = vunpack.c.l.b16 %v326
      %v807 = vunpack.c.h.b16 %v326
      %v808 = vunpack.c.l.b16 %v327
      %v809 = vunpack.c.h.b16 %v327
      %v810 = vpack.c.b16 %v512, %v510
      %v811 = vpack.c.b16 %v513, %v511
      %v812 = vpack.c.b16 %v516, %v514
      %v813 = vpack.c.b16 %v517, %v515
      %v814 = vpack.c.b16 %v520, %v518
      %v815 = vpack.c.b16 %v521, %v519
      %v816 = vpack.c.b16 %v524, %v522
      %v817 = vpack.c.b16 %v525, %v523
      %v818 = vpack.c.b16 %v528, %v526
      %v819 = vpack.c.b16 %v529, %v527
      %v820 = vpack.c.b16 %v532, %v530
      %v821 = vpack.c.b16 %v533, %v531
      %v822 = vpack.c.b16 %v536, %v534
      %v823 = vpack.c.b16 %v537, %v535
      %v824 = vpack.c.b16 %v540, %v538
      %v825 = vpack.c.b16 %v541, %v539
      %v826 = vpack.c.b16 %v544, %v542
      %v827 = vpack.c.b16 %v545, %v543
      %v828 = vpack.c.b16 %v548, %v546
      %v829 = vpack.c.b16 %v549, %v547
      %v830 = vpack.c.b16 %v552, %v550
      %v831 = vpack.c.b16 %v553, %v551
      %v832 = vpack.c.b16 %v556, %v554
      %v833 = vpack.c.b16 %v557, %v555
      %v834 = vpack.c.b16 %v560, %v558
      %v835 = vpack.c.b16 %v561, %v559
      %v836 = vpack.c.b16 %v564, %v562
      %v837 = vpack.c.b16 %v565, %v563
      %v838 = vpack.c.b16 %v568, %v566
      %v839 = vpack.c.b16 %v569, %v567
      %v840 = vpack.c.b16 %v572, %v570
      %v841 = vpack.c.b16 %v573, %v571
      %v842 = vpack.c.b16 %v576, %v574
      %v843 = vpack.c.b16 %v577, %v575
      %v844 = vpack.c.b16 %v580, %v578
      %v845 = vpack.c.b16 %v581, %v579
      %v846 = vpack.c.b16 %v584, %v582
      %v847 = vpack.c.b16 %v585, %v583
      %v848 = vpack.c.b16 %v588, %v586
      %v849 = vpack.c.b16 %v589, %v587
      %v850 = vpack.c.b16 %v592, %v590
      %v851 = vpack.c.b16 %v593, %v591
      %v852 = vpack.c.b16 %v596, %v594
      %v853 = vpack.c.b16 %v597, %v595
      %v854 = vpack.c.b16 %v600, %v598
      %v855 = vpack.c.b16 %v601, %v599
      %v856 = vpack.c.b16 %v604, %v602
      %v857 = vpack.c.b16 %v605, %v603
      %v858 = vpack.c.b16 %v608, %v606
      %v859 = vpack.c.b16 %v609, %v607
      %v860 = vpack.c.b16 %v612, %v610
      %v861 = vpack.c.b16 %v613, %v611
      %v862 = vpack.c.b16 %v616, %v614
      %v863 = vpack.c.b16 %v617, %v615
      %v864 = vpack.c.b16 %v620, %v618
      %v865 = vpack.c.b16 %v621, %v619
      %v866 = vpack.c.b16 %v624, %v622
      %v867 = vpack.c.b16 %v625, %v623
      %v868 = vpack.c.b16 %v628, %v626
      %v869 = vpack.c.b16 %v629, %v627
      %v870 = vpack.c.b16 %v632, %v630
      %v871 = vpack.c.b16 %v633, %v631
      %v872 = vpack.c.b16 %v636, %v634
      %v873 = vpack.c.b16 %v637, %v635
      %v874 = vpack.c.b16 %v640, %v638
      %v875 = vpack.c.b16 %v641, %v639
      %v876 = vpack.c.b16 %v644, %v642
      %v877 = vpack.c.b16 %v645, %v643
      %v878 = vpack.c.b16 %v648, %v646
      %v879 = vpack.c.b16 %v649, %v647
      %v880 = vpack.c.b16 %v652, %v650
      %v881 = vpack.c.b16 %v653, %v651
      %v882 = vpack.c.b16 %v656, %v654
      %v883 = vpack.c.b16 %v657, %v655
      %v884 = vpack.c.b16 %v660, %v658
      %v885 = vpack.c.b16 %v661, %v659
      %v886 = vpack.c.b16 %v664, %v662
      %v887 = vpack.c.b16 %v665, %v663
      %v888 = vpack.c.b16 %v668, %v666
      %v889 = vpack.c.b16 %v669, %v667
      %v890 = vpack.c.b16 %v672, %v670
      %v891 = vpack.c.b16 %v673, %v671
      %v892 = vpack.c.b16 %v676, %v674
      %v893 = vpack.c.b16 %v677, %v675
      %v894 = vpack.c.b16 %v680, %v678
      %v895 = vpack.c.b16 %v681, %v679
      %v896 = vpack.c.b16 %v684, %v682
      %v897 = vpack.c.b16 %v685, %v683
      %v898 = vpack.c.b16 %v688, %v686
      %v899 = vpack.c.b16 %v689, %v687
      %v900 = vpack.c.b16 %v692, %v690
      %v901 = vpack.c.b16 %v693, %v691
      %v902 = vpack.c.b16 %v696, %v694
      %v903 = vpack.c.b16 %v697, %v695
      %v904 = vpack.c.b16 %v700, %v698
      %v905 = vpack.c.b16 %v701, %v699
      %v906 = vpack.c.b16 %v704, %v702
      %v907 = vpack.c.b16 %v705, %v703
      %v908 = vpack.c.b16 %v708, %v706
      %v909 = vpack.c.b16 %v709, %v707
      %v910 = vpack.c.b16 %v712, %v710
      %v911 = vpack.c.b16 %v713, %v711
      %v912 = vpack.c.b16 %v716, %v714
      %v913 = vpack.c.b16 %v717, %v715
      %v914 = vpack.c.b16 %v720, %v718
      %v915 = vpack.c.b16 %v721, %v719
      %v916 = vpack.c.b16 %v724, %v722
      %v917 = vpack.c.b16 %v725, %v723
      %v918 = vpack.c.b16 %v728, %v726
      %v919 = vpack.c.b16 %v729, %v727
      %v920 = vpack.c.b16 %v732, %v730
      %v921 = vpack.c.b16 %v733, %v731
      %v922 = vpack.c.b16 %v736, %v734
      %v923 = vpack.c.b16 %v737, %v735
      %v924 = vpack.c.b16 %v740, %v738
      %v925 = vpack.c.b16 %v741, %v739
      %v926 = vpack.c.b16 %v744, %v742
      %v927 = vpack.c.b16 %v745, %v743
      %v928 = vpack.c.b16 %v748, %v746
      %v929 = vpack.c.b16 %v749, %v747
      %v930 = vpack.c.b16 %v752, %v750
      %v931 = vpack.c.b16 %v753, %v751
      %v932 = vpack.c.b16 %v756, %v754
      %v933 = vpack.c.b16 %v757, %v755
      %v934 = vpack.c.b16 %v760, %v758
      %v935 = vpack.c.b16 %v761, %v759
      %v936 = vpack.c.b16 %v764, %v762
      %v937 = vpack.c.b16 %v765, %v763
      %v938 = vpack.c.b16 %v768, %v766
      %v939 = vpack.c.b16 %v769, %v767
      %v940 = vpack.c.b16 %v772, %v770
      %v941 = vpack.c.b16 %v773, %v771
      %v942 = vpack.c.b16 %v776, %v774
      %v943 = vpack.c.b16 %v777, %v775
      %v944 = vpack.c.b16 %v780, %v778
      %v945 = vpack.c.b16 %v781, %v779
      %v946 = vpack.c.b16 %v784, %v782
      %v947 = vpack.c.b16 %v785, %v783
      %v948 = vpack.c.b16 %v788, %v786
      %v949 = vpack.c.b16 %v789, %v787
      %v950 = vpack.c.b16 %v792, %v790
      %v951 = vpack.c.b16 %v793, %v791
      %v952 = vpack.c.b16 %v796, %v794
      %v953 = vpack.c.b16 %v797, %v795
      %v954 = vpack.c.b16 %v800, %v798
      %v955 = vpack.c.b16 %v801, %v799
      %v956 = vpack.c.b16 %v804, %v802
      %v957 = vpack.c.b16 %v805, %v803
      %v958 = vpack.c.b16 %v808, %v806
      %v959 = vpack.c.b16 %v809, %v807
      %v1060 = vunpack.c.l.b16 %v328
      %v1061 = vunpack.c.l.b16 %v329
      %v1062 = vunpack.c.l.b16 %v330
      %v1063 = vunpack.c.l.b16 %v331
      %v1064 = vunpack.c.l.b16 %v332
      %v1065 = vunpack.c.l.b16 %v333
      %v1066 = vunpack.c.l.b16 %v334
      %v1067 = vunpack.c.l.b16 %v335
      %v1068 = vunpack.c.l.b16 %v336
      %v1069 = vunpack.c.l.b16 %v337
      %v1070 = vunpack.c.l.b16 %v338
      %v1071 = vunpack.c.l.b16 %v339
      %v1072 = vunpack.c.l.b16 %v340
      %v1073 = vunpack.c.l.b16 %v341
      %v1074 = vunpack.c.l.b16 %v342
      %v1075 = vunpack.c.l.b16 %v343
      %v1076 = vunpack.c.l.b16 %v344
      %v1077 = vunpack.c.l.b16 %v345
      %v1078 = vunpack.c.l.b16 %v346
      %v1079 = vunpack.c.l.b16 %v347
      %v1080 = vunpack.c.l.b16 %v348
      %v1081 = vunpack.c.l.b16 %v349
      %v1082 = vunpack.c.l.b16 %v350
      %v1083 = vunpack.c.l.b16 %v351
      %v1084 = vunpack.c.l.b16 %v352
      %v1085 = vpack.c.b16 %v1061, %v1060
      %v1086 = vpack.c.b16 %v1063, %v1062
      %v1087 = vpack.c.b16 %v1065, %v1064
      %v1088 = vpack.c.b16 %v1067, %v1066
      %v1089 = vpack.c.b16 %v1069, %v1068
      %v1090 = vpack.c.b16 %v1071, %v1070
      %v1091 = vpack.c.b16 %v1073, %v1072
      %v1092 = vpack.c.b16 %v1075, %v1074
      %v1093 = vpack.c.b16 %v1077, %v1076
      %v1094 = vpack.c.b16 %v1079, %v1078
      %v1095 = vpack.c.b16 %v1081, %v1080
      %v1096 = vpack.c.b16 %v1083, %v1082
      %v1097 = vpack.c.b16 %v1084, %v1084
      %vm1110 = vcmask 588800
      %v1112 = vsel %vm1110, %v811, 0
      %v1115 = vsel %vm1110, %v813, 0
      %v1118 = vsel %vm1110, %v815, 0
      %v1121 = vsel %vm1110, %v817, 0
      %v1124 = vsel %vm1110, %v819, 0
      %v1127 = vsel %vm1110, %v821, 0
      %v1130 = vsel %vm1110, %v823, 0
      %v1133 = vsel %vm1110, %v825, 0
      %v1136 = vsel %vm1110, %v827, 0
      %v1139 = vsel %vm1110, %v829, 0
      %v1142 = vsel %vm1110, %v831, 0
      %v1145 = vsel %vm1110, %v833, 0
      %v1148 = vsel %vm1110, %v835, 0
      %v1151 = vsel %vm1110, %v837, 0
      %v1154 = vsel %vm1110, %v839, 0
      %v1157 = vsel %vm1110, %v841, 0
      %v1160 = vsel %vm1110, %v843, 0
      %v1163 = vsel %vm1110, %v845, 0
      %v1166 = vsel %vm1110, %v847, 0
      %v1169 = vsel %vm1110, %v849, 0
      %v1172 = vsel %vm1110, %v851, 0
      %v1175 = vsel %vm1110, %v853, 0
      %v1178 = vsel %vm1110, %v855, 0
      %v1181 = vsel %vm1110, %v857, 0
      %v1184 = vsel %vm1110, %v859, 0
      %v1187 = vsel %vm1110, %v861, 0
      %v1190 = vsel %vm1110, %v863, 0
      %v1193 = vsel %vm1110, %v865, 0
      %v1196 = vsel %vm1110, %v867, 0
      %v1199 = vsel %vm1110, %v869, 0
      %v1202 = vsel %vm1110, %v871, 0
      %v1205 = vsel %vm1110, %v873, 0
      %v1208 = vsel %vm1110, %v875, 0
      %v1211 = vsel %vm1110, %v877, 0
      %v1214 = vsel %vm1110, %v879, 0
      %v1217 = vsel %vm1110, %v881, 0
      %v1220 = vsel %vm1110, %v883, 0
      %v1223 = vsel %vm1110, %v885, 0
      %v1226 = vsel %vm1110, %v887, 0
      %v1229 = vsel %vm1110, %v889, 0
      %v1232 = vsel %vm1110, %v891, 0
      %v1235 = vsel %vm1110, %v893, 0
      %v1238 = vsel %vm1110, %v895, 0
      %v1241 = vsel %vm1110, %v897, 0
      %v1244 = vsel %vm1110, %v899, 0
      %v1247 = vsel %vm1110, %v901, 0
      %v1250 = vsel %vm1110, %v903, 0
      %v1253 = vsel %vm1110, %v905, 0
      %v1256 = vsel %vm1110, %v907, 0
      %v1259 = vsel %vm1110, %v909, 0
      %v1262 = vsel %vm1110, %v911, 0
      %v1265 = vsel %vm1110, %v913, 0
      %v1268 = vsel %vm1110, %v915, 0
      %v1271 = vsel %vm1110, %v917, 0
      %v1274 = vsel %vm1110, %v919, 0
      %v1277 = vsel %vm1110, %v921, 0
      %v1280 = vsel %vm1110, %v923, 0
      %v1283 = vsel %vm1110, %v925, 0
      %v1286 = vsel %vm1110, %v927, 0
      %v1289 = vsel %vm1110, %v929, 0
      %v1292 = vsel %vm1110, %v931, 0
      %v1295 = vsel %vm1110, %v933, 0
      %v1298 = vsel %vm1110, %v935, 0
      %v1301 = vsel %vm1110, %v937, 0
      %v1304 = vsel %vm1110, %v939, 0
      %v1307 = vsel %vm1110, %v941, 0
      %v1310 = vsel %vm1110, %v943, 0
      %v1313 = vsel %vm1110, %v945, 0
      %v1316 = vsel %vm1110, %v947, 0
      %v1319 = vsel %vm1110, %v949, 0
      %v1322 = vsel %vm1110, %v951, 0
      %v1325 = vsel %vm1110, %v953, 0
      %v1328 = vsel %vm1110, %v955, 0
      %v1331 = vsel %vm1110, %v957, 0
      %v1334 = vsel %vm1110, %v959, 0
      %vm1336 = vcmask 1043456
      %v1338 = vsel %vm1336, %v1097, 0
      %1340 = vmatprep.subr.bf16.mxu0 0
      %1341 = vmatpush1.bf16.msra.mxu0 %v1085
      %1342 = vmatprep.subr.bf16.mxu0 0
      %1343 = vmatpush1.bf16.msra.mxu0 %v1086
      %1344 = vmatprep.subr.bf16.mxu0 0
      %1345 = vmatpush1.bf16.msra.mxu0 %v1087
      %1346 = vmatprep.subr.bf16.mxu0 0
      %1347 = vmatpush1.bf16.msra.mxu0 %v1088
      %1348 = vmatprep.subr.bf16.mxu0 0
      %1349 = vmatpush1.bf16.msra.mxu0 %v1089
      %1350 = vmatprep.subr.bf16.mxu0 0
      %1351 = vmatpush1.bf16.msra.mxu0 %v1090
      %1352 = vmatprep.subr.bf16.mxu0 0
      %1353 = vmatpush1.bf16.msra.mxu0 %v1091
      %1354 = vmatprep.subr.bf16.mxu0 0
      %1355 = vmatpush1.bf16.msra.mxu0 %v1092
      %1356 = vmatprep.subr.bf16.mxu0 0
      %1357 = vmatpush1.bf16.msra.mxu0 %v1093
      %1358 = vmatprep.subr.bf16.mxu0 0
      %1359 = vmatpush1.bf16.msra.mxu0 %v1094
      %1360 = vmatprep.subr.bf16.mxu0 0
      %1361 = vmatpush1.bf16.msra.mxu0 %v1095
      %1362 = vmatprep.subr.bf16.mxu0 0
      %1363 = vmatpush1.bf16.msra.mxu0 %v1096
      %1364 = vmatprep.subr.bf16.mxu0 0
      %1365 = vmatpush1.bf16.msra.mxu0 %v1338
      %1366 = vmatprep.subr.bf16.mxu0 0
      %1367 = vmatpush1.bf16.msra.mxu0 0
      %1368 = vmatprep.subr.bf16.mxu0 0
      %1369 = vmatpush1.bf16.msra.mxu0 0
      %1370 = vmatprep.subr.bf16.mxu0 0
      %1371 = vmatpush1.bf16.msra.mxu0 0
      %1372 = vmatprep.mubr.bf16.mxu0 %v1112
      %1373 = vmatmul.mubr.bf16.gmra.mrb[0].mxu0 %v810
      %v1374 = vpop.f32.mrb[0].mxu0
      %v1375 = vadd.f32 %v358, %v1374
      %v1376 = vpop.f32.mrb[0].mxu0
      %v1377 = vpop.f32.mrb[0].mxu0
      %v1378 = vadd.f32 %v358, %v1377
      %v1379 = vpop.f32.mrb[0].mxu0
      %1380 = vmatprep.mubr.bf16.mxu0 %v1115
      %1381 = vmatmul.mubr.bf16.gmra.mrb[0].mxu0 %v812
      %v1382 = vpop.f32.mrb[0].mxu0
      %v1383 = vadd.f32 %v358, %v1382
      %v1384 = vpop.f32.mrb[0].mxu0
      %v1385 = vpop.f32.mrb[0].mxu0
      %v1386 = vadd.f32 %v358, %v1385
      %v1387 = vpop.f32.mrb[0].mxu0
      %1388 = vmatprep.mubr.bf16.mxu0 %v1118
      %1389 = vmatmul.mubr.bf16.gmra.mrb[0].mxu0 %v814
      %v1390 = vpop.f32.mrb[0].mxu0
      %v1391 = vadd.f32 %v358, %v1390
      %v1392 = vpop.f32.mrb[0].mxu0
      %v1393 = vpop.f32.mrb[0].mxu0
      %v1394 = vadd.f32 %v358, %v1393
      %v1395 = vpop.f32.mrb[0].mxu0
      %1396 = vmatprep.mubr.bf16.mxu0 %v1121
      %1397 = vmatmul.mubr.bf16.gmra.mrb[0].mxu0 %v816
      %v1398 = vpop.f32.mrb[0].mxu0
      %v1399 = vadd.f32 %v358, %v1398
      %v1400 = vpop.f32.mrb[0].mxu0
      %v1401 = vpop.f32.mrb[0].mxu0
      %v1402 = vadd.f32 %v358, %v1401
      %v1403 = vpop.f32.mrb[0].mxu0
      %1404 = vmatprep.mubr.bf16.mxu0 %v1124
      %1405 = vmatmul.mubr.bf16.gmra.mrb[0].mxu0 %v818
      %v1406 = vpop.f32.mrb[0].mxu0
      %v1407 = vadd.f32 %v358, %v1406
      %v1408 = vpop.f32.mrb[0].mxu0
      %v1409 = vpop.f32.mrb[0].mxu0
      %v1410 = vadd.f32 %v358, %v1409
      %v1411 = vpop.f32.mrb[0].mxu0
      %1412 = vmatprep.mubr.bf16.mxu0 %v1127
      %1413 = vmatmul.mubr.bf16.gmra.mrb[0].mxu0 %v820
      %v1414 = vpop.f32.mrb[0].mxu0
      %v1415 = vadd.f32 %v358, %v1414
      %v1416 = vpop.f32.mrb[0].mxu0
      %v1417 = vpop.f32.mrb[0].mxu0
      %v1418 = vadd.f32 %v358, %v1417
      %v1419 = vpop.f32.mrb[0].mxu0
      %1420 = vmatprep.mubr.bf16.mxu0 %v1130
      %1421 = vmatmul.mubr.bf16.gmra.mrb[0].mxu0 %v822
      %v1422 = vpop.f32.mrb[0].mxu0
      %v1423 = vadd.f32 %v358, %v1422
      %v1424 = vpop.f32.mrb[0].mxu0
      %v1425 = vpop.f32.mrb[0].mxu0
      %v1426 = vadd.f32 %v358, %v1425
      %v1427 = vpop.f32.mrb[0].mxu0
      %1428 = vmatprep.mubr.bf16.mxu0 %v1133
      %1429 = vmatmul.mubr.bf16.gmra.mrb[0].mxu0 %v824
      %v1430 = vpop.f32.mrb[0].mxu0
      %v1431 = vadd.f32 %v358, %v1430
      %v1432 = vpop.f32.mrb[0].mxu0
      %v1433 = vpop.f32.mrb[0].mxu0
      %v1434 = vadd.f32 %v358, %v1433
      %v1435 = vpop.f32.mrb[0].mxu0
      %1436 = vmatprep.mubr.bf16.mxu0 %v1136
      %1437 = vmatmul.mubr.bf16.gmra.mrb[0].mxu0 %v826
      %v1438 = vpop.f32.mrb[0].mxu0
      %v1439 = vadd.f32 %v358, %v1438
      %v1440 = vpop.f32.mrb[0].mxu0
      %v1441 = vpop.f32.mrb[0].mxu0
      %v1442 = vadd.f32 %v358, %v1441
      %v1443 = vpop.f32.mrb[0].mxu0
      %1444 = vmatprep.mubr.bf16.mxu0 %v1139
      %1445 = vmatmul.mubr.bf16.gmra.mrb[0].mxu0 %v828
      %v1446 = vpop.f32.mrb[0].mxu0
      %v1447 = vadd.f32 %v358, %v1446
      %v1448 = vpop.f32.mrb[0].mxu0
      %v1449 = vpop.f32.mrb[0].mxu0
      %v1450 = vadd.f32 %v358, %v1449
      %v1451 = vpop.f32.mrb[0].mxu0
      %1452 = vmatprep.mubr.bf16.mxu0 %v1142
      %1453 = vmatmul.mubr.bf16.gmra.mrb[0].mxu0 %v830
      %v1454 = vpop.f32.mrb[0].mxu0
      %v1455 = vadd.f32 %v358, %v1454
      %v1456 = vpop.f32.mrb[0].mxu0
      %v1457 = vpop.f32.mrb[0].mxu0
      %v1458 = vadd.f32 %v358, %v1457
      %v1459 = vpop.f32.mrb[0].mxu0
      %1460 = vmatprep.mubr.bf16.mxu0 %v1145
      %1461 = vmatmul.mubr.bf16.gmra.mrb[0].mxu0 %v832
      %v1462 = vpop.f32.mrb[0].mxu0
      %v1463 = vadd.f32 %v358, %v1462
      %v1464 = vpop.f32.mrb[0].mxu0
      %v1465 = vpop.f32.mrb[0].mxu0
      %v1466 = vadd.f32 %v358, %v1465
      %v1467 = vpop.f32.mrb[0].mxu0
      %1468 = vmatprep.mubr.bf16.mxu0 %v1148
      %1469 = vmatmul.mubr.bf16.gmra.mrb[0].mxu0 %v834
      %v1470 = vpop.f32.mrb[0].mxu0
      %v1471 = vadd.f32 %v358, %v1470
      %v1472 = vpop.f32.mrb[0].mxu0
      %v1473 = vpop.f32.mrb[0].mxu0
      %v1474 = vadd.f32 %v358, %v1473
      %v1475 = vpop.f32.mrb[0].mxu0
      %1476 = vmatprep.mubr.bf16.mxu0 %v1151
      %1477 = vmatmul.mubr.bf16.gmra.mrb[0].mxu0 %v836
      %v1478 = vpop.f32.mrb[0].mxu0
      %v1479 = vadd.f32 %v358, %v1478
      %v1480 = vpop.f32.mrb[0].mxu0
      %v1481 = vpop.f32.mrb[0].mxu0
      %v1482 = vadd.f32 %v358, %v1481
      %v1483 = vpop.f32.mrb[0].mxu0
      %1484 = vmatprep.mubr.bf16.mxu0 %v1154
      %1485 = vmatmul.mubr.bf16.gmra.mrb[0].mxu0 %v838
      %v1486 = vpop.f32.mrb[0].mxu0
      %v1487 = vadd.f32 %v358, %v1486
      %v1488 = vpop.f32.mrb[0].mxu0
      %v1489 = vpop.f32.mrb[0].mxu0
      %v1490 = vadd.f32 %v358, %v1489
      %v1491 = vpop.f32.mrb[0].mxu0
      %1492 = vmatprep.mubr.bf16.mxu0 %v1157
      %1493 = vmatmul.mubr.bf16.gmra.mrb[0].mxu0 %v840
      %v1494 = vpop.f32.mrb[0].mxu0
      %v1495 = vadd.f32 %v358, %v1494
      %v1496 = vpop.f32.mrb[0].mxu0
      %v1497 = vpop.f32.mrb[0].mxu0
      %v1498 = vadd.f32 %v358, %v1497
      %v1499 = vpop.f32.mrb[0].mxu0
      %1500 = vmatprep.mubr.bf16.mxu0 %v1160
      %1501 = vmatmul.mubr.bf16.gmra.mrb[0].mxu0 %v842
      %v1502 = vpop.f32.mrb[0].mxu0
      %v1503 = vadd.f32 %v358, %v1502
      %v1504 = vpop.f32.mrb[0].mxu0
      %v1505 = vpop.f32.mrb[0].mxu0
      %v1506 = vadd.f32 %v358, %v1505
      %v1507 = vpop.f32.mrb[0].mxu0
      %1508 = vmatprep.mubr.bf16.mxu0 %v1163
      %1509 = vmatmul.mubr.bf16.gmra.mrb[0].mxu0 %v844
      %v1510 = vpop.f32.mrb[0].mxu0
      %v1511 = vadd.f32 %v358, %v1510
      %v1512 = vpop.f32.mrb[0].mxu0
      %v1513 = vpop.f32.mrb[0].mxu0
      %v1514 = vadd.f32 %v358, %v1513
      %v1515 = vpop.f32.mrb[0].mxu0
      %1516 = vmatprep.mubr.bf16.mxu0 %v1166
      %1517 = vmatmul.mubr.bf16.gmra.mrb[0].mxu0 %v846
      %v1518 = vpop.f32.mrb[0].mxu0
      %v1519 = vadd.f32 %v358, %v1518
      %v1520 = vpop.f32.mrb[0].mxu0
      %v1521 = vpop.f32.mrb[0].mxu0
      %v1522 = vadd.f32 %v358, %v1521
      %v1523 = vpop.f32.mrb[0].mxu0
      %1524 = vmatprep.mubr.bf16.mxu0 %v1169
      %1525 = vmatmul.mubr.bf16.gmra.mrb[0].mxu0 %v848
      %v1526 = vpop.f32.mrb[0].mxu0
      %v1527 = vadd.f32 %v358, %v1526
      %v1528 = vpop.f32.mrb[0].mxu0
      %v1529 = vpop.f32.mrb[0].mxu0
      %v1530 = vadd.f32 %v358, %v1529
      %v1531 = vpop.f32.mrb[0].mxu0
      %1532 = vmatprep.mubr.bf16.mxu0 %v1172
      %1533 = vmatmul.mubr.bf16.gmra.mrb[0].mxu0 %v850
      %v1534 = vpop.f32.mrb[0].mxu0
      %v1535 = vadd.f32 %v358, %v1534
      %v1536 = vpop.f32.mrb[0].mxu0
      %v1537 = vpop.f32.mrb[0].mxu0
      %v1538 = vadd.f32 %v358, %v1537
      %v1539 = vpop.f32.mrb[0].mxu0
      %1540 = vmatprep.mubr.bf16.mxu0 %v1175
      %1541 = vmatmul.mubr.bf16.gmra.mrb[0].mxu0 %v852
      %v1542 = vpop.f32.mrb[0].mxu0
      %v1543 = vadd.f32 %v358, %v1542
      %v1544 = vpop.f32.mrb[0].mxu0
      %v1545 = vpop.f32.mrb[0].mxu0
      %v1546 = vadd.f32 %v358, %v1545
      %v1547 = vpop.f32.mrb[0].mxu0
      %1548 = vmatprep.mubr.bf16.mxu0 %v1178
      %1549 = vmatmul.mubr.bf16.gmra.mrb[0].mxu0 %v854
      %v1550 = vpop.f32.mrb[0].mxu0
      %v1551 = vadd.f32 %v358, %v1550
      %v1552 = vpop.f32.mrb[0].mxu0
      %v1553 = vpop.f32.mrb[0].mxu0
      %v1554 = vadd.f32 %v358, %v1553
      %v1555 = vpop.f32.mrb[0].mxu0
      %1556 = vmatprep.mubr.bf16.mxu0 %v1181
      %1557 = vmatmul.mubr.bf16.gmra.mrb[0].mxu0 %v856
      %v1558 = vpop.f32.mrb[0].mxu0
      %v1559 = vadd.f32 %v358, %v1558
      %v1560 = vpop.f32.mrb[0].mxu0
      %v1561 = vpop.f32.mrb[0].mxu0
      %v1562 = vadd.f32 %v358, %v1561
      %v1563 = vpop.f32.mrb[0].mxu0
      %1564 = vmatprep.mubr.bf16.mxu0 %v1184
      %1565 = vmatmul.mubr.bf16.gmra.mrb[0].mxu0 %v858
      %v1566 = vpop.f32.mrb[0].mxu0
      %v1567 = vadd.f32 %v358, %v1566
      %v1568 = vpop.f32.mrb[0].mxu0
      %v1569 = vpop.f32.mrb[0].mxu0
      %v1570 = vadd.f32 %v358, %v1569
      %v1571 = vpop.f32.mrb[0].mxu0
      %1572 = vmatprep.mubr.bf16.mxu0 %v1187
      %1573 = vmatmul.mubr.bf16.gmra.mrb[0].mxu0 %v860
      %v1574 = vpop.f32.mrb[0].mxu0
      %v1575 = vadd.f32 %v358, %v1574
      %v1576 = vpop.f32.mrb[0].mxu0
      %v1577 = vpop.f32.mrb[0].mxu0
      %v1578 = vadd.f32 %v358, %v1577
      %v1579 = vpop.f32.mrb[0].mxu0
      %1580 = vmatprep.mubr.bf16.mxu0 %v1190
      %1581 = vmatmul.mubr.bf16.gmra.mrb[0].mxu0 %v862
      %v1582 = vpop.f32.mrb[0].mxu0
      %v1583 = vadd.f32 %v358, %v1582
      %v1584 = vpop.f32.mrb[0].mxu0
      %v1585 = vpop.f32.mrb[0].mxu0
      %v1586 = vadd.f32 %v358, %v1585
      %v1587 = vpop.f32.mrb[0].mxu0
      %1588 = vmatprep.mubr.bf16.mxu0 %v1193
      %1589 = vmatmul.mubr.bf16.gmra.mrb[0].mxu0 %v864
      %v1590 = vpop.f32.mrb[0].mxu0
      %v1591 = vadd.f32 %v358, %v1590
      %v1592 = vpop.f32.mrb[0].mxu0
      %v1593 = vpop.f32.mrb[0].mxu0
      %v1594 = vadd.f32 %v358, %v1593
      %v1595 = vpop.f32.mrb[0].mxu0
      %1596 = vmatprep.mubr.bf16.mxu0 %v1196
      %1597 = vmatmul.mubr.bf16.gmra.mrb[0].mxu0 %v866
      %v1598 = vpop.f32.mrb[0].mxu0
      %v1599 = vadd.f32 %v358, %v1598
      %v1600 = vpop.f32.mrb[0].mxu0
      %v1601 = vpop.f32.mrb[0].mxu0
      %v1602 = vadd.f32 %v358, %v1601
      %v1603 = vpop.f32.mrb[0].mxu0
      %1604 = vmatprep.mubr.bf16.mxu0 %v1199
      %1605 = vmatmul.mubr.bf16.gmra.mrb[0].mxu0 %v868
      %v1606 = vpop.f32.mrb[0].mxu0
      %v1607 = vadd.f32 %v358, %v1606
      %v1608 = vpop.f32.mrb[0].mxu0
      %v1609 = vpop.f32.mrb[0].mxu0
      %v1610 = vadd.f32 %v358, %v1609
      %v1611 = vpop.f32.mrb[0].mxu0
      %1612 = vmatprep.mubr.bf16.mxu0 %v1202
      %1613 = vmatmul.mubr.bf16.gmra.mrb[0].mxu0 %v870
      %v1614 = vpop.f32.mrb[0].mxu0
      %v1615 = vadd.f32 %v358, %v1614
      %v1616 = vpop.f32.mrb[0].mxu0
      %v1617 = vpop.f32.mrb[0].mxu0
      %v1618 = vadd.f32 %v358, %v1617
      %v1619 = vpop.f32.mrb[0].mxu0
      %1620 = vmatprep.mubr.bf16.mxu0 %v1205
      %1621 = vmatmul.mubr.bf16.gmra.mrb[0].mxu0 %v872
      %v1622 = vpop.f32.mrb[0].mxu0
      %v1623 = vadd.f32 %v358, %v1622
      %v1624 = vpop.f32.mrb[0].mxu0
      %v1625 = vpop.f32.mrb[0].mxu0
      %v1626 = vadd.f32 %v358, %v1625
      %v1627 = vpop.f32.mrb[0].mxu0
      %1628 = vmatprep.mubr.bf16.mxu0 %v1208
      %1629 = vmatmul.mubr.bf16.gmra.mrb[0].mxu0 %v874
      %v1630 = vpop.f32.mrb[0].mxu0
      %v1631 = vadd.f32 %v358, %v1630
      %v1632 = vpop.f32.mrb[0].mxu0
      %v1633 = vpop.f32.mrb[0].mxu0
      %v1634 = vadd.f32 %v358, %v1633
      %v1635 = vpop.f32.mrb[0].mxu0
      %1636 = vmatprep.mubr.bf16.mxu0 %v1211
      %1637 = vmatmul.mubr.bf16.gmra.mrb[0].mxu0 %v876
      %v1638 = vpop.f32.mrb[0].mxu0
      %v1639 = vadd.f32 %v358, %v1638
      %v1640 = vpop.f32.mrb[0].mxu0
      %v1641 = vpop.f32.mrb[0].mxu0
      %v1642 = vadd.f32 %v358, %v1641
      %v1643 = vpop.f32.mrb[0].mxu0
      %1644 = vmatprep.mubr.bf16.mxu0 %v1214
      %1645 = vmatmul.mubr.bf16.gmra.mrb[0].mxu0 %v878
      %v1646 = vpop.f32.mrb[0].mxu0
      %v1647 = vadd.f32 %v358, %v1646
      %v1648 = vpop.f32.mrb[0].mxu0
      %v1649 = vpop.f32.mrb[0].mxu0
      %v1650 = vadd.f32 %v358, %v1649
      %v1651 = vpop.f32.mrb[0].mxu0
      %1652 = vmatprep.mubr.bf16.mxu0 %v1217
      %1653 = vmatmul.mubr.bf16.gmra.mrb[0].mxu0 %v880
      %v1654 = vpop.f32.mrb[0].mxu0
      %v1655 = vadd.f32 %v358, %v1654
      %v1656 = vpop.f32.mrb[0].mxu0
      %v1657 = vpop.f32.mrb[0].mxu0
      %v1658 = vadd.f32 %v358, %v1657
      %v1659 = vpop.f32.mrb[0].mxu0
      %1660 = vmatprep.mubr.bf16.mxu0 %v1220
      %1661 = vmatmul.mubr.bf16.gmra.mrb[0].mxu0 %v882
      %v1662 = vpop.f32.mrb[0].mxu0
      %v1663 = vadd.f32 %v358, %v1662
      %v1664 = vpop.f32.mrb[0].mxu0
      %v1665 = vpop.f32.mrb[0].mxu0
      %v1666 = vadd.f32 %v358, %v1665
      %v1667 = vpop.f32.mrb[0].mxu0
      %1668 = vmatprep.mubr.bf16.mxu0 %v1223
      %1669 = vmatmul.mubr.bf16.gmra.mrb[0].mxu0 %v884
      %v1670 = vpop.f32.mrb[0].mxu0
      %v1671 = vadd.f32 %v358, %v1670
      %v1672 = vpop.f32.mrb[0].mxu0
      %v1673 = vpop.f32.mrb[0].mxu0
      %v1674 = vadd.f32 %v358, %v1673
      %v1675 = vpop.f32.mrb[0].mxu0
      %1676 = vmatprep.mubr.bf16.mxu0 %v1226
      %1677 = vmatmul.mubr.bf16.gmra.mrb[0].mxu0 %v886
      %v1678 = vpop.f32.mrb[0].mxu0
      %v1679 = vadd.f32 %v358, %v1678
      %v1680 = vpop.f32.mrb[0].mxu0
      %v1681 = vpop.f32.mrb[0].mxu0
      %v1682 = vadd.f32 %v358, %v1681
      %v1683 = vpop.f32.mrb[0].mxu0
      %1684 = vmatprep.mubr.bf16.mxu0 %v1229
      %1685 = vmatmul.mubr.bf16.gmra.mrb[0].mxu0 %v888
      %v1686 = vpop.f32.mrb[0].mxu0
      %v1687 = vadd.f32 %v358, %v1686
      %v1688 = vpop.f32.mrb[0].mxu0
      %v1689 = vpop.f32.mrb[0].mxu0
      %v1690 = vadd.f32 %v358, %v1689
      %v1691 = vpop.f32.mrb[0].mxu0
      %1692 = vmatprep.mubr.bf16.mxu0 %v1232
      %1693 = vmatmul.mubr.bf16.gmra.mrb[0].mxu0 %v890
      %v1694 = vpop.f32.mrb[0].mxu0
      %v1695 = vadd.f32 %v358, %v1694
      %v1696 = vpop.f32.mrb[0].mxu0
      %v1697 = vpop.f32.mrb[0].mxu0
      %v1698 = vadd.f32 %v358, %v1697
      %v1699 = vpop.f32.mrb[0].mxu0
      %1700 = vmatprep.mubr.bf16.mxu0 %v1235
      %1701 = vmatmul.mubr.bf16.gmra.mrb[0].mxu0 %v892
      %v1702 = vpop.f32.mrb[0].mxu0
      %v1703 = vadd.f32 %v358, %v1702
      %v1704 = vpop.f32.mrb[0].mxu0
      %v1705 = vpop.f32.mrb[0].mxu0
      %v1706 = vadd.f32 %v358, %v1705
      %v1707 = vpop.f32.mrb[0].mxu0
      %1708 = vmatprep.mubr.bf16.mxu0 %v1238
      %1709 = vmatmul.mubr.bf16.gmra.mrb[0].mxu0 %v894
      %v1710 = vpop.f32.mrb[0].mxu0
      %v1711 = vadd.f32 %v358, %v1710
      %v1712 = vpop.f32.mrb[0].mxu0
      %v1713 = vpop.f32.mrb[0].mxu0
      %v1714 = vadd.f32 %v358, %v1713
      %v1715 = vpop.f32.mrb[0].mxu0
      %1716 = vmatprep.mubr.bf16.mxu0 %v1241
      %1717 = vmatmul.mubr.bf16.gmra.mrb[0].mxu0 %v896
      %v1718 = vpop.f32.mrb[0].mxu0
      %v1719 = vadd.f32 %v358, %v1718
      %v1720 = vpop.f32.mrb[0].mxu0
      %v1721 = vpop.f32.mrb[0].mxu0
      %v1722 = vadd.f32 %v358, %v1721
      %v1723 = vpop.f32.mrb[0].mxu0
      %1724 = vmatprep.mubr.bf16.mxu0 %v1244
      %1725 = vmatmul.mubr.bf16.gmra.mrb[0].mxu0 %v898
      %v1726 = vpop.f32.mrb[0].mxu0
      %v1727 = vadd.f32 %v358, %v1726
      %v1728 = vpop.f32.mrb[0].mxu0
      %v1729 = vpop.f32.mrb[0].mxu0
      %v1730 = vadd.f32 %v358, %v1729
      %v1731 = vpop.f32.mrb[0].mxu0
      %1732 = vmatprep.mubr.bf16.mxu0 %v1247
      %1733 = vmatmul.mubr.bf16.gmra.mrb[0].mxu0 %v900
      %v1734 = vpop.f32.mrb[0].mxu0
      %v1735 = vadd.f32 %v358, %v1734
      %v1736 = vpop.f32.mrb[0].mxu0
      %v1737 = vpop.f32.mrb[0].mxu0
      %v1738 = vadd.f32 %v358, %v1737
      %v1739 = vpop.f32.mrb[0].mxu0
      %1740 = vmatprep.mubr.bf16.mxu0 %v1250
      %1741 = vmatmul.mubr.bf16.gmra.mrb[0].mxu0 %v902
      %v1742 = vpop.f32.mrb[0].mxu0
      %v1743 = vadd.f32 %v358, %v1742
      %v1744 = vpop.f32.mrb[0].mxu0
      %v1745 = vpop.f32.mrb[0].mxu0
      %v1746 = vadd.f32 %v358, %v1745
      %v1747 = vpop.f32.mrb[0].mxu0
      %1748 = vmatprep.mubr.bf16.mxu0 %v1253
      %1749 = vmatmul.mubr.bf16.gmra.mrb[0].mxu0 %v904
      %v1750 = vpop.f32.mrb[0].mxu0
      %v1751 = vadd.f32 %v358, %v1750
      %v1752 = vpop.f32.mrb[0].mxu0
      %v1753 = vpop.f32.mrb[0].mxu0
      %v1754 = vadd.f32 %v358, %v1753
      %v1755 = vpop.f32.mrb[0].mxu0
      %1756 = vmatprep.mubr.bf16.mxu0 %v1256
      %1757 = vmatmul.mubr.bf16.gmra.mrb[0].mxu0 %v906
      %v1758 = vpop.f32.mrb[0].mxu0
      %v1759 = vadd.f32 %v358, %v1758
      %v1760 = vpop.f32.mrb[0].mxu0
      %v1761 = vpop.f32.mrb[0].mxu0
      %v1762 = vadd.f32 %v358, %v1761
      %v1763 = vpop.f32.mrb[0].mxu0
      %1764 = vmatprep.mubr.bf16.mxu0 %v1259
      %1765 = vmatmul.mubr.bf16.gmra.mrb[0].mxu0 %v908
      %v1766 = vpop.f32.mrb[0].mxu0
      %v1767 = vadd.f32 %v358, %v1766
      %v1768 = vpop.f32.mrb[0].mxu0
      %v1769 = vpop.f32.mrb[0].mxu0
      %v1770 = vadd.f32 %v358, %v1769
      %v1771 = vpop.f32.mrb[0].mxu0
      %1772 = vmatprep.mubr.bf16.mxu0 %v1262
      %1773 = vmatmul.mubr.bf16.gmra.mrb[0].mxu0 %v910
      %v1774 = vpop.f32.mrb[0].mxu0
      %v1775 = vadd.f32 %v358, %v1774
      %v1776 = vpop.f32.mrb[0].mxu0
      %v1777 = vpop.f32.mrb[0].mxu0
      %v1778 = vadd.f32 %v358, %v1777
      %v1779 = vpop.f32.mrb[0].mxu0
      %1780 = vmatprep.mubr.bf16.mxu0 %v1265
      %1781 = vmatmul.mubr.bf16.gmra.mrb[0].mxu0 %v912
      %v1782 = vpop.f32.mrb[0].mxu0
      %v1783 = vadd.f32 %v358, %v1782
      %v1784 = vpop.f32.mrb[0].mxu0
      %v1785 = vpop.f32.mrb[0].mxu0
      %v1786 = vadd.f32 %v358, %v1785
      %v1787 = vpop.f32.mrb[0].mxu0
      %1788 = vmatprep.mubr.bf16.mxu0 %v1268
      %1789 = vmatmul.mubr.bf16.gmra.mrb[0].mxu0 %v914
      %v1790 = vpop.f32.mrb[0].mxu0
      %v1791 = vadd.f32 %v358, %v1790
      %v1792 = vpop.f32.mrb[0].mxu0
      %v1793 = vpop.f32.mrb[0].mxu0
      %v1794 = vadd.f32 %v358, %v1793
      %v1795 = vpop.f32.mrb[0].mxu0
      %1796 = vmatprep.mubr.bf16.mxu0 %v1271
      %1797 = vmatmul.mubr.bf16.gmra.mrb[0].mxu0 %v916
      %v1798 = vpop.f32.mrb[0].mxu0
      %v1799 = vadd.f32 %v358, %v1798
      %v1800 = vpop.f32.mrb[0].mxu0
      %v1801 = vpop.f32.mrb[0].mxu0
      %v1802 = vadd.f32 %v358, %v1801
      %v1803 = vpop.f32.mrb[0].mxu0
      %1804 = vmatprep.mubr.bf16.mxu0 %v1274
      %1805 = vmatmul.mubr.bf16.gmra.mrb[0].mxu0 %v918
      %v1806 = vpop.f32.mrb[0].mxu0
      %v1807 = vadd.f32 %v358, %v1806
      %v1808 = vpop.f32.mrb[0].mxu0
      %v1809 = vpop.f32.mrb[0].mxu0
      %v1810 = vadd.f32 %v358, %v1809
      %v1811 = vpop.f32.mrb[0].mxu0
      %1812 = vmatprep.mubr.bf16.mxu0 %v1277
      %1813 = vmatmul.mubr.bf16.gmra.mrb[0].mxu0 %v920
      %v1814 = vpop.f32.mrb[0].mxu0
      %v1815 = vadd.f32 %v358, %v1814
      %v1816 = vpop.f32.mrb[0].mxu0
      %v1817 = vpop.f32.mrb[0].mxu0
      %v1818 = vadd.f32 %v358, %v1817
      %v1819 = vpop.f32.mrb[0].mxu0
      %1820 = vmatprep.mubr.bf16.mxu0 %v1280
      %1821 = vmatmul.mubr.bf16.gmra.mrb[0].mxu0 %v922
      %v1822 = vpop.f32.mrb[0].mxu0
      %v1823 = vadd.f32 %v358, %v1822
      %v1824 = vpop.f32.mrb[0].mxu0
      %v1825 = vpop.f32.mrb[0].mxu0
      %v1826 = vadd.f32 %v358, %v1825
      %v1827 = vpop.f32.mrb[0].mxu0
      %1828 = vmatprep.mubr.bf16.mxu0 %v1283
      %1829 = vmatmul.mubr.bf16.gmra.mrb[0].mxu0 %v924
      %v1830 = vpop.f32.mrb[0].mxu0
      %v1831 = vadd.f32 %v358, %v1830
      %v1832 = vpop.f32.mrb[0].mxu0
      %v1833 = vpop.f32.mrb[0].mxu0
      %v1834 = vadd.f32 %v358, %v1833
      %v1835 = vpop.f32.mrb[0].mxu0
      %1836 = vmatprep.mubr.bf16.mxu0 %v1286
      %1837 = vmatmul.mubr.bf16.gmra.mrb[0].mxu0 %v926
      %v1838 = vpop.f32.mrb[0].mxu0
      %v1839 = vadd.f32 %v358, %v1838
      %v1840 = vpop.f32.mrb[0].mxu0
      %v1841 = vpop.f32.mrb[0].mxu0
      %v1842 = vadd.f32 %v358, %v1841
      %v1843 = vpop.f32.mrb[0].mxu0
      %1844 = vmatprep.mubr.bf16.mxu0 %v1289
      %1845 = vmatmul.mubr.bf16.gmra.mrb[0].mxu0 %v928
      %v1846 = vpop.f32.mrb[0].mxu0
      %v1847 = vadd.f32 %v358, %v1846
      %v1848 = vpop.f32.mrb[0].mxu0
      %v1849 = vpop.f32.mrb[0].mxu0
      %v1850 = vadd.f32 %v358, %v1849
      %v1851 = vpop.f32.mrb[0].mxu0
      %1852 = vmatprep.mubr.bf16.mxu0 %v1292
      %1853 = vmatmul.mubr.bf16.gmra.mrb[0].mxu0 %v930
      %v1854 = vpop.f32.mrb[0].mxu0
      %v1855 = vadd.f32 %v358, %v1854
      %v1856 = vpop.f32.mrb[0].mxu0
      %v1857 = vpop.f32.mrb[0].mxu0
      %v1858 = vadd.f32 %v358, %v1857
      %v1859 = vpop.f32.mrb[0].mxu0
      %1860 = vmatprep.mubr.bf16.mxu0 %v1295
      %1861 = vmatmul.mubr.bf16.gmra.mrb[0].mxu0 %v932
      %v1862 = vpop.f32.mrb[0].mxu0
      %v1863 = vadd.f32 %v358, %v1862
      %v1864 = vpop.f32.mrb[0].mxu0
      %v1865 = vpop.f32.mrb[0].mxu0
      %v1866 = vadd.f32 %v358, %v1865
      %v1867 = vpop.f32.mrb[0].mxu0
      %1868 = vmatprep.mubr.bf16.mxu0 %v1298
      %1869 = vmatmul.mubr.bf16.gmra.mrb[0].mxu0 %v934
      %v1870 = vpop.f32.mrb[0].mxu0
      %v1871 = vadd.f32 %v358, %v1870
      %v1872 = vpop.f32.mrb[0].mxu0
      %v1873 = vpop.f32.mrb[0].mxu0
      %v1874 = vadd.f32 %v358, %v1873
      %v1875 = vpop.f32.mrb[0].mxu0
      %1876 = vmatprep.mubr.bf16.mxu0 %v1301
      %1877 = vmatmul.mubr.bf16.gmra.mrb[0].mxu0 %v936
      %v1878 = vpop.f32.mrb[0].mxu0
      %v1879 = vadd.f32 %v358, %v1878
      %v1880 = vpop.f32.mrb[0].mxu0
      %v1881 = vpop.f32.mrb[0].mxu0
      %v1882 = vadd.f32 %v358, %v1881
      %v1883 = vpop.f32.mrb[0].mxu0
      %1884 = vmatprep.mubr.bf16.mxu0 %v1304
      %1885 = vmatmul.mubr.bf16.gmra.mrb[0].mxu0 %v938
      %v1886 = vpop.f32.mrb[0].mxu0
      %v1887 = vadd.f32 %v358, %v1886
      %v1888 = vpop.f32.mrb[0].mxu0
      %v1889 = vpop.f32.mrb[0].mxu0
      %v1890 = vadd.f32 %v358, %v1889
      %v1891 = vpop.f32.mrb[0].mxu0
      %1892 = vmatprep.mubr.bf16.mxu0 %v1307
      %1893 = vmatmul.mubr.bf16.gmra.mrb[0].mxu0 %v940
      %v1894 = vpop.f32.mrb[0].mxu0
      %v1895 = vadd.f32 %v358, %v1894
      %v1896 = vpop.f32.mrb[0].mxu0
      %v1897 = vpop.f32.mrb[0].mxu0
      %v1898 = vadd.f32 %v358, %v1897
      %v1899 = vpop.f32.mrb[0].mxu0
      %1900 = vmatprep.mubr.bf16.mxu0 %v1310
      %1901 = vmatmul.mubr.bf16.gmra.mrb[0].mxu0 %v942
      %v1902 = vpop.f32.mrb[0].mxu0
      %v1903 = vadd.f32 %v358, %v1902
      %v1904 = vpop.f32.mrb[0].mxu0
      %v1905 = vpop.f32.mrb[0].mxu0
      %v1906 = vadd.f32 %v358, %v1905
      %v1907 = vpop.f32.mrb[0].mxu0
      %1908 = vmatprep.mubr.bf16.mxu0 %v1313
      %1909 = vmatmul.mubr.bf16.gmra.mrb[0].mxu0 %v944
      %v1910 = vpop.f32.mrb[0].mxu0
      %v1911 = vadd.f32 %v358, %v1910
      %v1912 = vpop.f32.mrb[0].mxu0
      %v1913 = vpop.f32.mrb[0].mxu0
      %v1914 = vadd.f32 %v358, %v1913
      %v1915 = vpop.f32.mrb[0].mxu0
      %1916 = vmatprep.mubr.bf16.mxu0 %v1316
      %1917 = vmatmul.mubr.bf16.gmra.mrb[0].mxu0 %v946
      %v1918 = vpop.f32.mrb[0].mxu0
      %v1919 = vadd.f32 %v358, %v1918
      %v1920 = vpop.f32.mrb[0].mxu0
      %v1921 = vpop.f32.mrb[0].mxu0
      %v1922 = vadd.f32 %v358, %v1921
      %v1923 = vpop.f32.mrb[0].mxu0
      %1924 = vmatprep.mubr.bf16.mxu0 %v1319
      %1925 = vmatmul.mubr.bf16.gmra.mrb[0].mxu0 %v948
      %v1926 = vpop.f32.mrb[0].mxu0
      %v1927 = vadd.f32 %v358, %v1926
      %v1928 = vpop.f32.mrb[0].mxu0
      %v1929 = vpop.f32.mrb[0].mxu0
      %v1930 = vadd.f32 %v358, %v1929
      %v1931 = vpop.f32.mrb[0].mxu0
      %1932 = vmatprep.mubr.bf16.mxu0 %v1322
      %1933 = vmatmul.mubr.bf16.gmra.mrb[0].mxu0 %v950
      %v1934 = vpop.f32.mrb[0].mxu0
      %v1935 = vadd.f32 %v358, %v1934
      %v1936 = vpop.f32.mrb[0].mxu0
      %v1937 = vpop.f32.mrb[0].mxu0
      %v1938 = vadd.f32 %v358, %v1937
      %v1939 = vpop.f32.mrb[0].mxu0
      %1940 = vmatprep.mubr.bf16.mxu0 %v1325
      %1941 = vmatmul.mubr.bf16.gmra.mrb[0].mxu0 %v952
      %v1942 = vpop.f32.mrb[0].mxu0
      %v1943 = vadd.f32 %v358, %v1942
      %v1944 = vpop.f32.mrb[0].mxu0
      %v1945 = vpop.f32.mrb[0].mxu0
      %v1946 = vadd.f32 %v358, %v1945
      %v1947 = vpop.f32.mrb[0].mxu0
      %1948 = vmatprep.mubr.bf16.mxu0 %v1328
      %1949 = vmatmul.mubr.bf16.gmra.mrb[0].mxu0 %v954
      %v1950 = vpop.f32.mrb[0].mxu0
      %v1951 = vadd.f32 %v358, %v1950
      %v1952 = vpop.f32.mrb[0].mxu0
      %v1953 = vpop.f32.mrb[0].mxu0
      %v1954 = vadd.f32 %v358, %v1953
      %v1955 = vpop.f32.mrb[0].mxu0
      %1956 = vmatprep.mubr.bf16.mxu0 %v1331
      %1957 = vmatmul.mubr.bf16.gmra.mrb[0].mxu0 %v956
      %v1958 = vpop.f32.mrb[0].mxu0
      %v1959 = vadd.f32 %v358, %v1958
      %v1960 = vpop.f32.mrb[0].mxu0
      %v1961 = vpop.f32.mrb[0].mxu0
      %v1962 = vadd.f32 %v358, %v1961
      %v1963 = vpop.f32.mrb[0].mxu0
      %1964 = vmatprep.mubr.bf16.mxu0 %v1334
      %1965 = vmatmul.mubr.bf16.gmra.mrb[0].mxu0 %v958
      %v1966 = vpop.f32.mrb[0].mxu0
      %v1967 = vadd.f32 %v358, %v1966
      %v1968 = vpop.f32.mrb[0].mxu0
      %v1969 = vpop.f32.mrb[0].mxu0
      %v1970 = vadd.f32 %v358, %v1969
      %v1971 = vpop.f32.mrb[0].mxu0
      %1972 = vdwg.mxu0
      %v1973 = vmax.f32 %v1375, 0.0
      %v1974 = vmax.f32 %v1378, 0.0
      %v1975 = vmax.f32 %v1383, 0.0
      %v1976 = vmax.f32 %v1386, 0.0
      %v1977 = vmax.f32 %v1391, 0.0
      %v1978 = vmax.f32 %v1394, 0.0
      %v1979 = vmax.f32 %v1399, 0.0
      %v1980 = vmax.f32 %v1402, 0.0
      %v1981 = vmax.f32 %v1407, 0.0
      %v1982 = vmax.f32 %v1410, 0.0
      %v1983 = vmax.f32 %v1415, 0.0
      %v1984 = vmax.f32 %v1418, 0.0
      %v1985 = vmax.f32 %v1423, 0.0
      %v1986 = vmax.f32 %v1426, 0.0
      %v1987 = vmax.f32 %v1431, 0.0
      %v1988 = vmax.f32 %v1434, 0.0
      %v1989 = vmax.f32 %v1439, 0.0
      %v1990 = vmax.f32 %v1442, 0.0
      %v1991 = vmax.f32 %v1447, 0.0
      %v1992 = vmax.f32 %v1450, 0.0
      %v1993 = vmax.f32 %v1455, 0.0
      %v1994 = vmax.f32 %v1458, 0.0
      %v1995 = vmax.f32 %v1463, 0.0
      %v1996 = vmax.f32 %v1466, 0.0
      %v1997 = vmax.f32 %v1471, 0.0
      %v1998 = vmax.f32 %v1474, 0.0
      %v1999 = vmax.f32 %v1479, 0.0
      %v2000 = vmax.f32 %v1482, 0.0
      %v2001 = vmax.f32 %v1487, 0.0
      %v2002 = vmax.f32 %v1490, 0.0
      %v2003 = vmax.f32 %v1495, 0.0
      %v2004 = vmax.f32 %v1498, 0.0
      %v2005 = vmax.f32 %v1503, 0.0
      %v2006 = vmax.f32 %v1506, 0.0
      %v2007 = vmax.f32 %v1511, 0.0
      %v2008 = vmax.f32 %v1514, 0.0
      %v2009 = vmax.f32 %v1519, 0.0
      %v2010 = vmax.f32 %v1522, 0.0
      %v2011 = vmax.f32 %v1527, 0.0
      %v2012 = vmax.f32 %v1530, 0.0
      %v2013 = vmax.f32 %v1535, 0.0
      %v2014 = vmax.f32 %v1538, 0.0
      %v2015 = vmax.f32 %v1543, 0.0
      %v2016 = vmax.f32 %v1546, 0.0
      %v2017 = vmax.f32 %v1551, 0.0
      %v2018 = vmax.f32 %v1554, 0.0
      %v2019 = vmax.f32 %v1559, 0.0
      %v2020 = vmax.f32 %v1562, 0.0
      %v2021 = vmax.f32 %v1567, 0.0
      %v2022 = vmax.f32 %v1570, 0.0
      %v2023 = vmax.f32 %v1575, 0.0
      %v2024 = vmax.f32 %v1578, 0.0
      %v2025 = vmax.f32 %v1583, 0.0
      %v2026 = vmax.f32 %v1586, 0.0
      %v2027 = vmax.f32 %v1591, 0.0
      %v2028 = vmax.f32 %v1594, 0.0
      %v2029 = vmax.f32 %v1599, 0.0
      %v2030 = vmax.f32 %v1602, 0.0
      %v2031 = vmax.f32 %v1607, 0.0
      %v2032 = vmax.f32 %v1610, 0.0
      %v2033 = vmax.f32 %v1615, 0.0
      %v2034 = vmax.f32 %v1618, 0.0
      %v2035 = vmax.f32 %v1623, 0.0
      %v2036 = vmax.f32 %v1626, 0.0
      %v2037 = vmax.f32 %v1631, 0.0
      %v2038 = vmax.f32 %v1634, 0.0
      %v2039 = vmax.f32 %v1639, 0.0
      %v2040 = vmax.f32 %v1642, 0.0
      %v2041 = vmax.f32 %v1647, 0.0
      %v2042 = vmax.f32 %v1650, 0.0
      %v2043 = vmax.f32 %v1655, 0.0
      %v2044 = vmax.f32 %v1658, 0.0
      %v2045 = vmax.f32 %v1663, 0.0
      %v2046 = vmax.f32 %v1666, 0.0
      %v2047 = vmax.f32 %v1671, 0.0
      %v2048 = vmax.f32 %v1674, 0.0
      %v2049 = vmax.f32 %v1679, 0.0
      %v2050 = vmax.f32 %v1682, 0.0
      %v2051 = vmax.f32 %v1687, 0.0
      %v2052 = vmax.f32 %v1690, 0.0
      %v2053 = vmax.f32 %v1695, 0.0
      %v2054 = vmax.f32 %v1698, 0.0
      %v2055 = vmax.f32 %v1703, 0.0
      %v2056 = vmax.f32 %v1706, 0.0
      %v2057 = vmax.f32 %v1711, 0.0
      %v2058 = vmax.f32 %v1714, 0.0
      %v2059 = vmax.f32 %v1719, 0.0
      %v2060 = vmax.f32 %v1722, 0.0
      %v2061 = vmax.f32 %v1727, 0.0
      %v2062 = vmax.f32 %v1730, 0.0
      %v2063 = vmax.f32 %v1735, 0.0
      %v2064 = vmax.f32 %v1738, 0.0
      %v2065 = vmax.f32 %v1743, 0.0
      %v2066 = vmax.f32 %v1746, 0.0
      %v2067 = vmax.f32 %v1751, 0.0
      %v2068 = vmax.f32 %v1754, 0.0
      %v2069 = vmax.f32 %v1759, 0.0
      %v2070 = vmax.f32 %v1762, 0.0
      %v2071 = vmax.f32 %v1767, 0.0
      %v2072 = vmax.f32 %v1770, 0.0
      %v2073 = vmax.f32 %v1775, 0.0
      %v2074 = vmax.f32 %v1778, 0.0
      %v2075 = vmax.f32 %v1783, 0.0
      %v2076 = vmax.f32 %v1786, 0.0
      %v2077 = vmax.f32 %v1791, 0.0
      %v2078 = vmax.f32 %v1794, 0.0
      %v2079 = vmax.f32 %v1799, 0.0
      %v2080 = vmax.f32 %v1802, 0.0
      %v2081 = vmax.f32 %v1807, 0.0
      %v2082 = vmax.f32 %v1810, 0.0
      %v2083 = vmax.f32 %v1815, 0.0
      %v2084 = vmax.f32 %v1818, 0.0
      %v2085 = vmax.f32 %v1823, 0.0
      %v2086 = vmax.f32 %v1826, 0.0
      %v2087 = vmax.f32 %v1831, 0.0
      %v2088 = vmax.f32 %v1834, 0.0
      %v2089 = vmax.f32 %v1839, 0.0
      %v2090 = vmax.f32 %v1842, 0.0
      %v2091 = vmax.f32 %v1847, 0.0
      %v2092 = vmax.f32 %v1850, 0.0
      %v2093 = vmax.f32 %v1855, 0.0
      %v2094 = vmax.f32 %v1858, 0.0
      %v2095 = vmax.f32 %v1863, 0.0
      %v2096 = vmax.f32 %v1866, 0.0
      %v2097 = vmax.f32 %v1871, 0.0
      %v2098 = vmax.f32 %v1874, 0.0
      %v2099 = vmax.f32 %v1879, 0.0
      %v2100 = vmax.f32 %v1882, 0.0
      %v2101 = vmax.f32 %v1887, 0.0
      %v2102 = vmax.f32 %v1890, 0.0
      %v2103 = vmax.f32 %v1895, 0.0
      %v2104 = vmax.f32 %v1898, 0.0
      %v2105 = vmax.f32 %v1903, 0.0
      %v2106 = vmax.f32 %v1906, 0.0
      %v2107 = vmax.f32 %v1911, 0.0
      %v2108 = vmax.f32 %v1914, 0.0
      %v2109 = vmax.f32 %v1919, 0.0
      %v2110 = vmax.f32 %v1922, 0.0
      %v2111 = vmax.f32 %v1927, 0.0
      %v2112 = vmax.f32 %v1930, 0.0
      %v2113 = vmax.f32 %v1935, 0.0
      %v2114 = vmax.f32 %v1938, 0.0
      %v2115 = vmax.f32 %v1943, 0.0
      %v2116 = vmax.f32 %v1946, 0.0
      %v2117 = vmax.f32 %v1951, 0.0
      %v2118 = vmax.f32 %v1954, 0.0
      %v2119 = vmax.f32 %v1959, 0.0
      %v2120 = vmax.f32 %v1962, 0.0
      %v2121 = vmax.f32 %v1967, 0.0
      %v2122 = vmax.f32 %v1970, 0.0
      %v2123 = vpack.c.bf16 %v1974, %v1973
      %v2124 = vpack.c.bf16 %v1976, %v1975
      %v2125 = vpack.c.bf16 %v1978, %v1977
      %v2126 = vpack.c.bf16 %v1980, %v1979
      %v2127 = vpack.c.bf16 %v1982, %v1981
      %v2128 = vpack.c.bf16 %v1984, %v1983
      %v2129 = vpack.c.bf16 %v1986, %v1985
      %v2130 = vpack.c.bf16 %v1988, %v1987
      %v2131 = vpack.c.bf16 %v1990, %v1989
      %v2132 = vpack.c.bf16 %v1992, %v1991
      %v2133 = vpack.c.bf16 %v1994, %v1993
      %v2134 = vpack.c.bf16 %v1996, %v1995
      %v2135 = vpack.c.bf16 %v1998, %v1997
      %v2136 = vpack.c.bf16 %v2000, %v1999
      %v2137 = vpack.c.bf16 %v2002, %v2001
      %v2138 = vpack.c.bf16 %v2004, %v2003
      %v2139 = vpack.c.bf16 %v2006, %v2005
      %v2140 = vpack.c.bf16 %v2008, %v2007
      %v2141 = vpack.c.bf16 %v2010, %v2009
      %v2142 = vpack.c.bf16 %v2012, %v2011
      %v2143 = vpack.c.bf16 %v2014, %v2013
      %v2144 = vpack.c.bf16 %v2016, %v2015
      %v2145 = vpack.c.bf16 %v2018, %v2017
      %v2146 = vpack.c.bf16 %v2020, %v2019
      %v2147 = vpack.c.bf16 %v2022, %v2021
      %v2148 = vpack.c.bf16 %v2024, %v2023
      %v2149 = vpack.c.bf16 %v2026, %v2025
      %v2150 = vpack.c.bf16 %v2028, %v2027
      %v2151 = vpack.c.bf16 %v2030, %v2029
      %v2152 = vpack.c.bf16 %v2032, %v2031
      %v2153 = vpack.c.bf16 %v2034, %v2033
      %v2154 = vpack.c.bf16 %v2036, %v2035
      %v2155 = vpack.c.bf16 %v2038, %v2037
      %v2156 = vpack.c.bf16 %v2040, %v2039
      %v2157 = vpack.c.bf16 %v2042, %v2041
      %v2158 = vpack.c.bf16 %v2044, %v2043
      %v2159 = vpack.c.bf16 %v2046, %v2045
      %v2160 = vpack.c.bf16 %v2048, %v2047
      %v2161 = vpack.c.bf16 %v2050, %v2049
      %v2162 = vpack.c.bf16 %v2052, %v2051
      %v2163 = vpack.c.bf16 %v2054, %v2053
      %v2164 = vpack.c.bf16 %v2056, %v2055
      %v2165 = vpack.c.bf16 %v2058, %v2057
      %v2166 = vpack.c.bf16 %v2060, %v2059
      %v2167 = vpack.c.bf16 %v2062, %v2061
      %v2168 = vpack.c.bf16 %v2064, %v2063
      %v2169 = vpack.c.bf16 %v2066, %v2065
      %v2170 = vpack.c.bf16 %v2068, %v2067
      %v2171 = vpack.c.bf16 %v2070, %v2069
      %v2172 = vpack.c.bf16 %v2072, %v2071
      %v2173 = vpack.c.bf16 %v2074, %v2073
      %v2174 = vpack.c.bf16 %v2076, %v2075
      %v2175 = vpack.c.bf16 %v2078, %v2077
      %v2176 = vpack.c.bf16 %v2080, %v2079
      %v2177 = vpack.c.bf16 %v2082, %v2081
      %v2178 = vpack.c.bf16 %v2084, %v2083
      %v2179 = vpack.c.bf16 %v2086, %v2085
      %v2180 = vpack.c.bf16 %v2088, %v2087
      %v2181 = vpack.c.bf16 %v2090, %v2089
      %v2182 = vpack.c.bf16 %v2092, %v2091
      %v2183 = vpack.c.bf16 %v2094, %v2093
      %v2184 = vpack.c.bf16 %v2096, %v2095
      %v2185 = vpack.c.bf16 %v2098, %v2097
      %v2186 = vpack.c.bf16 %v2100, %v2099
      %v2187 = vpack.c.bf16 %v2102, %v2101
      %v2188 = vpack.c.bf16 %v2104, %v2103
      %v2189 = vpack.c.bf16 %v2106, %v2105
      %v2190 = vpack.c.bf16 %v2108, %v2107
      %v2191 = vpack.c.bf16 %v2110, %v2109
      %v2192 = vpack.c.bf16 %v2112, %v2111
      %v2193 = vpack.c.bf16 %v2114, %v2113
      %v2194 = vpack.c.bf16 %v2116, %v2115
      %v2195 = vpack.c.bf16 %v2118, %v2117
      %v2196 = vpack.c.bf16 %v2120, %v2119
      %v2197 = vpack.c.bf16 %v2122, %v2121
      %v2273 = vunpack.c.l.b16 %v2123
      %v2274 = vunpack.c.h.b16 %v2123
      %v2275 = vunpack.c.l.b16 %v2124
      %v2276 = vunpack.c.h.b16 %v2124
      %v2277 = vunpack.c.l.b16 %v2125
      %v2278 = vunpack.c.h.b16 %v2125
      %v2279 = vunpack.c.l.b16 %v2126
      %v2280 = vunpack.c.h.b16 %v2126
      %v2281 = vunpack.c.l.b16 %v2127
      %v2282 = vunpack.c.h.b16 %v2127
      %v2283 = vunpack.c.l.b16 %v2128
      %v2284 = vunpack.c.h.b16 %v2128
      %v2285 = vunpack.c.l.b16 %v2129
      %v2286 = vunpack.c.h.b16 %v2129
      %v2287 = vunpack.c.l.b16 %v2130
      %v2288 = vunpack.c.h.b16 %v2130
      %v2289 = vunpack.c.l.b16 %v2131
      %v2290 = vunpack.c.h.b16 %v2131
      %v2291 = vunpack.c.l.b16 %v2132
      %v2292 = vunpack.c.h.b16 %v2132
      %v2293 = vunpack.c.l.b16 %v2133
      %v2294 = vunpack.c.h.b16 %v2133
      %v2295 = vunpack.c.l.b16 %v2134
      %v2296 = vunpack.c.h.b16 %v2134
      %v2297 = vunpack.c.l.b16 %v2135
      %v2298 = vunpack.c.h.b16 %v2135
      %v2299 = vunpack.c.l.b16 %v2136
      %v2300 = vunpack.c.h.b16 %v2136
      %v2301 = vunpack.c.l.b16 %v2137
      %v2302 = vunpack.c.h.b16 %v2137
      %v2303 = vunpack.c.l.b16 %v2138
      %v2304 = vunpack.c.h.b16 %v2138
      %v2305 = vunpack.c.l.b16 %v2139
      %v2306 = vunpack.c.h.b16 %v2139
      %v2307 = vunpack.c.l.b16 %v2140
      %v2308 = vunpack.c.h.b16 %v2140
      %v2309 = vunpack.c.l.b16 %v2141
      %v2310 = vunpack.c.h.b16 %v2141
      %v2311 = vunpack.c.l.b16 %v2142
      %v2312 = vunpack.c.h.b16 %v2142
      %v2313 = vunpack.c.l.b16 %v2143
      %v2314 = vunpack.c.h.b16 %v2143
      %v2315 = vunpack.c.l.b16 %v2144
      %v2316 = vunpack.c.h.b16 %v2144
      %v2317 = vunpack.c.l.b16 %v2145
      %v2318 = vunpack.c.h.b16 %v2145
      %v2319 = vunpack.c.l.b16 %v2146
      %v2320 = vunpack.c.h.b16 %v2146
      %v2321 = vunpack.c.l.b16 %v2147
      %v2322 = vunpack.c.h.b16 %v2147
      %v2323 = vunpack.c.l.b16 %v2148
      %v2324 = vunpack.c.h.b16 %v2148
      %v2325 = vunpack.c.l.b16 %v2149
      %v2326 = vunpack.c.h.b16 %v2149
      %v2327 = vunpack.c.l.b16 %v2150
      %v2328 = vunpack.c.h.b16 %v2150
      %v2329 = vunpack.c.l.b16 %v2151
      %v2330 = vunpack.c.h.b16 %v2151
      %v2331 = vunpack.c.l.b16 %v2152
      %v2332 = vunpack.c.h.b16 %v2152
      %v2333 = vunpack.c.l.b16 %v2153
      %v2334 = vunpack.c.h.b16 %v2153
      %v2335 = vunpack.c.l.b16 %v2154
      %v2336 = vunpack.c.h.b16 %v2154
      %v2337 = vunpack.c.l.b16 %v2155
      %v2338 = vunpack.c.h.b16 %v2155
      %v2339 = vunpack.c.l.b16 %v2156
      %v2340 = vunpack.c.h.b16 %v2156
      %v2341 = vunpack.c.l.b16 %v2157
      %v2342 = vunpack.c.h.b16 %v2157
      %v2343 = vunpack.c.l.b16 %v2158
      %v2344 = vunpack.c.h.b16 %v2158
      %v2345 = vunpack.c.l.b16 %v2159
      %v2346 = vunpack.c.h.b16 %v2159
      %v2347 = vunpack.c.l.b16 %v2160
      %v2348 = vunpack.c.h.b16 %v2160
      %v2349 = vunpack.c.l.b16 %v2161
      %v2350 = vunpack.c.h.b16 %v2161
      %v2351 = vunpack.c.l.b16 %v2162
      %v2352 = vunpack.c.h.b16 %v2162
      %v2353 = vunpack.c.l.b16 %v2163
      %v2354 = vunpack.c.h.b16 %v2163
      %v2355 = vunpack.c.l.b16 %v2164
      %v2356 = vunpack.c.h.b16 %v2164
      %v2357 = vunpack.c.l.b16 %v2165
      %v2358 = vunpack.c.h.b16 %v2165
      %v2359 = vunpack.c.l.b16 %v2166
      %v2360 = vunpack.c.h.b16 %v2166
      %v2361 = vunpack.c.l.b16 %v2167
      %v2362 = vunpack.c.h.b16 %v2167
      %v2363 = vunpack.c.l.b16 %v2168
      %v2364 = vunpack.c.h.b16 %v2168
      %v2365 = vunpack.c.l.b16 %v2169
      %v2366 = vunpack.c.h.b16 %v2169
      %v2367 = vunpack.c.l.b16 %v2170
      %v2368 = vunpack.c.h.b16 %v2170
      %v2369 = vunpack.c.l.b16 %v2171
      %v2370 = vunpack.c.h.b16 %v2171
      %v2371 = vunpack.c.l.b16 %v2172
      %v2372 = vunpack.c.h.b16 %v2172
      %v2373 = vunpack.c.l.b16 %v2173
      %v2374 = vunpack.c.h.b16 %v2173
      %v2375 = vunpack.c.l.b16 %v2174
      %v2376 = vunpack.c.h.b16 %v2174
      %v2377 = vunpack.c.l.b16 %v2175
      %v2378 = vunpack.c.h.b16 %v2175
      %v2379 = vunpack.c.l.b16 %v2176
      %v2380 = vunpack.c.h.b16 %v2176
      %v2381 = vunpack.c.l.b16 %v2177
      %v2382 = vunpack.c.h.b16 %v2177
      %v2383 = vunpack.c.l.b16 %v2178
      %v2384 = vunpack.c.h.b16 %v2178
      %v2385 = vunpack.c.l.b16 %v2179
      %v2386 = vunpack.c.h.b16 %v2179
      %v2387 = vunpack.c.l.b16 %v2180
      %v2388 = vunpack.c.h.b16 %v2180
      %v2389 = vunpack.c.l.b16 %v2181
      %v2390 = vunpack.c.h.b16 %v2181
      %v2391 = vunpack.c.l.b16 %v2182
      %v2392 = vunpack.c.h.b16 %v2182
      %v2393 = vunpack.c.l.b16 %v2183
      %v2394 = vunpack.c.h.b16 %v2183
      %v2395 = vunpack.c.l.b16 %v2184
      %v2396 = vunpack.c.h.b16 %v2184
      %v2397 = vunpack.c.l.b16 %v2185
      %v2398 = vunpack.c.h.b16 %v2185
      %v2399 = vunpack.c.l.b16 %v2186
      %v2400 = vunpack.c.h.b16 %v2186
      %v2401 = vunpack.c.l.b16 %v2187
      %v2402 = vunpack.c.h.b16 %v2187
      %v2403 = vunpack.c.l.b16 %v2188
      %v2404 = vunpack.c.h.b16 %v2188
      %v2405 = vunpack.c.l.b16 %v2189
      %v2406 = vunpack.c.h.b16 %v2189
      %v2407 = vunpack.c.l.b16 %v2190
      %v2408 = vunpack.c.h.b16 %v2190
      %v2409 = vunpack.c.l.b16 %v2191
      %v2410 = vunpack.c.h.b16 %v2191
      %v2411 = vunpack.c.l.b16 %v2192
      %v2412 = vunpack.c.h.b16 %v2192
      %v2413 = vunpack.c.l.b16 %v2193
      %v2414 = vunpack.c.h.b16 %v2193
      %v2415 = vunpack.c.l.b16 %v2194
      %v2416 = vunpack.c.h.b16 %v2194
      %v2417 = vunpack.c.l.b16 %v2195
      %v2418 = vunpack.c.h.b16 %v2195
      %v2419 = vunpack.c.l.b16 %v2196
      %v2420 = vunpack.c.h.b16 %v2196
      %v2421 = vunpack.c.l.b16 %v2197
      %v2422 = vunpack.c.h.b16 %v2197
      %v2423 = vpack.c.b16 %v2273, %v2273
      %v2424 = vpack.c.b16 %v2274, %v2274
      %v2425 = vpack.c.b16 %v2275, %v2275
      %v2426 = vpack.c.b16 %v2276, %v2276
      %v2427 = vpack.c.b16 %v2277, %v2277
      %v2428 = vpack.c.b16 %v2278, %v2278
      %v2429 = vpack.c.b16 %v2279, %v2279
      %v2430 = vpack.c.b16 %v2280, %v2280
      %v2431 = vpack.c.b16 %v2281, %v2281
      %v2432 = vpack.c.b16 %v2282, %v2282
      %v2433 = vpack.c.b16 %v2283, %v2283
      %v2434 = vpack.c.b16 %v2284, %v2284
      %v2435 = vpack.c.b16 %v2285, %v2285
      %v2436 = vpack.c.b16 %v2286, %v2286
      %v2437 = vpack.c.b16 %v2287, %v2287
      %v2438 = vpack.c.b16 %v2288, %v2288
      %v2439 = vpack.c.b16 %v2289, %v2289
      %v2440 = vpack.c.b16 %v2290, %v2290
      %v2441 = vpack.c.b16 %v2291, %v2291
      %v2442 = vpack.c.b16 %v2292, %v2292
      %v2443 = vpack.c.b16 %v2293, %v2293
      %v2444 = vpack.c.b16 %v2294, %v2294
      %v2445 = vpack.c.b16 %v2295, %v2295
      %v2446 = vpack.c.b16 %v2296, %v2296
      %v2447 = vpack.c.b16 %v2297, %v2297
      %v2448 = vpack.c.b16 %v2298, %v2298
      %v2449 = vpack.c.b16 %v2299, %v2299
      %v2450 = vpack.c.b16 %v2300, %v2300
      %v2451 = vpack.c.b16 %v2301, %v2301
      %v2452 = vpack.c.b16 %v2302, %v2302
      %v2453 = vpack.c.b16 %v2303, %v2303
      %v2454 = vpack.c.b16 %v2304, %v2304
      %v2455 = vpack.c.b16 %v2305, %v2305
      %v2456 = vpack.c.b16 %v2306, %v2306
      %v2457 = vpack.c.b16 %v2307, %v2307
      %v2458 = vpack.c.b16 %v2308, %v2308
      %v2459 = vpack.c.b16 %v2309, %v2309
      %v2460 = vpack.c.b16 %v2310, %v2310
      %v2461 = vpack.c.b16 %v2311, %v2311
      %v2462 = vpack.c.b16 %v2312, %v2312
      %v2463 = vpack.c.b16 %v2313, %v2313
      %v2464 = vpack.c.b16 %v2314, %v2314
      %v2465 = vpack.c.b16 %v2315, %v2315
      %v2466 = vpack.c.b16 %v2316, %v2316
      %v2467 = vpack.c.b16 %v2317, %v2317
      %v2468 = vpack.c.b16 %v2318, %v2318
      %v2469 = vpack.c.b16 %v2319, %v2319
      %v2470 = vpack.c.b16 %v2320, %v2320
      %v2471 = vpack.c.b16 %v2321, %v2321
      %v2472 = vpack.c.b16 %v2322, %v2322
      %v2473 = vpack.c.b16 %v2323, %v2323
      %v2474 = vpack.c.b16 %v2324, %v2324
      %v2475 = vpack.c.b16 %v2325, %v2325
      %v2476 = vpack.c.b16 %v2326, %v2326
      %v2477 = vpack.c.b16 %v2327, %v2327
      %v2478 = vpack.c.b16 %v2328, %v2328
      %v2479 = vpack.c.b16 %v2329, %v2329
      %v2480 = vpack.c.b16 %v2330, %v2330
      %v2481 = vpack.c.b16 %v2331, %v2331
      %v2482 = vpack.c.b16 %v2332, %v2332
      %v2483 = vpack.c.b16 %v2333, %v2333
      %v2484 = vpack.c.b16 %v2334, %v2334
      %v2485 = vpack.c.b16 %v2335, %v2335
      %v2486 = vpack.c.b16 %v2336, %v2336
      %v2487 = vpack.c.b16 %v2337, %v2337
      %v2488 = vpack.c.b16 %v2338, %v2338
      %v2489 = vpack.c.b16 %v2339, %v2339
      %v2490 = vpack.c.b16 %v2340, %v2340
      %v2491 = vpack.c.b16 %v2341, %v2341
      %v2492 = vpack.c.b16 %v2342, %v2342
      %v2493 = vpack.c.b16 %v2343, %v2343
      %v2494 = vpack.c.b16 %v2344, %v2344
      %v2495 = vpack.c.b16 %v2345, %v2345
      %v2496 = vpack.c.b16 %v2346, %v2346
      %v2497 = vpack.c.b16 %v2347, %v2347
      %v2498 = vpack.c.b16 %v2348, %v2348
      %v2499 = vpack.c.b16 %v2349, %v2349
      %v2500 = vpack.c.b16 %v2350, %v2350
      %v2501 = vpack.c.b16 %v2351, %v2351
      %v2502 = vpack.c.b16 %v2352, %v2352
      %v2503 = vpack.c.b16 %v2353, %v2353
      %v2504 = vpack.c.b16 %v2354, %v2354
      %v2505 = vpack.c.b16 %v2355, %v2355
      %v2506 = vpack.c.b16 %v2356, %v2356
      %v2507 = vpack.c.b16 %v2357, %v2357
      %v2508 = vpack.c.b16 %v2358, %v2358
      %v2509 = vpack.c.b16 %v2359, %v2359
      %v2510 = vpack.c.b16 %v2360, %v2360
      %v2511 = vpack.c.b16 %v2361, %v2361
      %v2512 = vpack.c.b16 %v2362, %v2362
      %v2513 = vpack.c.b16 %v2363, %v2363
      %v2514 = vpack.c.b16 %v2364, %v2364
      %v2515 = vpack.c.b16 %v2365, %v2365
      %v2516 = vpack.c.b16 %v2366, %v2366
      %v2517 = vpack.c.b16 %v2367, %v2367
      %v2518 = vpack.c.b16 %v2368, %v2368
      %v2519 = vpack.c.b16 %v2369, %v2369
      %v2520 = vpack.c.b16 %v2370, %v2370
      %v2521 = vpack.c.b16 %v2371, %v2371
      %v2522 = vpack.c.b16 %v2372, %v2372
      %v2523 = vpack.c.b16 %v2373, %v2373
      %v2524 = vpack.c.b16 %v2374, %v2374
      %v2525 = vpack.c.b16 %v2375, %v2375
      %v2526 = vpack.c.b16 %v2376, %v2376
      %v2527 = vpack.c.b16 %v2377, %v2377
      %v2528 = vpack.c.b16 %v2378, %v2378
      %v2529 = vpack.c.b16 %v2379, %v2379
      %v2530 = vpack.c.b16 %v2380, %v2380
      %v2531 = vpack.c.b16 %v2381, %v2381
      %v2532 = vpack.c.b16 %v2382, %v2382
      %v2533 = vpack.c.b16 %v2383, %v2383
      %v2534 = vpack.c.b16 %v2384, %v2384
      %v2535 = vpack.c.b16 %v2385, %v2385
      %v2536 = vpack.c.b16 %v2386, %v2386
      %v2537 = vpack.c.b16 %v2387, %v2387
      %v2538 = vpack.c.b16 %v2388, %v2388
      %v2539 = vpack.c.b16 %v2389, %v2389
      %v2540 = vpack.c.b16 %v2390, %v2390
      %v2541 = vpack.c.b16 %v2391, %v2391
      %v2542 = vpack.c.b16 %v2392, %v2392
      %v2543 = vpack.c.b16 %v2393, %v2393
      %v2544 = vpack.c.b16 %v2394, %v2394
      %v2545 = vpack.c.b16 %v2395, %v2395
      %v2546 = vpack.c.b16 %v2396, %v2396
      %v2547 = vpack.c.b16 %v2397, %v2397
      %v2548 = vpack.c.b16 %v2398, %v2398
      %v2549 = vpack.c.b16 %v2399, %v2399
      %v2550 = vpack.c.b16 %v2400, %v2400
      %v2551 = vpack.c.b16 %v2401, %v2401
      %v2552 = vpack.c.b16 %v2402, %v2402
      %v2553 = vpack.c.b16 %v2403, %v2403
      %v2554 = vpack.c.b16 %v2404, %v2404
      %v2555 = vpack.c.b16 %v2405, %v2405
      %v2556 = vpack.c.b16 %v2406, %v2406
      %v2557 = vpack.c.b16 %v2407, %v2407
      %v2558 = vpack.c.b16 %v2408, %v2408
      %v2559 = vpack.c.b16 %v2409, %v2409
      %v2560 = vpack.c.b16 %v2410, %v2410
      %v2561 = vpack.c.b16 %v2411, %v2411
      %v2562 = vpack.c.b16 %v2412, %v2412
      %v2563 = vpack.c.b16 %v2413, %v2413
      %v2564 = vpack.c.b16 %v2414, %v2414
      %v2565 = vpack.c.b16 %v2415, %v2415
      %v2566 = vpack.c.b16 %v2416, %v2416
      %v2567 = vpack.c.b16 %v2417, %v2417
      %v2568 = vpack.c.b16 %v2418, %v2418
      %v2569 = vpack.c.b16 %v2419, %v2419
      %v2570 = vpack.c.b16 %v2420, %v2420
      %v2571 = vpack.c.b16 %v2421, %v2421
      %v2572 = vpack.c.b16 %v2422, %v2422
      %vm2723 = vcmask 519168
      %2724 = vst.msk [vmem:[%s175] sm:$0xf] %vm2723, %v2423
      %2725 = vst.msk [vmem:[%s175 + $0x4] sm:$0xf] %vm2723, %v2424
      %2726 = vst.msk [vmem:[%s175 + $0x8] sm:$0xf] %vm2723, %v2425
      %2727 = vst.msk [vmem:[%s175 + $0xc] sm:$0xf] %vm2723, %v2426
      %2728 = vst.msk [vmem:[%s175 + $0x10] sm:$0xf] %vm2723, %v2427
      %2729 = vst.msk [vmem:[%s175 + $0x14] sm:$0xf] %vm2723, %v2428
      %2730 = vst.msk [vmem:[%s175 + $0x18] sm:$0xf] %vm2723, %v2429
      %2731 = vst.msk [vmem:[%s175 + $0x1c] sm:$0xf] %vm2723, %v2430
      %2732 = vst.msk [vmem:[%s175 + $0x20] sm:$0xf] %vm2723, %v2431
      %2733 = vst.msk [vmem:[%s175 + $0x24] sm:$0xf] %vm2723, %v2432
      %2734 = vst.msk [vmem:[%s175 + $0x28] sm:$0xf] %vm2723, %v2433
      %2735 = vst.msk [vmem:[%s175 + $0x2c] sm:$0xf] %vm2723, %v2434
      %2736 = vst.msk [vmem:[%s175 + $0x30] sm:$0xf] %vm2723, %v2435
      %2737 = vst.msk [vmem:[%s175 + $0x34] sm:$0xf] %vm2723, %v2436
      %2738 = vst.msk [vmem:[%s175 + $0x38] sm:$0xf] %vm2723, %v2437
      %2739 = vst.msk [vmem:[%s175 + $0x3c] sm:$0xf] %vm2723, %v2438
      %2740 = vst.msk [vmem:[%s175 + $0x40] sm:$0xf] %vm2723, %v2439
      %2741 = vst.msk [vmem:[%s175 + $0x44] sm:$0xf] %vm2723, %v2440
      %2742 = vst.msk [vmem:[%s175 + $0x48] sm:$0xf] %vm2723, %v2441
      %2743 = vst.msk [vmem:[%s175 + $0x4c] sm:$0xf] %vm2723, %v2442
      %2744 = vst.msk [vmem:[%s175 + $0x50] sm:$0xf] %vm2723, %v2443
      %2745 = vst.msk [vmem:[%s175 + $0x54] sm:$0xf] %vm2723, %v2444
      %2746 = vst.msk [vmem:[%s175 + $0x58] sm:$0xf] %vm2723, %v2445
      %2747 = vst.msk [vmem:[%s175 + $0x5c] sm:$0xf] %vm2723, %v2446
      %2748 = vst.msk [vmem:[%s175 + $0x60] sm:$0xf] %vm2723, %v2447
      %2749 = vst.msk [vmem:[%s175 + $0x64] sm:$0xf] %vm2723, %v2448
      %2750 = vst.msk [vmem:[%s175 + $0x68] sm:$0xf] %vm2723, %v2449
      %2751 = vst.msk [vmem:[%s175 + $0x6c] sm:$0xf] %vm2723, %v2450
      %2752 = vst.msk [vmem:[%s175 + $0x70] sm:$0xf] %vm2723, %v2451
      %2753 = vst.msk [vmem:[%s175 + $0x74] sm:$0xf] %vm2723, %v2452
      %2754 = vst.msk [vmem:[%s175 + $0x78] sm:$0xf] %vm2723, %v2453
      %2755 = vst.msk [vmem:[%s175 + $0x7c] sm:$0xf] %vm2723, %v2454
      %2756 = vst.msk [vmem:[%s175 + $0x80] sm:$0xf] %vm2723, %v2455
      %2757 = vst.msk [vmem:[%s175 + $0x84] sm:$0xf] %vm2723, %v2456
      %2758 = vst.msk [vmem:[%s175 + $0x88] sm:$0xf] %vm2723, %v2457
      %2759 = vst.msk [vmem:[%s175 + $0x8c] sm:$0xf] %vm2723, %v2458
      %2760 = vst.msk [vmem:[%s175 + $0x90] sm:$0xf] %vm2723, %v2459
      %2761 = vst.msk [vmem:[%s175 + $0x94] sm:$0xf] %vm2723, %v2460
      %2762 = vst.msk [vmem:[%s175 + $0x98] sm:$0xf] %vm2723, %v2461
      %2763 = vst.msk [vmem:[%s175 + $0x9c] sm:$0xf] %vm2723, %v2462
      %2764 = vst.msk [vmem:[%s175 + $0xa0] sm:$0xf] %vm2723, %v2463
      %2765 = vst.msk [vmem:[%s175 + $0xa4] sm:$0xf] %vm2723, %v2464
      %2766 = vst.msk [vmem:[%s175 + $0xa8] sm:$0xf] %vm2723, %v2465
      %2767 = vst.msk [vmem:[%s175 + $0xac] sm:$0xf] %vm2723, %v2466
      %2768 = vst.msk [vmem:[%s175 + $0xb0] sm:$0xf] %vm2723, %v2467
      %2769 = vst.msk [vmem:[%s175 + $0xb4] sm:$0xf] %vm2723, %v2468
      %2770 = vst.msk [vmem:[%s175 + $0xb8] sm:$0xf] %vm2723, %v2469
      %2771 = vst.msk [vmem:[%s175 + $0xbc] sm:$0xf] %vm2723, %v2470
      %2772 = vst.msk [vmem:[%s175 + $0xc0] sm:$0xf] %vm2723, %v2471
      %2773 = vst.msk [vmem:[%s175 + $0xc4] sm:$0xf] %vm2723, %v2472
      %2774 = vst.msk [vmem:[%s175 + $0xc8] sm:$0xf] %vm2723, %v2473
      %2775 = vst.msk [vmem:[%s175 + $0xcc] sm:$0xf] %vm2723, %v2474
      %2776 = vst.msk [vmem:[%s175 + $0xd0] sm:$0xf] %vm2723, %v2475
      %2777 = vst.msk [vmem:[%s175 + $0xd4] sm:$0xf] %vm2723, %v2476
      %2778 = vst.msk [vmem:[%s175 + $0xd8] sm:$0xf] %vm2723, %v2477
      %2779 = vst.msk [vmem:[%s175 + $0xdc] sm:$0xf] %vm2723, %v2478
      %2780 = vst.msk [vmem:[%s175 + $0xe0] sm:$0xf] %vm2723, %v2479
      %2781 = vst.msk [vmem:[%s175 + $0xe4] sm:$0xf] %vm2723, %v2480
      %2782 = vst.msk [vmem:[%s175 + $0xe8] sm:$0xf] %vm2723, %v2481
      %2783 = vst.msk [vmem:[%s175 + $0xec] sm:$0xf] %vm2723, %v2482
      %2784 = vst.msk [vmem:[%s175 + $0xf0] sm:$0xf] %vm2723, %v2483
      %2785 = vst.msk [vmem:[%s175 + $0xf4] sm:$0xf] %vm2723, %v2484
      %2786 = vst.msk [vmem:[%s175 + $0xf8] sm:$0xf] %vm2723, %v2485
      %2787 = vst.msk [vmem:[%s175 + $0xfc] sm:$0xf] %vm2723, %v2486
      %2788 = vst.msk [vmem:[%s175 + $0x100] sm:$0xf] %vm2723, %v2487
      %2789 = vst.msk [vmem:[%s175 + $0x104] sm:$0xf] %vm2723, %v2488
      %2790 = vst.msk [vmem:[%s175 + $0x108] sm:$0xf] %vm2723, %v2489
      %2791 = vst.msk [vmem:[%s175 + $0x10c] sm:$0xf] %vm2723, %v2490
      %2792 = vst.msk [vmem:[%s175 + $0x110] sm:$0xf] %vm2723, %v2491
      %2793 = vst.msk [vmem:[%s175 + $0x114] sm:$0xf] %vm2723, %v2492
      %2794 = vst.msk [vmem:[%s175 + $0x118] sm:$0xf] %vm2723, %v2493
      %2795 = vst.msk [vmem:[%s175 + $0x11c] sm:$0xf] %vm2723, %v2494
      %2796 = vst.msk [vmem:[%s175 + $0x120] sm:$0xf] %vm2723, %v2495
      %2797 = vst.msk [vmem:[%s175 + $0x124] sm:$0xf] %vm2723, %v2496
      %2798 = vst.msk [vmem:[%s175 + $0x128] sm:$0xf] %vm2723, %v2497
      %2799 = vst.msk [vmem:[%s175 + $0x12c] sm:$0xf] %vm2723, %v2498
      %2800 = vst.msk [vmem:[%s175 + $0x130] sm:$0xf] %vm2723, %v2499
      %2801 = vst.msk [vmem:[%s175 + $0x134] sm:$0xf] %vm2723, %v2500
      %2802 = vst.msk [vmem:[%s175 + $0x138] sm:$0xf] %vm2723, %v2501
      %2803 = vst.msk [vmem:[%s175 + $0x13c] sm:$0xf] %vm2723, %v2502
      %2804 = vst.msk [vmem:[%s175 + $0x140] sm:$0xf] %vm2723, %v2503
      %2805 = vst.msk [vmem:[%s175 + $0x144] sm:$0xf] %vm2723, %v2504
      %2806 = vst.msk [vmem:[%s175 + $0x148] sm:$0xf] %vm2723, %v2505
      %2807 = vst.msk [vmem:[%s175 + $0x14c] sm:$0xf] %vm2723, %v2506
      %2808 = vst.msk [vmem:[%s175 + $0x150] sm:$0xf] %vm2723, %v2507
      %2809 = vst.msk [vmem:[%s175 + $0x154] sm:$0xf] %vm2723, %v2508
      %2810 = vst.msk [vmem:[%s175 + $0x158] sm:$0xf] %vm2723, %v2509
      %2811 = vst.msk [vmem:[%s175 + $0x15c] sm:$0xf] %vm2723, %v2510
      %2812 = vst.msk [vmem:[%s175 + $0x160] sm:$0xf] %vm2723, %v2511
      %2813 = vst.msk [vmem:[%s175 + $0x164] sm:$0xf] %vm2723, %v2512
      %2814 = vst.msk [vmem:[%s175 + $0x168] sm:$0xf] %vm2723, %v2513
      %2815 = vst.msk [vmem:[%s175 + $0x16c] sm:$0xf] %vm2723, %v2514
      %2816 = vst.msk [vmem:[%s175 + $0x170] sm:$0xf] %vm2723, %v2515
      %2817 = vst.msk [vmem:[%s175 + $0x174] sm:$0xf] %vm2723, %v2516
      %2818 = vst.msk [vmem:[%s175 + $0x178] sm:$0xf] %vm2723, %v2517
      %2819 = vst.msk [vmem:[%s175 + $0x17c] sm:$0xf] %vm2723, %v2518
      %2820 = vst.msk [vmem:[%s175 + $0x180] sm:$0xf] %vm2723, %v2519
      %2821 = vst.msk [vmem:[%s175 + $0x184] sm:$0xf] %vm2723, %v2520
      %2822 = vst.msk [vmem:[%s175 + $0x188] sm:$0xf] %vm2723, %v2521
      %2823 = vst.msk [vmem:[%s175 + $0x18c] sm:$0xf] %vm2723, %v2522
      %2824 = vst.msk [vmem:[%s175 + $0x190] sm:$0xf] %vm2723, %v2523
      %2825 = vst.msk [vmem:[%s175 + $0x194] sm:$0xf] %vm2723, %v2524
      %2826 = vst.msk [vmem:[%s175 + $0x198] sm:$0xf] %vm2723, %v2525
      %2827 = vst.msk [vmem:[%s175 + $0x19c] sm:$0xf] %vm2723, %v2526
      %2828 = vst.msk [vmem:[%s175 + $0x1a0] sm:$0xf] %vm2723, %v2527
      %2829 = vst.msk [vmem:[%s175 + $0x1a4] sm:$0xf] %vm2723, %v2528
      %2830 = vst.msk [vmem:[%s175 + $0x1a8] sm:$0xf] %vm2723, %v2529
      %2831 = vst.msk [vmem:[%s175 + $0x1ac] sm:$0xf] %vm2723, %v2530
      %2832 = vst.msk [vmem:[%s175 + $0x1b0] sm:$0xf] %vm2723, %v2531
      %2833 = vst.msk [vmem:[%s175 + $0x1b4] sm:$0xf] %vm2723, %v2532
      %2834 = vst.msk [vmem:[%s175 + $0x1b8] sm:$0xf] %vm2723, %v2533
      %2835 = vst.msk [vmem:[%s175 + $0x1bc] sm:$0xf] %vm2723, %v2534
      %2836 = vst.msk [vmem:[%s175 + $0x1c0] sm:$0xf] %vm2723, %v2535
      %2837 = vst.msk [vmem:[%s175 + $0x1c4] sm:$0xf] %vm2723, %v2536
      %2838 = vst.msk [vmem:[%s175 + $0x1c8] sm:$0xf] %vm2723, %v2537
      %2839 = vst.msk [vmem:[%s175 + $0x1cc] sm:$0xf] %vm2723, %v2538
      %2840 = vst.msk [vmem:[%s175 + $0x1d0] sm:$0xf] %vm2723, %v2539
      %2841 = vst.msk [vmem:[%s175 + $0x1d4] sm:$0xf] %vm2723, %v2540
      %2842 = vst.msk [vmem:[%s175 + $0x1d8] sm:$0xf] %vm2723, %v2541
      %2843 = vst.msk [vmem:[%s175 + $0x1dc] sm:$0xf] %vm2723, %v2542
      %2844 = vst.msk [vmem:[%s175 + $0x1e0] sm:$0xf] %vm2723, %v2543
      %2845 = vst.msk [vmem:[%s175 + $0x1e4] sm:$0xf] %vm2723, %v2544
      %2846 = vst.msk [vmem:[%s175 + $0x1e8] sm:$0xf] %vm2723, %v2545
      %2847 = vst.msk [vmem:[%s175 + $0x1ec] sm:$0xf] %vm2723, %v2546
      %2848 = vst.msk [vmem:[%s175 + $0x1f0] sm:$0xf] %vm2723, %v2547
      %2849 = vst.msk [vmem:[%s175 + $0x1f4] sm:$0xf] %vm2723, %v2548
      %2850 = vst.msk [vmem:[%s175 + $0x1f8] sm:$0xf] %vm2723, %v2549
      %2851 = vst.msk [vmem:[%s175 + $0x1fc] sm:$0xf] %vm2723, %v2550
      %2852 = vst.msk [vmem:[%s175 + $0x200] sm:$0xf] %vm2723, %v2551
      %2853 = vst.msk [vmem:[%s175 + $0x204] sm:$0xf] %vm2723, %v2552
      %2854 = vst.msk [vmem:[%s175 + $0x208] sm:$0xf] %vm2723, %v2553
      %2855 = vst.msk [vmem:[%s175 + $0x20c] sm:$0xf] %vm2723, %v2554
      %2856 = vst.msk [vmem:[%s175 + $0x210] sm:$0xf] %vm2723, %v2555
      %2857 = vst.msk [vmem:[%s175 + $0x214] sm:$0xf] %vm2723, %v2556
      %2858 = vst.msk [vmem:[%s175 + $0x218] sm:$0xf] %vm2723, %v2557
      %2859 = vst.msk [vmem:[%s175 + $0x21c] sm:$0xf] %vm2723, %v2558
      %2860 = vst.msk [vmem:[%s175 + $0x220] sm:$0xf] %vm2723, %v2559
      %2861 = vst.msk [vmem:[%s175 + $0x224] sm:$0xf] %vm2723, %v2560
      %2862 = vst.msk [vmem:[%s175 + $0x228] sm:$0xf] %vm2723, %v2561
      %2863 = vst.msk [vmem:[%s175 + $0x22c] sm:$0xf] %vm2723, %v2562
      %2864 = vst.msk [vmem:[%s175 + $0x230] sm:$0xf] %vm2723, %v2563
      %2865 = vst.msk [vmem:[%s175 + $0x234] sm:$0xf] %vm2723, %v2564
      %2866 = vst.msk [vmem:[%s175 + $0x238] sm:$0xf] %vm2723, %v2565
      %2867 = vst.msk [vmem:[%s175 + $0x23c] sm:$0xf] %vm2723, %v2566
      %2868 = vst.msk [vmem:[%s175 + $0x240] sm:$0xf] %vm2723, %v2567
      %2869 = vst.msk [vmem:[%s175 + $0x244] sm:$0xf] %vm2723, %v2568
      %2870 = vst.msk [vmem:[%s175 + $0x248] sm:$0xf] %vm2723, %v2569
      %2871 = vst.msk [vmem:[%s175 + $0x24c] sm:$0xf] %vm2723, %v2570
      %2872 = vst.msk [vmem:[%s175 + $0x250] sm:$0xf] %vm2723, %v2571
      %2873 = vst.msk [vmem:[%s175 + $0x254] sm:$0xf] %vm2723, %v2572
      %s2874 = smul.u32 150, %s14
      %p2875 = scmp.lt.s32.totalorder %s2874, 899
      %s2876 = scalar_select %p2875, %s2874, 899
      %s2877 = smul.addr %s2876, 4
      %s2878 = scalar_lea.vmem %s3, %s2877
      // Predicated region
      $region33: #{forward.5} parent=31 // pred_check
        %p2879 = pneg %p100
      $region34: #{forward.5} parent=31 // pred_check_branch
        %2881 = sbr.rel (%p2879) target = $region36
      $region35: #{forward.5} parent=31 // pred_region
        %s2882 = smul.u32 150, %s14
      $region36: #{forward.5} parent=31 // pred_fallthru
        _
    $region32: #{forward.5} parent=5 // pred_fallthru
      _
    %p2883 = scmp.le.s32.totalorder 2, %s9
    // Predicated region
    $region37: #{forward.5} parent=5 // pred_check
      %p2884 = pneg %p2883
    $region38: #{forward.5} parent=5 // pred_check_branch
      %2886 = sbr.rel (%p2884) target = $region40
    $region39: #{forward.5} parent=5 // pred_region
      %s2887 = ssub.s32 %s9, 2
      // Predicated region
      $region41: #{forward.5} parent=39 // pred_check
        %p2888 = pneg %p106
      $region42: #{forward.5} parent=39 // pred_check_branch
        %2890 = sbr.rel (%p2888) target = $region44
      $region43: #{forward.5} parent=39 // pred_region
        %s2891 = smul.u32 150, %s15
        %p2892 = scmp.lt.s32.totalorder %s2891, 899
        %s2893 = scalar_select %p2892, %s2891, 899
        %s2894 = smul.addr %s2893, 4
        %s2895 = scalar_lea.vmem %s3, %s2894
      $region44: #{forward.5} parent=39 // pred_fallthru
        _
    $region40: #{forward.5} parent=5 // pred_fallthru
      _
  $region6: #{forward.5} parent=0 // loop_footer
    %s13 = sadd.s32 1, %s9
  $region7: #{forward.5} parent=0 // loop_footer_branch
    %8 = sbr.rel target = $region3
  $region8: #{forward.5} parent=0 // loop_exit
    _

// kernel: forward.6
$region0: #{forward.6}
  #allocation0 [shape = 'u32[]', space=smem, size = 0x4, offset = 0x4, fixed_abs, tag = 'smem constant byte address 0x4 - core index']
  #allocation1 [shape = 'u32[144,128]{1,0:T(1,128)}', space=vmem, size = 0x12000, scoped, tag = 'internal scratch']
  %s0 = inlined_call_operand.vmem [shape: bf16[2,30,2,30,128], index: 0, kind: input, shape index: {}]
  %s1 = inlined_call_operand.vmem [shape: bf16[2,30,30,64], index: 1, kind: output, shape index: {}]
  %s2 = sld [smem:[#allocation0]]
  $region37: #{forward.6} parent=0
    _
  %s4 = ssub.s32 1, %s2
  %s5 = scalar_select 0, %s4, %s2
  loop: start=0, step=1, limit=4
  $region2: #{forward.6} parent=0 // loop_pre_header
    _
  $region3: #{forward.6} parent=0 // loop_header
    %s7 = sphi 0, %s11
    %p8 = scmp.ge.s32.totalorder %s7, 4
    %s17 = sphi 0, %s19
    %s20 = sphi 0, %s17
    %s21 = sphi 0, %s20
    %s37 = sphi 0, %s21
    %s43 = sphi 0, %s45
    %s46 = sphi 0, %s43
    %s47 = sphi 0, %s46
    %s63 = sphi 0, %s47
  $region4: #{forward.6} parent=0 // loop_header_branch
    %10 = sbr.rel (%p8) target = $region8
  $region5: #{forward.6} parent=0 // loop_body
    %s12 = ssub.s32 %s7, 1
    %s13 = ssub.s32 %s7, 2
    %s14 = sadd.s32 %s7, 1
    %s15 = ssub.s32 %s7, %s14
    %p16 = scmp.eq.s32.totalorder %s15, 0
    %s18 = sadd.s32 %s17, 1
    %s19 = scalar_select %p16, %s17, %s18
    %p22 = pneg %p16
    %p23 = scmp.eq.s32.totalorder %s7, 1
    %p24 = por %p22, %p23
    %p25 = scmp.ne.s32.totalorder %s17, %s20
    %p26 = scmp.eq.s32.totalorder %s7, 0
    %p27 = por %p25, %p26
    %p28 = scmp.ne.s32.totalorder %s17, %s20
    %p29 = scmp.eq.s32.totalorder %s12, 1
    %p30 = por %p28, %p29
    %p31 = scmp.ne.s32.totalorder %s20, %s21
    %p32 = scmp.eq.s32.totalorder %s12, 0
    %p33 = por %p31, %p32
    %p34 = scmp.ne.s32.totalorder %s20, %s21
    %p35 = scmp.eq.s32.totalorder %s13, 1
    %p36 = por %p34, %p35
    %p38 = scmp.ne.s32.totalorder %s21, %s37
    %p39 = scmp.eq.s32.totalorder %s13, 0
    %p40 = por %p38, %p39
    %s41 = ssub.s32 %s7, %s14
    %p42 = scmp.eq.s32.totalorder %s41, 0
    %s44 = sadd.s32 %s43, 1
    %s45 = scalar_select %p42, %s43, %s44
    %p48 = pneg %p42
    %p49 = scmp.eq.s32.totalorder %s7, 1
    %p50 = por %p48, %p49
    %p51 = scmp.ne.s32.totalorder %s43, %s46
    %p52 = scmp.eq.s32.totalorder %s7, 0
    %p53 = por %p51, %p52
    %p54 = scmp.ne.s32.totalorder %s43, %s46
    %p55 = scmp.eq.s32.totalorder %s12, 1
    %p56 = por %p54, %p55
    %p57 = scmp.ne.s32.totalorder %s46, %s47
    %p58 = scmp.eq.s32.totalorder %s12, 0
    %p59 = por %p57, %p58
    %p60 = scmp.ne.s32.totalorder %s46, %s47
    %p61 = scmp.eq.s32.totalorder %s13, 1
    %p62 = por %p60, %p61
    %p64 = scmp.ne.s32.totalorder %s47, %s63
    %p65 = scmp.eq.s32.totalorder %s13, 0
    %p66 = por %p64, %p65
    %p67 = scmp.le.s32.totalorder 1, %s7
    %p68 = scmp.lt.s32.totalorder %s7, 3
    %p69 = pnand %p67, %p68
    %p70 = pneg %p69
    // Predicated region
    $region9: #{forward.6} parent=5 // pred_check
      _
    $region10: #{forward.6} parent=5 // pred_check_branch
      %72 = sbr.rel (%p69) target = $region12
    $region11: #{forward.6} parent=5 // pred_region
      %s73 = ssub.s32 %s7, 1
    $region12: #{forward.6} parent=5 // pred_fallthru
      _
    %p74 = scmp.lt.s32.totalorder %s7, 2
    // Predicated region
    $region13: #{forward.6} parent=5 // pred_check
      %p75 = pneg %p74
    $region14: #{forward.6} parent=5 // pred_check_branch
      %77 = sbr.rel (%p75) target = $region16
    $region15: #{forward.6} parent=5 // pred_region
      // Predicated region
      $region17: #{forward.6} parent=15 // pred_check
        %p78 = pneg %p27
      $region18: #{forward.6} parent=15 // pred_check_branch
        %80 = sbr.rel (%p78) target = $region20
      $region19: #{forward.6} parent=15 // pred_region
        %p81 = scmp.lt.s32.totalorder %s7, 1
        %s82 = scalar_select %p81, %s7, 1
        %s83 = smul.addr %s82, 240
        %s84 = smul.addr %s83, 4
        %s85 = scalar_lea.vmem %s0, %s84
      $region20: #{forward.6} parent=15 // pred_fallthru
        _
    $region16: #{forward.6} parent=5 // pred_fallthru
      _
    %p86 = scmp.le.s32.totalorder 1, %s7
    %p87 = scmp.lt.s32.totalorder %s7, 3
    %p88 = pnand %p86, %p87
    %p89 = pneg %p88
    // Predicated region
    $region21: #{forward.6} parent=5 // pred_check
      _
    $region22: #{forward.6} parent=5 // pred_check_branch
      %91 = sbr.rel (%p88) target = $region24
    $region23: #{forward.6} parent=5 // pred_region
      %s92 = ssub.s32 %s7, 1
      %p93 = scmp.lt.s32.totalorder %s12, 1
      %s94 = scalar_select %p93, %s12, 1
      %s95 = smul.addr %s94, 240
      %s96 = smul.addr %s95, 4
      %s97 = scalar_lea.vmem %s0, %s96
      %p98 = pneg %p33
      %p99 = pneg %p30
      %p100 = pneg %p59
      %p101 = pneg %p56
      %p102 = scmp.lt.s32.totalorder %s12, 1
      %s103 = scalar_select %p102, %s12, 1
      %s104 = smul.addr %s103, 120
      %s105 = smul.addr %s104, 4
      %s106 = scalar_lea.vmem %s1, %s105
      %p107 = scmp.lt.s32.totalorder %s12, 1
      %s108 = scalar_select %p107, %s12, 1
      %s109 = smul.addr %s108, 240
      %s110 = smul.addr %s109, 4
      %s111 = scalar_lea.vmem %s0, %s110
      %p112 = scmp.lt.s32.totalorder %s12, 1
      %s113 = scalar_select %p112, %s12, 1
      %s114 = smul.addr %s113, 120
      %s115 = smul.addr %s114, 4
      %s116 = scalar_lea.vmem %s1, %s115
      %v117 = vld [vmem:[%s111] sm:$0xf]
      %v118 = vld [vmem:[%s111 + $0x4] sm:$0xf]
      %v119 = vld [vmem:[%s111 + $0x8] sm:$0xf]
      %v120 = vld [vmem:[%s111 + $0xc] sm:$0x7]
      %v121 = vld [vmem:[%s111 + $0x10] sm:$0xf]
      %v122 = vld [vmem:[%s111 + $0x14] sm:$0xf]
      %v123 = vld [vmem:[%s111 + $0x18] sm:$0xf]
      %v124 = vld [vmem:[%s111 + $0x1c] sm:$0x7]
      %v125 = vld [vmem:[%s111 + $0x20] sm:$0xf]
      %v126 = vld [vmem:[%s111 + $0x24] sm:$0xf]
      %v127 = vld [vmem:[%s111 + $0x28] sm:$0xf]
      %v128 = vld [vmem:[%s111 + $0x2c] sm:$0x7]
      %v129 = vld [vmem:[%s111 + $0x30] sm:$0xf]
      %v130 = vld [vmem:[%s111 + $0x34] sm:$0xf]
      %v131 = vld [vmem:[%s111 + $0x38] sm:$0xf]
      %v132 = vld [vmem:[%s111 + $0x3c] sm:$0x7]
      %v133 = vld [vmem:[%s111 + $0x40] sm:$0xf]
      %v134 = vld [vmem:[%s111 + $0x44] sm:$0xf]
      %v135 = vld [vmem:[%s111 + $0x48] sm:$0xf]
      %v136 = vld [vmem:[%s111 + $0x4c] sm:$0x7]
      %v137 = vld [vmem:[%s111 + $0x50] sm:$0xf]
      %v138 = vld [vmem:[%s111 + $0x54] sm:$0xf]
      %v139 = vld [vmem:[%s111 + $0x58] sm:$0xf]
      %v140 = vld [vmem:[%s111 + $0x5c] sm:$0x7]
      %v141 = vld [vmem:[%s111 + $0x60] sm:$0xf]
      %v142 = vld [vmem:[%s111 + $0x64] sm:$0xf]
      %v143 = vld [vmem:[%s111 + $0x68] sm:$0xf]
      %v144 = vld [vmem:[%s111 + $0x6c] sm:$0x7]
      %v145 = vld [vmem:[%s111 + $0x70] sm:$0xf]
      %v146 = vld [vmem:[%s111 + $0x74] sm:$0xf]
      %v147 = vld [vmem:[%s111 + $0x78] sm:$0xf]
      %v148 = vld [vmem:[%s111 + $0x7c] sm:$0x7]
      %v149 = vld [vmem:[%s111 + $0x80] sm:$0xf]
      %v150 = vld [vmem:[%s111 + $0x84] sm:$0xf]
      %v151 = vld [vmem:[%s111 + $0x88] sm:$0xf]
      %v152 = vld [vmem:[%s111 + $0x8c] sm:$0x7]
      %v153 = vld [vmem:[%s111 + $0x90] sm:$0xf]
      %v154 = vld [vmem:[%s111 + $0x94] sm:$0xf]
      %v155 = vld [vmem:[%s111 + $0x98] sm:$0xf]
      %v156 = vld [vmem:[%s111 + $0x9c] sm:$0x7]
      %v157 = vld [vmem:[%s111 + $0xa0] sm:$0xf]
      %v158 = vld [vmem:[%s111 + $0xa4] sm:$0xf]
      %v159 = vld [vmem:[%s111 + $0xa8] sm:$0xf]
      %v160 = vld [vmem:[%s111 + $0xac] sm:$0x7]
      %v161 = vld [vmem:[%s111 + $0xb0] sm:$0xf]
      %v162 = vld [vmem:[%s111 + $0xb4] sm:$0xf]
      %v163 = vld [vmem:[%s111 + $0xb8] sm:$0xf]
      %v164 = vld [vmem:[%s111 + $0xbc] sm:$0x7]
      %v165 = vld [vmem:[%s111 + $0xc0] sm:$0xf]
      %v166 = vld [vmem:[%s111 + $0xc4] sm:$0xf]
      %v167 = vld [vmem:[%s111 + $0xc8] sm:$0xf]
      %v168 = vld [vmem:[%s111 + $0xcc] sm:$0x7]
      %v169 = vld [vmem:[%s111 + $0xd0] sm:$0xf]
      %v170 = vld [vmem:[%s111 + $0xd4] sm:$0xf]
      %v171 = vld [vmem:[%s111 + $0xd8] sm:$0xf]
      %v172 = vld [vmem:[%s111 + $0xdc] sm:$0x7]
      %v173 = vld [vmem:[%s111 + $0xe0] sm:$0xf]
      %v174 = vld [vmem:[%s111 + $0xe4] sm:$0xf]
      %v175 = vld [vmem:[%s111 + $0xe8] sm:$0xf]
      %v176 = vld [vmem:[%s111 + $0xec] sm:$0x7]
      %v177 = vld [vmem:[%s111 + $0xf0] sm:$0xf]
      %v178 = vld [vmem:[%s111 + $0xf4] sm:$0xf]
      %v179 = vld [vmem:[%s111 + $0xf8] sm:$0xf]
      %v180 = vld [vmem:[%s111 + $0xfc] sm:$0x7]
      %v181 = vld [vmem:[%s111 + $0x100] sm:$0xf]
      %v182 = vld [vmem:[%s111 + $0x104] sm:$0xf]
      %v183 = vld [vmem:[%s111 + $0x108] sm:$0xf]
      %v184 = vld [vmem:[%s111 + $0x10c] sm:$0x7]
      %v185 = vld [vmem:[%s111 + $0x110] sm:$0xf]
      %v186 = vld [vmem:[%s111 + $0x114] sm:$0xf]
      %v187 = vld [vmem:[%s111 + $0x118] sm:$0xf]
      %v188 = vld [vmem:[%s111 + $0x11c] sm:$0x7]
      %v189 = vld [vmem:[%s111 + $0x120] sm:$0xf]
      %v190 = vld [vmem:[%s111 + $0x124] sm:$0xf]
      %v191 = vld [vmem:[%s111 + $0x128] sm:$0xf]
      %v192 = vld [vmem:[%s111 + $0x12c] sm:$0x7]
      %v193 = vld [vmem:[%s111 + $0x130] sm:$0xf]
      %v194 = vld [vmem:[%s111 + $0x134] sm:$0xf]
      %v195 = vld [vmem:[%s111 + $0x138] sm:$0xf]
      %v196 = vld [vmem:[%s111 + $0x13c] sm:$0x7]
      %v197 = vld [vmem:[%s111 + $0x140] sm:$0xf]
      %v198 = vld [vmem:[%s111 + $0x144] sm:$0xf]
      %v199 = vld [vmem:[%s111 + $0x148] sm:$0xf]
      %v200 = vld [vmem:[%s111 + $0x14c] sm:$0x7]
      %v201 = vld [vmem:[%s111 + $0x150] sm:$0xf]
      %v202 = vld [vmem:[%s111 + $0x154] sm:$0xf]
      %v203 = vld [vmem:[%s111 + $0x158] sm:$0xf]
      %v204 = vld [vmem:[%s111 + $0x15c] sm:$0x7]
      %v205 = vld [vmem:[%s111 + $0x160] sm:$0xf]
      %v206 = vld [vmem:[%s111 + $0x164] sm:$0xf]
      %v207 = vld [vmem:[%s111 + $0x168] sm:$0xf]
      %v208 = vld [vmem:[%s111 + $0x16c] sm:$0x7]
      %v209 = vld [vmem:[%s111 + $0x170] sm:$0xf]
      %v210 = vld [vmem:[%s111 + $0x174] sm:$0xf]
      %v211 = vld [vmem:[%s111 + $0x178] sm:$0xf]
      %v212 = vld [vmem:[%s111 + $0x17c] sm:$0x7]
      %v213 = vld [vmem:[%s111 + $0x180] sm:$0xf]
      %v214 = vld [vmem:[%s111 + $0x184] sm:$0xf]
      %v215 = vld [vmem:[%s111 + $0x188] sm:$0xf]
      %v216 = vld [vmem:[%s111 + $0x18c] sm:$0x7]
      %v217 = vld [vmem:[%s111 + $0x190] sm:$0xf]
      %v218 = vld [vmem:[%s111 + $0x194] sm:$0xf]
      %v219 = vld [vmem:[%s111 + $0x198] sm:$0xf]
      %v220 = vld [vmem:[%s111 + $0x19c] sm:$0x7]
      %v221 = vld [vmem:[%s111 + $0x1a0] sm:$0xf]
      %v222 = vld [vmem:[%s111 + $0x1a4] sm:$0xf]
      %v223 = vld [vmem:[%s111 + $0x1a8] sm:$0xf]
      %v224 = vld [vmem:[%s111 + $0x1ac] sm:$0x7]
      %v225 = vld [vmem:[%s111 + $0x1b0] sm:$0xf]
      %v226 = vld [vmem:[%s111 + $0x1b4] sm:$0xf]
      %v227 = vld [vmem:[%s111 + $0x1b8] sm:$0xf]
      %v228 = vld [vmem:[%s111 + $0x1bc] sm:$0x7]
      %v229 = vld [vmem:[%s111 + $0x1c0] sm:$0xf]
      %v230 = vld [vmem:[%s111 + $0x1c4] sm:$0xf]
      %v231 = vld [vmem:[%s111 + $0x1c8] sm:$0xf]
      %v232 = vld [vmem:[%s111 + $0x1cc] sm:$0x7]
      %v233 = vld [vmem:[%s111 + $0x1d0] sm:$0xf]
      %v234 = vld [vmem:[%s111 + $0x1d4] sm:$0xf]
      %v235 = vld [vmem:[%s111 + $0x1d8] sm:$0xf]
      %v236 = vld [vmem:[%s111 + $0x1dc] sm:$0x7]
      %v237 = vld [vmem:[%s111 + $0x1e0] sm:$0xf]
      %v238 = vld [vmem:[%s111 + $0x1e4] sm:$0xf]
      %v239 = vld [vmem:[%s111 + $0x1e8] sm:$0xf]
      %v240 = vld [vmem:[%s111 + $0x1ec] sm:$0x7]
      %v241 = vld [vmem:[%s111 + $0x1f0] sm:$0xf]
      %v242 = vld [vmem:[%s111 + $0x1f4] sm:$0xf]
      %v243 = vld [vmem:[%s111 + $0x1f8] sm:$0xf]
      %v244 = vld [vmem:[%s111 + $0x1fc] sm:$0x7]
      %v245 = vld [vmem:[%s111 + $0x200] sm:$0xf]
      %v246 = vld [vmem:[%s111 + $0x204] sm:$0xf]
      %v247 = vld [vmem:[%s111 + $0x208] sm:$0xf]
      %v248 = vld [vmem:[%s111 + $0x20c] sm:$0x7]
      %v249 = vld [vmem:[%s111 + $0x210] sm:$0xf]
      %v250 = vld [vmem:[%s111 + $0x214] sm:$0xf]
      %v251 = vld [vmem:[%s111 + $0x218] sm:$0xf]
      %v252 = vld [vmem:[%s111 + $0x21c] sm:$0x7]
      %v253 = vld [vmem:[%s111 + $0x220] sm:$0xf]
      %v254 = vld [vmem:[%s111 + $0x224] sm:$0xf]
      %v255 = vld [vmem:[%s111 + $0x228] sm:$0xf]
      %v256 = vld [vmem:[%s111 + $0x22c] sm:$0x7]
      %v257 = vld [vmem:[%s111 + $0x230] sm:$0xf]
      %v258 = vld [vmem:[%s111 + $0x234] sm:$0xf]
      %v259 = vld [vmem:[%s111 + $0x238] sm:$0xf]
      %v260 = vld [vmem:[%s111 + $0x23c] sm:$0x7]
      %v261 = vld [vmem:[%s111 + $0x240] sm:$0xf]
      %v262 = vld [vmem:[%s111 + $0x244] sm:$0xf]
      %v263 = vld [vmem:[%s111 + $0x248] sm:$0xf]
      %v264 = vld [vmem:[%s111 + $0x24c] sm:$0x7]
      %v265 = vld [vmem:[%s111 + $0x250] sm:$0xf]
      %v266 = vld [vmem:[%s111 + $0x254] sm:$0xf]
      %v267 = vld [vmem:[%s111 + $0x258] sm:$0xf]
      %v268 = vld [vmem:[%s111 + $0x25c] sm:$0x7]
      %v269 = vld [vmem:[%s111 + $0x260] sm:$0xf]
      %v270 = vld [vmem:[%s111 + $0x264] sm:$0xf]
      %v271 = vld [vmem:[%s111 + $0x268] sm:$0xf]
      %v272 = vld [vmem:[%s111 + $0x26c] sm:$0x7]
      %v273 = vld [vmem:[%s111 + $0x270] sm:$0xf]
      %v274 = vld [vmem:[%s111 + $0x274] sm:$0xf]
      %v275 = vld [vmem:[%s111 + $0x278] sm:$0xf]
      %v276 = vld [vmem:[%s111 + $0x27c] sm:$0x7]
      %v277 = vld [vmem:[%s111 + $0x280] sm:$0xf]
      %v278 = vld [vmem:[%s111 + $0x284] sm:$0xf]
      %v279 = vld [vmem:[%s111 + $0x288] sm:$0xf]
      %v280 = vld [vmem:[%s111 + $0x28c] sm:$0x7]
      %v281 = vld [vmem:[%s111 + $0x290] sm:$0xf]
      %v282 = vld [vmem:[%s111 + $0x294] sm:$0xf]
      %v283 = vld [vmem:[%s111 + $0x298] sm:$0xf]
      %v284 = vld [vmem:[%s111 + $0x29c] sm:$0x7]
      %v285 = vld [vmem:[%s111 + $0x2a0] sm:$0xf]
      %v286 = vld [vmem:[%s111 + $0x2a4] sm:$0xf]
      %v287 = vld [vmem:[%s111 + $0x2a8] sm:$0xf]
      %v288 = vld [vmem:[%s111 + $0x2ac] sm:$0x7]
      %v289 = vld [vmem:[%s111 + $0x2b0] sm:$0xf]
      %v290 = vld [vmem:[%s111 + $0x2b4] sm:$0xf]
      %v291 = vld [vmem:[%s111 + $0x2b8] sm:$0xf]
      %v292 = vld [vmem:[%s111 + $0x2bc] sm:$0x7]
      %v293 = vld [vmem:[%s111 + $0x2c0] sm:$0xf]
      %v294 = vld [vmem:[%s111 + $0x2c4] sm:$0xf]
      %v295 = vld [vmem:[%s111 + $0x2c8] sm:$0xf]
      %v296 = vld [vmem:[%s111 + $0x2cc] sm:$0x7]
      %v297 = vld [vmem:[%s111 + $0x2d0] sm:$0xf]
      %v298 = vld [vmem:[%s111 + $0x2d4] sm:$0xf]
      %v299 = vld [vmem:[%s111 + $0x2d8] sm:$0xf]
      %v300 = vld [vmem:[%s111 + $0x2dc] sm:$0x7]
      %v301 = vld [vmem:[%s111 + $0x2e0] sm:$0xf]
      %v302 = vld [vmem:[%s111 + $0x2e4] sm:$0xf]
      %v303 = vld [vmem:[%s111 + $0x2e8] sm:$0xf]
      %v304 = vld [vmem:[%s111 + $0x2ec] sm:$0x7]
      %v305 = vld [vmem:[%s111 + $0x2f0] sm:$0xf]
      %v306 = vld [vmem:[%s111 + $0x2f4] sm:$0xf]
      %v307 = vld [vmem:[%s111 + $0x2f8] sm:$0xf]
      %v308 = vld [vmem:[%s111 + $0x2fc] sm:$0x7]
      %v309 = vld [vmem:[%s111 + $0x300] sm:$0xf]
      %v310 = vld [vmem:[%s111 + $0x304] sm:$0xf]
      %v311 = vld [vmem:[%s111 + $0x308] sm:$0xf]
      %v312 = vld [vmem:[%s111 + $0x30c] sm:$0x7]
      %v313 = vld [vmem:[%s111 + $0x310] sm:$0xf]
      %v314 = vld [vmem:[%s111 + $0x314] sm:$0xf]
      %v315 = vld [vmem:[%s111 + $0x318] sm:$0xf]
      %v316 = vld [vmem:[%s111 + $0x31c] sm:$0x7]
      %v317 = vld [vmem:[%s111 + $0x320] sm:$0xf]
      %v318 = vld [vmem:[%s111 + $0x324] sm:$0xf]
      %v319 = vld [vmem:[%s111 + $0x328] sm:$0xf]
      %v320 = vld [vmem:[%s111 + $0x32c] sm:$0x7]
      %v321 = vld [vmem:[%s111 + $0x330] sm:$0xf]
      %v322 = vld [vmem:[%s111 + $0x334] sm:$0xf]
      %v323 = vld [vmem:[%s111 + $0x338] sm:$0xf]
      %v324 = vld [vmem:[%s111 + $0x33c] sm:$0x7]
      %v325 = vld [vmem:[%s111 + $0x340] sm:$0xf]
      %v326 = vld [vmem:[%s111 + $0x344] sm:$0xf]
      %v327 = vld [vmem:[%s111 + $0x348] sm:$0xf]
      %v328 = vld [vmem:[%s111 + $0x34c] sm:$0x7]
      %v329 = vld [vmem:[%s111 + $0x350] sm:$0xf]
      %v330 = vld [vmem:[%s111 + $0x354] sm:$0xf]
      %v331 = vld [vmem:[%s111 + $0x358] sm:$0xf]
      %v332 = vld [vmem:[%s111 + $0x35c] sm:$0x7]
      %v333 = vld [vmem:[%s111 + $0x360] sm:$0xf]
      %v334 = vld [vmem:[%s111 + $0x364] sm:$0xf]
      %v335 = vld [vmem:[%s111 + $0x368] sm:$0xf]
      %v336 = vld [vmem:[%s111 + $0x36c] sm:$0x7]
      %v337 = vld [vmem:[%s111 + $0x370] sm:$0xf]
      %v338 = vld [vmem:[%s111 + $0x374] sm:$0xf]
      %v339 = vld [vmem:[%s111 + $0x378] sm:$0xf]
      %v340 = vld [vmem:[%s111 + $0x37c] sm:$0x7]
      %v341 = vld [vmem:[%s111 + $0x380] sm:$0xf]
      %v342 = vld [vmem:[%s111 + $0x384] sm:$0xf]
      %v343 = vld [vmem:[%s111 + $0x388] sm:$0xf]
      %v344 = vld [vmem:[%s111 + $0x38c] sm:$0x7]
      %v345 = vld [vmem:[%s111 + $0x390] sm:$0xf]
      %v346 = vld [vmem:[%s111 + $0x394] sm:$0xf]
      %v347 = vld [vmem:[%s111 + $0x398] sm:$0xf]
      %v348 = vld [vmem:[%s111 + $0x39c] sm:$0x7]
      %v349 = vld [vmem:[%s111 + $0x3a0] sm:$0xf]
      %v350 = vld [vmem:[%s111 + $0x3a4] sm:$0xf]
      %v351 = vld [vmem:[%s111 + $0x3a8] sm:$0xf]
      %v352 = vld [vmem:[%s111 + $0x3ac] sm:$0x7]
      %v353 = vld [vmem:[%s111 + $0x3b0] sm:$0xf]
      %v354 = vld [vmem:[%s111 + $0x3b4] sm:$0xf]
      %v355 = vld [vmem:[%s111 + $0x3b8] sm:$0xf]
      %v356 = vld [vmem:[%s111 + $0x3bc] sm:$0x7]
      %v357 = vmax.bf16 %v117, %v121
      %v358 = vmax.bf16 %v118, %v122
      %v359 = vmax.bf16 %v119, %v123
      %v360 = vmax.bf16 %v120, %v124
      %v361 = vmax.bf16 %v125, %v129
      %v362 = vmax.bf16 %v126, %v130
      %v363 = vmax.bf16 %v127, %v131
      %v364 = vmax.bf16 %v128, %v132
      %v365 = vmax.bf16 %v133, %v137
      %v366 = vmax.bf16 %v134, %v138
      %v367 = vmax.bf16 %v135, %v139
      %v368 = vmax.bf16 %v136, %v140
      %v369 = vmax.bf16 %v141, %v145
      %v370 = vmax.bf16 %v142, %v146
      %v371 = vmax.bf16 %v143, %v147
      %v372 = vmax.bf16 %v144, %v148
      %v373 = vmax.bf16 %v149, %v153
      %v374 = vmax.bf16 %v150, %v154
      %v375 = vmax.bf16 %v151, %v155
      %v376 = vmax.bf16 %v152, %v156
      %v377 = vmax.bf16 %v157, %v161
      %v378 = vmax.bf16 %v158, %v162
      %v379 = vmax.bf16 %v159, %v163
      %v380 = vmax.bf16 %v160, %v164
      %v381 = vmax.bf16 %v165, %v169
      %v382 = vmax.bf16 %v166, %v170
      %v383 = vmax.bf16 %v167, %v171
      %v384 = vmax.bf16 %v168, %v172
      %v385 = vmax.bf16 %v173, %v177
      %v386 = vmax.bf16 %v174, %v178
      %v387 = vmax.bf16 %v175, %v179
      %v388 = vmax.bf16 %v176, %v180
      %v389 = vmax.bf16 %v181, %v185
      %v390 = vmax.bf16 %v182, %v186
      %v391 = vmax.bf16 %v183, %v187
      %v392 = vmax.bf16 %v184, %v188
      %v393 = vmax.bf16 %v189, %v193
      %v394 = vmax.bf16 %v190, %v194
      %v395 = vmax.bf16 %v191, %v195
      %v396 = vmax.bf16 %v192, %v196
      %v397 = vmax.bf16 %v197, %v201
      %v398 = vmax.bf16 %v198, %v202
      %v399 = vmax.bf16 %v199, %v203
      %v400 = vmax.bf16 %v200, %v204
      %v401 = vmax.bf16 %v205, %v209
      %v402 = vmax.bf16 %v206, %v210
      %v403 = vmax.bf16 %v207, %v211
      %v404 = vmax.bf16 %v208, %v212
      %v405 = vmax.bf16 %v213, %v217
      %v406 = vmax.bf16 %v214, %v218
      %v407 = vmax.bf16 %v215, %v219
      %v408 = vmax.bf16 %v216, %v220
      %v409 = vmax.bf16 %v221, %v225
      %v410 = vmax.bf16 %v222, %v226
      %v411 = vmax.bf16 %v223, %v227
      %v412 = vmax.bf16 %v224, %v228
      %v413 = vmax.bf16 %v229, %v233
      %v414 = vmax.bf16 %v230, %v234
      %v415 = vmax.bf16 %v231, %v235
      %v416 = vmax.bf16 %v232, %v236
      %v417 = vmax.bf16 %v237, %v241
      %v418 = vmax.bf16 %v238, %v242
      %v419 = vmax.bf16 %v239, %v243
      %v420 = vmax.bf16 %v240, %v244
      %v421 = vmax.bf16 %v245, %v249
      %v422 = vmax.bf16 %v246, %v250
      %v423 = vmax.bf16 %v247, %v251
      %v424 = vmax.bf16 %v248, %v252
      %v425 = vmax.bf16 %v253, %v257
      %v426 = vmax.bf16 %v254, %v258
      %v427 = vmax.bf16 %v255, %v259
      %v428 = vmax.bf16 %v256, %v260
      %v429 = vmax.bf16 %v261, %v265
      %v430 = vmax.bf16 %v262, %v266
      %v431 = vmax.bf16 %v263, %v267
      %v432 = vmax.bf16 %v264, %v268
      %v433 = vmax.bf16 %v269, %v273
      %v434 = vmax.bf16 %v270, %v274
      %v435 = vmax.bf16 %v271, %v275
      %v436 = vmax.bf16 %v272, %v276
      %v437 = vmax.bf16 %v277, %v281
      %v438 = vmax.bf16 %v278, %v282
      %v439 = vmax.bf16 %v279, %v283
      %v440 = vmax.bf16 %v280, %v284
      %v441 = vmax.bf16 %v285, %v289
      %v442 = vmax.bf16 %v286, %v290
      %v443 = vmax.bf16 %v287, %v291
      %v444 = vmax.bf16 %v288, %v292
      %v445 = vmax.bf16 %v293, %v297
      %v446 = vmax.bf16 %v294, %v298
      %v447 = vmax.bf16 %v295, %v299
      %v448 = vmax.bf16 %v296, %v300
      %v449 = vmax.bf16 %v301, %v305
      %v450 = vmax.bf16 %v302, %v306
      %v451 = vmax.bf16 %v303, %v307
      %v452 = vmax.bf16 %v304, %v308
      %v453 = vmax.bf16 %v309, %v313
      %v454 = vmax.bf16 %v310, %v314
      %v455 = vmax.bf16 %v311, %v315
      %v456 = vmax.bf16 %v312, %v316
      %v457 = vmax.bf16 %v317, %v321
      %v458 = vmax.bf16 %v318, %v322
      %v459 = vmax.bf16 %v319, %v323
      %v460 = vmax.bf16 %v320, %v324
      %v461 = vmax.bf16 %v325, %v329
      %v462 = vmax.bf16 %v326, %v330
      %v463 = vmax.bf16 %v327, %v331
      %v464 = vmax.bf16 %v328, %v332
      %v465 = vmax.bf16 %v333, %v337
      %v466 = vmax.bf16 %v334, %v338
      %v467 = vmax.bf16 %v335, %v339
      %v468 = vmax.bf16 %v336, %v340
      %v469 = vmax.bf16 %v341, %v345
      %v470 = vmax.bf16 %v342, %v346
      %v471 = vmax.bf16 %v343, %v347
      %v472 = vmax.bf16 %v344, %v348
      %v473 = vmax.bf16 %v349, %v353
      %v474 = vmax.bf16 %v350, %v354
      %v475 = vmax.bf16 %v351, %v355
      %v476 = vmax.bf16 %v352, %v356
      %597 = vrot.lane.b32.xlu0 %v357, 64
      %v598 = vpop.permute.xlu0 %597
      %599 = vrot.lane.b32.xlu0 %v358, 64
      %v600 = vpop.permute.xlu0 %599
      %601 = vrot.lane.b32.xlu0 %v359, 64
      %v602 = vpop.permute.xlu0 %601
      %603 = vrot.lane.b32.xlu0 %v360, 64
      %v604 = vpop.permute.xlu0 %603
      %605 = vrot.lane.b32.xlu0 %v361, 64
      %v606 = vpop.permute.xlu0 %605
      %607 = vrot.lane.b32.xlu0 %v362, 64
      %v608 = vpop.permute.xlu0 %607
      %609 = vrot.lane.b32.xlu0 %v363, 64
      %v610 = vpop.permute.xlu0 %609
      %611 = vrot.lane.b32.xlu0 %v364, 64
      %v612 = vpop.permute.xlu0 %611
      %613 = vrot.lane.b32.xlu0 %v365, 64
      %v614 = vpop.permute.xlu0 %613
      %615 = vrot.lane.b32.xlu0 %v366, 64
      %v616 = vpop.permute.xlu0 %615
      %617 = vrot.lane.b32.xlu0 %v367, 64
      %v618 = vpop.permute.xlu0 %617
      %619 = vrot.lane.b32.xlu0 %v368, 64
      %v620 = vpop.permute.xlu0 %619
      %621 = vrot.lane.b32.xlu0 %v369, 64
      %v622 = vpop.permute.xlu0 %621
      %623 = vrot.lane.b32.xlu0 %v370, 64
      %v624 = vpop.permute.xlu0 %623
      %625 = vrot.lane.b32.xlu0 %v371, 64
      %v626 = vpop.permute.xlu0 %625
      %627 = vrot.lane.b32.xlu0 %v372, 64
      %v628 = vpop.permute.xlu0 %627
      %629 = vrot.lane.b32.xlu0 %v373, 64
      %v630 = vpop.permute.xlu0 %629
      %631 = vrot.lane.b32.xlu0 %v374, 64
      %v632 = vpop.permute.xlu0 %631
      %633 = vrot.lane.b32.xlu0 %v375, 64
      %v634 = vpop.permute.xlu0 %633
      %635 = vrot.lane.b32.xlu0 %v376, 64
      %v636 = vpop.permute.xlu0 %635
      %637 = vrot.lane.b32.xlu0 %v377, 64
      %v638 = vpop.permute.xlu0 %637
      %639 = vrot.lane.b32.xlu0 %v378, 64
      %v640 = vpop.permute.xlu0 %639
      %641 = vrot.lane.b32.xlu0 %v379, 64
      %v642 = vpop.permute.xlu0 %641
      %643 = vrot.lane.b32.xlu0 %v380, 64
      %v644 = vpop.permute.xlu0 %643
      %645 = vrot.lane.b32.xlu0 %v381, 64
      %v646 = vpop.permute.xlu0 %645
      %647 = vrot.lane.b32.xlu0 %v382, 64
      %v648 = vpop.permute.xlu0 %647
      %649 = vrot.lane.b32.xlu0 %v383, 64
      %v650 = vpop.permute.xlu0 %649
      %651 = vrot.lane.b32.xlu0 %v384, 64
      %v652 = vpop.permute.xlu0 %651
      %653 = vrot.lane.b32.xlu0 %v385, 64
      %v654 = vpop.permute.xlu0 %653
      %655 = vrot.lane.b32.xlu0 %v386, 64
      %v656 = vpop.permute.xlu0 %655
      %657 = vrot.lane.b32.xlu0 %v387, 64
      %v658 = vpop.permute.xlu0 %657
      %659 = vrot.lane.b32.xlu0 %v388, 64
      %v660 = vpop.permute.xlu0 %659
      %661 = vrot.lane.b32.xlu0 %v389, 64
      %v662 = vpop.permute.xlu0 %661
      %663 = vrot.lane.b32.xlu0 %v390, 64
      %v664 = vpop.permute.xlu0 %663
      %665 = vrot.lane.b32.xlu0 %v391, 64
      %v666 = vpop.permute.xlu0 %665
      %667 = vrot.lane.b32.xlu0 %v392, 64
      %v668 = vpop.permute.xlu0 %667
      %669 = vrot.lane.b32.xlu0 %v393, 64
      %v670 = vpop.permute.xlu0 %669
      %671 = vrot.lane.b32.xlu0 %v394, 64
      %v672 = vpop.permute.xlu0 %671
      %673 = vrot.lane.b32.xlu0 %v395, 64
      %v674 = vpop.permute.xlu0 %673
      %675 = vrot.lane.b32.xlu0 %v396, 64
      %v676 = vpop.permute.xlu0 %675
      %677 = vrot.lane.b32.xlu0 %v397, 64
      %v678 = vpop.permute.xlu0 %677
      %679 = vrot.lane.b32.xlu0 %v398, 64
      %v680 = vpop.permute.xlu0 %679
      %681 = vrot.lane.b32.xlu0 %v399, 64
      %v682 = vpop.permute.xlu0 %681
      %683 = vrot.lane.b32.xlu0 %v400, 64
      %v684 = vpop.permute.xlu0 %683
      %685 = vrot.lane.b32.xlu0 %v401, 64
      %v686 = vpop.permute.xlu0 %685
      %687 = vrot.lane.b32.xlu0 %v402, 64
      %v688 = vpop.permute.xlu0 %687
      %689 = vrot.lane.b32.xlu0 %v403, 64
      %v690 = vpop.permute.xlu0 %689
      %691 = vrot.lane.b32.xlu0 %v404, 64
      %v692 = vpop.permute.xlu0 %691
      %693 = vrot.lane.b32.xlu0 %v405, 64
      %v694 = vpop.permute.xlu0 %693
      %695 = vrot.lane.b32.xlu0 %v406, 64
      %v696 = vpop.permute.xlu0 %695
      %697 = vrot.lane.b32.xlu0 %v407, 64
      %v698 = vpop.permute.xlu0 %697
      %699 = vrot.lane.b32.xlu0 %v408, 64
      %v700 = vpop.permute.xlu0 %699
      %701 = vrot.lane.b32.xlu0 %v409, 64
      %v702 = vpop.permute.xlu0 %701
      %703 = vrot.lane.b32.xlu0 %v410, 64
      %v704 = vpop.permute.xlu0 %703
      %705 = vrot.lane.b32.xlu0 %v411, 64
      %v706 = vpop.permute.xlu0 %705
      %707 = vrot.lane.b32.xlu0 %v412, 64
      %v708 = vpop.permute.xlu0 %707
      %709 = vrot.lane.b32.xlu0 %v413, 64
      %v710 = vpop.permute.xlu0 %709
      %711 = vrot.lane.b32.xlu0 %v414, 64
      %v712 = vpop.permute.xlu0 %711
      %713 = vrot.lane.b32.xlu0 %v415, 64
      %v714 = vpop.permute.xlu0 %713
      %715 = vrot.lane.b32.xlu0 %v416, 64
      %v716 = vpop.permute.xlu0 %715
      %717 = vrot.lane.b32.xlu0 %v417, 64
      %v718 = vpop.permute.xlu0 %717
      %719 = vrot.lane.b32.xlu0 %v418, 64
      %v720 = vpop.permute.xlu0 %719
      %721 = vrot.lane.b32.xlu0 %v419, 64
      %v722 = vpop.permute.xlu0 %721
      %723 = vrot.lane.b32.xlu0 %v420, 64
      %v724 = vpop.permute.xlu0 %723
      %725 = vrot.lane.b32.xlu0 %v421, 64
      %v726 = vpop.permute.xlu0 %725
      %727 = vrot.lane.b32.xlu0 %v422, 64
      %v728 = vpop.permute.xlu0 %727
      %729 = vrot.lane.b32.xlu0 %v423, 64
      %v730 = vpop.permute.xlu0 %729
      %731 = vrot.lane.b32.xlu0 %v424, 64
      %v732 = vpop.permute.xlu0 %731
      %733 = vrot.lane.b32.xlu0 %v425, 64
      %v734 = vpop.permute.xlu0 %733
      %735 = vrot.lane.b32.xlu0 %v426, 64
      %v736 = vpop.permute.xlu0 %735
      %737 = vrot.lane.b32.xlu0 %v427, 64
      %v738 = vpop.permute.xlu0 %737
      %739 = vrot.lane.b32.xlu0 %v428, 64
      %v740 = vpop.permute.xlu0 %739
      %741 = vrot.lane.b32.xlu0 %v429, 64
      %v742 = vpop.permute.xlu0 %741
      %743 = vrot.lane.b32.xlu0 %v430, 64
      %v744 = vpop.permute.xlu0 %743
      %745 = vrot.lane.b32.xlu0 %v431, 64
      %v746 = vpop.permute.xlu0 %745
      %747 = vrot.lane.b32.xlu0 %v432, 64
      %v748 = vpop.permute.xlu0 %747
      %749 = vrot.lane.b32.xlu0 %v433, 64
      %v750 = vpop.permute.xlu0 %749
      %751 = vrot.lane.b32.xlu0 %v434, 64
      %v752 = vpop.permute.xlu0 %751
      %753 = vrot.lane.b32.xlu0 %v435, 64
      %v754 = vpop.permute.xlu0 %753
      %755 = vrot.lane.b32.xlu0 %v436, 64
      %v756 = vpop.permute.xlu0 %755
      %757 = vrot.lane.b32.xlu0 %v437, 64
      %v758 = vpop.permute.xlu0 %757
      %759 = vrot.lane.b32.xlu0 %v438, 64
      %v760 = vpop.permute.xlu0 %759
      %761 = vrot.lane.b32.xlu0 %v439, 64
      %v762 = vpop.permute.xlu0 %761
      %763 = vrot.lane.b32.xlu0 %v440, 64
      %v764 = vpop.permute.xlu0 %763
      %765 = vrot.lane.b32.xlu0 %v441, 64
      %v766 = vpop.permute.xlu0 %765
      %767 = vrot.lane.b32.xlu0 %v442, 64
      %v768 = vpop.permute.xlu0 %767
      %769 = vrot.lane.b32.xlu0 %v443, 64
      %v770 = vpop.permute.xlu0 %769
      %771 = vrot.lane.b32.xlu0 %v444, 64
      %v772 = vpop.permute.xlu0 %771
      %773 = vrot.lane.b32.xlu0 %v445, 64
      %v774 = vpop.permute.xlu0 %773
      %775 = vrot.lane.b32.xlu0 %v446, 64
      %v776 = vpop.permute.xlu0 %775
      %777 = vrot.lane.b32.xlu0 %v447, 64
      %v778 = vpop.permute.xlu0 %777
      %779 = vrot.lane.b32.xlu0 %v448, 64
      %v780 = vpop.permute.xlu0 %779
      %781 = vrot.lane.b32.xlu0 %v449, 64
      %v782 = vpop.permute.xlu0 %781
      %783 = vrot.lane.b32.xlu0 %v450, 64
      %v784 = vpop.permute.xlu0 %783
      %785 = vrot.lane.b32.xlu0 %v451, 64
      %v786 = vpop.permute.xlu0 %785
      %787 = vrot.lane.b32.xlu0 %v452, 64
      %v788 = vpop.permute.xlu0 %787
      %789 = vrot.lane.b32.xlu0 %v453, 64
      %v790 = vpop.permute.xlu0 %789
      %791 = vrot.lane.b32.xlu0 %v454, 64
      %v792 = vpop.permute.xlu0 %791
      %793 = vrot.lane.b32.xlu0 %v455, 64
      %v794 = vpop.permute.xlu0 %793
      %795 = vrot.lane.b32.xlu0 %v456, 64
      %v796 = vpop.permute.xlu0 %795
      %797 = vrot.lane.b32.xlu0 %v457, 64
      %v798 = vpop.permute.xlu0 %797
      %799 = vrot.lane.b32.xlu0 %v458, 64
      %v800 = vpop.permute.xlu0 %799
      %801 = vrot.lane.b32.xlu0 %v459, 64
      %v802 = vpop.permute.xlu0 %801
      %803 = vrot.lane.b32.xlu0 %v460, 64
      %v804 = vpop.permute.xlu0 %803
      %805 = vrot.lane.b32.xlu0 %v461, 64
      %v806 = vpop.permute.xlu0 %805
      %807 = vrot.lane.b32.xlu0 %v462, 64
      %v808 = vpop.permute.xlu0 %807
      %809 = vrot.lane.b32.xlu0 %v463, 64
      %v810 = vpop.permute.xlu0 %809
      %811 = vrot.lane.b32.xlu0 %v464, 64
      %v812 = vpop.permute.xlu0 %811
      %813 = vrot.lane.b32.xlu0 %v465, 64
      %v814 = vpop.permute.xlu0 %813
      %815 = vrot.lane.b32.xlu0 %v466, 64
      %v816 = vpop.permute.xlu0 %815
      %817 = vrot.lane.b32.xlu0 %v467, 64
      %v818 = vpop.permute.xlu0 %817
      %819 = vrot.lane.b32.xlu0 %v468, 64
      %v820 = vpop.permute.xlu0 %819
      %821 = vrot.lane.b32.xlu0 %v469, 64
      %v822 = vpop.permute.xlu0 %821
      %823 = vrot.lane.b32.xlu0 %v470, 64
      %v824 = vpop.permute.xlu0 %823
      %825 = vrot.lane.b32.xlu0 %v471, 64
      %v826 = vpop.permute.xlu0 %825
      %827 = vrot.lane.b32.xlu0 %v472, 64
      %v828 = vpop.permute.xlu0 %827
      %829 = vrot.lane.b32.xlu0 %v473, 64
      %v830 = vpop.permute.xlu0 %829
      %831 = vrot.lane.b32.xlu0 %v474, 64
      %v832 = vpop.permute.xlu0 %831
      %833 = vrot.lane.b32.xlu0 %v475, 64
      %v834 = vpop.permute.xlu0 %833
      %835 = vrot.lane.b32.xlu0 %v476, 64
      %v836 = vpop.permute.xlu0 %835
      %v957 = vmax.bf16 %v357, %v598
      %v958 = vmax.bf16 %v358, %v600
      %v959 = vmax.bf16 %v359, %v602
      %v960 = vmax.bf16 %v360, %v604
      %v961 = vmax.bf16 %v361, %v606
      %v962 = vmax.bf16 %v362, %v608
      %v963 = vmax.bf16 %v363, %v610
      %v964 = vmax.bf16 %v364, %v612
      %v965 = vmax.bf16 %v365, %v614
      %v966 = vmax.bf16 %v366, %v616
      %v967 = vmax.bf16 %v367, %v618
      %v968 = vmax.bf16 %v368, %v620
      %v969 = vmax.bf16 %v369, %v622
      %v970 = vmax.bf16 %v370, %v624
      %v971 = vmax.bf16 %v371, %v626
      %v972 = vmax.bf16 %v372, %v628
      %v973 = vmax.bf16 %v373, %v630
      %v974 = vmax.bf16 %v374, %v632
      %v975 = vmax.bf16 %v375, %v634
      %v976 = vmax.bf16 %v376, %v636
      %v977 = vmax.bf16 %v377, %v638
      %v978 = vmax.bf16 %v378, %v640
      %v979 = vmax.bf16 %v379, %v642
      %v980 = vmax.bf16 %v380, %v644
      %v981 = vmax.bf16 %v381, %v646
      %v982 = vmax.bf16 %v382, %v648
      %v983 = vmax.bf16 %v383, %v650
      %v984 = vmax.bf16 %v384, %v652
      %v985 = vmax.bf16 %v385, %v654
      %v986 = vmax.bf16 %v386, %v656
      %v987 = vmax.bf16 %v387, %v658
      %v988 = vmax.bf16 %v388, %v660
      %v989 = vmax.bf16 %v389, %v662
      %v990 = vmax.bf16 %v390, %v664
      %v991 = vmax.bf16 %v391, %v666
      %v992 = vmax.bf16 %v392, %v668
      %v993 = vmax.bf16 %v393, %v670
      %v994 = vmax.bf16 %v394, %v672
      %v995 = vmax.bf16 %v395, %v674
      %v996 = vmax.bf16 %v396, %v676
      %v997 = vmax.bf16 %v397, %v678
      %v998 = vmax.bf16 %v398, %v680
      %v999 = vmax.bf16 %v399, %v682
      %v1000 = vmax.bf16 %v400, %v684
      %v1001 = vmax.bf16 %v401, %v686
      %v1002 = vmax.bf16 %v402, %v688
      %v1003 = vmax.bf16 %v403, %v690
      %v1004 = vmax.bf16 %v404, %v692
      %v1005 = vmax.bf16 %v405, %v694
      %v1006 = vmax.bf16 %v406, %v696
      %v1007 = vmax.bf16 %v407, %v698
      %v1008 = vmax.bf16 %v408, %v700
      %v1009 = vmax.bf16 %v409, %v702
      %v1010 = vmax.bf16 %v410, %v704
      %v1011 = vmax.bf16 %v411, %v706
      %v1012 = vmax.bf16 %v412, %v708
      %v1013 = vmax.bf16 %v413, %v710
      %v1014 = vmax.bf16 %v414, %v712
      %v1015 = vmax.bf16 %v415, %v714
      %v1016 = vmax.bf16 %v416, %v716
      %v1017 = vmax.bf16 %v417, %v718
      %v1018 = vmax.bf16 %v418, %v720
      %v1019 = vmax.bf16 %v419, %v722
      %v1020 = vmax.bf16 %v420, %v724
      %v1021 = vmax.bf16 %v421, %v726
      %v1022 = vmax.bf16 %v422, %v728
      %v1023 = vmax.bf16 %v423, %v730
      %v1024 = vmax.bf16 %v424, %v732
      %v1025 = vmax.bf16 %v425, %v734
      %v1026 = vmax.bf16 %v426, %v736
      %v1027 = vmax.bf16 %v427, %v738
      %v1028 = vmax.bf16 %v428, %v740
      %v1029 = vmax.bf16 %v429, %v742
      %v1030 = vmax.bf16 %v430, %v744
      %v1031 = vmax.bf16 %v431, %v746
      %v1032 = vmax.bf16 %v432, %v748
      %v1033 = vmax.bf16 %v433, %v750
      %v1034 = vmax.bf16 %v434, %v752
      %v1035 = vmax.bf16 %v435, %v754
      %v1036 = vmax.bf16 %v436, %v756
      %v1037 = vmax.bf16 %v437, %v758
      %v1038 = vmax.bf16 %v438, %v760
      %v1039 = vmax.bf16 %v439, %v762
      %v1040 = vmax.bf16 %v440, %v764
      %v1041 = vmax.bf16 %v441, %v766
      %v1042 = vmax.bf16 %v442, %v768
      %v1043 = vmax.bf16 %v443, %v770
      %v1044 = vmax.bf16 %v444, %v772
      %v1045 = vmax.bf16 %v445, %v774
      %v1046 = vmax.bf16 %v446, %v776
      %v1047 = vmax.bf16 %v447, %v778
      %v1048 = vmax.bf16 %v448, %v780
      %v1049 = vmax.bf16 %v449, %v782
      %v1050 = vmax.bf16 %v450, %v784
      %v1051 = vmax.bf16 %v451, %v786
      %v1052 = vmax.bf16 %v452, %v788
      %v1053 = vmax.bf16 %v453, %v790
      %v1054 = vmax.bf16 %v454, %v792
      %v1055 = vmax.bf16 %v455, %v794
      %v1056 = vmax.bf16 %v456, %v796
      %v1057 = vmax.bf16 %v457, %v798
      %v1058 = vmax.bf16 %v458, %v800
      %v1059 = vmax.bf16 %v459, %v802
      %v1060 = vmax.bf16 %v460, %v804
      %v1061 = vmax.bf16 %v461, %v806
      %v1062 = vmax.bf16 %v462, %v808
      %v1063 = vmax.bf16 %v463, %v810
      %v1064 = vmax.bf16 %v464, %v812
      %v1065 = vmax.bf16 %v465, %v814
      %v1066 = vmax.bf16 %v466, %v816
      %v1067 = vmax.bf16 %v467, %v818
      %v1068 = vmax.bf16 %v468, %v820
      %v1069 = vmax.bf16 %v469, %v822
      %v1070 = vmax.bf16 %v470, %v824
      %v1071 = vmax.bf16 %v471, %v826
      %v1072 = vmax.bf16 %v472, %v828
      %v1073 = vmax.bf16 %v473, %v830
      %v1074 = vmax.bf16 %v474, %v832
      %v1075 = vmax.bf16 %v475, %v834
      %v1076 = vmax.bf16 %v476, %v836
      %vm1077 = vcmask 519168
      %1078 = vst.msk [vmem:[%s116] sm:$0xf] %vm1077, %v957
      %1079 = vst.msk [vmem:[%s116 + $0x4] sm:$0xf] %vm1077, %v958
      %1080 = vst.msk [vmem:[%s116 + $0x8] sm:$0xf] %vm1077, %v959
      %vm1081 = vcmask 518144
      %1082 = vst.msk [vmem:[%s116 + $0xc] sm:$0x7] %vm1081, %v960
      %1083 = vst.msk [vmem:[%s116 + $0x10] sm:$0xf] %vm1077, %v961
      %1084 = vst.msk [vmem:[%s116 + $0x14] sm:$0xf] %vm1077, %v962
      %1085 = vst.msk [vmem:[%s116 + $0x18] sm:$0xf] %vm1077, %v963
      %1086 = vst.msk [vmem:[%s116 + $0x1c] sm:$0x7] %vm1081, %v964
      %1087 = vst.msk [vmem:[%s116 + $0x20] sm:$0xf] %vm1077, %v965
      %1088 = vst.msk [vmem:[%s116 + $0x24] sm:$0xf] %vm1077, %v966
      %1089 = vst.msk [vmem:[%s116 + $0x28] sm:$0xf] %vm1077, %v967
      %1090 = vst.msk [vmem:[%s116 + $0x2c] sm:$0x7] %vm1081, %v968
      %1091 = vst.msk [vmem:[%s116 + $0x30] sm:$0xf] %vm1077, %v969
      %1092 = vst.msk [vmem:[%s116 + $0x34] sm:$0xf] %vm1077, %v970
      %1093 = vst.msk [vmem:[%s116 + $0x38] sm:$0xf] %vm1077, %v971
      %1094 = vst.msk [vmem:[%s116 + $0x3c] sm:$0x7] %vm1081, %v972
      %1095 = vst.msk [vmem:[%s116 + $0x40] sm:$0xf] %vm1077, %v973
      %1096 = vst.msk [vmem:[%s116 + $0x44] sm:$0xf] %vm1077, %v974
      %1097 = vst.msk [vmem:[%s116 + $0x48] sm:$0xf] %vm1077, %v975
      %1098 = vst.msk [vmem:[%s116 + $0x4c] sm:$0x7] %vm1081, %v976
      %1099 = vst.msk [vmem:[%s116 + $0x50] sm:$0xf] %vm1077, %v977
      %1100 = vst.msk [vmem:[%s116 + $0x54] sm:$0xf] %vm1077, %v978
      %1101 = vst.msk [vmem:[%s116 + $0x58] sm:$0xf] %vm1077, %v979
      %1102 = vst.msk [vmem:[%s116 + $0x5c] sm:$0x7] %vm1081, %v980
      %1103 = vst.msk [vmem:[%s116 + $0x60] sm:$0xf] %vm1077, %v981
      %1104 = vst.msk [vmem:[%s116 + $0x64] sm:$0xf] %vm1077, %v982
      %1105 = vst.msk [vmem:[%s116 + $0x68] sm:$0xf] %vm1077, %v983
      %1106 = vst.msk [vmem:[%s116 + $0x6c] sm:$0x7] %vm1081, %v984
      %1107 = vst.msk [vmem:[%s116 + $0x70] sm:$0xf] %vm1077, %v985
      %1108 = vst.msk [vmem:[%s116 + $0x74] sm:$0xf] %vm1077, %v986
      %1109 = vst.msk [vmem:[%s116 + $0x78] sm:$0xf] %vm1077, %v987
      %1110 = vst.msk [vmem:[%s116 + $0x7c] sm:$0x7] %vm1081, %v988
      %1111 = vst.msk [vmem:[%s116 + $0x80] sm:$0xf] %vm1077, %v989
      %1112 = vst.msk [vmem:[%s116 + $0x84] sm:$0xf] %vm1077, %v990
      %1113 = vst.msk [vmem:[%s116 + $0x88] sm:$0xf] %vm1077, %v991
      %1114 = vst.msk [vmem:[%s116 + $0x8c] sm:$0x7] %vm1081, %v992
      %1115 = vst.msk [vmem:[%s116 + $0x90] sm:$0xf] %vm1077, %v993
      %1116 = vst.msk [vmem:[%s116 + $0x94] sm:$0xf] %vm1077, %v994
      %1117 = vst.msk [vmem:[%s116 + $0x98] sm:$0xf] %vm1077, %v995
      %1118 = vst.msk [vmem:[%s116 + $0x9c] sm:$0x7] %vm1081, %v996
      %1119 = vst.msk [vmem:[%s116 + $0xa0] sm:$0xf] %vm1077, %v997
      %1120 = vst.msk [vmem:[%s116 + $0xa4] sm:$0xf] %vm1077, %v998
      %1121 = vst.msk [vmem:[%s116 + $0xa8] sm:$0xf] %vm1077, %v999
      %1122 = vst.msk [vmem:[%s116 + $0xac] sm:$0x7] %vm1081, %v1000
      %1123 = vst.msk [vmem:[%s116 + $0xb0] sm:$0xf] %vm1077, %v1001
      %1124 = vst.msk [vmem:[%s116 + $0xb4] sm:$0xf] %vm1077, %v1002
      %1125 = vst.msk [vmem:[%s116 + $0xb8] sm:$0xf] %vm1077, %v1003
      %1126 = vst.msk [vmem:[%s116 + $0xbc] sm:$0x7] %vm1081, %v1004
      %1127 = vst.msk [vmem:[%s116 + $0xc0] sm:$0xf] %vm1077, %v1005
      %1128 = vst.msk [vmem:[%s116 + $0xc4] sm:$0xf] %vm1077, %v1006
      %1129 = vst.msk [vmem:[%s116 + $0xc8] sm:$0xf] %vm1077, %v1007
      %1130 = vst.msk [vmem:[%s116 + $0xcc] sm:$0x7] %vm1081, %v1008
      %1131 = vst.msk [vmem:[%s116 + $0xd0] sm:$0xf] %vm1077, %v1009
      %1132 = vst.msk [vmem:[%s116 + $0xd4] sm:$0xf] %vm1077, %v1010
      %1133 = vst.msk [vmem:[%s116 + $0xd8] sm:$0xf] %vm1077, %v1011
      %1134 = vst.msk [vmem:[%s116 + $0xdc] sm:$0x7] %vm1081, %v1012
      %1135 = vst.msk [vmem:[%s116 + $0xe0] sm:$0xf] %vm1077, %v1013
      %1136 = vst.msk [vmem:[%s116 + $0xe4] sm:$0xf] %vm1077, %v1014
      %1137 = vst.msk [vmem:[%s116 + $0xe8] sm:$0xf] %vm1077, %v1015
      %1138 = vst.msk [vmem:[%s116 + $0xec] sm:$0x7] %vm1081, %v1016
      %1139 = vst.msk [vmem:[%s116 + $0xf0] sm:$0xf] %vm1077, %v1017
      %1140 = vst.msk [vmem:[%s116 + $0xf4] sm:$0xf] %vm1077, %v1018
      %1141 = vst.msk [vmem:[%s116 + $0xf8] sm:$0xf] %vm1077, %v1019
      %1142 = vst.msk [vmem:[%s116 + $0xfc] sm:$0x7] %vm1081, %v1020
      %1143 = vst.msk [vmem:[%s116 + $0x100] sm:$0xf] %vm1077, %v1021
      %1144 = vst.msk [vmem:[%s116 + $0x104] sm:$0xf] %vm1077, %v1022
      %1145 = vst.msk [vmem:[%s116 + $0x108] sm:$0xf] %vm1077, %v1023
      %1146 = vst.msk [vmem:[%s116 + $0x10c] sm:$0x7] %vm1081, %v1024
      %1147 = vst.msk [vmem:[%s116 + $0x110] sm:$0xf] %vm1077, %v1025
      %1148 = vst.msk [vmem:[%s116 + $0x114] sm:$0xf] %vm1077, %v1026
      %1149 = vst.msk [vmem:[%s116 + $0x118] sm:$0xf] %vm1077, %v1027
      %1150 = vst.msk [vmem:[%s116 + $0x11c] sm:$0x7] %vm1081, %v1028
      %1151 = vst.msk [vmem:[%s116 + $0x120] sm:$0xf] %vm1077, %v1029
      %1152 = vst.msk [vmem:[%s116 + $0x124] sm:$0xf] %vm1077, %v1030
      %1153 = vst.msk [vmem:[%s116 + $0x128] sm:$0xf] %vm1077, %v1031
      %1154 = vst.msk [vmem:[%s116 + $0x12c] sm:$0x7] %vm1081, %v1032
      %1155 = vst.msk [vmem:[%s116 + $0x130] sm:$0xf] %vm1077, %v1033
      %1156 = vst.msk [vmem:[%s116 + $0x134] sm:$0xf] %vm1077, %v1034
      %1157 = vst.msk [vmem:[%s116 + $0x138] sm:$0xf] %vm1077, %v1035
      %1158 = vst.msk [vmem:[%s116 + $0x13c] sm:$0x7] %vm1081, %v1036
      %1159 = vst.msk [vmem:[%s116 + $0x140] sm:$0xf] %vm1077, %v1037
      %1160 = vst.msk [vmem:[%s116 + $0x144] sm:$0xf] %vm1077, %v1038
      %1161 = vst.msk [vmem:[%s116 + $0x148] sm:$0xf] %vm1077, %v1039
      %1162 = vst.msk [vmem:[%s116 + $0x14c] sm:$0x7] %vm1081, %v1040
      %1163 = vst.msk [vmem:[%s116 + $0x150] sm:$0xf] %vm1077, %v1041
      %1164 = vst.msk [vmem:[%s116 + $0x154] sm:$0xf] %vm1077, %v1042
      %1165 = vst.msk [vmem:[%s116 + $0x158] sm:$0xf] %vm1077, %v1043
      %1166 = vst.msk [vmem:[%s116 + $0x15c] sm:$0x7] %vm1081, %v1044
      %1167 = vst.msk [vmem:[%s116 + $0x160] sm:$0xf] %vm1077, %v1045
      %1168 = vst.msk [vmem:[%s116 + $0x164] sm:$0xf] %vm1077, %v1046
      %1169 = vst.msk [vmem:[%s116 + $0x168] sm:$0xf] %vm1077, %v1047
      %1170 = vst.msk [vmem:[%s116 + $0x16c] sm:$0x7] %vm1081, %v1048
      %1171 = vst.msk [vmem:[%s116 + $0x170] sm:$0xf] %vm1077, %v1049
      %1172 = vst.msk [vmem:[%s116 + $0x174] sm:$0xf] %vm1077, %v1050
      %1173 = vst.msk [vmem:[%s116 + $0x178] sm:$0xf] %vm1077, %v1051
      %1174 = vst.msk [vmem:[%s116 + $0x17c] sm:$0x7] %vm1081, %v1052
      %1175 = vst.msk [vmem:[%s116 + $0x180] sm:$0xf] %vm1077, %v1053
      %1176 = vst.msk [vmem:[%s116 + $0x184] sm:$0xf] %vm1077, %v1054
      %1177 = vst.msk [vmem:[%s116 + $0x188] sm:$0xf] %vm1077, %v1055
      %1178 = vst.msk [vmem:[%s116 + $0x18c] sm:$0x7] %vm1081, %v1056
      %1179 = vst.msk [vmem:[%s116 + $0x190] sm:$0xf] %vm1077, %v1057
      %1180 = vst.msk [vmem:[%s116 + $0x194] sm:$0xf] %vm1077, %v1058
      %1181 = vst.msk [vmem:[%s116 + $0x198] sm:$0xf] %vm1077, %v1059
      %1182 = vst.msk [vmem:[%s116 + $0x19c] sm:$0x7] %vm1081, %v1060
      %1183 = vst.msk [vmem:[%s116 + $0x1a0] sm:$0xf] %vm1077, %v1061
      %1184 = vst.msk [vmem:[%s116 + $0x1a4] sm:$0xf] %vm1077, %v1062
      %1185 = vst.msk [vmem:[%s116 + $0x1a8] sm:$0xf] %vm1077, %v1063
      %1186 = vst.msk [vmem:[%s116 + $0x1ac] sm:$0x7] %vm1081, %v1064
      %1187 = vst.msk [vmem:[%s116 + $0x1b0] sm:$0xf] %vm1077, %v1065
      %1188 = vst.msk [vmem:[%s116 + $0x1b4] sm:$0xf] %vm1077, %v1066
      %1189 = vst.msk [vmem:[%s116 + $0x1b8] sm:$0xf] %vm1077, %v1067
      %1190 = vst.msk [vmem:[%s116 + $0x1bc] sm:$0x7] %vm1081, %v1068
      %1191 = vst.msk [vmem:[%s116 + $0x1c0] sm:$0xf] %vm1077, %v1069
      %1192 = vst.msk [vmem:[%s116 + $0x1c4] sm:$0xf] %vm1077, %v1070
      %1193 = vst.msk [vmem:[%s116 + $0x1c8] sm:$0xf] %vm1077, %v1071
      %1194 = vst.msk [vmem:[%s116 + $0x1cc] sm:$0x7] %vm1081, %v1072
      %1195 = vst.msk [vmem:[%s116 + $0x1d0] sm:$0xf] %vm1077, %v1073
      %1196 = vst.msk [vmem:[%s116 + $0x1d4] sm:$0xf] %vm1077, %v1074
      %1197 = vst.msk [vmem:[%s116 + $0x1d8] sm:$0xf] %vm1077, %v1075
      %1198 = vst.msk [vmem:[%s116 + $0x1dc] sm:$0x7] %vm1081, %v1076
      %p1199 = scmp.lt.s32.totalorder %s12, 1
      %s1200 = scalar_select %p1199, %s12, 1
      %s1201 = smul.addr %s1200, 120
      %s1202 = smul.addr %s1201, 4
      %s1203 = scalar_lea.vmem %s1, %s1202
      // Predicated region
      $region25: #{forward.6} parent=23 // pred_check
        %p1204 = pneg %p56
      $region26: #{forward.6} parent=23 // pred_check_branch
        %1206 = sbr.rel (%p1204) target = $region28
      $region27: #{forward.6} parent=23 // pred_region
        _
      $region28: #{forward.6} parent=23 // pred_fallthru
        _
    $region24: #{forward.6} parent=5 // pred_fallthru
      _
    %p1207 = scmp.le.s32.totalorder 2, %s7
    // Predicated region
    $region29: #{forward.6} parent=5 // pred_check
      %p1208 = pneg %p1207
    $region30: #{forward.6} parent=5 // pred_check_branch
      %1210 = sbr.rel (%p1208) target = $region32
    $region31: #{forward.6} parent=5 // pred_region
      %s1211 = ssub.s32 %s7, 2
      // Predicated region
      $region33: #{forward.6} parent=31 // pred_check
        %p1212 = pneg %p62
      $region34: #{forward.6} parent=31 // pred_check_branch
        %1214 = sbr.rel (%p1212) target = $region36
      $region35: #{forward.6} parent=31 // pred_region
        %p1215 = scmp.lt.s32.totalorder %s13, 1
        %s1216 = scalar_select %p1215, %s13, 1
        %s1217 = smul.addr %s1216, 120
        %s1218 = smul.addr %s1217, 4
        %s1219 = scalar_lea.vmem %s1, %s1218
      $region36: #{forward.6} parent=31 // pred_fallthru
        _
    $region32: #{forward.6} parent=5 // pred_fallthru
      _
  $region6: #{forward.6} parent=0 // loop_footer
    %s11 = sadd.s32 1, %s7
  $region7: #{forward.6} parent=0 // loop_footer_branch
    %6 = sbr.rel target = $region3
  $region8: #{forward.6} parent=0 // loop_exit
    _

// kernel: forward.7
$region0: #{forward.7}
  #allocation0 [shape = 'u32[]', space=smem, size = 0x4, offset = 0x4, fixed_abs, tag = 'smem constant byte address 0x4 - core index']
  #allocation1 [shape = 'u32[144,128]{1,0:T(1,128)}', space=vmem, size = 0x12000, scoped, tag = 'internal scratch']
  %s0 = inlined_call_operand.vmem [shape: bf16[1568,576], index: 0, kind: input, shape index: {}]
  %s1 = inlined_call_operand.vmem [shape: bf16[576,128], index: 1, kind: input, shape index: {}]
  %s2 = inlined_call_operand.vmem [shape: f32[1,128], index: 2, kind: input, shape index: {}]
  %s3 = inlined_call_operand.vmem [shape: bf16[1568,128], index: 3, kind: output, shape index: {}]
  %s4 = sld [smem:[#allocation0]]
  $region45: #{forward.7} parent=0
    _
  %s6 = ssub.s32 1, %s4
  %s7 = scalar_select 0, %s6, %s4
  loop: start=0, step=1, limit=4
  $region2: #{forward.7} parent=0 // loop_pre_header
    _
  $region3: #{forward.7} parent=0 // loop_header
    %s9 = sphi 0, %s13
    %p10 = scmp.ge.s32.totalorder %s9, 4
    %s19 = sphi 0, %s21
    %s22 = sphi 0, %s19
    %s23 = sphi 0, %s22
    %s39 = sphi 0, %s23
    %s43 = sphi 0, %s43
    %s45 = sphi 0, %s43
    %s46 = sphi 0, %s45
    %s60 = sphi 0, %s46
    %s64 = sphi 0, %s64
    %s66 = sphi 0, %s64
    %s67 = sphi 0, %s66
    %s81 = sphi 0, %s67
    %s87 = sphi 0, %s89
    %s90 = sphi 0, %s87
    %s91 = sphi 0, %s90
    %s107 = sphi 0, %s91
  $region4: #{forward.7} parent=0 // loop_header_branch
    %12 = sbr.rel (%p10) target = $region8
  $region5: #{forward.7} parent=0 // loop_body
    %s14 = ssub.s32 %s9, 1
    %s15 = ssub.s32 %s9, 2
    %s16 = sadd.s32 %s9, 1
    %s17 = ssub.s32 %s9, %s16
    %p18 = scmp.eq.s32.totalorder %s17, 0
    %s20 = sadd.s32 %s19, 1
    %s21 = scalar_select %p18, %s19, %s20
    %p24 = pneg %p18
    %p25 = scmp.eq.s32.totalorder %s9, 1
    %p26 = por %p24, %p25
    %p27 = scmp.ne.s32.totalorder %s19, %s22
    %p28 = scmp.eq.s32.totalorder %s9, 0
    %p29 = por %p27, %p28
    %p30 = scmp.ne.s32.totalorder %s19, %s22
    %p31 = scmp.eq.s32.totalorder %s14, 1
    %p32 = por %p30, %p31
    %p33 = scmp.ne.s32.totalorder %s22, %s23
    %p34 = scmp.eq.s32.totalorder %s14, 0
    %p35 = por %p33, %p34
    %p36 = scmp.ne.s32.totalorder %s22, %s23
    %p37 = scmp.eq.s32.totalorder %s15, 1
    %p38 = por %p36, %p37
    %p40 = scmp.ne.s32.totalorder %s23, %s39
    %p41 = scmp.eq.s32.totalorder %s15, 0
    %p42 = por %p40, %p41
    %s44 = sadd.s32 %s43, 1
    %p47 = scmp.eq.s32.totalorder %s9, 1
    %p48 = scmp.ne.s32.totalorder %s43, %s45
    %p49 = scmp.eq.s32.totalorder %s9, 0
    %p50 = por %p48, %p49
    %p51 = scmp.ne.s32.totalorder %s43, %s45
    %p52 = scmp.eq.s32.totalorder %s14, 1
    %p53 = por %p51, %p52
    %p54 = scmp.ne.s32.totalorder %s45, %s46
    %p55 = scmp.eq.s32.totalorder %s14, 0
    %p56 = por %p54, %p55
    %p57 = scmp.ne.s32.totalorder %s45, %s46
    %p58 = scmp.eq.s32.totalorder %s15, 1
    %p59 = por %p57, %p58
    %p61 = scmp.ne.s32.totalorder %s46, %s60
    %p62 = scmp.eq.s32.totalorder %s15, 0
    %p63 = por %p61, %p62
    %s65 = sadd.s32 %s64, 1
    %p68 = scmp.eq.s32.totalorder %s9, 1
    %p69 = scmp.ne.s32.totalorder %s64, %s66
    %p70 = scmp.eq.s32.totalorder %s9, 0
    %p71 = por %p69, %p70
    %p72 = scmp.ne.s32.totalorder %s64, %s66
    %p73 = scmp.eq.s32.totalorder %s14, 1
    %p74 = por %p72, %p73
    %p75 = scmp.ne.s32.totalorder %s66, %s67
    %p76 = scmp.eq.s32.totalorder %s14, 0
    %p77 = por %p75, %p76
    %p78 = scmp.ne.s32.totalorder %s66, %s67
    %p79 = scmp.eq.s32.totalorder %s15, 1
    %p80 = por %p78, %p79
    %p82 = scmp.ne.s32.totalorder %s67, %s81
    %p83 = scmp.eq.s32.totalorder %s15, 0
    %p84 = por %p82, %p83
    %s85 = ssub.s32 %s9, %s16
    %p86 = scmp.eq.s32.totalorder %s85, 0
    %s88 = sadd.s32 %s87, 1
    %s89 = scalar_select %p86, %s87, %s88
    %p92 = pneg %p86
    %p93 = scmp.eq.s32.totalorder %s9, 1
    %p94 = por %p92, %p93
    %p95 = scmp.ne.s32.totalorder %s87, %s90
    %p96 = scmp.eq.s32.totalorder %s9, 0
    %p97 = por %p95, %p96
    %p98 = scmp.ne.s32.totalorder %s87, %s90
    %p99 = scmp.eq.s32.totalorder %s14, 1
    %p100 = por %p98, %p99
    %p101 = scmp.ne.s32.totalorder %s90, %s91
    %p102 = scmp.eq.s32.totalorder %s14, 0
    %p103 = por %p101, %p102
    %p104 = scmp.ne.s32.totalorder %s90, %s91
    %p105 = scmp.eq.s32.totalorder %s15, 1
    %p106 = por %p104, %p105
    %p108 = scmp.ne.s32.totalorder %s91, %s107
    %p109 = scmp.eq.s32.totalorder %s15, 0
    %p110 = por %p108, %p109
    %p111 = scmp.le.s32.totalorder 1, %s9
    %p112 = scmp.lt.s32.totalorder %s9, 3
    %p113 = pnand %p111, %p112
    %p114 = pneg %p113
    // Predicated region
    $region9: #{forward.7} parent=5 // pred_check
      _
    $region10: #{forward.7} parent=5 // pred_check_branch
      %116 = sbr.rel (%p113) target = $region12
    $region11: #{forward.7} parent=5 // pred_region
      %s117 = ssub.s32 %s9, 1
      // Predicated region
      $region13: #{forward.7} parent=11 // pred_check
        %p118 = pneg %p56
      $region14: #{forward.7} parent=11 // pred_check_branch
        %120 = sbr.rel (%p118) target = $region16
      $region15: #{forward.7} parent=11 // pred_region
        _
      $region16: #{forward.7} parent=11 // pred_fallthru
        _
      // Predicated region
      $region17: #{forward.7} parent=11 // pred_check
        %p121 = pneg %p77
      $region18: #{forward.7} parent=11 // pred_check_branch
        %123 = sbr.rel (%p121) target = $region20
      $region19: #{forward.7} parent=11 // pred_region
        _
      $region20: #{forward.7} parent=11 // pred_fallthru
        _
    $region12: #{forward.7} parent=5 // pred_fallthru
      _
    %p124 = scmp.lt.s32.totalorder %s9, 2
    // Predicated region
    $region21: #{forward.7} parent=5 // pred_check
      %p125 = pneg %p124
    $region22: #{forward.7} parent=5 // pred_check_branch
      %127 = sbr.rel (%p125) target = $region24
    $region23: #{forward.7} parent=5 // pred_region
      // Predicated region
      $region25: #{forward.7} parent=23 // pred_check
        %p128 = pneg %p29
      $region26: #{forward.7} parent=23 // pred_check_branch
        %130 = sbr.rel (%p128) target = $region28
      $region27: #{forward.7} parent=23 // pred_region
        %s131 = smul.u32 98, %s9
        %p132 = scmp.lt.s32.totalorder %s131, 195
        %s133 = scalar_select %p132, %s131, 195
        %s134 = smul.addr %s133, 5
        %s135 = smul.addr %s134, 4
        %s136 = scalar_lea.vmem %s0, %s135
        %s137 = smul.u32 98, %s9
      $region28: #{forward.7} parent=23 // pred_fallthru
        _
    $region24: #{forward.7} parent=5 // pred_fallthru
      _
    %p138 = scmp.le.s32.totalorder 1, %s9
    %p139 = scmp.lt.s32.totalorder %s9, 3
    %p140 = pnand %p138, %p139
    %p141 = pneg %p140
    // Predicated region
    $region29: #{forward.7} parent=5 // pred_check
      _
    $region30: #{forward.7} parent=5 // pred_check_branch
      %143 = sbr.rel (%p140) target = $region32
    $region31: #{forward.7} parent=5 // pred_region
      %s144 = ssub.s32 %s9, 1
      %s145 = smul.u32 98, %s14
      %p146 = scmp.lt.s32.totalorder %s145, 195
      %s147 = scalar_select %p146, %s145, 195
      %s148 = smul.addr %s147, 5
      %s149 = smul.addr %s148, 4
      %s150 = scalar_lea.vmem %s0, %s149
      %p151 = pneg %p35
      %p152 = pneg %p32
      %p153 = pneg %p56
      %p154 = pneg %p53
      %p155 = pneg %p77
      %p156 = pneg %p74
      %p157 = pneg %p103
      %p158 = pneg %p100
      %s159 = smul.u32 98, %s14
      %p160 = scmp.lt.s32.totalorder %s159, 195
      %s161 = scalar_select %p160, %s159, 195
      %s162 = smul.addr %s161, 4
      %s163 = scalar_lea.vmem %s3, %s162
      %s164 = smul.u32 98, %s14
      %p165 = scmp.lt.s32.totalorder %s164, 195
      %s166 = scalar_select %p165, %s164, 195
      %s167 = smul.addr %s166, 5
      %s168 = smul.addr %s167, 4
      %s169 = scalar_lea.vmem %s0, %s168
      %s170 = smul.u32 98, %s14
      %s171 = smul.u32 98, %s14
      %p172 = scmp.lt.s32.totalorder %s171, 195
      %s173 = scalar_select %p172, %s171, 195
      %s174 = smul.addr %s173, 4
      %s175 = scalar_lea.vmem %s3, %s174
      %s176 = smul.u32 98, %s14
      %v178 = vld [vmem:[%s169] sm:$0xff]
      %v179 = vld [vmem:[%s169 + $0x8] sm:$0xff]
      %v180 = vld [vmem:[%s169 + $0x10] sm:$0xf]
      %v181 = vld [vmem:[%s169 + $0x14] sm:$0xff]
      %v182 = vld [vmem:[%s169 + $0x1c] sm:$0xff]
      %v183 = vld [vmem:[%s169 + $0x24] sm:$0xf]
      %v184 = vld [vmem:[%s169 + $0x28] sm:$0xff]
      %v185 = vld [vmem:[%s169 + $0x30] sm:$0xff]
      %v186 = vld [vmem:[%s169 + $0x38] sm:$0xf]
      %v187 = vld [vmem:[%s169 + $0x3c] sm:$0xff]
      %v188 = vld [vmem:[%s169 + $0x44] sm:$0xff]
      %v189 = vld [vmem:[%s169 + $0x4c] sm:$0xf]
      %v190 = vld [vmem:[%s169 + $0x50] sm:$0xff]
      %v191 = vld [vmem:[%s169 + $0x58] sm:$0xff]
      %v192 = vld [vmem:[%s169 + $0x60] sm:$0xf]
      %v193 = vld [vmem:[%s169 + $0x64] sm:$0xff]
      %v194 = vld [vmem:[%s169 + $0x6c] sm:$0xff]
      %v195 = vld [vmem:[%s169 + $0x74] sm:$0xf]
      %v196 = vld [vmem:[%s169 + $0x78] sm:$0xff]
      %v197 = vld [vmem:[%s169 + $0x80] sm:$0xff]
      %v198 = vld [vmem:[%s169 + $0x88] sm:$0xf]
      %v199 = vld [vmem:[%s169 + $0x8c] sm:$0xff]
      %v200 = vld [vmem:[%s169 + $0x94] sm:$0xff]
      %v201 = vld [vmem:[%s169 + $0x9c] sm:$0xf]
      %v202 = vld [vmem:[%s169 + $0xa0] sm:$0xff]
      %v203 = vld [vmem:[%s169 + $0xa8] sm:$0xff]
      %v204 = vld [vmem:[%s169 + $0xb0] sm:$0xf]
      %v205 = vld [vmem:[%s169 + $0xb4] sm:$0xff]
      %v206 = vld [vmem:[%s169 + $0xbc] sm:$0xff]
      %v207 = vld [vmem:[%s169 + $0xc4] sm:$0xf]
      %v208 = vld [vmem:[%s169 + $0xc8] sm:$0xff]
      %v209 = vld [vmem:[%s169 + $0xd0] sm:$0xff]
      %v210 = vld [vmem:[%s169 + $0xd8] sm:$0xf]
      %v211 = vld [vmem:[%s169 + $0xdc] sm:$0xff]
      %v212 = vld [vmem:[%s169 + $0xe4] sm:$0xff]
      %v213 = vld [vmem:[%s169 + $0xec] sm:$0xf]
      %v214 = vld [vmem:[%s169 + $0xf0] sm:$0xff]
      %v215 = vld [vmem:[%s169 + $0xf8] sm:$0xff]
      %v216 = vld [vmem:[%s169 + $0x100] sm:$0xf]
      %v217 = vld [vmem:[%s169 + $0x104] sm:$0xff]
      %v218 = vld [vmem:[%s169 + $0x10c] sm:$0xff]
      %v219 = vld [vmem:[%s169 + $0x114] sm:$0xf]
      %v220 = vld [vmem:[%s169 + $0x118] sm:$0xff]
      %v221 = vld [vmem:[%s169 + $0x120] sm:$0xff]
      %v222 = vld [vmem:[%s169 + $0x128] sm:$0xf]
      %v223 = vld [vmem:[%s169 + $0x12c] sm:$0xff]
      %v224 = vld [vmem:[%s169 + $0x134] sm:$0xff]
      %v225 = vld [vmem:[%s169 + $0x13c] sm:$0xf]
      %v226 = vld [vmem:[%s169 + $0x140] sm:$0xff]
      %v227 = vld [vmem:[%s169 + $0x148] sm:$0xff]
      %v228 = vld [vmem:[%s169 + $0x150] sm:$0xf]
      %v229 = vld [vmem:[%s169 + $0x154] sm:$0xff]
      %v230 = vld [vmem:[%s169 + $0x15c] sm:$0xff]
      %v231 = vld [vmem:[%s169 + $0x164] sm:$0xf]
      %v232 = vld [vmem:[%s169 + $0x168] sm:$0xff]
      %v233 = vld [vmem:[%s169 + $0x170] sm:$0xff]
      %v234 = vld [vmem:[%s169 + $0x178] sm:$0xf]
      %v235 = vld [vmem:[%s169 + $0x17c] sm:$0xff]
      %v236 = vld [vmem:[%s169 + $0x184] sm:$0xff]
      %v237 = vld [vmem:[%s169 + $0x18c] sm:$0xf]
      %v238 = vld [vmem:[%s169 + $0x190] sm:$0xff]
      %v239 = vld [vmem:[%s169 + $0x198] sm:$0xff]
      %v240 = vld [vmem:[%s169 + $0x1a0] sm:$0xf]
      %v241 = vld [vmem:[%s169 + $0x1a4] sm:$0xff]
      %v242 = vld [vmem:[%s169 + $0x1ac] sm:$0xff]
      %v243 = vld [vmem:[%s169 + $0x1b4] sm:$0xf]
      %v244 = vld [vmem:[%s169 + $0x1b8] sm:$0xff]
      %v245 = vld [vmem:[%s169 + $0x1c0] sm:$0xff]
      %v246 = vld [vmem:[%s169 + $0x1c8] sm:$0xf]
      %v247 = vld [vmem:[%s169 + $0x1cc] sm:$0xff]
      %v248 = vld [vmem:[%s169 + $0x1d4] sm:$0xff]
      %v249 = vld [vmem:[%s169 + $0x1dc] sm:$0xf]
      %v250 = vld [vmem:[%s169 + $0x1e0] sm:$0xff]
      %v251 = vld [vmem:[%s169 + $0x1e8] sm:$0xff]
      %v252 = vld [vmem:[%s169 + $0x1f0] sm:$0xf]
      %v253 = vld [vmem:[%s169 + $0x1f4] sm:$0xff]
      %v254 = vld [vmem:[%s169 + $0x1fc] sm:$0xff]
      %v255 = vld [vmem:[%s169 + $0x204] sm:$0xf]
      %v256 = vld [vmem:[%s169 + $0x208] sm:$0xff]
      %v257 = vld [vmem:[%s169 + $0x210] sm:$0xff]
      %v258 = vld [vmem:[%s169 + $0x218] sm:$0xf]
      %v259 = vld [vmem:[%s169 + $0x21c] sm:$0xff]
      %v260 = vld [vmem:[%s169 + $0x224] sm:$0xff]
      %v261 = vld [vmem:[%s169 + $0x22c] sm:$0xf]
      %v262 = vld [vmem:[%s169 + $0x230] sm:$0xff]
      %v263 = vld [vmem:[%s169 + $0x238] sm:$0xff]
      %v264 = vld [vmem:[%s169 + $0x240] sm:$0xf]
      %v265 = vld [vmem:[%s169 + $0x244] sm:$0xff]
      %v266 = vld [vmem:[%s169 + $0x24c] sm:$0xff]
      %v267 = vld [vmem:[%s169 + $0x254] sm:$0xf]
      %v268 = vld [vmem:[%s169 + $0x258] sm:$0xff]
      %v269 = vld [vmem:[%s169 + $0x260] sm:$0xff]
      %v270 = vld [vmem:[%s169 + $0x268] sm:$0xf]
      %v271 = vld [vmem:[%s169 + $0x26c] sm:$0xff]
      %v272 = vld [vmem:[%s169 + $0x274] sm:$0xff]
      %v273 = vld [vmem:[%s169 + $0x27c] sm:$0xf]
      %v274 = vld [vmem:[%s169 + $0x280] sm:$0xff]
      %v275 = vld [vmem:[%s169 + $0x288] sm:$0xff]
      %v276 = vld [vmem:[%s169 + $0x290] sm:$0xf]
      %v277 = vld [vmem:[%s169 + $0x294] sm:$0xff]
      %v278 = vld [vmem:[%s169 + $0x29c] sm:$0xff]
      %v279 = vld [vmem:[%s169 + $0x2a4] sm:$0xf]
      %v280 = vld [vmem:[%s169 + $0x2a8] sm:$0xff]
      %v281 = vld [vmem:[%s169 + $0x2b0] sm:$0xff]
      %v282 = vld [vmem:[%s169 + $0x2b8] sm:$0xf]
      %v283 = vld [vmem:[%s169 + $0x2bc] sm:$0xff]
      %v284 = vld [vmem:[%s169 + $0x2c4] sm:$0xff]
      %v285 = vld [vmem:[%s169 + $0x2cc] sm:$0xf]
      %v286 = vld [vmem:[%s169 + $0x2d0] sm:$0xff]
      %v287 = vld [vmem:[%s169 + $0x2d8] sm:$0xff]
      %v288 = vld [vmem:[%s169 + $0x2e0] sm:$0xf]
      %v289 = vld [vmem:[%s169 + $0x2e4] sm:$0xff]
      %v290 = vld [vmem:[%s169 + $0x2ec] sm:$0xff]
      %v291 = vld [vmem:[%s169 + $0x2f4] sm:$0xf]
      %v292 = vld [vmem:[%s169 + $0x2f8] sm:$0xff]
      %v293 = vld [vmem:[%s169 + $0x300] sm:$0xff]
      %v294 = vld [vmem:[%s169 + $0x308] sm:$0xf]
      %v295 = vld [vmem:[%s169 + $0x30c] sm:$0xff]
      %v296 = vld [vmem:[%s169 + $0x314] sm:$0xff]
      %v297 = vld [vmem:[%s169 + $0x31c] sm:$0xf]
      %v298 = vld [vmem:[%s169 + $0x320] sm:$0xff]
      %v299 = vld [vmem:[%s169 + $0x328] sm:$0xff]
      %v300 = vld [vmem:[%s169 + $0x330] sm:$0xf]
      %v301 = vld [vmem:[%s169 + $0x334] sm:$0xff]
      %v302 = vld [vmem:[%s169 + $0x33c] sm:$0xff]
      %v303 = vld [vmem:[%s169 + $0x344] sm:$0xf]
      %v304 = vld [vmem:[%s169 + $0x348] sm:$0xff]
      %v305 = vld [vmem:[%s169 + $0x350] sm:$0xff]
      %v306 = vld [vmem:[%s169 + $0x358] sm:$0xf]
      %v307 = vld [vmem:[%s169 + $0x35c] sm:$0xff]
      %v308 = vld [vmem:[%s169 + $0x364] sm:$0xff]
      %v309 = vld [vmem:[%s169 + $0x36c] sm:$0xf]
      %v310 = vld [vmem:[%s169 + $0x370] sm:$0xff]
      %v311 = vld [vmem:[%s169 + $0x378] sm:$0xff]
      %v312 = vld [vmem:[%s169 + $0x380] sm:$0xf]
      %v313 = vld [vmem:[%s169 + $0x384] sm:$0xff]
      %v314 = vld [vmem:[%s169 + $0x38c] sm:$0xff]
      %v315 = vld [vmem:[%s169 + $0x394] sm:$0xf]
      %v316 = vld [vmem:[%s169 + $0x398] sm:$0xff]
      %v317 = vld [vmem:[%s169 + $0x3a0] sm:$0xff]
      %v318 = vld [vmem:[%s169 + $0x3a8] sm:$0xf]
      %v319 = vld [vmem:[%s169 + $0x3ac] sm:$0xff]
      %v320 = vld [vmem:[%s169 + $0x3b4] sm:$0xff]
      %v321 = vld [vmem:[%s169 + $0x3bc] sm:$0xf]
      %v322 = vld [vmem:[%s169 + $0x3c0] sm:$0xff]
      %v323 = vld [vmem:[%s169 + $0x3c8] sm:$0xff]
      %v324 = vld [vmem:[%s169 + $0x3d0] sm:$0xf]
      %v325 = vld [vmem:[%s169 + $0x3d4] sm:$0xff]
      %v326 = vld [vmem:[%s169 + $0x3dc] sm:$0xff]
      %v327 = vld [vmem:[%s169 + $0x3e4] sm:$0xf]
      %v328 = vld [vmem:[%s169 + $0x3e8] sm:$0xff]
      %v329 = vld [vmem:[%s169 + $0x3f0] sm:$0xff]
      %v330 = vld [vmem:[%s169 + $0x3f8] sm:$0xf]
      %v331 = vld [vmem:[%s169 + $0x3fc] sm:$0xff]
      %v332 = vld [vmem:[%s169 + $0x404] sm:$0xff]
      %v333 = vld [vmem:[%s169 + $0x40c] sm:$0xf]
      %v334 = vld [vmem:[%s169 + $0x410] sm:$0xff]
      %v335 = vld [vmem:[%s169 + $0x418] sm:$0xff]
      %v336 = vld [vmem:[%s169 + $0x420] sm:$0xf]
      %v337 = vld [vmem:[%s169 + $0x424] sm:$0xff]
      %v338 = vld [vmem:[%s169 + $0x42c] sm:$0xff]
      %v339 = vld [vmem:[%s169 + $0x434] sm:$0xf]
      %v340 = vld [vmem:[%s169 + $0x438] sm:$0xff]
      %v341 = vld [vmem:[%s169 + $0x440] sm:$0xff]
      %v342 = vld [vmem:[%s169 + $0x448] sm:$0xf]
      %v343 = vld [vmem:[%s169 + $0x44c] sm:$0xff]
      %v344 = vld [vmem:[%s169 + $0x454] sm:$0xff]
      %v345 = vld [vmem:[%s169 + $0x45c] sm:$0xf]
      %v346 = vld [vmem:[%s169 + $0x460] sm:$0xff]
      %v347 = vld [vmem:[%s169 + $0x468] sm:$0xff]
      %v348 = vld [vmem:[%s169 + $0x470] sm:$0xf]
      %v349 = vld [vmem:[%s169 + $0x474] sm:$0xff]
      %v350 = vld [vmem:[%s169 + $0x47c] sm:$0xff]
      %v351 = vld [vmem:[%s169 + $0x484] sm:$0xf]
      %v352 = vld [vmem:[%s169 + $0x488] sm:$0xff]
      %v353 = vld [vmem:[%s169 + $0x490] sm:$0xff]
      %v354 = vld [vmem:[%s169 + $0x498] sm:$0xf]
      %v355 = vld [vmem:[%s169 + $0x49c] sm:$0xff]
      %v356 = vld [vmem:[%s169 + $0x4a4] sm:$0xff]
      %v357 = vld [vmem:[%s169 + $0x4ac] sm:$0xf]
      %v358 = vld [vmem:[%s169 + $0x4b0] sm:$0xff]
      %v359 = vld [vmem:[%s169 + $0x4b8] sm:$0xff]
      %v360 = vld [vmem:[%s169 + $0x4c0] sm:$0xf]
      %v361 = vld [vmem:[%s169 + $0x4c4] sm:$0xff]
      %v362 = vld [vmem:[%s169 + $0x4cc] sm:$0xff]
      %v363 = vld [vmem:[%s169 + $0x4d4] sm:$0xf]
      %v364 = vld [vmem:[%s169 + $0x4d8] sm:$0xff]
      %v365 = vld [vmem:[%s169 + $0x4e0] sm:$0xff]
      %v366 = vld [vmem:[%s169 + $0x4e8] sm:$0xf]
      %v367 = vld [vmem:[%s169 + $0x4ec] sm:$0xff]
      %v368 = vld [vmem:[%s169 + $0x4f4] sm:$0xff]
      %v369 = vld [vmem:[%s169 + $0x4fc] sm:$0xf]
      %v370 = vld [vmem:[%s169 + $0x500] sm:$0xff]
      %v371 = vld [vmem:[%s169 + $0x508] sm:$0xff]
      %v372 = vld [vmem:[%s169 + $0x510] sm:$0xf]
      %v373 = vld [vmem:[%s169 + $0x514] sm:$0xff]
      %v374 = vld [vmem:[%s169 + $0x51c] sm:$0xff]
      %v375 = vld [vmem:[%s169 + $0x524] sm:$0xf]
      %v376 = vld [vmem:[%s169 + $0x528] sm:$0xff]
      %v377 = vld [vmem:[%s169 + $0x530] sm:$0xff]
      %v378 = vld [vmem:[%s169 + $0x538] sm:$0xf]
      %v379 = vld [vmem:[%s169 + $0x53c] sm:$0xff]
      %v380 = vld [vmem:[%s169 + $0x544] sm:$0xff]
      %v381 = vld [vmem:[%s169 + $0x54c] sm:$0xf]
      %v382 = vld [vmem:[%s169 + $0x550] sm:$0xff]
      %v383 = vld [vmem:[%s169 + $0x558] sm:$0xff]
      %v384 = vld [vmem:[%s169 + $0x560] sm:$0xf]
      %v385 = vld [vmem:[%s169 + $0x564] sm:$0xff]
      %v386 = vld [vmem:[%s169 + $0x56c] sm:$0xff]
      %v387 = vld [vmem:[%s169 + $0x574] sm:$0xf]
      %v388 = vld [vmem:[%s169 + $0x578] sm:$0xff]
      %v389 = vld [vmem:[%s169 + $0x580] sm:$0xff]
      %v390 = vld [vmem:[%s169 + $0x588] sm:$0xf]
      %v391 = vld [vmem:[%s169 + $0x58c] sm:$0xff]
      %v392 = vld [vmem:[%s169 + $0x594] sm:$0xff]
      %v393 = vld [vmem:[%s169 + $0x59c] sm:$0xf]
      %v394 = vld [vmem:[%s169 + $0x5a0] sm:$0xff]
      %v395 = vld [vmem:[%s169 + $0x5a8] sm:$0xff]
      %v396 = vld [vmem:[%s169 + $0x5b0] sm:$0xf]
      %v397 = vld [vmem:[%s169 + $0x5b4] sm:$0xff]
      %v398 = vld [vmem:[%s169 + $0x5bc] sm:$0xff]
      %v399 = vld [vmem:[%s169 + $0x5c4] sm:$0xf]
      %v400 = vld [vmem:[%s169 + $0x5c8] sm:$0xff]
      %v401 = vld [vmem:[%s169 + $0x5d0] sm:$0xff]
      %v402 = vld [vmem:[%s169 + $0x5d8] sm:$0xf]
      %v403 = vld [vmem:[%s169 + $0x5dc] sm:$0xff]
      %v404 = vld [vmem:[%s169 + $0x5e4] sm:$0xff]
      %v405 = vld [vmem:[%s169 + $0x5ec] sm:$0xf]
      %v406 = vld [vmem:[%s169 + $0x5f0] sm:$0xff]
      %v407 = vld [vmem:[%s169 + $0x5f8] sm:$0xff]
      %v408 = vld [vmem:[%s169 + $0x600] sm:$0xf]
      %v409 = vld [vmem:[%s169 + $0x604] sm:$0xff]
      %v410 = vld [vmem:[%s169 + $0x60c] sm:$0xff]
      %v411 = vld [vmem:[%s169 + $0x614] sm:$0xf]
      %v412 = vld [vmem:[%s169 + $0x618] sm:$0xff]
      %v413 = vld [vmem:[%s169 + $0x620] sm:$0xff]
      %v414 = vld [vmem:[%s169 + $0x628] sm:$0xf]
      %v415 = vld [vmem:[%s169 + $0x62c] sm:$0xff]
      %v416 = vld [vmem:[%s169 + $0x634] sm:$0xff]
      %v417 = vld [vmem:[%s169 + $0x63c] sm:$0xf]
      %v418 = vld [vmem:[%s169 + $0x640] sm:$0xff]
      %v419 = vld [vmem:[%s169 + $0x648] sm:$0xff]
      %v420 = vld [vmem:[%s169 + $0x650] sm:$0xf]
      %v421 = vld [vmem:[%s169 + $0x654] sm:$0xff]
      %v422 = vld [vmem:[%s169 + $0x65c] sm:$0xff]
      %v423 = vld [vmem:[%s169 + $0x664] sm:$0xf]
      %v424 = vld [vmem:[%s169 + $0x668] sm:$0xff]
      %v425 = vld [vmem:[%s169 + $0x670] sm:$0xff]
      %v426 = vld [vmem:[%s169 + $0x678] sm:$0xf]
      %v427 = vld [vmem:[%s169 + $0x67c] sm:$0xff]
      %v428 = vld [vmem:[%s169 + $0x684] sm:$0xff]
      %v429 = vld [vmem:[%s169 + $0x68c] sm:$0xf]
      %v430 = vld [vmem:[%s169 + $0x690] sm:$0xff]
      %v431 = vld [vmem:[%s169 + $0x698] sm:$0xff]
      %v432 = vld [vmem:[%s169 + $0x6a0] sm:$0xf]
      %v433 = vld [vmem:[%s169 + $0x6a4] sm:$0xff]
      %v434 = vld [vmem:[%s169 + $0x6ac] sm:$0xff]
      %v435 = vld [vmem:[%s169 + $0x6b4] sm:$0xf]
      %v436 = vld [vmem:[%s169 + $0x6b8] sm:$0xff]
      %v437 = vld [vmem:[%s169 + $0x6c0] sm:$0xff]
      %v438 = vld [vmem:[%s169 + $0x6c8] sm:$0xf]
      %v439 = vld [vmem:[%s169 + $0x6cc] sm:$0xff]
      %v440 = vld [vmem:[%s169 + $0x6d4] sm:$0xff]
      %v441 = vld [vmem:[%s169 + $0x6dc] sm:$0xf]
      %v442 = vld [vmem:[%s169 + $0x6e0] sm:$0xff]
      %v443 = vld [vmem:[%s169 + $0x6e8] sm:$0xff]
      %v444 = vld [vmem:[%s169 + $0x6f0] sm:$0xf]
      %v445 = vld [vmem:[%s169 + $0x6f4] sm:$0xff]
      %v446 = vld [vmem:[%s169 + $0x6fc] sm:$0xff]
      %v447 = vld [vmem:[%s169 + $0x704] sm:$0xf]
      %v448 = vld [vmem:[%s169 + $0x708] sm:$0xff]
      %v449 = vld [vmem:[%s169 + $0x710] sm:$0xff]
      %v450 = vld [vmem:[%s169 + $0x718] sm:$0xf]
      %v451 = vld [vmem:[%s169 + $0x71c] sm:$0xff]
      %v452 = vld [vmem:[%s169 + $0x724] sm:$0xff]
      %v453 = vld [vmem:[%s169 + $0x72c] sm:$0xf]
      %v454 = vld [vmem:[%s169 + $0x730] sm:$0xff]
      %v455 = vld [vmem:[%s169 + $0x738] sm:$0xff]
      %v456 = vld [vmem:[%s169 + $0x740] sm:$0xf]
      %v457 = vld [vmem:[%s169 + $0x744] sm:$0xff]
      %v458 = vld [vmem:[%s169 + $0x74c] sm:$0xff]
      %v459 = vld [vmem:[%s169 + $0x754] sm:$0xf]
      %v460 = vld [vmem:[%s169 + $0x758] sm:$0xff]
      %v461 = vld [vmem:[%s169 + $0x760] sm:$0xff]
      %v462 = vld [vmem:[%s169 + $0x768] sm:$0xf]
      %v463 = vld [vmem:[%s169 + $0x76c] sm:$0xff]
      %v464 = vld [vmem:[%s169 + $0x774] sm:$0xff]
      %v465 = vld [vmem:[%s169 + $0x77c] sm:$0xf]
      %v466 = vld [vmem:[%s169 + $0x780] sm:$0xff]
      %v467 = vld [vmem:[%s169 + $0x788] sm:$0xff]
      %v468 = vld [vmem:[%s169 + $0x790] sm:$0xf]
      %v469 = vld [vmem:[%s169 + $0x794] sm:$0xff]
      %v470 = vld [vmem:[%s169 + $0x79c] sm:$0xff]
      %v471 = vld [vmem:[%s169 + $0x7a4] sm:$0xf]
      %v472 = vld [vmem:[%s1] sm:$0xf]
      %v473 = vld [vmem:[%s1 + $0x4] sm:$0xf]
      %v474 = vld [vmem:[%s1 + $0x8] sm:$0xf]
      %v475 = vld [vmem:[%s1 + $0xc] sm:$0xf]
      %v476 = vld [vmem:[%s1 + $0x10] sm:$0xf]
      %v477 = vld [vmem:[%s1 + $0x14] sm:$0xf]
      %v478 = vld [vmem:[%s1 + $0x18] sm:$0xf]
      %v479 = vld [vmem:[%s1 + $0x1c] sm:$0xf]
      %v480 = vld [vmem:[%s1 + $0x20] sm:$0xf]
      %v481 = vld [vmem:[%s1 + $0x24] sm:$0xf]
      %v482 = vld [vmem:[%s1 + $0x28] sm:$0xf]
      %v483 = vld [vmem:[%s1 + $0x2c] sm:$0xf]
      %v484 = vld [vmem:[%s1 + $0x30] sm:$0xf]
      %v485 = vld [vmem:[%s1 + $0x34] sm:$0xf]
      %v486 = vld [vmem:[%s1 + $0x38] sm:$0xf]
      %v487 = vld [vmem:[%s1 + $0x3c] sm:$0xf]
      %v488 = vld [vmem:[%s1 + $0x40] sm:$0xf]
      %v489 = vld [vmem:[%s1 + $0x44] sm:$0xf]
      %v490 = vld [vmem:[%s1 + $0x48] sm:$0xf]
      %v491 = vld [vmem:[%s1 + $0x4c] sm:$0xf]
      %v492 = vld [vmem:[%s1 + $0x50] sm:$0xf]
      %v493 = vld [vmem:[%s1 + $0x54] sm:$0xf]
      %v494 = vld [vmem:[%s1 + $0x58] sm:$0xf]
      %v495 = vld [vmem:[%s1 + $0x5c] sm:$0xf]
      %v496 = vld [vmem:[%s1 + $0x60] sm:$0xf]
      %v497 = vld [vmem:[%s1 + $0x64] sm:$0xf]
      %v498 = vld [vmem:[%s1 + $0x68] sm:$0xf]
      %v499 = vld [vmem:[%s1 + $0x6c] sm:$0xf]
      %v500 = vld [vmem:[%s1 + $0x70] sm:$0xf]
      %v501 = vld [vmem:[%s1 + $0x74] sm:$0xf]
      %v502 = vld [vmem:[%s1 + $0x78] sm:$0xf]
      %v503 = vld [vmem:[%s1 + $0x7c] sm:$0xf]
      %v504 = vld [vmem:[%s1 + $0x80] sm:$0xf]
      %v505 = vld [vmem:[%s1 + $0x84] sm:$0xf]
      %v506 = vld [vmem:[%s1 + $0x88] sm:$0xf]
      %v507 = vld [vmem:[%s1 + $0x8c] sm:$0xf]
      %v508 = vld [vmem:[%s1 + $0x90] sm:$0xf]
      %v509 = vld [vmem:[%s1 + $0x94] sm:$0xf]
      %v510 = vld [vmem:[%s1 + $0x98] sm:$0xf]
      %v511 = vld [vmem:[%s1 + $0x9c] sm:$0xf]
      %v512 = vld [vmem:[%s1 + $0xa0] sm:$0xf]
      %v513 = vld [vmem:[%s1 + $0xa4] sm:$0xf]
      %v514 = vld [vmem:[%s1 + $0xa8] sm:$0xf]
      %v515 = vld [vmem:[%s1 + $0xac] sm:$0xf]
      %v516 = vld [vmem:[%s1 + $0xb0] sm:$0xf]
      %v517 = vld [vmem:[%s1 + $0xb4] sm:$0xf]
      %v518 = vld [vmem:[%s1 + $0xb8] sm:$0xf]
      %v519 = vld [vmem:[%s1 + $0xbc] sm:$0xf]
      %v520 = vld [vmem:[%s1 + $0xc0] sm:$0xf]
      %v521 = vld [vmem:[%s1 + $0xc4] sm:$0xf]
      %v522 = vld [vmem:[%s1 + $0xc8] sm:$0xf]
      %v523 = vld [vmem:[%s1 + $0xcc] sm:$0xf]
      %v524 = vld [vmem:[%s1 + $0xd0] sm:$0xf]
      %v525 = vld [vmem:[%s1 + $0xd4] sm:$0xf]
      %v526 = vld [vmem:[%s1 + $0xd8] sm:$0xf]
      %v527 = vld [vmem:[%s1 + $0xdc] sm:$0xf]
      %v528 = vld [vmem:[%s1 + $0xe0] sm:$0xf]
      %v529 = vld [vmem:[%s1 + $0xe4] sm:$0xf]
      %v530 = vld [vmem:[%s1 + $0xe8] sm:$0xf]
      %v531 = vld [vmem:[%s1 + $0xec] sm:$0xf]
      %v532 = vld [vmem:[%s1 + $0xf0] sm:$0xf]
      %v533 = vld [vmem:[%s1 + $0xf4] sm:$0xf]
      %v534 = vld [vmem:[%s1 + $0xf8] sm:$0xf]
      %v535 = vld [vmem:[%s1 + $0xfc] sm:$0xf]
      %v536 = vld [vmem:[%s1 + $0x100] sm:$0xf]
      %v537 = vld [vmem:[%s1 + $0x104] sm:$0xf]
      %v538 = vld [vmem:[%s1 + $0x108] sm:$0xf]
      %v539 = vld [vmem:[%s1 + $0x10c] sm:$0xf]
      %v540 = vld [vmem:[%s1 + $0x110] sm:$0xf]
      %v541 = vld [vmem:[%s1 + $0x114] sm:$0xf]
      %v542 = vld [vmem:[%s1 + $0x118] sm:$0xf]
      %v543 = vld [vmem:[%s1 + $0x11c] sm:$0xf]
      %v544 = vld [vmem:[%s2] sm:$0x1]
      %v546 = vlaneseq
      %v547 = vshrl.u32 %v546, 7
      %v548 = vsub.s32 0, %v547
      %v549 = vrot.slane %v544, %v548
      %v845 = vunpack.c.l.b16 %v178
      %v846 = vunpack.c.h.b16 %v178
      %v847 = vunpack.c.l.b16 %v179
      %v848 = vunpack.c.h.b16 %v179
      %v849 = vunpack.c.l.b16 %v180
      %v850 = vunpack.c.l.b16 %v181
      %v851 = vunpack.c.h.b16 %v181
      %v852 = vunpack.c.l.b16 %v182
      %v853 = vunpack.c.h.b16 %v182
      %v854 = vunpack.c.l.b16 %v183
      %v855 = vunpack.c.l.b16 %v184
      %v856 = vunpack.c.h.b16 %v184
      %v857 = vunpack.c.l.b16 %v185
      %v858 = vunpack.c.h.b16 %v185
      %v859 = vunpack.c.l.b16 %v186
      %v860 = vunpack.c.l.b16 %v187
      %v861 = vunpack.c.h.b16 %v187
      %v862 = vunpack.c.l.b16 %v188
      %v863 = vunpack.c.h.b16 %v188
      %v864 = vunpack.c.l.b16 %v189
      %v865 = vunpack.c.l.b16 %v190
      %v866 = vunpack.c.h.b16 %v190
      %v867 = vunpack.c.l.b16 %v191
      %v868 = vunpack.c.h.b16 %v191
      %v869 = vunpack.c.l.b16 %v192
      %v870 = vunpack.c.l.b16 %v193
      %v871 = vunpack.c.h.b16 %v193
      %v872 = vunpack.c.l.b16 %v194
      %v873 = vunpack.c.h.b16 %v194
      %v874 = vunpack.c.l.b16 %v195
      %v875 = vunpack.c.l.b16 %v196
      %v876 = vunpack.c.h.b16 %v196
      %v877 = vunpack.c.l.b16 %v197
      %v878 = vunpack.c.h.b16 %v197
      %v879 = vunpack.c.l.b16 %v198
      %v880 = vunpack.c.l.b16 %v199
      %v881 = vunpack.c.h.b16 %v199
      %v882 = vunpack.c.l.b16 %v200
      %v883 = vunpack.c.h.b16 %v200
      %v884 = vunpack.c.l.b16 %v201
      %v885 = vunpack.c.l.b16 %v202
      %v886 = vunpack.c.h.b16 %v202
      %v887 = vunpack.c.l.b16 %v203
      %v888 = vunpack.c.h.b16 %v203
      %v889 = vunpack.c.l.b16 %v204
      %v890 = vunpack.c.l.b16 %v205
      %v891 = vunpack.c.h.b16 %v205
      %v892 = vunpack.c.l.b16 %v206
      %v893 = vunpack.c.h.b16 %v206
      %v894 = vunpack.c.l.b16 %v207
      %v895 = vunpack.c.l.b16 %v208
      %v896 = vunpack.c.h.b16 %v208
      %v897 = vunpack.c.l.b16 %v209
      %v898 = vunpack.c.h.b16 %v209
      %v899 = vunpack.c.l.b16 %v210
      %v900 = vunpack.c.l.b16 %v211
      %v901 = vunpack.c.h.b16 %v211
      %v902 = vunpack.c.l.b16 %v212
      %v903 = vunpack.c.h.b16 %v212
      %v904 = vunpack.c.l.b16 %v213
      %v905 = vunpack.c.l.b16 %v214
      %v906 = vunpack.c.h.b16 %v214
      %v907 = vunpack.c.l.b16 %v215
      %v908 = vunpack.c.h.b16 %v215
      %v909 = vunpack.c.l.b16 %v216
      %v910 = vunpack.c.l.b16 %v217
      %v911 = vunpack.c.h.b16 %v217
      %v912 = vunpack.c.l.b16 %v218
      %v913 = vunpack.c.h.b16 %v218
      %v914 = vunpack.c.l.b16 %v219
      %v915 = vunpack.c.l.b16 %v220
      %v916 = vunpack.c.h.b16 %v220
      %v917 = vunpack.c.l.b16 %v221
      %v918 = vunpack.c.h.b16 %v221
      %v919 = vunpack.c.l.b16 %v222
      %v920 = vunpack.c.l.b16 %v223
      %v921 = vunpack.c.h.b16 %v223
      %v922 = vunpack.c.l.b16 %v224
      %v923 = vunpack.c.h.b16 %v224
      %v924 = vunpack.c.l.b16 %v225
      %v925 = vunpack.c.l.b16 %v226
      %v926 = vunpack.c.h.b16 %v226
      %v927 = vunpack.c.l.b16 %v227
      %v928 = vunpack.c.h.b16 %v227
      %v929 = vunpack.c.l.b16 %v228
      %v930 = vunpack.c.l.b16 %v229
      %v931 = vunpack.c.h.b16 %v229
      %v932 = vunpack.c.l.b16 %v230
      %v933 = vunpack.c.h.b16 %v230
      %v934 = vunpack.c.l.b16 %v231
      %v935 = vunpack.c.l.b16 %v232
      %v936 = vunpack.c.h.b16 %v232
      %v937 = vunpack.c.l.b16 %v233
      %v938 = vunpack.c.h.b16 %v233
      %v939 = vunpack.c.l.b16 %v234
      %v940 = vunpack.c.l.b16 %v235
      %v941 = vunpack.c.h.b16 %v235
      %v942 = vunpack.c.l.b16 %v236
      %v943 = vunpack.c.h.b16 %v236
      %v944 = vunpack.c.l.b16 %v237
      %v945 = vunpack.c.l.b16 %v238
      %v946 = vunpack.c.h.b16 %v238
      %v947 = vunpack.c.l.b16 %v239
      %v948 = vunpack.c.h.b16 %v239
      %v949 = vunpack.c.l.b16 %v240
      %v950 = vunpack.c.l.b16 %v241
      %v951 = vunpack.c.h.b16 %v241
      %v952 = vunpack.c.l.b16 %v242
      %v953 = vunpack.c.h.b16 %v242
      %v954 = vunpack.c.l.b16 %v243
      %v955 = vunpack.c.l.b16 %v244
      %v956 = vunpack.c.h.b16 %v244
      %v957 = vunpack.c.l.b16 %v245
      %v958 = vunpack.c.h.b16 %v245
      %v959 = vunpack.c.l.b16 %v246
      %v960 = vunpack.c.l.b16 %v247
      %v961 = vunpack.c.h.b16 %v247
      %v962 = vunpack.c.l.b16 %v248
      %v963 = vunpack.c.h.b16 %v248
      %v964 = vunpack.c.l.b16 %v249
      %v965 = vunpack.c.l.b16 %v250
      %v966 = vunpack.c.h.b16 %v250
      %v967 = vunpack.c.l.b16 %v251
      %v968 = vunpack.c.h.b16 %v251
      %v969 = vunpack.c.l.b16 %v252
      %v970 = vunpack.c.l.b16 %v253
      %v971 = vunpack.c.h.b16 %v253
      %v972 = vunpack.c.l.b16 %v254
      %v973 = vunpack.c.h.b16 %v254
      %v974 = vunpack.c.l.b16 %v255
      %v975 = vunpack.c.l.b16 %v256
      %v976 = vunpack.c.h.b16 %v256
      %v977 = vunpack.c.l.b16 %v257
      %v978 = vunpack.c.h.b16 %v257
      %v979 = vunpack.c.l.b16 %v258
      %v980 = vunpack.c.l.b16 %v259
      %v981 = vunpack.c.h.b16 %v259
      %v982 = vunpack.c.l.b16 %v260
      %v983 = vunpack.c.h.b16 %v260
      %v984 = vunpack.c.l.b16 %v261
      %v985 = vunpack.c.l.b16 %v262
      %v986 = vunpack.c.h.b16 %v262
      %v987 = vunpack.c.l.b16 %v263
      %v988 = vunpack.c.h.b16 %v263
      %v989 = vunpack.c.l.b16 %v264
      %v990 = vunpack.c.l.b16 %v265
      %v991 = vunpack.c.h.b16 %v265
      %v992 = vunpack.c.l.b16 %v266
      %v993 = vunpack.c.h.b16 %v266
      %v994 = vunpack.c.l.b16 %v267
      %v995 = vunpack.c.l.b16 %v268
      %v996 = vunpack.c.h.b16 %v268
      %v997 = vunpack.c.l.b16 %v269
      %v998 = vunpack.c.h.b16 %v269
      %v999 = vunpack.c.l.b16 %v270
      %v1000 = vunpack.c.l.b16 %v271
      %v1001 = vunpack.c.h.b16 %v271
      %v1002 = vunpack.c.l.b16 %v272
      %v1003 = vunpack.c.h.b16 %v272
      %v1004 = vunpack.c.l.b16 %v273
      %v1005 = vunpack.c.l.b16 %v274
      %v1006 = vunpack.c.h.b16 %v274
      %v1007 = vunpack.c.l.b16 %v275
      %v1008 = vunpack.c.h.b16 %v275
      %v1009 = vunpack.c.l.b16 %v276
      %v1010 = vunpack.c.l.b16 %v277
      %v1011 = vunpack.c.h.b16 %v277
      %v1012 = vunpack.c.l.b16 %v278
      %v1013 = vunpack.c.h.b16 %v278
      %v1014 = vunpack.c.l.b16 %v279
      %v1015 = vunpack.c.l.b16 %v280
      %v1016 = vunpack.c.h.b16 %v280
      %v1017 = vunpack.c.l.b16 %v281
      %v1018 = vunpack.c.h.b16 %v281
      %v1019 = vunpack.c.l.b16 %v282
      %v1020 = vunpack.c.l.b16 %v283
      %v1021 = vunpack.c.h.b16 %v283
      %v1022 = vunpack.c.l.b16 %v284
      %v1023 = vunpack.c.h.b16 %v284
      %v1024 = vunpack.c.l.b16 %v285
      %v1025 = vunpack.c.l.b16 %v286
      %v1026 = vunpack.c.h.b16 %v286
      %v1027 = vunpack.c.l.b16 %v287
      %v1028 = vunpack.c.h.b16 %v287
      %v1029 = vunpack.c.l.b16 %v288
      %v1030 = vunpack.c.l.b16 %v289
      %v1031 = vunpack.c.h.b16 %v289
      %v1032 = vunpack.c.l.b16 %v290
      %v1033 = vunpack.c.h.b16 %v290
      %v1034 = vunpack.c.l.b16 %v291
      %v1035 = vunpack.c.l.b16 %v292
      %v1036 = vunpack.c.h.b16 %v292
      %v1037 = vunpack.c.l.b16 %v293
      %v1038 = vunpack.c.h.b16 %v293
      %v1039 = vunpack.c.l.b16 %v294
      %v1040 = vunpack.c.l.b16 %v295
      %v1041 = vunpack.c.h.b16 %v295
      %v1042 = vunpack.c.l.b16 %v296
      %v1043 = vunpack.c.h.b16 %v296
      %v1044 = vunpack.c.l.b16 %v297
      %v1045 = vunpack.c.l.b16 %v298
      %v1046 = vunpack.c.h.b16 %v298
      %v1047 = vunpack.c.l.b16 %v299
      %v1048 = vunpack.c.h.b16 %v299
      %v1049 = vunpack.c.l.b16 %v300
      %v1050 = vunpack.c.l.b16 %v301
      %v1051 = vunpack.c.h.b16 %v301
      %v1052 = vunpack.c.l.b16 %v302
      %v1053 = vunpack.c.h.b16 %v302
      %v1054 = vunpack.c.l.b16 %v303
      %v1055 = vunpack.c.l.b16 %v304
      %v1056 = vunpack.c.h.b16 %v304
      %v1057 = vunpack.c.l.b16 %v305
      %v1058 = vunpack.c.h.b16 %v305
      %v1059 = vunpack.c.l.b16 %v306
      %v1060 = vunpack.c.l.b16 %v307
      %v1061 = vunpack.c.h.b16 %v307
      %v1062 = vunpack.c.l.b16 %v308
      %v1063 = vunpack.c.h.b16 %v308
      %v1064 = vunpack.c.l.b16 %v309
      %v1065 = vunpack.c.l.b16 %v310
      %v1066 = vunpack.c.h.b16 %v310
      %v1067 = vunpack.c.l.b16 %v311
      %v1068 = vunpack.c.h.b16 %v311
      %v1069 = vunpack.c.l.b16 %v312
      %v1070 = vunpack.c.l.b16 %v313
      %v1071 = vunpack.c.h.b16 %v313
      %v1072 = vunpack.c.l.b16 %v314
      %v1073 = vunpack.c.h.b16 %v314
      %v1074 = vunpack.c.l.b16 %v315
      %v1075 = vunpack.c.l.b16 %v316
      %v1076 = vunpack.c.h.b16 %v316
      %v1077 = vunpack.c.l.b16 %v317
      %v1078 = vunpack.c.h.b16 %v317
      %v1079 = vunpack.c.l.b16 %v318
      %v1080 = vunpack.c.l.b16 %v319
      %v1081 = vunpack.c.h.b16 %v319
      %v1082 = vunpack.c.l.b16 %v320
      %v1083 = vunpack.c.h.b16 %v320
      %v1084 = vunpack.c.l.b16 %v321
      %v1085 = vunpack.c.l.b16 %v322
      %v1086 = vunpack.c.h.b16 %v322
      %v1087 = vunpack.c.l.b16 %v323
      %v1088 = vunpack.c.h.b16 %v323
      %v1089 = vunpack.c.l.b16 %v324
      %v1090 = vunpack.c.l.b16 %v325
      %v1091 = vunpack.c.h.b16 %v325
      %v1092 = vunpack.c.l.b16 %v326
      %v1093 = vunpack.c.h.b16 %v326
      %v1094 = vunpack.c.l.b16 %v327
      %v1095 = vunpack.c.l.b16 %v328
      %v1096 = vunpack.c.h.b16 %v328
      %v1097 = vunpack.c.l.b16 %v329
      %v1098 = vunpack.c.h.b16 %v329
      %v1099 = vunpack.c.l.b16 %v330
      %v1100 = vunpack.c.l.b16 %v331
      %v1101 = vunpack.c.h.b16 %v331
      %v1102 = vunpack.c.l.b16 %v332
      %v1103 = vunpack.c.h.b16 %v332
      %v1104 = vunpack.c.l.b16 %v333
      %v1105 = vunpack.c.l.b16 %v334
      %v1106 = vunpack.c.h.b16 %v334
      %v1107 = vunpack.c.l.b16 %v335
      %v1108 = vunpack.c.h.b16 %v335
      %v1109 = vunpack.c.l.b16 %v336
      %v1110 = vunpack.c.l.b16 %v337
      %v1111 = vunpack.c.h.b16 %v337
      %v1112 = vunpack.c.l.b16 %v338
      %v1113 = vunpack.c.h.b16 %v338
      %v1114 = vunpack.c.l.b16 %v339
      %v1115 = vunpack.c.l.b16 %v340
      %v1116 = vunpack.c.h.b16 %v340
      %v1117 = vunpack.c.l.b16 %v341
      %v1118 = vunpack.c.h.b16 %v341
      %v1119 = vunpack.c.l.b16 %v342
      %v1120 = vunpack.c.l.b16 %v343
      %v1121 = vunpack.c.h.b16 %v343
      %v1122 = vunpack.c.l.b16 %v344
      %v1123 = vunpack.c.h.b16 %v344
      %v1124 = vunpack.c.l.b16 %v345
      %v1125 = vunpack.c.l.b16 %v346
      %v1126 = vunpack.c.h.b16 %v346
      %v1127 = vunpack.c.l.b16 %v347
      %v1128 = vunpack.c.h.b16 %v347
      %v1129 = vunpack.c.l.b16 %v348
      %v1130 = vunpack.c.l.b16 %v349
      %v1131 = vunpack.c.h.b16 %v349
      %v1132 = vunpack.c.l.b16 %v350
      %v1133 = vunpack.c.h.b16 %v350
      %v1134 = vunpack.c.l.b16 %v351
      %v1135 = vunpack.c.l.b16 %v352
      %v1136 = vunpack.c.h.b16 %v352
      %v1137 = vunpack.c.l.b16 %v353
      %v1138 = vunpack.c.h.b16 %v353
      %v1139 = vunpack.c.l.b16 %v354
      %v1140 = vunpack.c.l.b16 %v355
      %v1141 = vunpack.c.h.b16 %v355
      %v1142 = vunpack.c.l.b16 %v356
      %v1143 = vunpack.c.h.b16 %v356
      %v1144 = vunpack.c.l.b16 %v357
      %v1145 = vunpack.c.l.b16 %v358
      %v1146 = vunpack.c.h.b16 %v358
      %v1147 = vunpack.c.l.b16 %v359
      %v1148 = vunpack.c.h.b16 %v359
      %v1149 = vunpack.c.l.b16 %v360
      %v1150 = vunpack.c.l.b16 %v361
      %v1151 = vunpack.c.h.b16 %v361
      %v1152 = vunpack.c.l.b16 %v362
      %v1153 = vunpack.c.h.b16 %v362
      %v1154 = vunpack.c.l.b16 %v363
      %v1155 = vunpack.c.l.b16 %v364
      %v1156 = vunpack.c.h.b16 %v364
      %v1157 = vunpack.c.l.b16 %v365
      %v1158 = vunpack.c.h.b16 %v365
      %v1159 = vunpack.c.l.b16 %v366
      %v1160 = vunpack.c.l.b16 %v367
      %v1161 = vunpack.c.h.b16 %v367
      %v1162 = vunpack.c.l.b16 %v368
      %v1163 = vunpack.c.h.b16 %v368
      %v1164 = vunpack.c.l.b16 %v369
      %v1165 = vunpack.c.l.b16 %v370
      %v1166 = vunpack.c.h.b16 %v370
      %v1167 = vunpack.c.l.b16 %v371
      %v1168 = vunpack.c.h.b16 %v371
      %v1169 = vunpack.c.l.b16 %v372
      %v1170 = vunpack.c.l.b16 %v373
      %v1171 = vunpack.c.h.b16 %v373
      %v1172 = vunpack.c.l.b16 %v374
      %v1173 = vunpack.c.h.b16 %v374
      %v1174 = vunpack.c.l.b16 %v375
      %v1175 = vunpack.c.l.b16 %v376
      %v1176 = vunpack.c.h.b16 %v376
      %v1177 = vunpack.c.l.b16 %v377
      %v1178 = vunpack.c.h.b16 %v377
      %v1179 = vunpack.c.l.b16 %v378
      %v1180 = vunpack.c.l.b16 %v379
      %v1181 = vunpack.c.h.b16 %v379
      %v1182 = vunpack.c.l.b16 %v380
      %v1183 = vunpack.c.h.b16 %v380
      %v1184 = vunpack.c.l.b16 %v381
      %v1185 = vunpack.c.l.b16 %v382
      %v1186 = vunpack.c.h.b16 %v382
      %v1187 = vunpack.c.l.b16 %v383
      %v1188 = vunpack.c.h.b16 %v383
      %v1189 = vunpack.c.l.b16 %v384
      %v1190 = vunpack.c.l.b16 %v385
      %v1191 = vunpack.c.h.b16 %v385
      %v1192 = vunpack.c.l.b16 %v386
      %v1193 = vunpack.c.h.b16 %v386
      %v1194 = vunpack.c.l.b16 %v387
      %v1195 = vunpack.c.l.b16 %v388
      %v1196 = vunpack.c.h.b16 %v388
      %v1197 = vunpack.c.l.b16 %v389
      %v1198 = vunpack.c.h.b16 %v389
      %v1199 = vunpack.c.l.b16 %v390
      %v1200 = vunpack.c.l.b16 %v391
      %v1201 = vunpack.c.h.b16 %v391
      %v1202 = vunpack.c.l.b16 %v392
      %v1203 = vunpack.c.h.b16 %v392
      %v1204 = vunpack.c.l.b16 %v393
      %v1205 = vunpack.c.l.b16 %v394
      %v1206 = vunpack.c.h.b16 %v394
      %v1207 = vunpack.c.l.b16 %v395
      %v1208 = vunpack.c.h.b16 %v395
      %v1209 = vunpack.c.l.b16 %v396
      %v1210 = vunpack.c.l.b16 %v397
      %v1211 = vunpack.c.h.b16 %v397
      %v1212 = vunpack.c.l.b16 %v398
      %v1213 = vunpack.c.h.b16 %v398
      %v1214 = vunpack.c.l.b16 %v399
      %v1215 = vunpack.c.l.b16 %v400
      %v1216 = vunpack.c.h.b16 %v400
      %v1217 = vunpack.c.l.b16 %v401
      %v1218 = vunpack.c.h.b16 %v401
      %v1219 = vunpack.c.l.b16 %v402
      %v1220 = vunpack.c.l.b16 %v403
      %v1221 = vunpack.c.h.b16 %v403
      %v1222 = vunpack.c.l.b16 %v404
      %v1223 = vunpack.c.h.b16 %v404
      %v1224 = vunpack.c.l.b16 %v405
      %v1225 = vunpack.c.l.b16 %v406
      %v1226 = vunpack.c.h.b16 %v406
      %v1227 = vunpack.c.l.b16 %v407
      %v1228 = vunpack.c.h.b16 %v407
      %v1229 = vunpack.c.l.b16 %v408
      %v1230 = vunpack.c.l.b16 %v409
      %v1231 = vunpack.c.h.b16 %v409
      %v1232 = vunpack.c.l.b16 %v410
      %v1233 = vunpack.c.h.b16 %v410
      %v1234 = vunpack.c.l.b16 %v411
      %v1235 = vunpack.c.l.b16 %v412
      %v1236 = vunpack.c.h.b16 %v412
      %v1237 = vunpack.c.l.b16 %v413
      %v1238 = vunpack.c.h.b16 %v413
      %v1239 = vunpack.c.l.b16 %v414
      %v1240 = vunpack.c.l.b16 %v415
      %v1241 = vunpack.c.h.b16 %v415
      %v1242 = vunpack.c.l.b16 %v416
      %v1243 = vunpack.c.h.b16 %v416
      %v1244 = vunpack.c.l.b16 %v417
      %v1245 = vunpack.c.l.b16 %v418
      %v1246 = vunpack.c.h.b16 %v418
      %v1247 = vunpack.c.l.b16 %v419
      %v1248 = vunpack.c.h.b16 %v419
      %v1249 = vunpack.c.l.b16 %v420
      %v1250 = vunpack.c.l.b16 %v421
      %v1251 = vunpack.c.h.b16 %v421
      %v1252 = vunpack.c.l.b16 %v422
      %v1253 = vunpack.c.h.b16 %v422
      %v1254 = vunpack.c.l.b16 %v423
      %v1255 = vunpack.c.l.b16 %v424
      %v1256 = vunpack.c.h.b16 %v424
      %v1257 = vunpack.c.l.b16 %v425
      %v1258 = vunpack.c.h.b16 %v425
      %v1259 = vunpack.c.l.b16 %v426
      %v1260 = vunpack.c.l.b16 %v427
      %v1261 = vunpack.c.h.b16 %v427
      %v1262 = vunpack.c.l.b16 %v428
      %v1263 = vunpack.c.h.b16 %v428
      %v1264 = vunpack.c.l.b16 %v429
      %v1265 = vunpack.c.l.b16 %v430
      %v1266 = vunpack.c.h.b16 %v430
      %v1267 = vunpack.c.l.b16 %v431
      %v1268 = vunpack.c.h.b16 %v431
      %v1269 = vunpack.c.l.b16 %v432
      %v1270 = vunpack.c.l.b16 %v433
      %v1271 = vunpack.c.h.b16 %v433
      %v1272 = vunpack.c.l.b16 %v434
      %v1273 = vunpack.c.h.b16 %v434
      %v1274 = vunpack.c.l.b16 %v435
      %v1275 = vunpack.c.l.b16 %v436
      %v1276 = vunpack.c.h.b16 %v436
      %v1277 = vunpack.c.l.b16 %v437
      %v1278 = vunpack.c.h.b16 %v437
      %v1279 = vunpack.c.l.b16 %v438
      %v1280 = vunpack.c.l.b16 %v439
      %v1281 = vunpack.c.h.b16 %v439
      %v1282 = vunpack.c.l.b16 %v440
      %v1283 = vunpack.c.h.b16 %v440
      %v1284 = vunpack.c.l.b16 %v441
      %v1285 = vunpack.c.l.b16 %v442
      %v1286 = vunpack.c.h.b16 %v442
      %v1287 = vunpack.c.l.b16 %v443
      %v1288 = vunpack.c.h.b16 %v443
      %v1289 = vunpack.c.l.b16 %v444
      %v1290 = vunpack.c.l.b16 %v445
      %v1291 = vunpack.c.h.b16 %v445
      %v1292 = vunpack.c.l.b16 %v446
      %v1293 = vunpack.c.h.b16 %v446
      %v1294 = vunpack.c.l.b16 %v447
      %v1295 = vunpack.c.l.b16 %v448
      %v1296 = vunpack.c.h.b16 %v448
      %v1297 = vunpack.c.l.b16 %v449
      %v1298 = vunpack.c.h.b16 %v449
      %v1299 = vunpack.c.l.b16 %v450
      %v1300 = vunpack.c.l.b16 %v451
      %v1301 = vunpack.c.h.b16 %v451
      %v1302 = vunpack.c.l.b16 %v452
      %v1303 = vunpack.c.h.b16 %v452
      %v1304 = vunpack.c.l.b16 %v453
      %v1305 = vunpack.c.l.b16 %v454
      %v1306 = vunpack.c.h.b16 %v454
      %v1307 = vunpack.c.l.b16 %v455
      %v1308 = vunpack.c.h.b16 %v455
      %v1309 = vunpack.c.l.b16 %v456
      %v1310 = vunpack.c.l.b16 %v457
      %v1311 = vunpack.c.h.b16 %v457
      %v1312 = vunpack.c.l.b16 %v458
      %v1313 = vunpack.c.h.b16 %v458
      %v1314 = vunpack.c.l.b16 %v459
      %v1315 = vunpack.c.l.b16 %v460
      %v1316 = vunpack.c.h.b16 %v460
      %v1317 = vunpack.c.l.b16 %v461
      %v1318 = vunpack.c.h.b16 %v461
      %v1319 = vunpack.c.l.b16 %v462
      %v1320 = vunpack.c.l.b16 %v463
      %v1321 = vunpack.c.h.b16 %v463
      %v1322 = vunpack.c.l.b16 %v464
      %v1323 = vunpack.c.h.b16 %v464
      %v1324 = vunpack.c.l.b16 %v465
      %v1325 = vunpack.c.l.b16 %v466
      %v1326 = vunpack.c.h.b16 %v466
      %v1327 = vunpack.c.l.b16 %v467
      %v1328 = vunpack.c.h.b16 %v467
      %v1329 = vunpack.c.l.b16 %v468
      %v1330 = vunpack.c.l.b16 %v469
      %v1331 = vunpack.c.h.b16 %v469
      %v1332 = vunpack.c.l.b16 %v470
      %v1333 = vunpack.c.h.b16 %v470
      %v1334 = vunpack.c.l.b16 %v471
      %v1335 = vpack.c.b16 %v850, %v845
      %v1336 = vpack.c.b16 %v851, %v846
      %v1337 = vpack.c.b16 %v852, %v847
      %v1338 = vpack.c.b16 %v853, %v848
      %v1339 = vpack.c.b16 %v854, %v849
      %v1340 = vpack.c.b16 %v860, %v855
      %v1341 = vpack.c.b16 %v861, %v856
      %v1342 = vpack.c.b16 %v862, %v857
      %v1343 = vpack.c.b16 %v863, %v858
      %v1344 = vpack.c.b16 %v864, %v859
      %v1345 = vpack.c.b16 %v870, %v865
      %v1346 = vpack.c.b16 %v871, %v866
      %v1347 = vpack.c.b16 %v872, %v867
      %v1348 = vpack.c.b16 %v873, %v868
      %v1349 = vpack.c.b16 %v874, %v869
      %v1350 = vpack.c.b16 %v880, %v875
      %v1351 = vpack.c.b16 %v881, %v876
      %v1352 = vpack.c.b16 %v882, %v877
      %v1353 = vpack.c.b16 %v883, %v878
      %v1354 = vpack.c.b16 %v884, %v879
      %v1355 = vpack.c.b16 %v890, %v885
      %v1356 = vpack.c.b16 %v891, %v886
      %v1357 = vpack.c.b16 %v892, %v887
      %v1358 = vpack.c.b16 %v893, %v888
      %v1359 = vpack.c.b16 %v894, %v889
      %v1360 = vpack.c.b16 %v900, %v895
      %v1361 = vpack.c.b16 %v901, %v896
      %v1362 = vpack.c.b16 %v902, %v897
      %v1363 = vpack.c.b16 %v903, %v898
      %v1364 = vpack.c.b16 %v904, %v899
      %v1365 = vpack.c.b16 %v910, %v905
      %v1366 = vpack.c.b16 %v911, %v906
      %v1367 = vpack.c.b16 %v912, %v907
      %v1368 = vpack.c.b16 %v913, %v908
      %v1369 = vpack.c.b16 %v914, %v909
      %v1370 = vpack.c.b16 %v920, %v915
      %v1371 = vpack.c.b16 %v921, %v916
      %v1372 = vpack.c.b16 %v922, %v917
      %v1373 = vpack.c.b16 %v923, %v918
      %v1374 = vpack.c.b16 %v924, %v919
      %v1375 = vpack.c.b16 %v930, %v925
      %v1376 = vpack.c.b16 %v931, %v926
      %v1377 = vpack.c.b16 %v932, %v927
      %v1378 = vpack.c.b16 %v933, %v928
      %v1379 = vpack.c.b16 %v934, %v929
      %v1380 = vpack.c.b16 %v940, %v935
      %v1381 = vpack.c.b16 %v941, %v936
      %v1382 = vpack.c.b16 %v942, %v937
      %v1383 = vpack.c.b16 %v943, %v938
      %v1384 = vpack.c.b16 %v944, %v939
      %v1385 = vpack.c.b16 %v950, %v945
      %v1386 = vpack.c.b16 %v951, %v946
      %v1387 = vpack.c.b16 %v952, %v947
      %v1388 = vpack.c.b16 %v953, %v948
      %v1389 = vpack.c.b16 %v954, %v949
      %v1390 = vpack.c.b16 %v960, %v955
      %v1391 = vpack.c.b16 %v961, %v956
      %v1392 = vpack.c.b16 %v962, %v957
      %v1393 = vpack.c.b16 %v963, %v958
      %v1394 = vpack.c.b16 %v964, %v959
      %v1395 = vpack.c.b16 %v970, %v965
      %v1396 = vpack.c.b16 %v971, %v966
      %v1397 = vpack.c.b16 %v972, %v967
      %v1398 = vpack.c.b16 %v973, %v968
      %v1399 = vpack.c.b16 %v974, %v969
      %v1400 = vpack.c.b16 %v980, %v975
      %v1401 = vpack.c.b16 %v981, %v976
      %v1402 = vpack.c.b16 %v982, %v977
      %v1403 = vpack.c.b16 %v983, %v978
      %v1404 = vpack.c.b16 %v984, %v979
      %v1405 = vpack.c.b16 %v990, %v985
      %v1406 = vpack.c.b16 %v991, %v986
      %v1407 = vpack.c.b16 %v992, %v987
      %v1408 = vpack.c.b16 %v993, %v988
      %v1409 = vpack.c.b16 %v994, %v989
      %v1410 = vpack.c.b16 %v1000, %v995
      %v1411 = vpack.c.b16 %v1001, %v996
      %v1412 = vpack.c.b16 %v1002, %v997
      %v1413 = vpack.c.b16 %v1003, %v998
      %v1414 = vpack.c.b16 %v1004, %v999
      %v1415 = vpack.c.b16 %v1010, %v1005
      %v1416 = vpack.c.b16 %v1011, %v1006
      %v1417 = vpack.c.b16 %v1012, %v1007
      %v1418 = vpack.c.b16 %v1013, %v1008
      %v1419 = vpack.c.b16 %v1014, %v1009
      %v1420 = vpack.c.b16 %v1020, %v1015
      %v1421 = vpack.c.b16 %v1021, %v1016
      %v1422 = vpack.c.b16 %v1022, %v1017
      %v1423 = vpack.c.b16 %v1023, %v1018
      %v1424 = vpack.c.b16 %v1024, %v1019
      %v1425 = vpack.c.b16 %v1030, %v1025
      %v1426 = vpack.c.b16 %v1031, %v1026
      %v1427 = vpack.c.b16 %v1032, %v1027
      %v1428 = vpack.c.b16 %v1033, %v1028
      %v1429 = vpack.c.b16 %v1034, %v1029
      %v1430 = vpack.c.b16 %v1040, %v1035
      %v1431 = vpack.c.b16 %v1041, %v1036
      %v1432 = vpack.c.b16 %v1042, %v1037
      %v1433 = vpack.c.b16 %v1043, %v1038
      %v1434 = vpack.c.b16 %v1044, %v1039
      %v1435 = vpack.c.b16 %v1050, %v1045
      %v1436 = vpack.c.b16 %v1051, %v1046
      %v1437 = vpack.c.b16 %v1052, %v1047
      %v1438 = vpack.c.b16 %v1053, %v1048
      %v1439 = vpack.c.b16 %v1054, %v1049
      %v1440 = vpack.c.b16 %v1060, %v1055
      %v1441 = vpack.c.b16 %v1061, %v1056
      %v1442 = vpack.c.b16 %v1062, %v1057
      %v1443 = vpack.c.b16 %v1063, %v1058
      %v1444 = vpack.c.b16 %v1064, %v1059
      %v1445 = vpack.c.b16 %v1070, %v1065
      %v1446 = vpack.c.b16 %v1071, %v1066
      %v1447 = vpack.c.b16 %v1072, %v1067
      %v1448 = vpack.c.b16 %v1073, %v1068
      %v1449 = vpack.c.b16 %v1074, %v1069
      %v1450 = vpack.c.b16 %v1080, %v1075
      %v1451 = vpack.c.b16 %v1081, %v1076
      %v1452 = vpack.c.b16 %v1082, %v1077
      %v1453 = vpack.c.b16 %v1083, %v1078
      %v1454 = vpack.c.b16 %v1084, %v1079
      %v1455 = vpack.c.b16 %v1090, %v1085
      %v1456 = vpack.c.b16 %v1091, %v1086
      %v1457 = vpack.c.b16 %v1092, %v1087
      %v1458 = vpack.c.b16 %v1093, %v1088
      %v1459 = vpack.c.b16 %v1094, %v1089
      %v1460 = vpack.c.b16 %v1100, %v1095
      %v1461 = vpack.c.b16 %v1101, %v1096
      %v1462 = vpack.c.b16 %v1102, %v1097
      %v1463 = vpack.c.b16 %v1103, %v1098
      %v1464 = vpack.c.b16 %v1104, %v1099
      %v1465 = vpack.c.b16 %v1110, %v1105
      %v1466 = vpack.c.b16 %v1111, %v1106
      %v1467 = vpack.c.b16 %v1112, %v1107
      %v1468 = vpack.c.b16 %v1113, %v1108
      %v1469 = vpack.c.b16 %v1114, %v1109
      %v1470 = vpack.c.b16 %v1120, %v1115
      %v1471 = vpack.c.b16 %v1121, %v1116
      %v1472 = vpack.c.b16 %v1122, %v1117
      %v1473 = vpack.c.b16 %v1123, %v1118
      %v1474 = vpack.c.b16 %v1124, %v1119
      %v1475 = vpack.c.b16 %v1130, %v1125
      %v1476 = vpack.c.b16 %v1131, %v1126
      %v1477 = vpack.c.b16 %v1132, %v1127
      %v1478 = vpack.c.b16 %v1133, %v1128
      %v1479 = vpack.c.b16 %v1134, %v1129
      %v1480 = vpack.c.b16 %v1140, %v1135
      %v1481 = vpack.c.b16 %v1141, %v1136
      %v1482 = vpack.c.b16 %v1142, %v1137
      %v1483 = vpack.c.b16 %v1143, %v1138
      %v1484 = vpack.c.b16 %v1144, %v1139
      %v1485 = vpack.c.b16 %v1150, %v1145
      %v1486 = vpack.c.b16 %v1151, %v1146
      %v1487 = vpack.c.b16 %v1152, %v1147
      %v1488 = vpack.c.b16 %v1153, %v1148
      %v1489 = vpack.c.b16 %v1154, %v1149
      %v1490 = vpack.c.b16 %v1160, %v1155
      %v1491 = vpack.c.b16 %v1161, %v1156
      %v1492 = vpack.c.b16 %v1162, %v1157
      %v1493 = vpack.c.b16 %v1163, %v1158
      %v1494 = vpack.c.b16 %v1164, %v1159
      %v1495 = vpack.c.b16 %v1170, %v1165
      %v1496 = vpack.c.b16 %v1171, %v1166
      %v1497 = vpack.c.b16 %v1172, %v1167
      %v1498 = vpack.c.b16 %v1173, %v1168
      %v1499 = vpack.c.b16 %v1174, %v1169
      %v1500 = vpack.c.b16 %v1180, %v1175
      %v1501 = vpack.c.b16 %v1181, %v1176
      %v1502 = vpack.c.b16 %v1182, %v1177
      %v1503 = vpack.c.b16 %v1183, %v1178
      %v1504 = vpack.c.b16 %v1184, %v1179
      %v1505 = vpack.c.b16 %v1190, %v1185
      %v1506 = vpack.c.b16 %v1191, %v1186
      %v1507 = vpack.c.b16 %v1192, %v1187
      %v1508 = vpack.c.b16 %v1193, %v1188
      %v1509 = vpack.c.b16 %v1194, %v1189
      %v1510 = vpack.c.b16 %v1200, %v1195
      %v1511 = vpack.c.b16 %v1201, %v1196
      %v1512 = vpack.c.b16 %v1202, %v1197
      %v1513 = vpack.c.b16 %v1203, %v1198
      %v1514 = vpack.c.b16 %v1204, %v1199
      %v1515 = vpack.c.b16 %v1210, %v1205
      %v1516 = vpack.c.b16 %v1211, %v1206
      %v1517 = vpack.c.b16 %v1212, %v1207
      %v1518 = vpack.c.b16 %v1213, %v1208
      %v1519 = vpack.c.b16 %v1214, %v1209
      %v1520 = vpack.c.b16 %v1220, %v1215
      %v1521 = vpack.c.b16 %v1221, %v1216
      %v1522 = vpack.c.b16 %v1222, %v1217
      %v1523 = vpack.c.b16 %v1223, %v1218
      %v1524 = vpack.c.b16 %v1224, %v1219
      %v1525 = vpack.c.b16 %v1230, %v1225
      %v1526 = vpack.c.b16 %v1231, %v1226
      %v1527 = vpack.c.b16 %v1232, %v1227
      %v1528 = vpack.c.b16 %v1233, %v1228
      %v1529 = vpack.c.b16 %v1234, %v1229
      %v1530 = vpack.c.b16 %v1240, %v1235
      %v1531 = vpack.c.b16 %v1241, %v1236
      %v1532 = vpack.c.b16 %v1242, %v1237
      %v1533 = vpack.c.b16 %v1243, %v1238
      %v1534 = vpack.c.b16 %v1244, %v1239
      %v1535 = vpack.c.b16 %v1250, %v1245
      %v1536 = vpack.c.b16 %v1251, %v1246
      %v1537 = vpack.c.b16 %v1252, %v1247
      %v1538 = vpack.c.b16 %v1253, %v1248
      %v1539 = vpack.c.b16 %v1254, %v1249
      %v1540 = vpack.c.b16 %v1260, %v1255
      %v1541 = vpack.c.b16 %v1261, %v1256
      %v1542 = vpack.c.b16 %v1262, %v1257
      %v1543 = vpack.c.b16 %v1263, %v1258
      %v1544 = vpack.c.b16 %v1264, %v1259
      %v1545 = vpack.c.b16 %v1270, %v1265
      %v1546 = vpack.c.b16 %v1271, %v1266
      %v1547 = vpack.c.b16 %v1272, %v1267
      %v1548 = vpack.c.b16 %v1273, %v1268
      %v1549 = vpack.c.b16 %v1274, %v1269
      %v1550 = vpack.c.b16 %v1280, %v1275
      %v1551 = vpack.c.b16 %v1281, %v1276
      %v1552 = vpack.c.b16 %v1282, %v1277
      %v1553 = vpack.c.b16 %v1283, %v1278
      %v1554 = vpack.c.b16 %v1284, %v1279
      %v1555 = vpack.c.b16 %v1290, %v1285
      %v1556 = vpack.c.b16 %v1291, %v1286
      %v1557 = vpack.c.b16 %v1292, %v1287
      %v1558 = vpack.c.b16 %v1293, %v1288
      %v1559 = vpack.c.b16 %v1294, %v1289
      %v1560 = vpack.c.b16 %v1300, %v1295
      %v1561 = vpack.c.b16 %v1301, %v1296
      %v1562 = vpack.c.b16 %v1302, %v1297
      %v1563 = vpack.c.b16 %v1303, %v1298
      %v1564 = vpack.c.b16 %v1304, %v1299
      %v1565 = vpack.c.b16 %v1310, %v1305
      %v1566 = vpack.c.b16 %v1311, %v1306
      %v1567 = vpack.c.b16 %v1312, %v1307
      %v1568 = vpack.c.b16 %v1313, %v1308
      %v1569 = vpack.c.b16 %v1314, %v1309
      %v1570 = vpack.c.b16 %v1320, %v1315
      %v1571 = vpack.c.b16 %v1321, %v1316
      %v1572 = vpack.c.b16 %v1322, %v1317
      %v1573 = vpack.c.b16 %v1323, %v1318
      %v1574 = vpack.c.b16 %v1324, %v1319
      %v1575 = vpack.c.b16 %v1330, %v1325
      %v1576 = vpack.c.b16 %v1331, %v1326
      %v1577 = vpack.c.b16 %v1332, %v1327
      %v1578 = vpack.c.b16 %v1333, %v1328
      %v1579 = vpack.c.b16 %v1334, %v1329
      %v1848 = vunpack.c.l.b16 %v472
      %v1849 = vunpack.c.l.b16 %v473
      %v1850 = vunpack.c.l.b16 %v474
      %v1851 = vunpack.c.l.b16 %v475
      %v1852 = vunpack.c.l.b16 %v476
      %v1853 = vunpack.c.l.b16 %v477
      %v1854 = vunpack.c.l.b16 %v478
      %v1855 = vunpack.c.l.b16 %v479
      %v1856 = vunpack.c.l.b16 %v480
      %v1857 = vunpack.c.l.b16 %v481
      %v1858 = vunpack.c.l.b16 %v482
      %v1859 = vunpack.c.l.b16 %v483
      %v1860 = vunpack.c.l.b16 %v484
      %v1861 = vunpack.c.l.b16 %v485
      %v1862 = vunpack.c.l.b16 %v486
      %v1863 = vunpack.c.l.b16 %v487
      %v1864 = vunpack.c.l.b16 %v488
      %v1865 = vunpack.c.l.b16 %v489
      %v1866 = vunpack.c.l.b16 %v490
      %v1867 = vunpack.c.l.b16 %v491
      %v1868 = vunpack.c.l.b16 %v492
      %v1869 = vunpack.c.l.b16 %v493
      %v1870 = vunpack.c.l.b16 %v494
      %v1871 = vunpack.c.l.b16 %v495
      %v1872 = vunpack.c.l.b16 %v496
      %v1873 = vunpack.c.l.b16 %v497
      %v1874 = vunpack.c.l.b16 %v498
      %v1875 = vunpack.c.l.b16 %v499
      %v1876 = vunpack.c.l.b16 %v500
      %v1877 = vunpack.c.l.b16 %v501
      %v1878 = vunpack.c.l.b16 %v502
      %v1879 = vunpack.c.l.b16 %v503
      %v1880 = vunpack.c.l.b16 %v504
      %v1881 = vunpack.c.l.b16 %v505
      %v1882 = vunpack.c.l.b16 %v506
      %v1883 = vunpack.c.l.b16 %v507
      %v1884 = vunpack.c.l.b16 %v508
      %v1885 = vunpack.c.l.b16 %v509
      %v1886 = vunpack.c.l.b16 %v510
      %v1887 = vunpack.c.l.b16 %v511
      %v1888 = vunpack.c.l.b16 %v512
      %v1889 = vunpack.c.l.b16 %v513
      %v1890 = vunpack.c.l.b16 %v514
      %v1891 = vunpack.c.l.b16 %v515
      %v1892 = vunpack.c.l.b16 %v516
      %v1893 = vunpack.c.l.b16 %v517
      %v1894 = vunpack.c.l.b16 %v518
      %v1895 = vunpack.c.l.b16 %v519
      %v1896 = vunpack.c.l.b16 %v520
      %v1897 = vunpack.c.l.b16 %v521
      %v1898 = vunpack.c.l.b16 %v522
      %v1899 = vunpack.c.l.b16 %v523
      %v1900 = vunpack.c.l.b16 %v524
      %v1901 = vunpack.c.l.b16 %v525
      %v1902 = vunpack.c.l.b16 %v526
      %v1903 = vunpack.c.l.b16 %v527
      %v1904 = vunpack.c.l.b16 %v528
      %v1905 = vunpack.c.l.b16 %v529
      %v1906 = vunpack.c.l.b16 %v530
      %v1907 = vunpack.c.l.b16 %v531
      %v1908 = vunpack.c.l.b16 %v532
      %v1909 = vunpack.c.l.b16 %v533
      %v1910 = vunpack.c.l.b16 %v534
      %v1911 = vunpack.c.l.b16 %v535
      %v1912 = vunpack.c.l.b16 %v536
      %v1913 = vunpack.c.l.b16 %v537
      %v1914 = vunpack.c.l.b16 %v538
      %v1915 = vunpack.c.l.b16 %v539
      %v1916 = vunpack.c.l.b16 %v540
      %v1917 = vunpack.c.l.b16 %v541
      %v1918 = vunpack.c.l.b16 %v542
      %v1919 = vunpack.c.l.b16 %v543
      %v1920 = vpack.c.b16 %v1849, %v1848
      %v1921 = vpack.c.b16 %v1851, %v1850
      %v1922 = vpack.c.b16 %v1853, %v1852
      %v1923 = vpack.c.b16 %v1855, %v1854
      %v1924 = vpack.c.b16 %v1857, %v1856
      %v1925 = vpack.c.b16 %v1859, %v1858
      %v1926 = vpack.c.b16 %v1861, %v1860
      %v1927 = vpack.c.b16 %v1863, %v1862
      %v1928 = vpack.c.b16 %v1865, %v1864
      %v1929 = vpack.c.b16 %v1867, %v1866
      %v1930 = vpack.c.b16 %v1869, %v1868
      %v1931 = vpack.c.b16 %v1871, %v1870
      %v1932 = vpack.c.b16 %v1873, %v1872
      %v1933 = vpack.c.b16 %v1875, %v1874
      %v1934 = vpack.c.b16 %v1877, %v1876
      %v1935 = vpack.c.b16 %v1879, %v1878
      %v1936 = vpack.c.b16 %v1881, %v1880
      %v1937 = vpack.c.b16 %v1883, %v1882
      %v1938 = vpack.c.b16 %v1885, %v1884
      %v1939 = vpack.c.b16 %v1887, %v1886
      %v1940 = vpack.c.b16 %v1889, %v1888
      %v1941 = vpack.c.b16 %v1891, %v1890
      %v1942 = vpack.c.b16 %v1893, %v1892
      %v1943 = vpack.c.b16 %v1895, %v1894
      %v1944 = vpack.c.b16 %v1897, %v1896
      %v1945 = vpack.c.b16 %v1899, %v1898
      %v1946 = vpack.c.b16 %v1901, %v1900
      %v1947 = vpack.c.b16 %v1903, %v1902
      %v1948 = vpack.c.b16 %v1905, %v1904
      %v1949 = vpack.c.b16 %v1907, %v1906
      %v1950 = vpack.c.b16 %v1909, %v1908
      %v1951 = vpack.c.b16 %v1911, %v1910
      %v1952 = vpack.c.b16 %v1913, %v1912
      %v1953 = vpack.c.b16 %v1915, %v1914
      %v1954 = vpack.c.b16 %v1917, %v1916
      %v1955 = vpack.c.b16 %v1919, %v1918
      %vm1992 = vcmask 523264
      %v1994 = vsel %vm1992, %v1339, 0
      %v1997 = vsel %vm1992, %v1344, 0
      %v2000 = vsel %vm1992, %v1349, 0
      %v2003 = vsel %vm1992, %v1354, 0
      %v2006 = vsel %vm1992, %v1359, 0
      %v2009 = vsel %vm1992, %v1364, 0
      %v2012 = vsel %vm1992, %v1369, 0
      %v2015 = vsel %vm1992, %v1374, 0
      %v2018 = vsel %vm1992, %v1379, 0
      %v2021 = vsel %vm1992, %v1384, 0
      %v2024 = vsel %vm1992, %v1389, 0
      %v2027 = vsel %vm1992, %v1394, 0
      %v2030 = vsel %vm1992, %v1399, 0
      %v2033 = vsel %vm1992, %v1404, 0
      %v2036 = vsel %vm1992, %v1409, 0
      %v2039 = vsel %vm1992, %v1414, 0
      %v2042 = vsel %vm1992, %v1419, 0
      %v2045 = vsel %vm1992, %v1424, 0
      %v2048 = vsel %vm1992, %v1429, 0
      %v2051 = vsel %vm1992, %v1434, 0
      %v2054 = vsel %vm1992, %v1439, 0
      %v2057 = vsel %vm1992, %v1444, 0
      %v2060 = vsel %vm1992, %v1449, 0
      %v2063 = vsel %vm1992, %v1454, 0
      %v2066 = vsel %vm1992, %v1459, 0
      %v2069 = vsel %vm1992, %v1464, 0
      %v2072 = vsel %vm1992, %v1469, 0
      %v2075 = vsel %vm1992, %v1474, 0
      %v2078 = vsel %vm1992, %v1479, 0
      %v2081 = vsel %vm1992, %v1484, 0
      %v2084 = vsel %vm1992, %v1489, 0
      %v2087 = vsel %vm1992, %v1494, 0
      %v2090 = vsel %vm1992, %v1499, 0
      %v2093 = vsel %vm1992, %v1504, 0
      %v2096 = vsel %vm1992, %v1509, 0
      %v2099 = vsel %vm1992, %v1514, 0
      %v2102 = vsel %vm1992, %v1519, 0
      %v2105 = vsel %vm1992, %v1524, 0
      %v2108 = vsel %vm1992, %v1529, 0
      %v2111 = vsel %vm1992, %v1534, 0
      %v2114 = vsel %vm1992, %v1539, 0
      %v2117 = vsel %vm1992, %v1544, 0
      %v2120 = vsel %vm1992, %v1549, 0
      %v2123 = vsel %vm1992, %v1554, 0
      %v2126 = vsel %vm1992, %v1559, 0
      %v2129 = vsel %vm1992, %v1564, 0
      %v2132 = vsel %vm1992, %v1569, 0
      %v2135 = vsel %vm1992, %v1574, 0
      %v2138 = vsel %vm1992, %v1579, 0
      %2140 = vmatprep.subr.bf16.mxu0 0
      %2141 = vmatpush1.bf16.msra.mxu0 %v1920
      %2142 = vmatprep.subr.bf16.mxu0 0
      %2143 = vmatpush1.bf16.msra.mxu0 %v1921
      %2144 = vmatprep.subr.bf16.mxu0 0
      %2145 = vmatpush1.bf16.msra.mxu0 %v1922
      %2146 = vmatprep.subr.bf16.mxu0 0
      %2147 = vmatpush1.bf16.msra.mxu0 %v1923
      %2148 = vmatprep.subr.bf16.mxu0 0
      %2149 = vmatpush1.bf16.msra.mxu0 %v1924
      %2150 = vmatprep.subr.bf16.mxu0 0
      %2151 = vmatpush1.bf16.msra.mxu0 %v1925
      %2152 = vmatprep.subr.bf16.mxu0 0
      %2153 = vmatpush1.bf16.msra.mxu0 %v1926
      %2154 = vmatprep.subr.bf16.mxu0 0
      %2155 = vmatpush1.bf16.msra.mxu0 %v1927
      %2156 = vmatprep.subr.bf16.mxu0 0
      %2157 = vmatpush1.bf16.msra.mxu0 %v1928
      %2158 = vmatprep.subr.bf16.mxu0 0
      %2159 = vmatpush1.bf16.msra.mxu0 %v1929
      %2160 = vmatprep.subr.bf16.mxu0 0
      %2161 = vmatpush1.bf16.msra.mxu0 %v1930
      %2162 = vmatprep.subr.bf16.mxu0 0
      %2163 = vmatpush1.bf16.msra.mxu0 %v1931
      %2164 = vmatprep.subr.bf16.mxu0 0
      %2165 = vmatpush1.bf16.msra.mxu0 %v1932
      %2166 = vmatprep.subr.bf16.mxu0 0
      %2167 = vmatpush1.bf16.msra.mxu0 %v1933
      %2168 = vmatprep.subr.bf16.mxu0 0
      %2169 = vmatpush1.bf16.msra.mxu0 %v1934
      %2170 = vmatprep.subr.bf16.mxu0 0
      %2171 = vmatpush1.bf16.msra.mxu0 %v1935
      %2172 = vmatprep.mubr.bf16.mxu0 %v1336
      %2173 = vmatmul.mubr.bf16.gmra.mrb[0].mxu0 %v1335
      %v2174 = vpop.f32.mrb[0].mxu0
      %v2175 = vadd.f32 %v549, %v2174
      %v2176 = vpop.f32.mrb[0].mxu0
      %v2177 = vpop.f32.mrb[0].mxu0
      %v2178 = vadd.f32 %v549, %v2177
      %v2179 = vpop.f32.mrb[0].mxu0
      %2180 = vmatprep.mubr.bf16.mxu0 %v1341
      %2181 = vmatmul.mubr.bf16.gmra.mrb[0].mxu0 %v1340
      %v2182 = vpop.f32.mrb[0].mxu0
      %v2183 = vadd.f32 %v549, %v2182
      %v2184 = vpop.f32.mrb[0].mxu0
      %v2185 = vpop.f32.mrb[0].mxu0
      %v2186 = vadd.f32 %v549, %v2185
      %v2187 = vpop.f32.mrb[0].mxu0
      %2188 = vmatprep.mubr.bf16.mxu0 %v1346
      %2189 = vmatmul.mubr.bf16.gmra.mrb[0].mxu0 %v1345
      %v2190 = vpop.f32.mrb[0].mxu0
      %v2191 = vadd.f32 %v549, %v2190
      %v2192 = vpop.f32.mrb[0].mxu0
      %v2193 = vpop.f32.mrb[0].mxu0
      %v2194 = vadd.f32 %v549, %v2193
      %v2195 = vpop.f32.mrb[0].mxu0
      %2196 = vmatprep.mubr.bf16.mxu0 %v1351
      %2197 = vmatmul.mubr.bf16.gmra.mrb[0].mxu0 %v1350
      %v2198 = vpop.f32.mrb[0].mxu0
      %v2199 = vadd.f32 %v549, %v2198
      %v2200 = vpop.f32.mrb[0].mxu0
      %v2201 = vpop.f32.mrb[0].mxu0
      %v2202 = vadd.f32 %v549, %v2201
      %v2203 = vpop.f32.mrb[0].mxu0
      %2204 = vmatprep.mubr.bf16.mxu0 %v1356
      %2205 = vmatmul.mubr.bf16.gmra.mrb[0].mxu0 %v1355
      %v2206 = vpop.f32.mrb[0].mxu0
      %v2207 = vadd.f32 %v549, %v2206
      %v2208 = vpop.f32.mrb[0].mxu0
      %v2209 = vpop.f32.mrb[0].mxu0
      %v2210 = vadd.f32 %v549, %v2209
      %v2211 = vpop.f32.mrb[0].mxu0
      %2212 = vmatprep.mubr.bf16.mxu0 %v1361
      %2213 = vmatmul.mubr.bf16.gmra.mrb[0].mxu0 %v1360
      %v2214 = vpop.f32.mrb[0].mxu0
      %v2215 = vadd.f32 %v549, %v2214
      %v2216 = vpop.f32.mrb[0].mxu0
      %v2217 = vpop.f32.mrb[0].mxu0
      %v2218 = vadd.f32 %v549, %v2217
      %v2219 = vpop.f32.mrb[0].mxu0
      %2220 = vmatprep.mubr.bf16.mxu0 %v1366
      %2221 = vmatmul.mubr.bf16.gmra.mrb[0].mxu0 %v1365
      %v2222 = vpop.f32.mrb[0].mxu0
      %v2223 = vadd.f32 %v549, %v2222
      %v2224 = vpop.f32.mrb[0].mxu0
      %v2225 = vpop.f32.mrb[0].mxu0
      %v2226 = vadd.f32 %v549, %v2225
      %v2227 = vpop.f32.mrb[0].mxu0
      %2228 = vmatprep.mubr.bf16.mxu0 %v1371
      %2229 = vmatmul.mubr.bf16.gmra.mrb[0].mxu0 %v1370
      %v2230 = vpop.f32.mrb[0].mxu0
      %v2231 = vadd.f32 %v549, %v2230
      %v2232 = vpop.f32.mrb[0].mxu0
      %v2233 = vpop.f32.mrb[0].mxu0
      %v2234 = vadd.f32 %v549, %v2233
      %v2235 = vpop.f32.mrb[0].mxu0
      %2236 = vmatprep.mubr.bf16.mxu0 %v1376
      %2237 = vmatmul.mubr.bf16.gmra.mrb[0].mxu0 %v1375
      %v2238 = vpop.f32.mrb[0].mxu0
      %v2239 = vadd.f32 %v549, %v2238
      %v2240 = vpop.f32.mrb[0].mxu0
      %v2241 = vpop.f32.mrb[0].mxu0
      %v2242 = vadd.f32 %v549, %v2241
      %v2243 = vpop.f32.mrb[0].mxu0
      %2244 = vmatprep.mubr.bf16.mxu0 %v1381
      %2245 = vmatmul.mubr.bf16.gmra.mrb[0].mxu0 %v1380
      %v2246 = vpop.f32.mrb[0].mxu0
      %v2247 = vadd.f32 %v549, %v2246
      %v2248 = vpop.f32.mrb[0].mxu0
      %v2249 = vpop.f32.mrb[0].mxu0
      %v2250 = vadd.f32 %v549, %v2249
      %v2251 = vpop.f32.mrb[0].mxu0
      %2252 = vmatprep.mubr.bf16.mxu0 %v1386
      %2253 = vmatmul.mubr.bf16.gmra.mrb[0].mxu0 %v1385
      %v2254 = vpop.f32.mrb[0].mxu0
      %v2255 = vadd.f32 %v549, %v2254
      %v2256 = vpop.f32.mrb[0].mxu0
      %v2257 = vpop.f32.mrb[0].mxu0
      %v2258 = vadd.f32 %v549, %v2257
      %v2259 = vpop.f32.mrb[0].mxu0
      %2260 = vmatprep.mubr.bf16.mxu0 %v1391
      %2261 = vmatmul.mubr.bf16.gmra.mrb[0].mxu0 %v1390
      %v2262 = vpop.f32.mrb[0].mxu0
      %v2263 = vadd.f32 %v549, %v2262
      %v2264 = vpop.f32.mrb[0].mxu0
      %v2265 = vpop.f32.mrb[0].mxu0
      %v2266 = vadd.f32 %v549, %v2265
      %v2267 = vpop.f32.mrb[0].mxu0
      %2268 = vmatprep.mubr.bf16.mxu0 %v1396
      %2269 = vmatmul.mubr.bf16.gmra.mrb[0].mxu0 %v1395
      %v2270 = vpop.f32.mrb[0].mxu0
      %v2271 = vadd.f32 %v549, %v2270
      %v2272 = vpop.f32.mrb[0].mxu0
      %v2273 = vpop.f32.mrb[0].mxu0
      %v2274 = vadd.f32 %v549, %v2273
      %v2275 = vpop.f32.mrb[0].mxu0
      %2276 = vmatprep.mubr.bf16.mxu0 %v1401
      %2277 = vmatmul.mubr.bf16.gmra.mrb[0].mxu0 %v1400
      %v2278 = vpop.f32.mrb[0].mxu0
      %v2279 = vadd.f32 %v549, %v2278
      %v2280 = vpop.f32.mrb[0].mxu0
      %v2281 = vpop.f32.mrb[0].mxu0
      %v2282 = vadd.f32 %v549, %v2281
      %v2283 = vpop.f32.mrb[0].mxu0
      %2284 = vmatprep.mubr.bf16.mxu0 %v1406
      %2285 = vmatmul.mubr.bf16.gmra.mrb[0].mxu0 %v1405
      %v2286 = vpop.f32.mrb[0].mxu0
      %v2287 = vadd.f32 %v549, %v2286
      %v2288 = vpop.f32.mrb[0].mxu0
      %v2289 = vpop.f32.mrb[0].mxu0
      %v2290 = vadd.f32 %v549, %v2289
      %v2291 = vpop.f32.mrb[0].mxu0
      %2292 = vmatprep.mubr.bf16.mxu0 %v1411
      %2293 = vmatmul.mubr.bf16.gmra.mrb[0].mxu0 %v1410
      %v2294 = vpop.f32.mrb[0].mxu0
      %v2295 = vadd.f32 %v549, %v2294
      %v2296 = vpop.f32.mrb[0].mxu0
      %v2297 = vpop.f32.mrb[0].mxu0
      %v2298 = vadd.f32 %v549, %v2297
      %v2299 = vpop.f32.mrb[0].mxu0
      %2300 = vmatprep.mubr.bf16.mxu0 %v1416
      %2301 = vmatmul.mubr.bf16.gmra.mrb[0].mxu0 %v1415
      %v2302 = vpop.f32.mrb[0].mxu0
      %v2303 = vadd.f32 %v549, %v2302
      %v2304 = vpop.f32.mrb[0].mxu0
      %v2305 = vpop.f32.mrb[0].mxu0
      %v2306 = vadd.f32 %v549, %v2305
      %v2307 = vpop.f32.mrb[0].mxu0
      %2308 = vmatprep.mubr.bf16.mxu0 %v1421
      %2309 = vmatmul.mubr.bf16.gmra.mrb[0].mxu0 %v1420
      %v2310 = vpop.f32.mrb[0].mxu0
      %v2311 = vadd.f32 %v549, %v2310
      %v2312 = vpop.f32.mrb[0].mxu0
      %v2313 = vpop.f32.mrb[0].mxu0
      %v2314 = vadd.f32 %v549, %v2313
      %v2315 = vpop.f32.mrb[0].mxu0
      %2316 = vmatprep.mubr.bf16.mxu0 %v1426
      %2317 = vmatmul.mubr.bf16.gmra.mrb[0].mxu0 %v1425
      %v2318 = vpop.f32.mrb[0].mxu0
      %v2319 = vadd.f32 %v549, %v2318
      %v2320 = vpop.f32.mrb[0].mxu0
      %v2321 = vpop.f32.mrb[0].mxu0
      %v2322 = vadd.f32 %v549, %v2321
      %v2323 = vpop.f32.mrb[0].mxu0
      %2324 = vmatprep.mubr.bf16.mxu0 %v1431
      %2325 = vmatmul.mubr.bf16.gmra.mrb[0].mxu0 %v1430
      %v2326 = vpop.f32.mrb[0].mxu0
      %v2327 = vadd.f32 %v549, %v2326
      %v2328 = vpop.f32.mrb[0].mxu0
      %v2329 = vpop.f32.mrb[0].mxu0
      %v2330 = vadd.f32 %v549, %v2329
      %v2331 = vpop.f32.mrb[0].mxu0
      %2332 = vmatprep.mubr.bf16.mxu0 %v1436
      %2333 = vmatmul.mubr.bf16.gmra.mrb[0].mxu0 %v1435
      %v2334 = vpop.f32.mrb[0].mxu0
      %v2335 = vadd.f32 %v549, %v2334
      %v2336 = vpop.f32.mrb[0].mxu0
      %v2337 = vpop.f32.mrb[0].mxu0
      %v2338 = vadd.f32 %v549, %v2337
      %v2339 = vpop.f32.mrb[0].mxu0
      %2340 = vmatprep.mubr.bf16.mxu0 %v1441
      %2341 = vmatmul.mubr.bf16.gmra.mrb[0].mxu0 %v1440
      %v2342 = vpop.f32.mrb[0].mxu0
      %v2343 = vadd.f32 %v549, %v2342
      %v2344 = vpop.f32.mrb[0].mxu0
      %v2345 = vpop.f32.mrb[0].mxu0
      %v2346 = vadd.f32 %v549, %v2345
      %v2347 = vpop.f32.mrb[0].mxu0
      %2348 = vmatprep.mubr.bf16.mxu0 %v1446
      %2349 = vmatmul.mubr.bf16.gmra.mrb[0].mxu0 %v1445
      %v2350 = vpop.f32.mrb[0].mxu0
      %v2351 = vadd.f32 %v549, %v2350
      %v2352 = vpop.f32.mrb[0].mxu0
      %v2353 = vpop.f32.mrb[0].mxu0
      %v2354 = vadd.f32 %v549, %v2353
      %v2355 = vpop.f32.mrb[0].mxu0
      %2356 = vmatprep.mubr.bf16.mxu0 %v1451
      %2357 = vmatmul.mubr.bf16.gmra.mrb[0].mxu0 %v1450
      %v2358 = vpop.f32.mrb[0].mxu0
      %v2359 = vadd.f32 %v549, %v2358
      %v2360 = vpop.f32.mrb[0].mxu0
      %v2361 = vpop.f32.mrb[0].mxu0
      %v2362 = vadd.f32 %v549, %v2361
      %v2363 = vpop.f32.mrb[0].mxu0
      %2364 = vmatprep.mubr.bf16.mxu0 %v1456
      %2365 = vmatmul.mubr.bf16.gmra.mrb[0].mxu0 %v1455
      %v2366 = vpop.f32.mrb[0].mxu0
      %v2367 = vadd.f32 %v549, %v2366
      %v2368 = vpop.f32.mrb[0].mxu0
      %v2369 = vpop.f32.mrb[0].mxu0
      %v2370 = vadd.f32 %v549, %v2369
      %v2371 = vpop.f32.mrb[0].mxu0
      %2372 = vmatprep.mubr.bf16.mxu0 %v1461
      %2373 = vmatmul.mubr.bf16.gmra.mrb[0].mxu0 %v1460
      %v2374 = vpop.f32.mrb[0].mxu0
      %v2375 = vadd.f32 %v549, %v2374
      %v2376 = vpop.f32.mrb[0].mxu0
      %v2377 = vpop.f32.mrb[0].mxu0
      %v2378 = vadd.f32 %v549, %v2377
      %v2379 = vpop.f32.mrb[0].mxu0
      %2380 = vmatprep.mubr.bf16.mxu0 %v1466
      %2381 = vmatmul.mubr.bf16.gmra.mrb[0].mxu0 %v1465
      %v2382 = vpop.f32.mrb[0].mxu0
      %v2383 = vadd.f32 %v549, %v2382
      %v2384 = vpop.f32.mrb[0].mxu0
      %v2385 = vpop.f32.mrb[0].mxu0
      %v2386 = vadd.f32 %v549, %v2385
      %v2387 = vpop.f32.mrb[0].mxu0
      %2388 = vmatprep.mubr.bf16.mxu0 %v1471
      %2389 = vmatmul.mubr.bf16.gmra.mrb[0].mxu0 %v1470
      %v2390 = vpop.f32.mrb[0].mxu0
      %v2391 = vadd.f32 %v549, %v2390
      %v2392 = vpop.f32.mrb[0].mxu0
      %v2393 = vpop.f32.mrb[0].mxu0
      %v2394 = vadd.f32 %v549, %v2393
      %v2395 = vpop.f32.mrb[0].mxu0
      %2396 = vmatprep.mubr.bf16.mxu0 %v1476
      %2397 = vmatmul.mubr.bf16.gmra.mrb[0].mxu0 %v1475
      %v2398 = vpop.f32.mrb[0].mxu0
      %v2399 = vadd.f32 %v549, %v2398
      %v2400 = vpop.f32.mrb[0].mxu0
      %v2401 = vpop.f32.mrb[0].mxu0
      %v2402 = vadd.f32 %v549, %v2401
      %v2403 = vpop.f32.mrb[0].mxu0
      %2404 = vmatprep.mubr.bf16.mxu0 %v1481
      %2405 = vmatmul.mubr.bf16.gmra.mrb[0].mxu0 %v1480
      %v2406 = vpop.f32.mrb[0].mxu0
      %v2407 = vadd.f32 %v549, %v2406
      %v2408 = vpop.f32.mrb[0].mxu0
      %v2409 = vpop.f32.mrb[0].mxu0
      %v2410 = vadd.f32 %v549, %v2409
      %v2411 = vpop.f32.mrb[0].mxu0
      %2412 = vmatprep.mubr.bf16.mxu0 %v1486
      %2413 = vmatmul.mubr.bf16.gmra.mrb[0].mxu0 %v1485
      %v2414 = vpop.f32.mrb[0].mxu0
      %v2415 = vadd.f32 %v549, %v2414
      %v2416 = vpop.f32.mrb[0].mxu0
      %v2417 = vpop.f32.mrb[0].mxu0
      %v2418 = vadd.f32 %v549, %v2417
      %v2419 = vpop.f32.mrb[0].mxu0
      %2420 = vmatprep.mubr.bf16.mxu0 %v1491
      %2421 = vmatmul.mubr.bf16.gmra.mrb[0].mxu0 %v1490
      %v2422 = vpop.f32.mrb[0].mxu0
      %v2423 = vadd.f32 %v549, %v2422
      %v2424 = vpop.f32.mrb[0].mxu0
      %v2425 = vpop.f32.mrb[0].mxu0
      %v2426 = vadd.f32 %v549, %v2425
      %v2427 = vpop.f32.mrb[0].mxu0
      %2428 = vmatprep.mubr.bf16.mxu0 %v1496
      %2429 = vmatmul.mubr.bf16.gmra.mrb[0].mxu0 %v1495
      %v2430 = vpop.f32.mrb[0].mxu0
      %v2431 = vadd.f32 %v549, %v2430
      %v2432 = vpop.f32.mrb[0].mxu0
      %v2433 = vpop.f32.mrb[0].mxu0
      %v2434 = vadd.f32 %v549, %v2433
      %v2435 = vpop.f32.mrb[0].mxu0
      %2436 = vmatprep.mubr.bf16.mxu0 %v1501
      %2437 = vmatmul.mubr.bf16.gmra.mrb[0].mxu0 %v1500
      %v2438 = vpop.f32.mrb[0].mxu0
      %v2439 = vadd.f32 %v549, %v2438
      %v2440 = vpop.f32.mrb[0].mxu0
      %v2441 = vpop.f32.mrb[0].mxu0
      %v2442 = vadd.f32 %v549, %v2441
      %v2443 = vpop.f32.mrb[0].mxu0
      %2444 = vmatprep.mubr.bf16.mxu0 %v1506
      %2445 = vmatmul.mubr.bf16.gmra.mrb[0].mxu0 %v1505
      %v2446 = vpop.f32.mrb[0].mxu0
      %v2447 = vadd.f32 %v549, %v2446
      %v2448 = vpop.f32.mrb[0].mxu0
      %v2449 = vpop.f32.mrb[0].mxu0
      %v2450 = vadd.f32 %v549, %v2449
      %v2451 = vpop.f32.mrb[0].mxu0
      %2452 = vmatprep.mubr.bf16.mxu0 %v1511
      %2453 = vmatmul.mubr.bf16.gmra.mrb[0].mxu0 %v1510
      %v2454 = vpop.f32.mrb[0].mxu0
      %v2455 = vadd.f32 %v549, %v2454
      %v2456 = vpop.f32.mrb[0].mxu0
      %v2457 = vpop.f32.mrb[0].mxu0
      %v2458 = vadd.f32 %v549, %v2457
      %v2459 = vpop.f32.mrb[0].mxu0
      %2460 = vmatprep.mubr.bf16.mxu0 %v1516
      %2461 = vmatmul.mubr.bf16.gmra.mrb[0].mxu0 %v1515
      %v2462 = vpop.f32.mrb[0].mxu0
      %v2463 = vadd.f32 %v549, %v2462
      %v2464 = vpop.f32.mrb[0].mxu0
      %v2465 = vpop.f32.mrb[0].mxu0
      %v2466 = vadd.f32 %v549, %v2465
      %v2467 = vpop.f32.mrb[0].mxu0
      %2468 = vmatprep.mubr.bf16.mxu0 %v1521
      %2469 = vmatmul.mubr.bf16.gmra.mrb[0].mxu0 %v1520
      %v2470 = vpop.f32.mrb[0].mxu0
      %v2471 = vadd.f32 %v549, %v2470
      %v2472 = vpop.f32.mrb[0].mxu0
      %v2473 = vpop.f32.mrb[0].mxu0
      %v2474 = vadd.f32 %v549, %v2473
      %v2475 = vpop.f32.mrb[0].mxu0
      %2476 = vmatprep.mubr.bf16.mxu0 %v1526
      %2477 = vmatmul.mubr.bf16.gmra.mrb[0].mxu0 %v1525
      %v2478 = vpop.f32.mrb[0].mxu0
      %v2479 = vadd.f32 %v549, %v2478
      %v2480 = vpop.f32.mrb[0].mxu0
      %v2481 = vpop.f32.mrb[0].mxu0
      %v2482 = vadd.f32 %v549, %v2481
      %v2483 = vpop.f32.mrb[0].mxu0
      %2484 = vmatprep.mubr.bf16.mxu0 %v1531
      %2485 = vmatmul.mubr.bf16.gmra.mrb[0].mxu0 %v1530
      %v2486 = vpop.f32.mrb[0].mxu0
      %v2487 = vadd.f32 %v549, %v2486
      %v2488 = vpop.f32.mrb[0].mxu0
      %v2489 = vpop.f32.mrb[0].mxu0
      %v2490 = vadd.f32 %v549, %v2489
      %v2491 = vpop.f32.mrb[0].mxu0
      %2492 = vmatprep.mubr.bf16.mxu0 %v1536
      %2493 = vmatmul.mubr.bf16.gmra.mrb[0].mxu0 %v1535
      %v2494 = vpop.f32.mrb[0].mxu0
      %v2495 = vadd.f32 %v549, %v2494
      %v2496 = vpop.f32.mrb[0].mxu0
      %v2497 = vpop.f32.mrb[0].mxu0
      %v2498 = vadd.f32 %v549, %v2497
      %v2499 = vpop.f32.mrb[0].mxu0
      %2500 = vmatprep.mubr.bf16.mxu0 %v1541
      %2501 = vmatmul.mubr.bf16.gmra.mrb[0].mxu0 %v1540
      %v2502 = vpop.f32.mrb[0].mxu0
      %v2503 = vadd.f32 %v549, %v2502
      %v2504 = vpop.f32.mrb[0].mxu0
      %v2505 = vpop.f32.mrb[0].mxu0
      %v2506 = vadd.f32 %v549, %v2505
      %v2507 = vpop.f32.mrb[0].mxu0
      %2508 = vmatprep.mubr.bf16.mxu0 %v1546
      %2509 = vmatmul.mubr.bf16.gmra.mrb[0].mxu0 %v1545
      %v2510 = vpop.f32.mrb[0].mxu0
      %v2511 = vadd.f32 %v549, %v2510
      %v2512 = vpop.f32.mrb[0].mxu0
      %v2513 = vpop.f32.mrb[0].mxu0
      %v2514 = vadd.f32 %v549, %v2513
      %v2515 = vpop.f32.mrb[0].mxu0
      %2516 = vmatprep.mubr.bf16.mxu0 %v1551
      %2517 = vmatmul.mubr.bf16.gmra.mrb[0].mxu0 %v1550
      %v2518 = vpop.f32.mrb[0].mxu0
      %v2519 = vadd.f32 %v549, %v2518
      %v2520 = vpop.f32.mrb[0].mxu0
      %v2521 = vpop.f32.mrb[0].mxu0
      %v2522 = vadd.f32 %v549, %v2521
      %v2523 = vpop.f32.mrb[0].mxu0
      %2524 = vmatprep.mubr.bf16.mxu0 %v1556
      %2525 = vmatmul.mubr.bf16.gmra.mrb[0].mxu0 %v1555
      %v2526 = vpop.f32.mrb[0].mxu0
      %v2527 = vadd.f32 %v549, %v2526
      %v2528 = vpop.f32.mrb[0].mxu0
      %v2529 = vpop.f32.mrb[0].mxu0
      %v2530 = vadd.f32 %v549, %v2529
      %v2531 = vpop.f32.mrb[0].mxu0
      %2532 = vmatprep.mubr.bf16.mxu0 %v1561
      %2533 = vmatmul.mubr.bf16.gmra.mrb[0].mxu0 %v1560
      %v2534 = vpop.f32.mrb[0].mxu0
      %v2535 = vadd.f32 %v549, %v2534
      %v2536 = vpop.f32.mrb[0].mxu0
      %v2537 = vpop.f32.mrb[0].mxu0
      %v2538 = vadd.f32 %v549, %v2537
      %v2539 = vpop.f32.mrb[0].mxu0
      %2540 = vmatprep.mubr.bf16.mxu0 %v1566
      %2541 = vmatmul.mubr.bf16.gmra.mrb[0].mxu0 %v1565
      %v2542 = vpop.f32.mrb[0].mxu0
      %v2543 = vadd.f32 %v549, %v2542
      %v2544 = vpop.f32.mrb[0].mxu0
      %v2545 = vpop.f32.mrb[0].mxu0
      %v2546 = vadd.f32 %v549, %v2545
      %v2547 = vpop.f32.mrb[0].mxu0
      %2548 = vmatprep.mubr.bf16.mxu0 %v1571
      %2549 = vmatmul.mubr.bf16.gmra.mrb[0].mxu0 %v1570
      %v2550 = vpop.f32.mrb[0].mxu0
      %v2551 = vadd.f32 %v549, %v2550
      %v2552 = vpop.f32.mrb[0].mxu0
      %v2553 = vpop.f32.mrb[0].mxu0
      %v2554 = vadd.f32 %v549, %v2553
      %v2555 = vpop.f32.mrb[0].mxu0
      %2556 = vmatprep.mubr.bf16.mxu0 %v1576
      %2557 = vmatmul.mubr.bf16.gmra.mrb[0].mxu0 %v1575
      %v2558 = vpop.f32.mrb[0].mxu0
      %v2559 = vadd.f32 %v549, %v2558
      %v2560 = vpop.f32.mrb[0].mxu0
      %v2561 = vpop.f32.mrb[0].mxu0
      %v2562 = vadd.f32 %v549, %v2561
      %v2563 = vpop.f32.mrb[0].mxu0
      %2564 = vdwg.mxu0
      %2565 = vmatprep.subr.bf16.mxu0 0
      %2566 = vmatpush1.bf16.msra.mxu0 %v1936
      %2567 = vmatprep.subr.bf16.mxu0 0
      %2568 = vmatpush1.bf16.msra.mxu0 %v1937
      %2569 = vmatprep.subr.bf16.mxu0 0
      %2570 = vmatpush1.bf16.msra.mxu0 %v1938
      %2571 = vmatprep.subr.bf16.mxu0 0
      %2572 = vmatpush1.bf16.msra.mxu0 %v1939
      %2573 = vmatprep.subr.bf16.mxu0 0
      %2574 = vmatpush1.bf16.msra.mxu0 %v1940
      %2575 = vmatprep.subr.bf16.mxu0 0
      %2576 = vmatpush1.bf16.msra.mxu0 %v1941
      %2577 = vmatprep.subr.bf16.mxu0 0
      %2578 = vmatpush1.bf16.msra.mxu0 %v1942
      %2579 = vmatprep.subr.bf16.mxu0 0
      %2580 = vmatpush1.bf16.msra.mxu0 %v1943
      %2581 = vmatprep.subr.bf16.mxu0 0
      %2582 = vmatpush1.bf16.msra.mxu0 %v1944
      %2583 = vmatprep.subr.bf16.mxu0 0
      %2584 = vmatpush1.bf16.msra.mxu0 %v1945
      %2585 = vmatprep.subr.bf16.mxu0 0
      %2586 = vmatpush1.bf16.msra.mxu0 %v1946
      %2587 = vmatprep.subr.bf16.mxu0 0
      %2588 = vmatpush1.bf16.msra.mxu0 %v1947
      %2589 = vmatprep.subr.bf16.mxu0 0
      %2590 = vmatpush1.bf16.msra.mxu0 %v1948
      %2591 = vmatprep.subr.bf16.mxu0 0
      %2592 = vmatpush1.bf16.msra.mxu0 %v1949
      %2593 = vmatprep.subr.bf16.mxu0 0
      %2594 = vmatpush1.bf16.msra.mxu0 %v1950
      %2595 = vmatprep.subr.bf16.mxu0 0
      %2596 = vmatpush1.bf16.msra.mxu0 %v1951
      %2597 = vmatprep.mubr.bf16.mxu0 %v1338
      %2598 = vmatmul.mubr.bf16.gmra.mrb[0].mxu0 %v1337
      %v2599 = vpop.f32.mrb[0].mxu0
      %v2600 = vadd.f32 %v2175, %v2599
      %v2601 = vpop.f32.mrb[0].mxu0
      %v2602 = vpop.f32.mrb[0].mxu0
      %v2603 = vadd.f32 %v2178, %v2602
      %v2604 = vpop.f32.mrb[0].mxu0
      %2605 = vmatprep.mubr.bf16.mxu0 %v1343
      %2606 = vmatmul.mubr.bf16.gmra.mrb[0].mxu0 %v1342
      %v2607 = vpop.f32.mrb[0].mxu0
      %v2608 = vadd.f32 %v2183, %v2607
      %v2609 = vpop.f32.mrb[0].mxu0
      %v2610 = vpop.f32.mrb[0].mxu0
      %v2611 = vadd.f32 %v2186, %v2610
      %v2612 = vpop.f32.mrb[0].mxu0
      %2613 = vmatprep.mubr.bf16.mxu0 %v1348
      %2614 = vmatmul.mubr.bf16.gmra.mrb[0].mxu0 %v1347
      %v2615 = vpop.f32.mrb[0].mxu0
      %v2616 = vadd.f32 %v2191, %v2615
      %v2617 = vpop.f32.mrb[0].mxu0
      %v2618 = vpop.f32.mrb[0].mxu0
      %v2619 = vadd.f32 %v2194, %v2618
      %v2620 = vpop.f32.mrb[0].mxu0
      %2621 = vmatprep.mubr.bf16.mxu0 %v1353
      %2622 = vmatmul.mubr.bf16.gmra.mrb[0].mxu0 %v1352
      %v2623 = vpop.f32.mrb[0].mxu0
      %v2624 = vadd.f32 %v2199, %v2623
      %v2625 = vpop.f32.mrb[0].mxu0
      %v2626 = vpop.f32.mrb[0].mxu0
      %v2627 = vadd.f32 %v2202, %v2626
      %v2628 = vpop.f32.mrb[0].mxu0
      %2629 = vmatprep.mubr.bf16.mxu0 %v1358
      %2630 = vmatmul.mubr.bf16.gmra.mrb[0].mxu0 %v1357
      %v2631 = vpop.f32.mrb[0].mxu0
      %v2632 = vadd.f32 %v2207, %v2631
      %v2633 = vpop.f32.mrb[0].mxu0
      %v2634 = vpop.f32.mrb[0].mxu0
      %v2635 = vadd.f32 %v2210, %v2634
      %v2636 = vpop.f32.mrb[0].mxu0
      %2637 = vmatprep.mubr.bf16.mxu0 %v1363
      %2638 = vmatmul.mubr.bf16.gmra.mrb[0].mxu0 %v1362
      %v2639 = vpop.f32.mrb[0].mxu0
      %v2640 = vadd.f32 %v2215, %v2639
      %v2641 = vpop.f32.mrb[0].mxu0
      %v2642 = vpop.f32.mrb[0].mxu0
      %v2643 = vadd.f32 %v2218, %v2642
      %v2644 = vpop.f32.mrb[0].mxu0
      %2645 = vmatprep.mubr.bf16.mxu0 %v1368
      %2646 = vmatmul.mubr.bf16.gmra.mrb[0].mxu0 %v1367
      %v2647 = vpop.f32.mrb[0].mxu0
      %v2648 = vadd.f32 %v2223, %v2647
      %v2649 = vpop.f32.mrb[0].mxu0
      %v2650 = vpop.f32.mrb[0].mxu0
      %v2651 = vadd.f32 %v2226, %v2650
      %v2652 = vpop.f32.mrb[0].mxu0
      %2653 = vmatprep.mubr.bf16.mxu0 %v1373
      %2654 = vmatmul.mubr.bf16.gmra.mrb[0].mxu0 %v1372
      %v2655 = vpop.f32.mrb[0].mxu0
      %v2656 = vadd.f32 %v2231, %v2655
      %v2657 = vpop.f32.mrb[0].mxu0
      %v2658 = vpop.f32.mrb[0].mxu0
      %v2659 = vadd.f32 %v2234, %v2658
      %v2660 = vpop.f32.mrb[0].mxu0
      %2661 = vmatprep.mubr.bf16.mxu0 %v1378
      %2662 = vmatmul.mubr.bf16.gmra.mrb[0].mxu0 %v1377
      %v2663 = vpop.f32.mrb[0].mxu0
      %v2664 = vadd.f32 %v2239, %v2663
      %v2665 = vpop.f32.mrb[0].mxu0
      %v2666 = vpop.f32.mrb[0].mxu0
      %v2667 = vadd.f32 %v2242, %v2666
      %v2668 = vpop.f32.mrb[0].mxu0
      %2669 = vmatprep.mubr.bf16.mxu0 %v1383
      %2670 = vmatmul.mubr.bf16.gmra.mrb[0].mxu0 %v1382
      %v2671 = vpop.f32.mrb[0].mxu0
      %v2672 = vadd.f32 %v2247, %v2671
      %v2673 = vpop.f32.mrb[0].mxu0
      %v2674 = vpop.f32.mrb[0].mxu0
      %v2675 = vadd.f32 %v2250, %v2674
      %v2676 = vpop.f32.mrb[0].mxu0
      %2677 = vmatprep.mubr.bf16.mxu0 %v1388
      %2678 = vmatmul.mubr.bf16.gmra.mrb[0].mxu0 %v1387
      %v2679 = vpop.f32.mrb[0].mxu0
      %v2680 = vadd.f32 %v2255, %v2679
      %v2681 = vpop.f32.mrb[0].mxu0
      %v2682 = vpop.f32.mrb[0].mxu0
      %v2683 = vadd.f32 %v2258, %v2682
      %v2684 = vpop.f32.mrb[0].mxu0
      %2685 = vmatprep.mubr.bf16.mxu0 %v1393
      %2686 = vmatmul.mubr.bf16.gmra.mrb[0].mxu0 %v1392
      %v2687 = vpop.f32.mrb[0].mxu0
      %v2688 = vadd.f32 %v2263, %v2687
      %v2689 = vpop.f32.mrb[0].mxu0
      %v2690 = vpop.f32.mrb[0].mxu0
      %v2691 = vadd.f32 %v2266, %v2690
      %v2692 = vpop.f32.mrb[0].mxu0
      %2693 = vmatprep.mubr.bf16.mxu0 %v1398
      %2694 = vmatmul.mubr.bf16.gmra.mrb[0].mxu0 %v1397
      %v2695 = vpop.f32.mrb[0].mxu0
      %v2696 = vadd.f32 %v2271, %v2695
      %v2697 = vpop.f32.mrb[0].mxu0
      %v2698 = vpop.f32.mrb[0].mxu0
      %v2699 = vadd.f32 %v2274, %v2698
      %v2700 = vpop.f32.mrb[0].mxu0
      %2701 = vmatprep.mubr.bf16.mxu0 %v1403
      %2702 = vmatmul.mubr.bf16.gmra.mrb[0].mxu0 %v1402
      %v2703 = vpop.f32.mrb[0].mxu0
      %v2704 = vadd.f32 %v2279, %v2703
      %v2705 = vpop.f32.mrb[0].mxu0
      %v2706 = vpop.f32.mrb[0].mxu0
      %v2707 = vadd.f32 %v2282, %v2706
      %v2708 = vpop.f32.mrb[0].mxu0
      %2709 = vmatprep.mubr.bf16.mxu0 %v1408
      %2710 = vmatmul.mubr.bf16.gmra.mrb[0].mxu0 %v1407
      %v2711 = vpop.f32.mrb[0].mxu0
      %v2712 = vadd.f32 %v2287, %v2711
      %v2713 = vpop.f32.mrb[0].mxu0
      %v2714 = vpop.f32.mrb[0].mxu0
      %v2715 = vadd.f32 %v2290, %v2714
      %v2716 = vpop.f32.mrb[0].mxu0
      %2717 = vmatprep.mubr.bf16.mxu0 %v1413
      %2718 = vmatmul.mubr.bf16.gmra.mrb[0].mxu0 %v1412
      %v2719 = vpop.f32.mrb[0].mxu0
      %v2720 = vadd.f32 %v2295, %v2719
      %v2721 = vpop.f32.mrb[0].mxu0
      %v2722 = vpop.f32.mrb[0].mxu0
      %v2723 = vadd.f32 %v2298, %v2722
      %v2724 = vpop.f32.mrb[0].mxu0
      %2725 = vmatprep.mubr.bf16.mxu0 %v1418
      %2726 = vmatmul.mubr.bf16.gmra.mrb[0].mxu0 %v1417
      %v2727 = vpop.f32.mrb[0].mxu0
      %v2728 = vadd.f32 %v2303, %v2727
      %v2729 = vpop.f32.mrb[0].mxu0
      %v2730 = vpop.f32.mrb[0].mxu0
      %v2731 = vadd.f32 %v2306, %v2730
      %v2732 = vpop.f32.mrb[0].mxu0
      %2733 = vmatprep.mubr.bf16.mxu0 %v1423
      %2734 = vmatmul.mubr.bf16.gmra.mrb[0].mxu0 %v1422
      %v2735 = vpop.f32.mrb[0].mxu0
      %v2736 = vadd.f32 %v2311, %v2735
      %v2737 = vpop.f32.mrb[0].mxu0
      %v2738 = vpop.f32.mrb[0].mxu0
      %v2739 = vadd.f32 %v2314, %v2738
      %v2740 = vpop.f32.mrb[0].mxu0
      %2741 = vmatprep.mubr.bf16.mxu0 %v1428
      %2742 = vmatmul.mubr.bf16.gmra.mrb[0].mxu0 %v1427
      %v2743 = vpop.f32.mrb[0].mxu0
      %v2744 = vadd.f32 %v2319, %v2743
      %v2745 = vpop.f32.mrb[0].mxu0
      %v2746 = vpop.f32.mrb[0].mxu0
      %v2747 = vadd.f32 %v2322, %v2746
      %v2748 = vpop.f32.mrb[0].mxu0
      %2749 = vmatprep.mubr.bf16.mxu0 %v1433
      %2750 = vmatmul.mubr.bf16.gmra.mrb[0].mxu0 %v1432
      %v2751 = vpop.f32.mrb[0].mxu0
      %v2752 = vadd.f32 %v2327, %v2751
      %v2753 = vpop.f32.mrb[0].mxu0
      %v2754 = vpop.f32.mrb[0].mxu0
      %v2755 = vadd.f32 %v2330, %v2754
      %v2756 = vpop.f32.mrb[0].mxu0
      %2757 = vmatprep.mubr.bf16.mxu0 %v1438
      %2758 = vmatmul.mubr.bf16.gmra.mrb[0].mxu0 %v1437
      %v2759 = vpop.f32.mrb[0].mxu0
      %v2760 = vadd.f32 %v2335, %v2759
      %v2761 = vpop.f32.mrb[0].mxu0
      %v2762 = vpop.f32.mrb[0].mxu0
      %v2763 = vadd.f32 %v2338, %v2762
      %v2764 = vpop.f32.mrb[0].mxu0
      %2765 = vmatprep.mubr.bf16.mxu0 %v1443
      %2766 = vmatmul.mubr.bf16.gmra.mrb[0].mxu0 %v1442
      %v2767 = vpop.f32.mrb[0].mxu0
      %v2768 = vadd.f32 %v2343, %v2767
      %v2769 = vpop.f32.mrb[0].mxu0
      %v2770 = vpop.f32.mrb[0].mxu0
      %v2771 = vadd.f32 %v2346, %v2770
      %v2772 = vpop.f32.mrb[0].mxu0
      %2773 = vmatprep.mubr.bf16.mxu0 %v1448
      %2774 = vmatmul.mubr.bf16.gmra.mrb[0].mxu0 %v1447
      %v2775 = vpop.f32.mrb[0].mxu0
      %v2776 = vadd.f32 %v2351, %v2775
      %v2777 = vpop.f32.mrb[0].mxu0
      %v2778 = vpop.f32.mrb[0].mxu0
      %v2779 = vadd.f32 %v2354, %v2778
      %v2780 = vpop.f32.mrb[0].mxu0
      %2781 = vmatprep.mubr.bf16.mxu0 %v1453
      %2782 = vmatmul.mubr.bf16.gmra.mrb[0].mxu0 %v1452
      %v2783 = vpop.f32.mrb[0].mxu0
      %v2784 = vadd.f32 %v2359, %v2783
      %v2785 = vpop.f32.mrb[0].mxu0
      %v2786 = vpop.f32.mrb[0].mxu0
      %v2787 = vadd.f32 %v2362, %v2786
      %v2788 = vpop.f32.mrb[0].mxu0
      %2789 = vmatprep.mubr.bf16.mxu0 %v1458
      %2790 = vmatmul.mubr.bf16.gmra.mrb[0].mxu0 %v1457
      %v2791 = vpop.f32.mrb[0].mxu0
      %v2792 = vadd.f32 %v2367, %v2791
      %v2793 = vpop.f32.mrb[0].mxu0
      %v2794 = vpop.f32.mrb[0].mxu0
      %v2795 = vadd.f32 %v2370, %v2794
      %v2796 = vpop.f32.mrb[0].mxu0
      %2797 = vmatprep.mubr.bf16.mxu0 %v1463
      %2798 = vmatmul.mubr.bf16.gmra.mrb[0].mxu0 %v1462
      %v2799 = vpop.f32.mrb[0].mxu0
      %v2800 = vadd.f32 %v2375, %v2799
      %v2801 = vpop.f32.mrb[0].mxu0
      %v2802 = vpop.f32.mrb[0].mxu0
      %v2803 = vadd.f32 %v2378, %v2802
      %v2804 = vpop.f32.mrb[0].mxu0
      %2805 = vmatprep.mubr.bf16.mxu0 %v1468
      %2806 = vmatmul.mubr.bf16.gmra.mrb[0].mxu0 %v1467
      %v2807 = vpop.f32.mrb[0].mxu0
      %v2808 = vadd.f32 %v2383, %v2807
      %v2809 = vpop.f32.mrb[0].mxu0
      %v2810 = vpop.f32.mrb[0].mxu0
      %v2811 = vadd.f32 %v2386, %v2810
      %v2812 = vpop.f32.mrb[0].mxu0
      %2813 = vmatprep.mubr.bf16.mxu0 %v1473
      %2814 = vmatmul.mubr.bf16.gmra.mrb[0].mxu0 %v1472
      %v2815 = vpop.f32.mrb[0].mxu0
      %v2816 = vadd.f32 %v2391, %v2815
      %v2817 = vpop.f32.mrb[0].mxu0
      %v2818 = vpop.f32.mrb[0].mxu0
      %v2819 = vadd.f32 %v2394, %v2818
      %v2820 = vpop.f32.mrb[0].mxu0
      %2821 = vmatprep.mubr.bf16.mxu0 %v1478
      %2822 = vmatmul.mubr.bf16.gmra.mrb[0].mxu0 %v1477
      %v2823 = vpop.f32.mrb[0].mxu0
      %v2824 = vadd.f32 %v2399, %v2823
      %v2825 = vpop.f32.mrb[0].mxu0
      %v2826 = vpop.f32.mrb[0].mxu0
      %v2827 = vadd.f32 %v2402, %v2826
      %v2828 = vpop.f32.mrb[0].mxu0
      %2829 = vmatprep.mubr.bf16.mxu0 %v1483
      %2830 = vmatmul.mubr.bf16.gmra.mrb[0].mxu0 %v1482
      %v2831 = vpop.f32.mrb[0].mxu0
      %v2832 = vadd.f32 %v2407, %v2831
      %v2833 = vpop.f32.mrb[0].mxu0
      %v2834 = vpop.f32.mrb[0].mxu0
      %v2835 = vadd.f32 %v2410, %v2834
      %v2836 = vpop.f32.mrb[0].mxu0
      %2837 = vmatprep.mubr.bf16.mxu0 %v1488
      %2838 = vmatmul.mubr.bf16.gmra.mrb[0].mxu0 %v1487
      %v2839 = vpop.f32.mrb[0].mxu0
      %v2840 = vadd.f32 %v2415, %v2839
      %v2841 = vpop.f32.mrb[0].mxu0
      %v2842 = vpop.f32.mrb[0].mxu0
      %v2843 = vadd.f32 %v2418, %v2842
      %v2844 = vpop.f32.mrb[0].mxu0
      %2845 = vmatprep.mubr.bf16.mxu0 %v1493
      %2846 = vmatmul.mubr.bf16.gmra.mrb[0].mxu0 %v1492
      %v2847 = vpop.f32.mrb[0].mxu0
      %v2848 = vadd.f32 %v2423, %v2847
      %v2849 = vpop.f32.mrb[0].mxu0
      %v2850 = vpop.f32.mrb[0].mxu0
      %v2851 = vadd.f32 %v2426, %v2850
      %v2852 = vpop.f32.mrb[0].mxu0
      %2853 = vmatprep.mubr.bf16.mxu0 %v1498
      %2854 = vmatmul.mubr.bf16.gmra.mrb[0].mxu0 %v1497
      %v2855 = vpop.f32.mrb[0].mxu0
      %v2856 = vadd.f32 %v2431, %v2855
      %v2857 = vpop.f32.mrb[0].mxu0
      %v2858 = vpop.f32.mrb[0].mxu0
      %v2859 = vadd.f32 %v2434, %v2858
      %v2860 = vpop.f32.mrb[0].mxu0
      %2861 = vmatprep.mubr.bf16.mxu0 %v1503
      %2862 = vmatmul.mubr.bf16.gmra.mrb[0].mxu0 %v1502
      %v2863 = vpop.f32.mrb[0].mxu0
      %v2864 = vadd.f32 %v2439, %v2863
      %v2865 = vpop.f32.mrb[0].mxu0
      %v2866 = vpop.f32.mrb[0].mxu0
      %v2867 = vadd.f32 %v2442, %v2866
      %v2868 = vpop.f32.mrb[0].mxu0
      %2869 = vmatprep.mubr.bf16.mxu0 %v1508
      %2870 = vmatmul.mubr.bf16.gmra.mrb[0].mxu0 %v1507
      %v2871 = vpop.f32.mrb[0].mxu0
      %v2872 = vadd.f32 %v2447, %v2871
      %v2873 = vpop.f32.mrb[0].mxu0
      %v2874 = vpop.f32.mrb[0].mxu0
      %v2875 = vadd.f32 %v2450, %v2874
      %v2876 = vpop.f32.mrb[0].mxu0
      %2877 = vmatprep.mubr.bf16.mxu0 %v1513
      %2878 = vmatmul.mubr.bf16.gmra.mrb[0].mxu0 %v1512
      %v2879 = vpop.f32.mrb[0].mxu0
      %v2880 = vadd.f32 %v2455, %v2879
      %v2881 = vpop.f32.mrb[0].mxu0
      %v2882 = vpop.f32.mrb[0].mxu0
      %v2883 = vadd.f32 %v2458, %v2882
      %v2884 = vpop.f32.mrb[0].mxu0
      %2885 = vmatprep.mubr.bf16.mxu0 %v1518
      %2886 = vmatmul.mubr.bf16.gmra.mrb[0].mxu0 %v1517
      %v2887 = vpop.f32.mrb[0].mxu0
      %v2888 = vadd.f32 %v2463, %v2887
      %v2889 = vpop.f32.mrb[0].mxu0
      %v2890 = vpop.f32.mrb[0].mxu0
      %v2891 = vadd.f32 %v2466, %v2890
      %v2892 = vpop.f32.mrb[0].mxu0
      %2893 = vmatprep.mubr.bf16.mxu0 %v1523
      %2894 = vmatmul.mubr.bf16.gmra.mrb[0].mxu0 %v1522
      %v2895 = vpop.f32.mrb[0].mxu0
      %v2896 = vadd.f32 %v2471, %v2895
      %v2897 = vpop.f32.mrb[0].mxu0
      %v2898 = vpop.f32.mrb[0].mxu0
      %v2899 = vadd.f32 %v2474, %v2898
      %v2900 = vpop.f32.mrb[0].mxu0
      %2901 = vmatprep.mubr.bf16.mxu0 %v1528
      %2902 = vmatmul.mubr.bf16.gmra.mrb[0].mxu0 %v1527
      %v2903 = vpop.f32.mrb[0].mxu0
      %v2904 = vadd.f32 %v2479, %v2903
      %v2905 = vpop.f32.mrb[0].mxu0
      %v2906 = vpop.f32.mrb[0].mxu0
      %v2907 = vadd.f32 %v2482, %v2906
      %v2908 = vpop.f32.mrb[0].mxu0
      %2909 = vmatprep.mubr.bf16.mxu0 %v1533
      %2910 = vmatmul.mubr.bf16.gmra.mrb[0].mxu0 %v1532
      %v2911 = vpop.f32.mrb[0].mxu0
      %v2912 = vadd.f32 %v2487, %v2911
      %v2913 = vpop.f32.mrb[0].mxu0
      %v2914 = vpop.f32.mrb[0].mxu0
      %v2915 = vadd.f32 %v2490, %v2914
      %v2916 = vpop.f32.mrb[0].mxu0
      %2917 = vmatprep.mubr.bf16.mxu0 %v1538
      %2918 = vmatmul.mubr.bf16.gmra.mrb[0].mxu0 %v1537
      %v2919 = vpop.f32.mrb[0].mxu0
      %v2920 = vadd.f32 %v2495, %v2919
      %v2921 = vpop.f32.mrb[0].mxu0
      %v2922 = vpop.f32.mrb[0].mxu0
      %v2923 = vadd.f32 %v2498, %v2922
      %v2924 = vpop.f32.mrb[0].mxu0
      %2925 = vmatprep.mubr.bf16.mxu0 %v1543
      %2926 = vmatmul.mubr.bf16.gmra.mrb[0].mxu0 %v1542
      %v2927 = vpop.f32.mrb[0].mxu0
      %v2928 = vadd.f32 %v2503, %v2927
      %v2929 = vpop.f32.mrb[0].mxu0
      %v2930 = vpop.f32.mrb[0].mxu0
      %v2931 = vadd.f32 %v2506, %v2930
      %v2932 = vpop.f32.mrb[0].mxu0
      %2933 = vmatprep.mubr.bf16.mxu0 %v1548
      %2934 = vmatmul.mubr.bf16.gmra.mrb[0].mxu0 %v1547
      %v2935 = vpop.f32.mrb[0].mxu0
      %v2936 = vadd.f32 %v2511, %v2935
      %v2937 = vpop.f32.mrb[0].mxu0
      %v2938 = vpop.f32.mrb[0].mxu0
      %v2939 = vadd.f32 %v2514, %v2938
      %v2940 = vpop.f32.mrb[0].mxu0
      %2941 = vmatprep.mubr.bf16.mxu0 %v1553
      %2942 = vmatmul.mubr.bf16.gmra.mrb[0].mxu0 %v1552
      %v2943 = vpop.f32.mrb[0].mxu0
      %v2944 = vadd.f32 %v2519, %v2943
      %v2945 = vpop.f32.mrb[0].mxu0
      %v2946 = vpop.f32.mrb[0].mxu0
      %v2947 = vadd.f32 %v2522, %v2946
      %v2948 = vpop.f32.mrb[0].mxu0
      %2949 = vmatprep.mubr.bf16.mxu0 %v1558
      %2950 = vmatmul.mubr.bf16.gmra.mrb[0].mxu0 %v1557
      %v2951 = vpop.f32.mrb[0].mxu0
      %v2952 = vadd.f32 %v2527, %v2951
      %v2953 = vpop.f32.mrb[0].mxu0
      %v2954 = vpop.f32.mrb[0].mxu0
      %v2955 = vadd.f32 %v2530, %v2954
      %v2956 = vpop.f32.mrb[0].mxu0
      %2957 = vmatprep.mubr.bf16.mxu0 %v1563
      %2958 = vmatmul.mubr.bf16.gmra.mrb[0].mxu0 %v1562
      %v2959 = vpop.f32.mrb[0].mxu0
      %v2960 = vadd.f32 %v2535, %v2959
      %v2961 = vpop.f32.mrb[0].mxu0
      %v2962 = vpop.f32.mrb[0].mxu0
      %v2963 = vadd.f32 %v2538, %v2962
      %v2964 = vpop.f32.mrb[0].mxu0
      %2965 = vmatprep.mubr.bf16.mxu0 %v1568
      %2966 = vmatmul.mubr.bf16.gmra.mrb[0].mxu0 %v1567
      %v2967 = vpop.f32.mrb[0].mxu0
      %v2968 = vadd.f32 %v2543, %v2967
      %v2969 = vpop.f32.mrb[0].mxu0
      %v2970 = vpop.f32.mrb[0].mxu0
      %v2971 = vadd.f32 %v2546, %v2970
      %v2972 = vpop.f32.mrb[0].mxu0
      %2973 = vmatprep.mubr.bf16.mxu0 %v1573
      %2974 = vmatmul.mubr.bf16.gmra.mrb[0].mxu0 %v1572
      %v2975 = vpop.f32.mrb[0].mxu0
      %v2976 = vadd.f32 %v2551, %v2975
      %v2977 = vpop.f32.mrb[0].mxu0
      %v2978 = vpop.f32.mrb[0].mxu0
      %v2979 = vadd.f32 %v2554, %v2978
      %v2980 = vpop.f32.mrb[0].mxu0
      %2981 = vmatprep.mubr.bf16.mxu0 %v1578
      %2982 = vmatmul.mubr.bf16.gmra.mrb[0].mxu0 %v1577
      %v2983 = vpop.f32.mrb[0].mxu0
      %v2984 = vadd.f32 %v2559, %v2983
      %v2985 = vpop.f32.mrb[0].mxu0
      %v2986 = vpop.f32.mrb[0].mxu0
      %v2987 = vadd.f32 %v2562, %v2986
      %v2988 = vpop.f32.mrb[0].mxu0
      %2989 = vdwg.mxu0
      %2990 = vmatprep.subr.bf16.mxu0 0
      %2991 = vmatpush1.bf16.msra.mxu0 %v1952
      %2992 = vmatprep.subr.bf16.mxu0 0
      %2993 = vmatpush1.bf16.msra.mxu0 %v1953
      %2994 = vmatprep.subr.bf16.mxu0 0
      %2995 = vmatpush1.bf16.msra.mxu0 %v1954
      %2996 = vmatprep.subr.bf16.mxu0 0
      %2997 = vmatpush1.bf16.msra.mxu0 %v1955
      %2998 = vmatprep.subr.bf16.mxu0 0
      %2999 = vmatpush1.bf16.msra.mxu0 0
      %3000 = vmatprep.subr.bf16.mxu0 0
      %3001 = vmatpush1.bf16.msra.mxu0 0
      %3002 = vmatprep.subr.bf16.mxu0 0
      %3003 = vmatpush1.bf16.msra.mxu0 0
      %3004 = vmatprep.subr.bf16.mxu0 0
      %3005 = vmatpush1.bf16.msra.mxu0 0
      %3006 = vmatprep.subr.bf16.mxu0 0
      %3007 = vmatpush1.bf16.msra.mxu0 0
      %3008 = vmatprep.subr.bf16.mxu0 0
      %3009 = vmatpush1.bf16.msra.mxu0 0
      %3010 = vmatprep.subr.bf16.mxu0 0
      %3011 = vmatpush1.bf16.msra.mxu0 0
      %3012 = vmatprep.subr.bf16.mxu0 0
      %3013 = vmatpush1.bf16.msra.mxu0 0
      %3014 = vmatprep.subr.bf16.mxu0 0
      %3015 = vmatpush1.bf16.msra.mxu0 0
      %3016 = vmatprep.subr.bf16.mxu0 0
      %3017 = vmatpush1.bf16.msra.mxu0 0
      %3018 = vmatprep.subr.bf16.mxu0 0
      %3019 = vmatpush1.bf16.msra.mxu0 0
      %3020 = vmatprep.subr.bf16.mxu0 0
      %3021 = vmatpush1.bf16.msra.mxu0 0
      %3022 = vmatprep.mubr.bf16.mxu0 0
      %3023 = vmatmul.mubr.bf16.gmra.mrb[0].mxu0 %v1994
      %v3024 = vpop.f32.mrb[0].mxu0
      %v3025 = vadd.f32 %v2600, %v3024
      %v3026 = vpop.f32.mrb[0].mxu0
      %v3027 = vpop.f32.mrb[0].mxu0
      %v3028 = vadd.f32 %v2603, %v3027
      %v3029 = vpop.f32.mrb[0].mxu0
      %3030 = vmatprep.mubr.bf16.mxu0 0
      %3031 = vmatmul.mubr.bf16.gmra.mrb[0].mxu0 %v1997
      %v3032 = vpop.f32.mrb[0].mxu0
      %v3033 = vadd.f32 %v2608, %v3032
      %v3034 = vpop.f32.mrb[0].mxu0
      %v3035 = vpop.f32.mrb[0].mxu0
      %v3036 = vadd.f32 %v2611, %v3035
      %v3037 = vpop.f32.mrb[0].mxu0
      %3038 = vmatprep.mubr.bf16.mxu0 0
      %3039 = vmatmul.mubr.bf16.gmra.mrb[0].mxu0 %v2000
      %v3040 = vpop.f32.mrb[0].mxu0
      %v3041 = vadd.f32 %v2616, %v3040
      %v3042 = vpop.f32.mrb[0].mxu0
      %v3043 = vpop.f32.mrb[0].mxu0
      %v3044 = vadd.f32 %v2619, %v3043
      %v3045 = vpop.f32.mrb[0].mxu0
      %3046 = vmatprep.mubr.bf16.mxu0 0
      %3047 = vmatmul.mubr.bf16.gmra.mrb[0].mxu0 %v2003
      %v3048 = vpop.f32.mrb[0].mxu0
      %v3049 = vadd.f32 %v2624, %v3048
      %v3050 = vpop.f32.mrb[0].mxu0
      %v3051 = vpop.f32.mrb[0].mxu0
      %v3052 = vadd.f32 %v2627, %v3051
      %v3053 = vpop.f32.mrb[0].mxu0
      %3054 = vmatprep.mubr.bf16.mxu0 0
      %3055 = vmatmul.mubr.bf16.gmra.mrb[0].mxu0 %v2006
      %v3056 = vpop.f32.mrb[0].mxu0
      %v3057 = vadd.f32 %v2632, %v3056
      %v3058 = vpop.f32.mrb[0].mxu0
      %v3059 = vpop.f32.mrb[0].mxu0
      %v3060 = vadd.f32 %v2635, %v3059
      %v3061 = vpop.f32.mrb[0].mxu0
      %3062 = vmatprep.mubr.bf16.mxu0 0
      %3063 = vmatmul.mubr.bf16.gmra.mrb[0].mxu0 %v2009
      %v3064 = vpop.f32.mrb[0].mxu0
      %v3065 = vadd.f32 %v2640, %v3064
      %v3066 = vpop.f32.mrb[0].mxu0
      %v3067 = vpop.f32.mrb[0].mxu0
      %v3068 = vadd.f32 %v2643, %v3067
      %v3069 = vpop.f32.mrb[0].mxu0
      %3070 = vmatprep.mubr.bf16.mxu0 0
      %3071 = vmatmul.mubr.bf16.gmra.mrb[0].mxu0 %v2012
      %v3072 = vpop.f32.mrb[0].mxu0
      %v3073 = vadd.f32 %v2648, %v3072
      %v3074 = vpop.f32.mrb[0].mxu0
      %v3075 = vpop.f32.mrb[0].mxu0
      %v3076 = vadd.f32 %v2651, %v3075
      %v3077 = vpop.f32.mrb[0].mxu0
      %3078 = vmatprep.mubr.bf16.mxu0 0
      %3079 = vmatmul.mubr.bf16.gmra.mrb[0].mxu0 %v2015
      %v3080 = vpop.f32.mrb[0].mxu0
      %v3081 = vadd.f32 %v2656, %v3080
      %v3082 = vpop.f32.mrb[0].mxu0
      %v3083 = vpop.f32.mrb[0].mxu0
      %v3084 = vadd.f32 %v2659, %v3083
      %v3085 = vpop.f32.mrb[0].mxu0
      %3086 = vmatprep.mubr.bf16.mxu0 0
      %3087 = vmatmul.mubr.bf16.gmra.mrb[0].mxu0 %v2018
      %v3088 = vpop.f32.mrb[0].mxu0
      %v3089 = vadd.f32 %v2664, %v3088
      %v3090 = vpop.f32.mrb[0].mxu0
      %v3091 = vpop.f32.mrb[0].mxu0
      %v3092 = vadd.f32 %v2667, %v3091
      %v3093 = vpop.f32.mrb[0].mxu0
      %3094 = vmatprep.mubr.bf16.mxu0 0
      %3095 = vmatmul.mubr.bf16.gmra.mrb[0].mxu0 %v2021
      %v3096 = vpop.f32.mrb[0].mxu0
      %v3097 = vadd.f32 %v2672, %v3096
      %v3098 = vpop.f32.mrb[0].mxu0
      %v3099 = vpop.f32.mrb[0].mxu0
      %v3100 = vadd.f32 %v2675, %v3099
      %v3101 = vpop.f32.mrb[0].mxu0
      %3102 = vmatprep.mubr.bf16.mxu0 0
      %3103 = vmatmul.mubr.bf16.gmra.mrb[0].mxu0 %v2024
      %v3104 = vpop.f32.mrb[0].mxu0
      %v3105 = vadd.f32 %v2680, %v3104
      %v3106 = vpop.f32.mrb[0].mxu0
      %v3107 = vpop.f32.mrb[0].mxu0
      %v3108 = vadd.f32 %v2683, %v3107
      %v3109 = vpop.f32.mrb[0].mxu0
      %3110 = vmatprep.mubr.bf16.mxu0 0
      %3111 = vmatmul.mubr.bf16.gmra.mrb[0].mxu0 %v2027
      %v3112 = vpop.f32.mrb[0].mxu0
      %v3113 = vadd.f32 %v2688, %v3112
      %v3114 = vpop.f32.mrb[0].mxu0
      %v3115 = vpop.f32.mrb[0].mxu0
      %v3116 = vadd.f32 %v2691, %v3115
      %v3117 = vpop.f32.mrb[0].mxu0
      %3118 = vmatprep.mubr.bf16.mxu0 0
      %3119 = vmatmul.mubr.bf16.gmra.mrb[0].mxu0 %v2030
      %v3120 = vpop.f32.mrb[0].mxu0
      %v3121 = vadd.f32 %v2696, %v3120
      %v3122 = vpop.f32.mrb[0].mxu0
      %v3123 = vpop.f32.mrb[0].mxu0
      %v3124 = vadd.f32 %v2699, %v3123
      %v3125 = vpop.f32.mrb[0].mxu0
      %3126 = vmatprep.mubr.bf16.mxu0 0
      %3127 = vmatmul.mubr.bf16.gmra.mrb[0].mxu0 %v2033
      %v3128 = vpop.f32.mrb[0].mxu0
      %v3129 = vadd.f32 %v2704, %v3128
      %v3130 = vpop.f32.mrb[0].mxu0
      %v3131 = vpop.f32.mrb[0].mxu0
      %v3132 = vadd.f32 %v2707, %v3131
      %v3133 = vpop.f32.mrb[0].mxu0
      %3134 = vmatprep.mubr.bf16.mxu0 0
      %3135 = vmatmul.mubr.bf16.gmra.mrb[0].mxu0 %v2036
      %v3136 = vpop.f32.mrb[0].mxu0
      %v3137 = vadd.f32 %v2712, %v3136
      %v3138 = vpop.f32.mrb[0].mxu0
      %v3139 = vpop.f32.mrb[0].mxu0
      %v3140 = vadd.f32 %v2715, %v3139
      %v3141 = vpop.f32.mrb[0].mxu0
      %3142 = vmatprep.mubr.bf16.mxu0 0
      %3143 = vmatmul.mubr.bf16.gmra.mrb[0].mxu0 %v2039
      %v3144 = vpop.f32.mrb[0].mxu0
      %v3145 = vadd.f32 %v2720, %v3144
      %v3146 = vpop.f32.mrb[0].mxu0
      %v3147 = vpop.f32.mrb[0].mxu0
      %v3148 = vadd.f32 %v2723, %v3147
      %v3149 = vpop.f32.mrb[0].mxu0
      %3150 = vmatprep.mubr.bf16.mxu0 0
      %3151 = vmatmul.mubr.bf16.gmra.mrb[0].mxu0 %v2042
      %v3152 = vpop.f32.mrb[0].mxu0
      %v3153 = vadd.f32 %v2728, %v3152
      %v3154 = vpop.f32.mrb[0].mxu0
      %v3155 = vpop.f32.mrb[0].mxu0
      %v3156 = vadd.f32 %v2731, %v3155
      %v3157 = vpop.f32.mrb[0].mxu0
      %3158 = vmatprep.mubr.bf16.mxu0 0
      %3159 = vmatmul.mubr.bf16.gmra.mrb[0].mxu0 %v2045
      %v3160 = vpop.f32.mrb[0].mxu0
      %v3161 = vadd.f32 %v2736, %v3160
      %v3162 = vpop.f32.mrb[0].mxu0
      %v3163 = vpop.f32.mrb[0].mxu0
      %v3164 = vadd.f32 %v2739, %v3163
      %v3165 = vpop.f32.mrb[0].mxu0
      %3166 = vmatprep.mubr.bf16.mxu0 0
      %3167 = vmatmul.mubr.bf16.gmra.mrb[0].mxu0 %v2048
      %v3168 = vpop.f32.mrb[0].mxu0
      %v3169 = vadd.f32 %v2744, %v3168
      %v3170 = vpop.f32.mrb[0].mxu0
      %v3171 = vpop.f32.mrb[0].mxu0
      %v3172 = vadd.f32 %v2747, %v3171
      %v3173 = vpop.f32.mrb[0].mxu0
      %3174 = vmatprep.mubr.bf16.mxu0 0
      %3175 = vmatmul.mubr.bf16.gmra.mrb[0].mxu0 %v2051
      %v3176 = vpop.f32.mrb[0].mxu0
      %v3177 = vadd.f32 %v2752, %v3176
      %v3178 = vpop.f32.mrb[0].mxu0
      %v3179 = vpop.f32.mrb[0].mxu0
      %v3180 = vadd.f32 %v2755, %v3179
      %v3181 = vpop.f32.mrb[0].mxu0
      %3182 = vmatprep.mubr.bf16.mxu0 0
      %3183 = vmatmul.mubr.bf16.gmra.mrb[0].mxu0 %v2054
      %v3184 = vpop.f32.mrb[0].mxu0
      %v3185 = vadd.f32 %v2760, %v3184
      %v3186 = vpop.f32.mrb[0].mxu0
      %v3187 = vpop.f32.mrb[0].mxu0
      %v3188 = vadd.f32 %v2763, %v3187
      %v3189 = vpop.f32.mrb[0].mxu0
      %3190 = vmatprep.mubr.bf16.mxu0 0
      %3191 = vmatmul.mubr.bf16.gmra.mrb[0].mxu0 %v2057
      %v3192 = vpop.f32.mrb[0].mxu0
      %v3193 = vadd.f32 %v2768, %v3192
      %v3194 = vpop.f32.mrb[0].mxu0
      %v3195 = vpop.f32.mrb[0].mxu0
      %v3196 = vadd.f32 %v2771, %v3195
      %v3197 = vpop.f32.mrb[0].mxu0
      %3198 = vmatprep.mubr.bf16.mxu0 0
      %3199 = vmatmul.mubr.bf16.gmra.mrb[0].mxu0 %v2060
      %v3200 = vpop.f32.mrb[0].mxu0
      %v3201 = vadd.f32 %v2776, %v3200
      %v3202 = vpop.f32.mrb[0].mxu0
      %v3203 = vpop.f32.mrb[0].mxu0
      %v3204 = vadd.f32 %v2779, %v3203
      %v3205 = vpop.f32.mrb[0].mxu0
      %3206 = vmatprep.mubr.bf16.mxu0 0
      %3207 = vmatmul.mubr.bf16.gmra.mrb[0].mxu0 %v2063
      %v3208 = vpop.f32.mrb[0].mxu0
      %v3209 = vadd.f32 %v2784, %v3208
      %v3210 = vpop.f32.mrb[0].mxu0
      %v3211 = vpop.f32.mrb[0].mxu0
      %v3212 = vadd.f32 %v2787, %v3211
      %v3213 = vpop.f32.mrb[0].mxu0
      %3214 = vmatprep.mubr.bf16.mxu0 0
      %3215 = vmatmul.mubr.bf16.gmra.mrb[0].mxu0 %v2066
      %v3216 = vpop.f32.mrb[0].mxu0
      %v3217 = vadd.f32 %v2792, %v3216
      %v3218 = vpop.f32.mrb[0].mxu0
      %v3219 = vpop.f32.mrb[0].mxu0
      %v3220 = vadd.f32 %v2795, %v3219
      %v3221 = vpop.f32.mrb[0].mxu0
      %3222 = vmatprep.mubr.bf16.mxu0 0
      %3223 = vmatmul.mubr.bf16.gmra.mrb[0].mxu0 %v2069
      %v3224 = vpop.f32.mrb[0].mxu0
      %v3225 = vadd.f32 %v2800, %v3224
      %v3226 = vpop.f32.mrb[0].mxu0
      %v3227 = vpop.f32.mrb[0].mxu0
      %v3228 = vadd.f32 %v2803, %v3227
      %v3229 = vpop.f32.mrb[0].mxu0
      %3230 = vmatprep.mubr.bf16.mxu0 0
      %3231 = vmatmul.mubr.bf16.gmra.mrb[0].mxu0 %v2072
      %v3232 = vpop.f32.mrb[0].mxu0
      %v3233 = vadd.f32 %v2808, %v3232
      %v3234 = vpop.f32.mrb[0].mxu0
      %v3235 = vpop.f32.mrb[0].mxu0
      %v3236 = vadd.f32 %v2811, %v3235
      %v3237 = vpop.f32.mrb[0].mxu0
      %3238 = vmatprep.mubr.bf16.mxu0 0
      %3239 = vmatmul.mubr.bf16.gmra.mrb[0].mxu0 %v2075
      %v3240 = vpop.f32.mrb[0].mxu0
      %v3241 = vadd.f32 %v2816, %v3240
      %v3242 = vpop.f32.mrb[0].mxu0
      %v3243 = vpop.f32.mrb[0].mxu0
      %v3244 = vadd.f32 %v2819, %v3243
      %v3245 = vpop.f32.mrb[0].mxu0
      %3246 = vmatprep.mubr.bf16.mxu0 0
      %3247 = vmatmul.mubr.bf16.gmra.mrb[0].mxu0 %v2078
      %v3248 = vpop.f32.mrb[0].mxu0
      %v3249 = vadd.f32 %v2824, %v3248
      %v3250 = vpop.f32.mrb[0].mxu0
      %v3251 = vpop.f32.mrb[0].mxu0
      %v3252 = vadd.f32 %v2827, %v3251
      %v3253 = vpop.f32.mrb[0].mxu0
      %3254 = vmatprep.mubr.bf16.mxu0 0
      %3255 = vmatmul.mubr.bf16.gmra.mrb[0].mxu0 %v2081
      %v3256 = vpop.f32.mrb[0].mxu0
      %v3257 = vadd.f32 %v2832, %v3256
      %v3258 = vpop.f32.mrb[0].mxu0
      %v3259 = vpop.f32.mrb[0].mxu0
      %v3260 = vadd.f32 %v2835, %v3259
      %v3261 = vpop.f32.mrb[0].mxu0
      %3262 = vmatprep.mubr.bf16.mxu0 0
      %3263 = vmatmul.mubr.bf16.gmra.mrb[0].mxu0 %v2084
      %v3264 = vpop.f32.mrb[0].mxu0
      %v3265 = vadd.f32 %v2840, %v3264
      %v3266 = vpop.f32.mrb[0].mxu0
      %v3267 = vpop.f32.mrb[0].mxu0
      %v3268 = vadd.f32 %v2843, %v3267
      %v3269 = vpop.f32.mrb[0].mxu0
      %3270 = vmatprep.mubr.bf16.mxu0 0
      %3271 = vmatmul.mubr.bf16.gmra.mrb[0].mxu0 %v2087
      %v3272 = vpop.f32.mrb[0].mxu0
      %v3273 = vadd.f32 %v2848, %v3272
      %v3274 = vpop.f32.mrb[0].mxu0
      %v3275 = vpop.f32.mrb[0].mxu0
      %v3276 = vadd.f32 %v2851, %v3275
      %v3277 = vpop.f32.mrb[0].mxu0
      %3278 = vmatprep.mubr.bf16.mxu0 0
      %3279 = vmatmul.mubr.bf16.gmra.mrb[0].mxu0 %v2090
      %v3280 = vpop.f32.mrb[0].mxu0
      %v3281 = vadd.f32 %v2856, %v3280
      %v3282 = vpop.f32.mrb[0].mxu0
      %v3283 = vpop.f32.mrb[0].mxu0
      %v3284 = vadd.f32 %v2859, %v3283
      %v3285 = vpop.f32.mrb[0].mxu0
      %3286 = vmatprep.mubr.bf16.mxu0 0
      %3287 = vmatmul.mubr.bf16.gmra.mrb[0].mxu0 %v2093
      %v3288 = vpop.f32.mrb[0].mxu0
      %v3289 = vadd.f32 %v2864, %v3288
      %v3290 = vpop.f32.mrb[0].mxu0
      %v3291 = vpop.f32.mrb[0].mxu0
      %v3292 = vadd.f32 %v2867, %v3291
      %v3293 = vpop.f32.mrb[0].mxu0
      %3294 = vmatprep.mubr.bf16.mxu0 0
      %3295 = vmatmul.mubr.bf16.gmra.mrb[0].mxu0 %v2096
      %v3296 = vpop.f32.mrb[0].mxu0
      %v3297 = vadd.f32 %v2872, %v3296
      %v3298 = vpop.f32.mrb[0].mxu0
      %v3299 = vpop.f32.mrb[0].mxu0
      %v3300 = vadd.f32 %v2875, %v3299
      %v3301 = vpop.f32.mrb[0].mxu0
      %3302 = vmatprep.mubr.bf16.mxu0 0
      %3303 = vmatmul.mubr.bf16.gmra.mrb[0].mxu0 %v2099
      %v3304 = vpop.f32.mrb[0].mxu0
      %v3305 = vadd.f32 %v2880, %v3304
      %v3306 = vpop.f32.mrb[0].mxu0
      %v3307 = vpop.f32.mrb[0].mxu0
      %v3308 = vadd.f32 %v2883, %v3307
      %v3309 = vpop.f32.mrb[0].mxu0
      %3310 = vmatprep.mubr.bf16.mxu0 0
      %3311 = vmatmul.mubr.bf16.gmra.mrb[0].mxu0 %v2102
      %v3312 = vpop.f32.mrb[0].mxu0
      %v3313 = vadd.f32 %v2888, %v3312
      %v3314 = vpop.f32.mrb[0].mxu0
      %v3315 = vpop.f32.mrb[0].mxu0
      %v3316 = vadd.f32 %v2891, %v3315
      %v3317 = vpop.f32.mrb[0].mxu0
      %3318 = vmatprep.mubr.bf16.mxu0 0
      %3319 = vmatmul.mubr.bf16.gmra.mrb[0].mxu0 %v2105
      %v3320 = vpop.f32.mrb[0].mxu0
      %v3321 = vadd.f32 %v2896, %v3320
      %v3322 = vpop.f32.mrb[0].mxu0
      %v3323 = vpop.f32.mrb[0].mxu0
      %v3324 = vadd.f32 %v2899, %v3323
      %v3325 = vpop.f32.mrb[0].mxu0
      %3326 = vmatprep.mubr.bf16.mxu0 0
      %3327 = vmatmul.mubr.bf16.gmra.mrb[0].mxu0 %v2108
      %v3328 = vpop.f32.mrb[0].mxu0
      %v3329 = vadd.f32 %v2904, %v3328
      %v3330 = vpop.f32.mrb[0].mxu0
      %v3331 = vpop.f32.mrb[0].mxu0
      %v3332 = vadd.f32 %v2907, %v3331
      %v3333 = vpop.f32.mrb[0].mxu0
      %3334 = vmatprep.mubr.bf16.mxu0 0
      %3335 = vmatmul.mubr.bf16.gmra.mrb[0].mxu0 %v2111
      %v3336 = vpop.f32.mrb[0].mxu0
      %v3337 = vadd.f32 %v2912, %v3336
      %v3338 = vpop.f32.mrb[0].mxu0
      %v3339 = vpop.f32.mrb[0].mxu0
      %v3340 = vadd.f32 %v2915, %v3339
      %v3341 = vpop.f32.mrb[0].mxu0
      %3342 = vmatprep.mubr.bf16.mxu0 0
      %3343 = vmatmul.mubr.bf16.gmra.mrb[0].mxu0 %v2114
      %v3344 = vpop.f32.mrb[0].mxu0
      %v3345 = vadd.f32 %v2920, %v3344
      %v3346 = vpop.f32.mrb[0].mxu0
      %v3347 = vpop.f32.mrb[0].mxu0
      %v3348 = vadd.f32 %v2923, %v3347
      %v3349 = vpop.f32.mrb[0].mxu0
      %3350 = vmatprep.mubr.bf16.mxu0 0
      %3351 = vmatmul.mubr.bf16.gmra.mrb[0].mxu0 %v2117
      %v3352 = vpop.f32.mrb[0].mxu0
      %v3353 = vadd.f32 %v2928, %v3352
      %v3354 = vpop.f32.mrb[0].mxu0
      %v3355 = vpop.f32.mrb[0].mxu0
      %v3356 = vadd.f32 %v2931, %v3355
      %v3357 = vpop.f32.mrb[0].mxu0
      %3358 = vmatprep.mubr.bf16.mxu0 0
      %3359 = vmatmul.mubr.bf16.gmra.mrb[0].mxu0 %v2120
      %v3360 = vpop.f32.mrb[0].mxu0
      %v3361 = vadd.f32 %v2936, %v3360
      %v3362 = vpop.f32.mrb[0].mxu0
      %v3363 = vpop.f32.mrb[0].mxu0
      %v3364 = vadd.f32 %v2939, %v3363
      %v3365 = vpop.f32.mrb[0].mxu0
      %3366 = vmatprep.mubr.bf16.mxu0 0
      %3367 = vmatmul.mubr.bf16.gmra.mrb[0].mxu0 %v2123
      %v3368 = vpop.f32.mrb[0].mxu0
      %v3369 = vadd.f32 %v2944, %v3368
      %v3370 = vpop.f32.mrb[0].mxu0
      %v3371 = vpop.f32.mrb[0].mxu0
      %v3372 = vadd.f32 %v2947, %v3371
      %v3373 = vpop.f32.mrb[0].mxu0
      %3374 = vmatprep.mubr.bf16.mxu0 0
      %3375 = vmatmul.mubr.bf16.gmra.mrb[0].mxu0 %v2126
      %v3376 = vpop.f32.mrb[0].mxu0
      %v3377 = vadd.f32 %v2952, %v3376
      %v3378 = vpop.f32.mrb[0].mxu0
      %v3379 = vpop.f32.mrb[0].mxu0
      %v3380 = vadd.f32 %v2955, %v3379
      %v3381 = vpop.f32.mrb[0].mxu0
      %3382 = vmatprep.mubr.bf16.mxu0 0
      %3383 = vmatmul.mubr.bf16.gmra.mrb[0].mxu0 %v2129
      %v3384 = vpop.f32.mrb[0].mxu0
      %v3385 = vadd.f32 %v2960, %v3384
      %v3386 = vpop.f32.mrb[0].mxu0
      %v3387 = vpop.f32.mrb[0].mxu0
      %v3388 = vadd.f32 %v2963, %v3387
      %v3389 = vpop.f32.mrb[0].mxu0
      %3390 = vmatprep.mubr.bf16.mxu0 0
      %3391 = vmatmul.mubr.bf16.gmra.mrb[0].mxu0 %v2132
      %v3392 = vpop.f32.mrb[0].mxu0
      %v3393 = vadd.f32 %v2968, %v3392
      %v3394 = vpop.f32.mrb[0].mxu0
      %v3395 = vpop.f32.mrb[0].mxu0
      %v3396 = vadd.f32 %v2971, %v3395
      %v3397 = vpop.f32.mrb[0].mxu0
      %3398 = vmatprep.mubr.bf16.mxu0 0
      %3399 = vmatmul.mubr.bf16.gmra.mrb[0].mxu0 %v2135
      %v3400 = vpop.f32.mrb[0].mxu0
      %v3401 = vadd.f32 %v2976, %v3400
      %v3402 = vpop.f32.mrb[0].mxu0
      %v3403 = vpop.f32.mrb[0].mxu0
      %v3404 = vadd.f32 %v2979, %v3403
      %v3405 = vpop.f32.mrb[0].mxu0
      %3406 = vmatprep.mubr.bf16.mxu0 0
      %3407 = vmatmul.mubr.bf16.gmra.mrb[0].mxu0 %v2138
      %v3408 = vpop.f32.mrb[0].mxu0
      %v3409 = vadd.f32 %v2984, %v3408
      %v3410 = vpop.f32.mrb[0].mxu0
      %v3411 = vpop.f32.mrb[0].mxu0
      %v3412 = vadd.f32 %v2987, %v3411
      %v3413 = vpop.f32.mrb[0].mxu0
      %3414 = vdwg.mxu0
      %v3415 = vmax.f32 %v3025, 0.0
      %v3416 = vmax.f32 %v3028, 0.0
      %v3417 = vmax.f32 %v3033, 0.0
      %v3418 = vmax.f32 %v3036, 0.0
      %v3419 = vmax.f32 %v3041, 0.0
      %v3420 = vmax.f32 %v3044, 0.0
      %v3421 = vmax.f32 %v3049, 0.0
      %v3422 = vmax.f32 %v3052, 0.0
      %v3423 = vmax.f32 %v3057, 0.0
      %v3424 = vmax.f32 %v3060, 0.0
      %v3425 = vmax.f32 %v3065, 0.0
      %v3426 = vmax.f32 %v3068, 0.0
      %v3427 = vmax.f32 %v3073, 0.0
      %v3428 = vmax.f32 %v3076, 0.0
      %v3429 = vmax.f32 %v3081, 0.0
      %v3430 = vmax.f32 %v3084, 0.0
      %v3431 = vmax.f32 %v3089, 0.0
      %v3432 = vmax.f32 %v3092, 0.0
      %v3433 = vmax.f32 %v3097, 0.0
      %v3434 = vmax.f32 %v3100, 0.0
      %v3435 = vmax.f32 %v3105, 0.0
      %v3436 = vmax.f32 %v3108, 0.0
      %v3437 = vmax.f32 %v3113, 0.0
      %v3438 = vmax.f32 %v3116, 0.0
      %v3439 = vmax.f32 %v3121, 0.0
      %v3440 = vmax.f32 %v3124, 0.0
      %v3441 = vmax.f32 %v3129, 0.0
      %v3442 = vmax.f32 %v3132, 0.0
      %v3443 = vmax.f32 %v3137, 0.0
      %v3444 = vmax.f32 %v3140, 0.0
      %v3445 = vmax.f32 %v3145, 0.0
      %v3446 = vmax.f32 %v3148, 0.0
      %v3447 = vmax.f32 %v3153, 0.0
      %v3448 = vmax.f32 %v3156, 0.0
      %v3449 = vmax.f32 %v3161, 0.0
      %v3450 = vmax.f32 %v3164, 0.0
      %v3451 = vmax.f32 %v3169, 0.0
      %v3452 = vmax.f32 %v3172, 0.0
      %v3453 = vmax.f32 %v3177, 0.0
      %v3454 = vmax.f32 %v3180, 0.0
      %v3455 = vmax.f32 %v3185, 0.0
      %v3456 = vmax.f32 %v3188, 0.0
      %v3457 = vmax.f32 %v3193, 0.0
      %v3458 = vmax.f32 %v3196, 0.0
      %v3459 = vmax.f32 %v3201, 0.0
      %v3460 = vmax.f32 %v3204, 0.0
      %v3461 = vmax.f32 %v3209, 0.0
      %v3462 = vmax.f32 %v3212, 0.0
      %v3463 = vmax.f32 %v3217, 0.0
      %v3464 = vmax.f32 %v3220, 0.0
      %v3465 = vmax.f32 %v3225, 0.0
      %v3466 = vmax.f32 %v3228, 0.0
      %v3467 = vmax.f32 %v3233, 0.0
      %v3468 = vmax.f32 %v3236, 0.0
      %v3469 = vmax.f32 %v3241, 0.0
      %v3470 = vmax.f32 %v3244, 0.0
      %v3471 = vmax.f32 %v3249, 0.0
      %v3472 = vmax.f32 %v3252, 0.0
      %v3473 = vmax.f32 %v3257, 0.0
      %v3474 = vmax.f32 %v3260, 0.0
      %v3475 = vmax.f32 %v3265, 0.0
      %v3476 = vmax.f32 %v3268, 0.0
      %v3477 = vmax.f32 %v3273, 0.0
      %v3478 = vmax.f32 %v3276, 0.0
      %v3479 = vmax.f32 %v3281, 0.0
      %v3480 = vmax.f32 %v3284, 0.0
      %v3481 = vmax.f32 %v3289, 0.0
      %v3482 = vmax.f32 %v3292, 0.0
      %v3483 = vmax.f32 %v3297, 0.0
      %v3484 = vmax.f32 %v3300, 0.0
      %v3485 = vmax.f32 %v3305, 0.0
      %v3486 = vmax.f32 %v3308, 0.0
      %v3487 = vmax.f32 %v3313, 0.0
      %v3488 = vmax.f32 %v3316, 0.0
      %v3489 = vmax.f32 %v3321, 0.0
      %v3490 = vmax.f32 %v3324, 0.0
      %v3491 = vmax.f32 %v3329, 0.0
      %v3492 = vmax.f32 %v3332, 0.0
      %v3493 = vmax.f32 %v3337, 0.0
      %v3494 = vmax.f32 %v3340, 0.0
      %v3495 = vmax.f32 %v3345, 0.0
      %v3496 = vmax.f32 %v3348, 0.0
      %v3497 = vmax.f32 %v3353, 0.0
      %v3498 = vmax.f32 %v3356, 0.0
      %v3499 = vmax.f32 %v3361, 0.0
      %v3500 = vmax.f32 %v3364, 0.0
      %v3501 = vmax.f32 %v3369, 0.0
      %v3502 = vmax.f32 %v3372, 0.0
      %v3503 = vmax.f32 %v3377, 0.0
      %v3504 = vmax.f32 %v3380, 0.0
      %v3505 = vmax.f32 %v3385, 0.0
      %v3506 = vmax.f32 %v3388, 0.0
      %v3507 = vmax.f32 %v3393, 0.0
      %v3508 = vmax.f32 %v3396, 0.0
      %v3509 = vmax.f32 %v3401, 0.0
      %v3510 = vmax.f32 %v3404, 0.0
      %v3511 = vmax.f32 %v3409, 0.0
      %v3512 = vmax.f32 %v3412, 0.0
      %v3513 = vpack.c.bf16 %v3416, %v3415
      %v3514 = vpack.c.bf16 %v3418, %v3417
      %v3515 = vpack.c.bf16 %v3420, %v3419
      %v3516 = vpack.c.bf16 %v3422, %v3421
      %v3517 = vpack.c.bf16 %v3424, %v3423
      %v3518 = vpack.c.bf16 %v3426, %v3425
      %v3519 = vpack.c.bf16 %v3428, %v3427
      %v3520 = vpack.c.bf16 %v3430, %v3429
      %v3521 = vpack.c.bf16 %v3432, %v3431
      %v3522 = vpack.c.bf16 %v3434, %v3433
      %v3523 = vpack.c.bf16 %v3436, %v3435
      %v3524 = vpack.c.bf16 %v3438, %v3437
      %v3525 = vpack.c.bf16 %v3440, %v3439
      %v3526 = vpack.c.bf16 %v3442, %v3441
      %v3527 = vpack.c.bf16 %v3444, %v3443
      %v3528 = vpack.c.bf16 %v3446, %v3445
      %v3529 = vpack.c.bf16 %v3448, %v3447
      %v3530 = vpack.c.bf16 %v3450, %v3449
      %v3531 = vpack.c.bf16 %v3452, %v3451
      %v3532 = vpack.c.bf16 %v3454, %v3453
      %v3533 = vpack.c.bf16 %v3456, %v3455
      %v3534 = vpack.c.bf16 %v3458, %v3457
      %v3535 = vpack.c.bf16 %v3460, %v3459
      %v3536 = vpack.c.bf16 %v3462, %v3461
      %v3537 = vpack.c.bf16 %v3464, %v3463
      %v3538 = vpack.c.bf16 %v3466, %v3465
      %v3539 = vpack.c.bf16 %v3468, %v3467
      %v3540 = vpack.c.bf16 %v3470, %v3469
      %v3541 = vpack.c.bf16 %v3472, %v3471
      %v3542 = vpack.c.bf16 %v3474, %v3473
      %v3543 = vpack.c.bf16 %v3476, %v3475
      %v3544 = vpack.c.bf16 %v3478, %v3477
      %v3545 = vpack.c.bf16 %v3480, %v3479
      %v3546 = vpack.c.bf16 %v3482, %v3481
      %v3547 = vpack.c.bf16 %v3484, %v3483
      %v3548 = vpack.c.bf16 %v3486, %v3485
      %v3549 = vpack.c.bf16 %v3488, %v3487
      %v3550 = vpack.c.bf16 %v3490, %v3489
      %v3551 = vpack.c.bf16 %v3492, %v3491
      %v3552 = vpack.c.bf16 %v3494, %v3493
      %v3553 = vpack.c.bf16 %v3496, %v3495
      %v3554 = vpack.c.bf16 %v3498, %v3497
      %v3555 = vpack.c.bf16 %v3500, %v3499
      %v3556 = vpack.c.bf16 %v3502, %v3501
      %v3557 = vpack.c.bf16 %v3504, %v3503
      %v3558 = vpack.c.bf16 %v3506, %v3505
      %v3559 = vpack.c.bf16 %v3508, %v3507
      %v3560 = vpack.c.bf16 %v3510, %v3509
      %v3561 = vpack.c.bf16 %v3512, %v3511
      %v3611 = vunpack.c.l.b16 %v3513
      %v3612 = vunpack.c.h.b16 %v3513
      %v3613 = vunpack.c.l.b16 %v3514
      %v3614 = vunpack.c.h.b16 %v3514
      %v3615 = vunpack.c.l.b16 %v3515
      %v3616 = vunpack.c.h.b16 %v3515
      %v3617 = vunpack.c.l.b16 %v3516
      %v3618 = vunpack.c.h.b16 %v3516
      %v3619 = vunpack.c.l.b16 %v3517
      %v3620 = vunpack.c.h.b16 %v3517
      %v3621 = vunpack.c.l.b16 %v3518
      %v3622 = vunpack.c.h.b16 %v3518
      %v3623 = vunpack.c.l.b16 %v3519
      %v3624 = vunpack.c.h.b16 %v3519
      %v3625 = vunpack.c.l.b16 %v3520
      %v3626 = vunpack.c.h.b16 %v3520
      %v3627 = vunpack.c.l.b16 %v3521
      %v3628 = vunpack.c.h.b16 %v3521
      %v3629 = vunpack.c.l.b16 %v3522
      %v3630 = vunpack.c.h.b16 %v3522
      %v3631 = vunpack.c.l.b16 %v3523
      %v3632 = vunpack.c.h.b16 %v3523
      %v3633 = vunpack.c.l.b16 %v3524
      %v3634 = vunpack.c.h.b16 %v3524
      %v3635 = vunpack.c.l.b16 %v3525
      %v3636 = vunpack.c.h.b16 %v3525
      %v3637 = vunpack.c.l.b16 %v3526
      %v3638 = vunpack.c.h.b16 %v3526
      %v3639 = vunpack.c.l.b16 %v3527
      %v3640 = vunpack.c.h.b16 %v3527
      %v3641 = vunpack.c.l.b16 %v3528
      %v3642 = vunpack.c.h.b16 %v3528
      %v3643 = vunpack.c.l.b16 %v3529
      %v3644 = vunpack.c.h.b16 %v3529
      %v3645 = vunpack.c.l.b16 %v3530
      %v3646 = vunpack.c.h.b16 %v3530
      %v3647 = vunpack.c.l.b16 %v3531
      %v3648 = vunpack.c.h.b16 %v3531
      %v3649 = vunpack.c.l.b16 %v3532
      %v3650 = vunpack.c.h.b16 %v3532
      %v3651 = vunpack.c.l.b16 %v3533
      %v3652 = vunpack.c.h.b16 %v3533
      %v3653 = vunpack.c.l.b16 %v3534
      %v3654 = vunpack.c.h.b16 %v3534
      %v3655 = vunpack.c.l.b16 %v3535
      %v3656 = vunpack.c.h.b16 %v3535
      %v3657 = vunpack.c.l.b16 %v3536
      %v3658 = vunpack.c.h.b16 %v3536
      %v3659 = vunpack.c.l.b16 %v3537
      %v3660 = vunpack.c.h.b16 %v3537
      %v3661 = vunpack.c.l.b16 %v3538
      %v3662 = vunpack.c.h.b16 %v3538
      %v3663 = vunpack.c.l.b16 %v3539
      %v3664 = vunpack.c.h.b16 %v3539
      %v3665 = vunpack.c.l.b16 %v3540
      %v3666 = vunpack.c.h.b16 %v3540
      %v3667 = vunpack.c.l.b16 %v3541
      %v3668 = vunpack.c.h.b16 %v3541
      %v3669 = vunpack.c.l.b16 %v3542
      %v3670 = vunpack.c.h.b16 %v3542
      %v3671 = vunpack.c.l.b16 %v3543
      %v3672 = vunpack.c.h.b16 %v3543
      %v3673 = vunpack.c.l.b16 %v3544
      %v3674 = vunpack.c.h.b16 %v3544
      %v3675 = vunpack.c.l.b16 %v3545
      %v3676 = vunpack.c.h.b16 %v3545
      %v3677 = vunpack.c.l.b16 %v3546
      %v3678 = vunpack.c.h.b16 %v3546
      %v3679 = vunpack.c.l.b16 %v3547
      %v3680 = vunpack.c.h.b16 %v3547
      %v3681 = vunpack.c.l.b16 %v3548
      %v3682 = vunpack.c.h.b16 %v3548
      %v3683 = vunpack.c.l.b16 %v3549
      %v3684 = vunpack.c.h.b16 %v3549
      %v3685 = vunpack.c.l.b16 %v3550
      %v3686 = vunpack.c.h.b16 %v3550
      %v3687 = vunpack.c.l.b16 %v3551
      %v3688 = vunpack.c.h.b16 %v3551
      %v3689 = vunpack.c.l.b16 %v3552
      %v3690 = vunpack.c.h.b16 %v3552
      %v3691 = vunpack.c.l.b16 %v3553
      %v3692 = vunpack.c.h.b16 %v3553
      %v3693 = vunpack.c.l.b16 %v3554
      %v3694 = vunpack.c.h.b16 %v3554
      %v3695 = vunpack.c.l.b16 %v3555
      %v3696 = vunpack.c.h.b16 %v3555
      %v3697 = vunpack.c.l.b16 %v3556
      %v3698 = vunpack.c.h.b16 %v3556
      %v3699 = vunpack.c.l.b16 %v3557
      %v3700 = vunpack.c.h.b16 %v3557
      %v3701 = vunpack.c.l.b16 %v3558
      %v3702 = vunpack.c.h.b16 %v3558
      %v3703 = vunpack.c.l.b16 %v3559
      %v3704 = vunpack.c.h.b16 %v3559
      %v3705 = vunpack.c.l.b16 %v3560
      %v3706 = vunpack.c.h.b16 %v3560
      %v3707 = vunpack.c.l.b16 %v3561
      %v3708 = vunpack.c.h.b16 %v3561
      %v3709 = vpack.c.b16 %v3611, %v3611
      %v3710 = vpack.c.b16 %v3612, %v3612
      %v3711 = vpack.c.b16 %v3613, %v3613
      %v3712 = vpack.c.b16 %v3614, %v3614
      %v3713 = vpack.c.b16 %v3615, %v3615
      %v3714 = vpack.c.b16 %v3616, %v3616
      %v3715 = vpack.c.b16 %v3617, %v3617
      %v3716 = vpack.c.b16 %v3618, %v3618
      %v3717 = vpack.c.b16 %v3619, %v3619
      %v3718 = vpack.c.b16 %v3620, %v3620
      %v3719 = vpack.c.b16 %v3621, %v3621
      %v3720 = vpack.c.b16 %v3622, %v3622
      %v3721 = vpack.c.b16 %v3623, %v3623
      %v3722 = vpack.c.b16 %v3624, %v3624
      %v3723 = vpack.c.b16 %v3625, %v3625
      %v3724 = vpack.c.b16 %v3626, %v3626
      %v3725 = vpack.c.b16 %v3627, %v3627
      %v3726 = vpack.c.b16 %v3628, %v3628
      %v3727 = vpack.c.b16 %v3629, %v3629
      %v3728 = vpack.c.b16 %v3630, %v3630
      %v3729 = vpack.c.b16 %v3631, %v3631
      %v3730 = vpack.c.b16 %v3632, %v3632
      %v3731 = vpack.c.b16 %v3633, %v3633
      %v3732 = vpack.c.b16 %v3634, %v3634
      %v3733 = vpack.c.b16 %v3635, %v3635
      %v3734 = vpack.c.b16 %v3636, %v3636
      %v3735 = vpack.c.b16 %v3637, %v3637
      %v3736 = vpack.c.b16 %v3638, %v3638
      %v3737 = vpack.c.b16 %v3639, %v3639
      %v3738 = vpack.c.b16 %v3640, %v3640
      %v3739 = vpack.c.b16 %v3641, %v3641
      %v3740 = vpack.c.b16 %v3642, %v3642
      %v3741 = vpack.c.b16 %v3643, %v3643
      %v3742 = vpack.c.b16 %v3644, %v3644
      %v3743 = vpack.c.b16 %v3645, %v3645
      %v3744 = vpack.c.b16 %v3646, %v3646
      %v3745 = vpack.c.b16 %v3647, %v3647
      %v3746 = vpack.c.b16 %v3648, %v3648
      %v3747 = vpack.c.b16 %v3649, %v3649
      %v3748 = vpack.c.b16 %v3650, %v3650
      %v3749 = vpack.c.b16 %v3651, %v3651
      %v3750 = vpack.c.b16 %v3652, %v3652
      %v3751 = vpack.c.b16 %v3653, %v3653
      %v3752 = vpack.c.b16 %v3654, %v3654
      %v3753 = vpack.c.b16 %v3655, %v3655
      %v3754 = vpack.c.b16 %v3656, %v3656
      %v3755 = vpack.c.b16 %v3657, %v3657
      %v3756 = vpack.c.b16 %v3658, %v3658
      %v3757 = vpack.c.b16 %v3659, %v3659
      %v3758 = vpack.c.b16 %v3660, %v3660
      %v3759 = vpack.c.b16 %v3661, %v3661
      %v3760 = vpack.c.b16 %v3662, %v3662
      %v3761 = vpack.c.b16 %v3663, %v3663
      %v3762 = vpack.c.b16 %v3664, %v3664
      %v3763 = vpack.c.b16 %v3665, %v3665
      %v3764 = vpack.c.b16 %v3666, %v3666
      %v3765 = vpack.c.b16 %v3667, %v3667
      %v3766 = vpack.c.b16 %v3668, %v3668
      %v3767 = vpack.c.b16 %v3669, %v3669
      %v3768 = vpack.c.b16 %v3670, %v3670
      %v3769 = vpack.c.b16 %v3671, %v3671
      %v3770 = vpack.c.b16 %v3672, %v3672
      %v3771 = vpack.c.b16 %v3673, %v3673
      %v3772 = vpack.c.b16 %v3674, %v3674
      %v3773 = vpack.c.b16 %v3675, %v3675
      %v3774 = vpack.c.b16 %v3676, %v3676
      %v3775 = vpack.c.b16 %v3677, %v3677
      %v3776 = vpack.c.b16 %v3678, %v3678
      %v3777 = vpack.c.b16 %v3679, %v3679
      %v3778 = vpack.c.b16 %v3680, %v3680
      %v3779 = vpack.c.b16 %v3681, %v3681
      %v3780 = vpack.c.b16 %v3682, %v3682
      %v3781 = vpack.c.b16 %v3683, %v3683
      %v3782 = vpack.c.b16 %v3684, %v3684
      %v3783 = vpack.c.b16 %v3685, %v3685
      %v3784 = vpack.c.b16 %v3686, %v3686
      %v3785 = vpack.c.b16 %v3687, %v3687
      %v3786 = vpack.c.b16 %v3688, %v3688
      %v3787 = vpack.c.b16 %v3689, %v3689
      %v3788 = vpack.c.b16 %v3690, %v3690
      %v3789 = vpack.c.b16 %v3691, %v3691
      %v3790 = vpack.c.b16 %v3692, %v3692
      %v3791 = vpack.c.b16 %v3693, %v3693
      %v3792 = vpack.c.b16 %v3694, %v3694
      %v3793 = vpack.c.b16 %v3695, %v3695
      %v3794 = vpack.c.b16 %v3696, %v3696
      %v3795 = vpack.c.b16 %v3697, %v3697
      %v3796 = vpack.c.b16 %v3698, %v3698
      %v3797 = vpack.c.b16 %v3699, %v3699
      %v3798 = vpack.c.b16 %v3700, %v3700
      %v3799 = vpack.c.b16 %v3701, %v3701
      %v3800 = vpack.c.b16 %v3702, %v3702
      %v3801 = vpack.c.b16 %v3703, %v3703
      %v3802 = vpack.c.b16 %v3704, %v3704
      %v3803 = vpack.c.b16 %v3705, %v3705
      %v3804 = vpack.c.b16 %v3706, %v3706
      %v3805 = vpack.c.b16 %v3707, %v3707
      %v3806 = vpack.c.b16 %v3708, %v3708
      %3905 = vst [vmem:[%s175] sm:$0xf] %v3709
      %3906 = vst [vmem:[%s175 + $0x4] sm:$0xf] %v3710
      %3907 = vst [vmem:[%s175 + $0x8] sm:$0xf] %v3711
      %3908 = vst [vmem:[%s175 + $0xc] sm:$0xf] %v3712
      %3909 = vst [vmem:[%s175 + $0x10] sm:$0xf] %v3713
      %3910 = vst [vmem:[%s175 + $0x14] sm:$0xf] %v3714
      %3911 = vst [vmem:[%s175 + $0x18] sm:$0xf] %v3715
      %3912 = vst [vmem:[%s175 + $0x1c] sm:$0xf] %v3716
      %3913 = vst [vmem:[%s175 + $0x20] sm:$0xf] %v3717
      %3914 = vst [vmem:[%s175 + $0x24] sm:$0xf] %v3718
      %3915 = vst [vmem:[%s175 + $0x28] sm:$0xf] %v3719
      %3916 = vst [vmem:[%s175 + $0x2c] sm:$0xf] %v3720
      %3917 = vst [vmem:[%s175 + $0x30] sm:$0xf] %v3721
      %3918 = vst [vmem:[%s175 + $0x34] sm:$0xf] %v3722
      %3919 = vst [vmem:[%s175 + $0x38] sm:$0xf] %v3723
      %3920 = vst [vmem:[%s175 + $0x3c] sm:$0xf] %v3724
      %3921 = vst [vmem:[%s175 + $0x40] sm:$0xf] %v3725
      %3922 = vst [vmem:[%s175 + $0x44] sm:$0xf] %v3726
      %3923 = vst [vmem:[%s175 + $0x48] sm:$0xf] %v3727
      %3924 = vst [vmem:[%s175 + $0x4c] sm:$0xf] %v3728
      %3925 = vst [vmem:[%s175 + $0x50] sm:$0xf] %v3729
      %3926 = vst [vmem:[%s175 + $0x54] sm:$0xf] %v3730
      %3927 = vst [vmem:[%s175 + $0x58] sm:$0xf] %v3731
      %3928 = vst [vmem:[%s175 + $0x5c] sm:$0xf] %v3732
      %3929 = vst [vmem:[%s175 + $0x60] sm:$0xf] %v3733
      %3930 = vst [vmem:[%s175 + $0x64] sm:$0xf] %v3734
      %3931 = vst [vmem:[%s175 + $0x68] sm:$0xf] %v3735
      %3932 = vst [vmem:[%s175 + $0x6c] sm:$0xf] %v3736
      %3933 = vst [vmem:[%s175 + $0x70] sm:$0xf] %v3737
      %3934 = vst [vmem:[%s175 + $0x74] sm:$0xf] %v3738
      %3935 = vst [vmem:[%s175 + $0x78] sm:$0xf] %v3739
      %3936 = vst [vmem:[%s175 + $0x7c] sm:$0xf] %v3740
      %3937 = vst [vmem:[%s175 + $0x80] sm:$0xf] %v3741
      %3938 = vst [vmem:[%s175 + $0x84] sm:$0xf] %v3742
      %3939 = vst [vmem:[%s175 + $0x88] sm:$0xf] %v3743
      %3940 = vst [vmem:[%s175 + $0x8c] sm:$0xf] %v3744
      %3941 = vst [vmem:[%s175 + $0x90] sm:$0xf] %v3745
      %3942 = vst [vmem:[%s175 + $0x94] sm:$0xf] %v3746
      %3943 = vst [vmem:[%s175 + $0x98] sm:$0xf] %v3747
      %3944 = vst [vmem:[%s175 + $0x9c] sm:$0xf] %v3748
      %3945 = vst [vmem:[%s175 + $0xa0] sm:$0xf] %v3749
      %3946 = vst [vmem:[%s175 + $0xa4] sm:$0xf] %v3750
      %3947 = vst [vmem:[%s175 + $0xa8] sm:$0xf] %v3751
      %3948 = vst [vmem:[%s175 + $0xac] sm:$0xf] %v3752
      %3949 = vst [vmem:[%s175 + $0xb0] sm:$0xf] %v3753
      %3950 = vst [vmem:[%s175 + $0xb4] sm:$0xf] %v3754
      %3951 = vst [vmem:[%s175 + $0xb8] sm:$0xf] %v3755
      %3952 = vst [vmem:[%s175 + $0xbc] sm:$0xf] %v3756
      %3953 = vst [vmem:[%s175 + $0xc0] sm:$0xf] %v3757
      %3954 = vst [vmem:[%s175 + $0xc4] sm:$0xf] %v3758
      %3955 = vst [vmem:[%s175 + $0xc8] sm:$0xf] %v3759
      %3956 = vst [vmem:[%s175 + $0xcc] sm:$0xf] %v3760
      %3957 = vst [vmem:[%s175 + $0xd0] sm:$0xf] %v3761
      %3958 = vst [vmem:[%s175 + $0xd4] sm:$0xf] %v3762
      %3959 = vst [vmem:[%s175 + $0xd8] sm:$0xf] %v3763
      %3960 = vst [vmem:[%s175 + $0xdc] sm:$0xf] %v3764
      %3961 = vst [vmem:[%s175 + $0xe0] sm:$0xf] %v3765
      %3962 = vst [vmem:[%s175 + $0xe4] sm:$0xf] %v3766
      %3963 = vst [vmem:[%s175 + $0xe8] sm:$0xf] %v3767
      %3964 = vst [vmem:[%s175 + $0xec] sm:$0xf] %v3768
      %3965 = vst [vmem:[%s175 + $0xf0] sm:$0xf] %v3769
      %3966 = vst [vmem:[%s175 + $0xf4] sm:$0xf] %v3770
      %3967 = vst [vmem:[%s175 + $0xf8] sm:$0xf] %v3771
      %3968 = vst [vmem:[%s175 + $0xfc] sm:$0xf] %v3772
      %3969 = vst [vmem:[%s175 + $0x100] sm:$0xf] %v3773
      %3970 = vst [vmem:[%s175 + $0x104] sm:$0xf] %v3774
      %3971 = vst [vmem:[%s175 + $0x108] sm:$0xf] %v3775
      %3972 = vst [vmem:[%s175 + $0x10c] sm:$0xf] %v3776
      %3973 = vst [vmem:[%s175 + $0x110] sm:$0xf] %v3777
      %3974 = vst [vmem:[%s175 + $0x114] sm:$0xf] %v3778
      %3975 = vst [vmem:[%s175 + $0x118] sm:$0xf] %v3779
      %3976 = vst [vmem:[%s175 + $0x11c] sm:$0xf] %v3780
      %3977 = vst [vmem:[%s175 + $0x120] sm:$0xf] %v3781
      %3978 = vst [vmem:[%s175 + $0x124] sm:$0xf] %v3782
      %3979 = vst [vmem:[%s175 + $0x128] sm:$0xf] %v3783
      %3980 = vst [vmem:[%s175 + $0x12c] sm:$0xf] %v3784
      %3981 = vst [vmem:[%s175 + $0x130] sm:$0xf] %v3785
      %3982 = vst [vmem:[%s175 + $0x134] sm:$0xf] %v3786
      %3983 = vst [vmem:[%s175 + $0x138] sm:$0xf] %v3787
      %3984 = vst [vmem:[%s175 + $0x13c] sm:$0xf] %v3788
      %3985 = vst [vmem:[%s175 + $0x140] sm:$0xf] %v3789
      %3986 = vst [vmem:[%s175 + $0x144] sm:$0xf] %v3790
      %3987 = vst [vmem:[%s175 + $0x148] sm:$0xf] %v3791
      %3988 = vst [vmem:[%s175 + $0x14c] sm:$0xf] %v3792
      %3989 = vst [vmem:[%s175 + $0x150] sm:$0xf] %v3793
      %3990 = vst [vmem:[%s175 + $0x154] sm:$0xf] %v3794
      %3991 = vst [vmem:[%s175 + $0x158] sm:$0xf] %v3795
      %3992 = vst [vmem:[%s175 + $0x15c] sm:$0xf] %v3796
      %3993 = vst [vmem:[%s175 + $0x160] sm:$0xf] %v3797
      %3994 = vst [vmem:[%s175 + $0x164] sm:$0xf] %v3798
      %3995 = vst [vmem:[%s175 + $0x168] sm:$0xf] %v3799
      %3996 = vst [vmem:[%s175 + $0x16c] sm:$0xf] %v3800
      %3997 = vst [vmem:[%s175 + $0x170] sm:$0xf] %v3801
      %3998 = vst [vmem:[%s175 + $0x174] sm:$0xf] %v3802
      %3999 = vst [vmem:[%s175 + $0x178] sm:$0xf] %v3803
      %4000 = vst [vmem:[%s175 + $0x17c] sm:$0xf] %v3804
      %4001 = vst [vmem:[%s175 + $0x180] sm:$0xf] %v3805
      %4002 = vst [vmem:[%s175 + $0x184] sm:$0xf] %v3806
      %s4003 = smul.u32 98, %s14
      %p4004 = scmp.lt.s32.totalorder %s4003, 195
      %s4005 = scalar_select %p4004, %s4003, 195
      %s4006 = smul.addr %s4005, 4
      %s4007 = scalar_lea.vmem %s3, %s4006
      // Predicated region
      $region33: #{forward.7} parent=31 // pred_check
        %p4008 = pneg %p100
      $region34: #{forward.7} parent=31 // pred_check_branch
        %4010 = sbr.rel (%p4008) target = $region36
      $region35: #{forward.7} parent=31 // pred_region
        %s4011 = smul.u32 98, %s14
      $region36: #{forward.7} parent=31 // pred_fallthru
        _
    $region32: #{forward.7} parent=5 // pred_fallthru
      _
    %p4012 = scmp.le.s32.totalorder 2, %s9
    // Predicated region
    $region37: #{forward.7} parent=5 // pred_check
      %p4013 = pneg %p4012
    $region38: #{forward.7} parent=5 // pred_check_branch
      %4015 = sbr.rel (%p4013) target = $region40
    $region39: #{forward.7} parent=5 // pred_region
      %s4016 = ssub.s32 %s9, 2
      // Predicated region
      $region41: #{forward.7} parent=39 // pred_check
        %p4017 = pneg %p106
      $region42: #{forward.7} parent=39 // pred_check_branch
        %4019 = sbr.rel (%p4017) target = $region44
      $region43: #{forward.7} parent=39 // pred_region
        %s4020 = smul.u32 98, %s15
        %p4021 = scmp.lt.s32.totalorder %s4020, 195
        %s4022 = scalar_select %p4021, %s4020, 195
        %s4023 = smul.addr %s4022, 4
        %s4024 = scalar_lea.vmem %s3, %s4023
      $region44: #{forward.7} parent=39 // pred_fallthru
        _
    $region40: #{forward.7} parent=5 // pred_fallthru
      _
  $region6: #{forward.7} parent=0 // loop_footer
    %s13 = sadd.s32 1, %s9
  $region7: #{forward.7} parent=0 // loop_footer_branch
    %8 = sbr.rel target = $region3
  $region8: #{forward.7} parent=0 // loop_exit
    _

// kernel: forward.8
$region0: #{forward.8}
  #allocation0 [shape = 'u32[]', space=smem, size = 0x4, offset = 0x4, fixed_abs, tag = 'smem constant byte address 0x4 - core index']
  #allocation1 [shape = 'u32[144,128]{1,0:T(1,128)}', space=vmem, size = 0x12000, scoped, tag = 'internal scratch']
  %s0 = inlined_call_operand.vmem [shape: bf16[2,14,2,14,256], index: 0, kind: input, shape index: {}]
  %s1 = inlined_call_operand.vmem [shape: bf16[2,14,14,128], index: 1, kind: output, shape index: {}]
  %s2 = sld [smem:[#allocation0]]
  $region37: #{forward.8} parent=0
    _
  %s4 = ssub.s32 1, %s2
  %s5 = scalar_select 0, %s4, %s2
  loop: start=0, step=1, limit=4
  $region2: #{forward.8} parent=0 // loop_pre_header
    _
  $region3: #{forward.8} parent=0 // loop_header
    %s7 = sphi 0, %s11
    %p8 = scmp.ge.s32.totalorder %s7, 4
    %s17 = sphi 0, %s19
    %s20 = sphi 0, %s17
    %s21 = sphi 0, %s20
    %s37 = sphi 0, %s21
    %s43 = sphi 0, %s45
    %s46 = sphi 0, %s43
    %s47 = sphi 0, %s46
    %s63 = sphi 0, %s47
  $region4: #{forward.8} parent=0 // loop_header_branch
    %10 = sbr.rel (%p8) target = $region8
  $region5: #{forward.8} parent=0 // loop_body
    %s12 = ssub.s32 %s7, 1
    %s13 = ssub.s32 %s7, 2
    %s14 = sadd.s32 %s7, 1
    %s15 = ssub.s32 %s7, %s14
    %p16 = scmp.eq.s32.totalorder %s15, 0
    %s18 = sadd.s32 %s17, 1
    %s19 = scalar_select %p16, %s17, %s18
    %p22 = pneg %p16
    %p23 = scmp.eq.s32.totalorder %s7, 1
    %p24 = por %p22, %p23
    %p25 = scmp.ne.s32.totalorder %s17, %s20
    %p26 = scmp.eq.s32.totalorder %s7, 0
    %p27 = por %p25, %p26
    %p28 = scmp.ne.s32.totalorder %s17, %s20
    %p29 = scmp.eq.s32.totalorder %s12, 1
    %p30 = por %p28, %p29
    %p31 = scmp.ne.s32.totalorder %s20, %s21
    %p32 = scmp.eq.s32.totalorder %s12, 0
    %p33 = por %p31, %p32
    %p34 = scmp.ne.s32.totalorder %s20, %s21
    %p35 = scmp.eq.s32.totalorder %s13, 1
    %p36 = por %p34, %p35
    %p38 = scmp.ne.s32.totalorder %s21, %s37
    %p39 = scmp.eq.s32.totalorder %s13, 0
    %p40 = por %p38, %p39
    %s41 = ssub.s32 %s7, %s14
    %p42 = scmp.eq.s32.totalorder %s41, 0
    %s44 = sadd.s32 %s43, 1
    %s45 = scalar_select %p42, %s43, %s44
    %p48 = pneg %p42
    %p49 = scmp.eq.s32.totalorder %s7, 1
    %p50 = por %p48, %p49
    %p51 = scmp.ne.s32.totalorder %s43, %s46
    %p52 = scmp.eq.s32.totalorder %s7, 0
    %p53 = por %p51, %p52
    %p54 = scmp.ne.s32.totalorder %s43, %s46
    %p55 = scmp.eq.s32.totalorder %s12, 1
    %p56 = por %p54, %p55
    %p57 = scmp.ne.s32.totalorder %s46, %s47
    %p58 = scmp.eq.s32.totalorder %s12, 0
    %p59 = por %p57, %p58
    %p60 = scmp.ne.s32.totalorder %s46, %s47
    %p61 = scmp.eq.s32.totalorder %s13, 1
    %p62 = por %p60, %p61
    %p64 = scmp.ne.s32.totalorder %s47, %s63
    %p65 = scmp.eq.s32.totalorder %s13, 0
    %p66 = por %p64, %p65
    %p67 = scmp.le.s32.totalorder 1, %s7
    %p68 = scmp.lt.s32.totalorder %s7, 3
    %p69 = pnand %p67, %p68
    %p70 = pneg %p69
    // Predicated region
    $region9: #{forward.8} parent=5 // pred_check
      _
    $region10: #{forward.8} parent=5 // pred_check_branch
      %72 = sbr.rel (%p69) target = $region12
    $region11: #{forward.8} parent=5 // pred_region
      %s73 = ssub.s32 %s7, 1
    $region12: #{forward.8} parent=5 // pred_fallthru
      _
    %p74 = scmp.lt.s32.totalorder %s7, 2
    // Predicated region
    $region13: #{forward.8} parent=5 // pred_check
      %p75 = pneg %p74
    $region14: #{forward.8} parent=5 // pred_check_branch
      %77 = sbr.rel (%p75) target = $region16
    $region15: #{forward.8} parent=5 // pred_region
      // Predicated region
      $region17: #{forward.8} parent=15 // pred_check
        %p78 = pneg %p27
      $region18: #{forward.8} parent=15 // pred_check_branch
        %80 = sbr.rel (%p78) target = $region20
      $region19: #{forward.8} parent=15 // pred_region
        %p81 = scmp.lt.s32.totalorder %s7, 1
        %s82 = scalar_select %p81, %s7, 1
        %s83 = smul.addr %s82, 112
        %s84 = smul.addr %s83, 4
        %s85 = scalar_lea.vmem %s0, %s84
      $region20: #{forward.8} parent=15 // pred_fallthru
        _
    $region16: #{forward.8} parent=5 // pred_fallthru
      _
    %p86 = scmp.le.s32.totalorder 1, %s7
    %p87 = scmp.lt.s32.totalorder %s7, 3
    %p88 = pnand %p86, %p87
    %p89 = pneg %p88
    // Predicated region
    $region21: #{forward.8} parent=5 // pred_check
      _
    $region22: #{forward.8} parent=5 // pred_check_branch
      %91 = sbr.rel (%p88) target = $region24
    $region23: #{forward.8} parent=5 // pred_region
      %s92 = ssub.s32 %s7, 1
      %p93 = scmp.lt.s32.totalorder %s12, 1
      %s94 = scalar_select %p93, %s12, 1
      %s95 = smul.addr %s94, 112
      %s96 = smul.addr %s95, 4
      %s97 = scalar_lea.vmem %s0, %s96
      %p98 = pneg %p33
      %p99 = pneg %p30
      %p100 = pneg %p59
      %p101 = pneg %p56
      %p102 = scmp.lt.s32.totalorder %s12, 1
      %s103 = scalar_select %p102, %s12, 1
      %s104 = smul.addr %s103, 28
      %s105 = smul.addr %s104, 4
      %s106 = scalar_lea.vmem %s1, %s105
      %p107 = scmp.lt.s32.totalorder %s12, 1
      %s108 = scalar_select %p107, %s12, 1
      %s109 = smul.addr %s108, 112
      %s110 = smul.addr %s109, 4
      %s111 = scalar_lea.vmem %s0, %s110
      %p112 = scmp.lt.s32.totalorder %s12, 1
      %s113 = scalar_select %p112, %s12, 1
      %s114 = smul.addr %s113, 28
      %s115 = smul.addr %s114, 4
      %s116 = scalar_lea.vmem %s1, %s115
      %v117 = vld [vmem:[%s111] sm:$0xff]
      %v118 = vld [vmem:[%s111 + $0x8] sm:$0x77]
      %v119 = vld [vmem:[%s111 + $0x10] sm:$0xff]
      %v120 = vld [vmem:[%s111 + $0x18] sm:$0x77]
      %v121 = vld [vmem:[%s111 + $0x20] sm:$0xff]
      %v122 = vld [vmem:[%s111 + $0x28] sm:$0x77]
      %v123 = vld [vmem:[%s111 + $0x30] sm:$0xff]
      %v124 = vld [vmem:[%s111 + $0x38] sm:$0x77]
      %v125 = vld [vmem:[%s111 + $0x40] sm:$0xff]
      %v126 = vld [vmem:[%s111 + $0x48] sm:$0x77]
      %v127 = vld [vmem:[%s111 + $0x50] sm:$0xff]
      %v128 = vld [vmem:[%s111 + $0x58] sm:$0x77]
      %v129 = vld [vmem:[%s111 + $0x60] sm:$0xff]
      %v130 = vld [vmem:[%s111 + $0x68] sm:$0x77]
      %v131 = vld [vmem:[%s111 + $0x70] sm:$0xff]
      %v132 = vld [vmem:[%s111 + $0x78] sm:$0x77]
      %v133 = vld [vmem:[%s111 + $0x80] sm:$0xff]
      %v134 = vld [vmem:[%s111 + $0x88] sm:$0x77]
      %v135 = vld [vmem:[%s111 + $0x90] sm:$0xff]
      %v136 = vld [vmem:[%s111 + $0x98] sm:$0x77]
      %v137 = vld [vmem:[%s111 + $0xa0] sm:$0xff]
      %v138 = vld [vmem:[%s111 + $0xa8] sm:$0x77]
      %v139 = vld [vmem:[%s111 + $0xb0] sm:$0xff]
      %v140 = vld [vmem:[%s111 + $0xb8] sm:$0x77]
      %v141 = vld [vmem:[%s111 + $0xc0] sm:$0xff]
      %v142 = vld [vmem:[%s111 + $0xc8] sm:$0x77]
      %v143 = vld [vmem:[%s111 + $0xd0] sm:$0xff]
      %v144 = vld [vmem:[%s111 + $0xd8] sm:$0x77]
      %v145 = vld [vmem:[%s111 + $0xe0] sm:$0xff]
      %v146 = vld [vmem:[%s111 + $0xe8] sm:$0x77]
      %v147 = vld [vmem:[%s111 + $0xf0] sm:$0xff]
      %v148 = vld [vmem:[%s111 + $0xf8] sm:$0x77]
      %v149 = vld [vmem:[%s111 + $0x100] sm:$0xff]
      %v150 = vld [vmem:[%s111 + $0x108] sm:$0x77]
      %v151 = vld [vmem:[%s111 + $0x110] sm:$0xff]
      %v152 = vld [vmem:[%s111 + $0x118] sm:$0x77]
      %v153 = vld [vmem:[%s111 + $0x120] sm:$0xff]
      %v154 = vld [vmem:[%s111 + $0x128] sm:$0x77]
      %v155 = vld [vmem:[%s111 + $0x130] sm:$0xff]
      %v156 = vld [vmem:[%s111 + $0x138] sm:$0x77]
      %v157 = vld [vmem:[%s111 + $0x140] sm:$0xff]
      %v158 = vld [vmem:[%s111 + $0x148] sm:$0x77]
      %v159 = vld [vmem:[%s111 + $0x150] sm:$0xff]
      %v160 = vld [vmem:[%s111 + $0x158] sm:$0x77]
      %v161 = vld [vmem:[%s111 + $0x160] sm:$0xff]
      %v162 = vld [vmem:[%s111 + $0x168] sm:$0x77]
      %v163 = vld [vmem:[%s111 + $0x170] sm:$0xff]
      %v164 = vld [vmem:[%s111 + $0x178] sm:$0x77]
      %v165 = vld [vmem:[%s111 + $0x180] sm:$0xff]
      %v166 = vld [vmem:[%s111 + $0x188] sm:$0x77]
      %v167 = vld [vmem:[%s111 + $0x190] sm:$0xff]
      %v168 = vld [vmem:[%s111 + $0x198] sm:$0x77]
      %v169 = vld [vmem:[%s111 + $0x1a0] sm:$0xff]
      %v170 = vld [vmem:[%s111 + $0x1a8] sm:$0x77]
      %v171 = vld [vmem:[%s111 + $0x1b0] sm:$0xff]
      %v172 = vld [vmem:[%s111 + $0x1b8] sm:$0x77]
      %v173 = vmax.bf16 %v117, %v119
      %v174 = vmax.bf16 %v118, %v120
      %v175 = vmax.bf16 %v121, %v123
      %v176 = vmax.bf16 %v122, %v124
      %v177 = vmax.bf16 %v125, %v127
      %v178 = vmax.bf16 %v126, %v128
      %v179 = vmax.bf16 %v129, %v131
      %v180 = vmax.bf16 %v130, %v132
      %v181 = vmax.bf16 %v133, %v135
      %v182 = vmax.bf16 %v134, %v136
      %v183 = vmax.bf16 %v137, %v139
      %v184 = vmax.bf16 %v138, %v140
      %v185 = vmax.bf16 %v141, %v143
      %v186 = vmax.bf16 %v142, %v144
      %v187 = vmax.bf16 %v145, %v147
      %v188 = vmax.bf16 %v146, %v148
      %v189 = vmax.bf16 %v149, %v151
      %v190 = vmax.bf16 %v150, %v152
      %v191 = vmax.bf16 %v153, %v155
      %v192 = vmax.bf16 %v154, %v156
      %v193 = vmax.bf16 %v157, %v159
      %v194 = vmax.bf16 %v158, %v160
      %v195 = vmax.bf16 %v161, %v163
      %v196 = vmax.bf16 %v162, %v164
      %v197 = vmax.bf16 %v165, %v167
      %v198 = vmax.bf16 %v166, %v168
      %v199 = vmax.bf16 %v169, %v171
      %v200 = vmax.bf16 %v170, %v172
      %v229 = vrot.slane %v173, 4
      %v230 = vrot.slane %v174, 4
      %v231 = vrot.slane %v175, 4
      %v232 = vrot.slane %v176, 4
      %v233 = vrot.slane %v177, 4
      %v234 = vrot.slane %v178, 4
      %v235 = vrot.slane %v179, 4
      %v236 = vrot.slane %v180, 4
      %v237 = vrot.slane %v181, 4
      %v238 = vrot.slane %v182, 4
      %v239 = vrot.slane %v183, 4
      %v240 = vrot.slane %v184, 4
      %v241 = vrot.slane %v185, 4
      %v242 = vrot.slane %v186, 4
      %v243 = vrot.slane %v187, 4
      %v244 = vrot.slane %v188, 4
      %v245 = vrot.slane %v189, 4
      %v246 = vrot.slane %v190, 4
      %v247 = vrot.slane %v191, 4
      %v248 = vrot.slane %v192, 4
      %v249 = vrot.slane %v193, 4
      %v250 = vrot.slane %v194, 4
      %v251 = vrot.slane %v195, 4
      %v252 = vrot.slane %v196, 4
      %v253 = vrot.slane %v197, 4
      %v254 = vrot.slane %v198, 4
      %v255 = vrot.slane %v199, 4
      %v256 = vrot.slane %v200, 4
      %v285 = vmax.bf16 %v173, %v229
      %v286 = vmax.bf16 %v174, %v230
      %v287 = vmax.bf16 %v175, %v231
      %v288 = vmax.bf16 %v176, %v232
      %v289 = vmax.bf16 %v177, %v233
      %v290 = vmax.bf16 %v178, %v234
      %v291 = vmax.bf16 %v179, %v235
      %v292 = vmax.bf16 %v180, %v236
      %v293 = vmax.bf16 %v181, %v237
      %v294 = vmax.bf16 %v182, %v238
      %v295 = vmax.bf16 %v183, %v239
      %v296 = vmax.bf16 %v184, %v240
      %v297 = vmax.bf16 %v185, %v241
      %v298 = vmax.bf16 %v186, %v242
      %v299 = vmax.bf16 %v187, %v243
      %v300 = vmax.bf16 %v188, %v244
      %v301 = vmax.bf16 %v189, %v245
      %v302 = vmax.bf16 %v190, %v246
      %v303 = vmax.bf16 %v191, %v247
      %v304 = vmax.bf16 %v192, %v248
      %v305 = vmax.bf16 %v193, %v249
      %v306 = vmax.bf16 %v194, %v250
      %v307 = vmax.bf16 %v195, %v251
      %v308 = vmax.bf16 %v196, %v252
      %v309 = vmax.bf16 %v197, %v253
      %v310 = vmax.bf16 %v198, %v254
      %v311 = vmax.bf16 %v199, %v255
      %v312 = vmax.bf16 %v200, %v256
      %313 = vst [vmem:[%s116] sm:$0xf] %v285
      %314 = vst [vmem:[%s116 + $0x4] sm:$0x7] %v286
      %315 = vst [vmem:[%s116 + $0x8] sm:$0xf] %v287
      %316 = vst [vmem:[%s116 + $0xc] sm:$0x7] %v288
      %317 = vst [vmem:[%s116 + $0x10] sm:$0xf] %v289
      %318 = vst [vmem:[%s116 + $0x14] sm:$0x7] %v290
      %319 = vst [vmem:[%s116 + $0x18] sm:$0xf] %v291
      %320 = vst [vmem:[%s116 + $0x1c] sm:$0x7] %v292
      %321 = vst [vmem:[%s116 + $0x20] sm:$0xf] %v293
      %322 = vst [vmem:[%s116 + $0x24] sm:$0x7] %v294
      %323 = vst [vmem:[%s116 + $0x28] sm:$0xf] %v295
      %324 = vst [vmem:[%s116 + $0x2c] sm:$0x7] %v296
      %325 = vst [vmem:[%s116 + $0x30] sm:$0xf] %v297
      %326 = vst [vmem:[%s116 + $0x34] sm:$0x7] %v298
      %327 = vst [vmem:[%s116 + $0x38] sm:$0xf] %v299
      %328 = vst [vmem:[%s116 + $0x3c] sm:$0x7] %v300
      %329 = vst [vmem:[%s116 + $0x40] sm:$0xf] %v301
      %330 = vst [vmem:[%s116 + $0x44] sm:$0x7] %v302
      %331 = vst [vmem:[%s116 + $0x48] sm:$0xf] %v303
      %332 = vst [vmem:[%s116 + $0x4c] sm:$0x7] %v304
      %333 = vst [vmem:[%s116 + $0x50] sm:$0xf] %v305
      %334 = vst [vmem:[%s116 + $0x54] sm:$0x7] %v306
      %335 = vst [vmem:[%s116 + $0x58] sm:$0xf] %v307
      %336 = vst [vmem:[%s116 + $0x5c] sm:$0x7] %v308
      %337 = vst [vmem:[%s116 + $0x60] sm:$0xf] %v309
      %338 = vst [vmem:[%s116 + $0x64] sm:$0x7] %v310
      %339 = vst [vmem:[%s116 + $0x68] sm:$0xf] %v311
      %340 = vst [vmem:[%s116 + $0x6c] sm:$0x7] %v312
      %p341 = scmp.lt.s32.totalorder %s12, 1
      %s342 = scalar_select %p341, %s12, 1
      %s343 = smul.addr %s342, 28
      %s344 = smul.addr %s343, 4
      %s345 = scalar_lea.vmem %s1, %s344
      // Predicated region
      $region25: #{forward.8} parent=23 // pred_check
        %p346 = pneg %p56
      $region26: #{forward.8} parent=23 // pred_check_branch
        %348 = sbr.rel (%p346) target = $region28
      $region27: #{forward.8} parent=23 // pred_region
        _
      $region28: #{forward.8} parent=23 // pred_fallthru
        _
    $region24: #{forward.8} parent=5 // pred_fallthru
      _
    %p349 = scmp.le.s32.totalorder 2, %s7
    // Predicated region
    $region29: #{forward.8} parent=5 // pred_check
      %p350 = pneg %p349
    $region30: #{forward.8} parent=5 // pred_check_branch
      %352 = sbr.rel (%p350) target = $region32
    $region31: #{forward.8} parent=5 // pred_region
      %s353 = ssub.s32 %s7, 2
      // Predicated region
      $region33: #{forward.8} parent=31 // pred_check
        %p354 = pneg %p62
      $region34: #{forward.8} parent=31 // pred_check_branch
        %356 = sbr.rel (%p354) target = $region36
      $region35: #{forward.8} parent=31 // pred_region
        %p357 = scmp.lt.s32.totalorder %s13, 1
        %s358 = scalar_select %p357, %s13, 1
        %s359 = smul.addr %s358, 28
        %s360 = smul.addr %s359, 4
        %s361 = scalar_lea.vmem %s1, %s360
      $region36: #{forward.8} parent=31 // pred_fallthru
        _
    $region32: #{forward.8} parent=5 // pred_fallthru
      _
  $region6: #{forward.8} parent=0 // loop_footer
    %s11 = sadd.s32 1, %s7
  $region7: #{forward.8} parent=0 // loop_footer_branch
    %6 = sbr.rel target = $region3
  $region8: #{forward.8} parent=0 // loop_exit
    _

// kernel: forward.9
$region0: #{forward.9}
  #allocation0 [shape = 'u32[]', space=smem, size = 0x4, offset = 0x4, fixed_abs, tag = 'smem constant byte address 0x4 - core index']
  #allocation1 [shape = 'u32[144,128]{1,0:T(1,128)}', space=vmem, size = 0x12000, scoped, tag = 'internal scratch']
  #allocation2 [shape = 'f32[2,128]{1,0:T(2,128)}', space=vmem, size = 0x400, scoped, tag = 'scratch operand']
  %s0 = inlined_call_operand.vmem [shape: bf16[2,25088], index: 0, kind: input, shape index: {}]
  %s1 = inlined_call_operand.vmem [shape: bf16[25088,128], index: 1, kind: input, shape index: {}]
  %s2 = inlined_call_operand.vmem [shape: f32[1,128], index: 2, kind: input, shape index: {}]
  %s3 = inlined_call_operand.vmem [shape: bf16[128,64], index: 3, kind: input, shape index: {}]
  %s4 = inlined_call_operand.vmem [shape: f32[1,64], index: 4, kind: input, shape index: {}]
  %s5 = inlined_call_operand.vmem [shape: bf16[64,2], index: 5, kind: input, shape index: {}]
  %s6 = inlined_call_operand.vmem [shape: f32[1,2], index: 6, kind: input, shape index: {}]
  %s7 = inlined_call_operand.hbm [shape: f32[2,2], index: 7, kind: output, shape index: {}]
  %s8 = sld [smem:[#allocation0]]
  $region69: #{forward.9} parent=0
    _
  %s10 = ssub.s32 1, %s8
  %s11 = scalar_select 0, %s10, %s8
  $region1: #{forward.9} parent=0
    #allocation3 [shape = 'u8[1024]{0}', space=vmem, size = 0x400, scoped, tag = 'output window, operand 0, single buffered']
    #allocation4 [shape = 's32[2]{0}', space=sflag, size = 0x8, scoped, tag = 'scoped memory for forward.9']
    %12 = vsyncpa [#allocation4], 0
    loop: start=0, step=1, limit=9
    $region2: #{forward.9} parent=1 // loop_pre_header
      _
    $region3: #{forward.9} parent=1 // loop_header
      %s14 = sphi 0, %s18
      %p15 = scmp.ge.s32.totalorder %s14, 9
      %s24 = sphi 0, %s26
      %s27 = sphi 0, %s24
      %s28 = sphi 0, %s27
      %s44 = sphi 0, %s28
      %s50 = sphi 0, %s52
      %s53 = sphi 0, %s50
      %s54 = sphi 0, %s53
      %s70 = sphi 0, %s54
      %s74 = sphi 0, %s74
      %s76 = sphi 0, %s74
      %s77 = sphi 0, %s76
      %s91 = sphi 0, %s77
      %s95 = sphi 0, %s95
      %s97 = sphi 0, %s95
      %s98 = sphi 0, %s97
      %s112 = sphi 0, %s98
      %s116 = sphi 0, %s116
      %s118 = sphi 0, %s116
      %s119 = sphi 0, %s118
      %s133 = sphi 0, %s119
      %s137 = sphi 0, %s137
      %s139 = sphi 0, %s137
      %s140 = sphi 0, %s139
      %s154 = sphi 0, %s140
      %s158 = sphi 0, %s158
      %s160 = sphi 0, %s158
      %s161 = sphi 0, %s160
      %s175 = sphi 0, %s161
      %s179 = sphi 0, %s179
      %s181 = sphi 0, %s179
      %s182 = sphi 0, %s181
      %s196 = sphi 0, %s182
    $region4: #{forward.9} parent=1 // loop_header_branch
      %17 = sbr.rel (%p15) target = $region8
    $region5: #{forward.9} parent=1 // loop_body
      %s19 = ssub.s32 %s14, 1
      %s20 = ssub.s32 %s14, 2
      %s21 = sadd.s32 %s14, 1
      %s22 = ssub.s32 %s14, %s21
      %p23 = scmp.eq.s32.totalorder %s22, 0
      %s25 = sadd.s32 %s24, 1
      %s26 = scalar_select %p23, %s24, %s25
      %p29 = pneg %p23
      %p30 = scmp.eq.s32.totalorder %s14, 6
      %p31 = por %p29, %p30
      %p32 = scmp.ne.s32.totalorder %s24, %s27
      %p33 = scmp.eq.s32.totalorder %s14, 0
      %p34 = por %p32, %p33
      %p35 = scmp.ne.s32.totalorder %s24, %s27
      %p36 = scmp.eq.s32.totalorder %s19, 6
      %p37 = por %p35, %p36
      %p38 = scmp.ne.s32.totalorder %s27, %s28
      %p39 = scmp.eq.s32.totalorder %s19, 0
      %p40 = por %p38, %p39
      %p41 = scmp.ne.s32.totalorder %s27, %s28
      %p42 = scmp.eq.s32.totalorder %s20, 6
      %p43 = por %p41, %p42
      %p45 = scmp.ne.s32.totalorder %s28, %s44
      %p46 = scmp.eq.s32.totalorder %s20, 0
      %p47 = por %p45, %p46
      %s48 = ssub.s32 %s14, %s21
      %p49 = scmp.eq.s32.totalorder %s48, 0
      %s51 = sadd.s32 %s50, 1
      %s52 = scalar_select %p49, %s50, %s51
      %p55 = pneg %p49
      %p56 = scmp.eq.s32.totalorder %s14, 6
      %p57 = por %p55, %p56
      %p58 = scmp.ne.s32.totalorder %s50, %s53
      %p59 = scmp.eq.s32.totalorder %s14, 0
      %p60 = por %p58, %p59
      %p61 = scmp.ne.s32.totalorder %s50, %s53
      %p62 = scmp.eq.s32.totalorder %s19, 6
      %p63 = por %p61, %p62
      %p64 = scmp.ne.s32.totalorder %s53, %s54
      %p65 = scmp.eq.s32.totalorder %s19, 0
      %p66 = por %p64, %p65
      %p67 = scmp.ne.s32.totalorder %s53, %s54
      %p68 = scmp.eq.s32.totalorder %s20, 6
      %p69 = por %p67, %p68
      %p71 = scmp.ne.s32.totalorder %s54, %s70
      %p72 = scmp.eq.s32.totalorder %s20, 0
      %p73 = por %p71, %p72
      %s75 = sadd.s32 %s74, 1
      %p78 = scmp.eq.s32.totalorder %s14, 6
      %p79 = scmp.ne.s32.totalorder %s74, %s76
      %p80 = scmp.eq.s32.totalorder %s14, 0
      %p81 = por %p79, %p80
      %p82 = scmp.ne.s32.totalorder %s74, %s76
      %p83 = scmp.eq.s32.totalorder %s19, 6
      %p84 = por %p82, %p83
      %p85 = scmp.ne.s32.totalorder %s76, %s77
      %p86 = scmp.eq.s32.totalorder %s19, 0
      %p87 = por %p85, %p86
      %p88 = scmp.ne.s32.totalorder %s76, %s77
      %p89 = scmp.eq.s32.totalorder %s20, 6
      %p90 = por %p88, %p89
      %p92 = scmp.ne.s32.totalorder %s77, %s91
      %p93 = scmp.eq.s32.totalorder %s20, 0
      %p94 = por %p92, %p93
      %s96 = sadd.s32 %s95, 1
      %p99 = scmp.eq.s32.totalorder %s14, 6
      %p100 = scmp.ne.s32.totalorder %s95, %s97
      %p101 = scmp.eq.s32.totalorder %s14, 0
      %p102 = por %p100, %p101
      %p103 = scmp.ne.s32.totalorder %s95, %s97
      %p104 = scmp.eq.s32.totalorder %s19, 6
      %p105 = por %p103, %p104
      %p106 = scmp.ne.s32.totalorder %s97, %s98
      %p107 = scmp.eq.s32.totalorder %s19, 0
      %p108 = por %p106, %p107
      %p109 = scmp.ne.s32.totalorder %s97, %s98
      %p110 = scmp.eq.s32.totalorder %s20, 6
      %p111 = por %p109, %p110
      %p113 = scmp.ne.s32.totalorder %s98, %s112
      %p114 = scmp.eq.s32.totalorder %s20, 0
      %p115 = por %p113, %p114
      %s117 = sadd.s32 %s116, 1
      %p120 = scmp.eq.s32.totalorder %s14, 6
      %p121 = scmp.ne.s32.totalorder %s116, %s118
      %p122 = scmp.eq.s32.totalorder %s14, 0
      %p123 = por %p121, %p122
      %p124 = scmp.ne.s32.totalorder %s116, %s118
      %p125 = scmp.eq.s32.totalorder %s19, 6
      %p126 = por %p124, %p125
      %p127 = scmp.ne.s32.totalorder %s118, %s119
      %p128 = scmp.eq.s32.totalorder %s19, 0
      %p129 = por %p127, %p128
      %p130 = scmp.ne.s32.totalorder %s118, %s119
      %p131 = scmp.eq.s32.totalorder %s20, 6
      %p132 = por %p130, %p131
      %p134 = scmp.ne.s32.totalorder %s119, %s133
      %p135 = scmp.eq.s32.totalorder %s20, 0
      %p136 = por %p134, %p135
      %s138 = sadd.s32 %s137, 1
      %p141 = scmp.eq.s32.totalorder %s14, 6
      %p142 = scmp.ne.s32.totalorder %s137, %s139
      %p143 = scmp.eq.s32.totalorder %s14, 0
      %p144 = por %p142, %p143
      %p145 = scmp.ne.s32.totalorder %s137, %s139
      %p146 = scmp.eq.s32.totalorder %s19, 6
      %p147 = por %p145, %p146
      %p148 = scmp.ne.s32.totalorder %s139, %s140
      %p149 = scmp.eq.s32.totalorder %s19, 0
      %p150 = por %p148, %p149
      %p151 = scmp.ne.s32.totalorder %s139, %s140
      %p152 = scmp.eq.s32.totalorder %s20, 6
      %p153 = por %p151, %p152
      %p155 = scmp.ne.s32.totalorder %s140, %s154
      %p156 = scmp.eq.s32.totalorder %s20, 0
      %p157 = por %p155, %p156
      %s159 = sadd.s32 %s158, 1
      %p162 = scmp.eq.s32.totalorder %s14, 6
      %p163 = scmp.ne.s32.totalorder %s158, %s160
      %p164 = scmp.eq.s32.totalorder %s14, 0
      %p165 = por %p163, %p164
      %p166 = scmp.ne.s32.totalorder %s158, %s160
      %p167 = scmp.eq.s32.totalorder %s19, 6
      %p168 = por %p166, %p167
      %p169 = scmp.ne.s32.totalorder %s160, %s161
      %p170 = scmp.eq.s32.totalorder %s19, 0
      %p171 = por %p169, %p170
      %p172 = scmp.ne.s32.totalorder %s160, %s161
      %p173 = scmp.eq.s32.totalorder %s20, 6
      %p174 = por %p172, %p173
      %p176 = scmp.ne.s32.totalorder %s161, %s175
      %p177 = scmp.eq.s32.totalorder %s20, 0
      %p178 = por %p176, %p177
      %s180 = sadd.s32 %s179, 1
      %p183 = scmp.eq.s32.totalorder %s14, 6
      %p184 = scmp.ne.s32.totalorder %s179, %s181
      %p185 = scmp.eq.s32.totalorder %s14, 0
      %p186 = por %p184, %p185
      %p187 = scmp.ne.s32.totalorder %s179, %s181
      %p188 = scmp.eq.s32.totalorder %s19, 6
      %p189 = por %p187, %p188
      %p190 = scmp.ne.s32.totalorder %s181, %s182
      %p191 = scmp.eq.s32.totalorder %s19, 0
      %p192 = por %p190, %p191
      %p193 = scmp.ne.s32.totalorder %s181, %s182
      %p194 = scmp.eq.s32.totalorder %s20, 6
      %p195 = por %p193, %p194
      %p197 = scmp.ne.s32.totalorder %s182, %s196
      %p198 = scmp.eq.s32.totalorder %s20, 0
      %p199 = por %p197, %p198
      %p200 = scmp.le.s32.totalorder 1, %s14
      %p201 = scmp.lt.s32.totalorder %s14, 8
      %p202 = pnand %p200, %p201
      %p203 = pneg %p202
      // Predicated region
      $region9: #{forward.9} parent=5 // pred_check
        _
      $region10: #{forward.9} parent=5 // pred_check_branch
        %205 = sbr.rel (%p202) target = $region12
      $region11: #{forward.9} parent=5 // pred_region
        %s206 = ssub.s32 %s14, 1
        // Predicated region
        $region13: #{forward.9} parent=11 // pred_check
          %p207 = pneg %p87
        $region14: #{forward.9} parent=11 // pred_check_branch
          %209 = sbr.rel (%p207) target = $region16
        $region15: #{forward.9} parent=11 // pred_region
          _
        $region16: #{forward.9} parent=11 // pred_fallthru
          _
        // Predicated region
        $region17: #{forward.9} parent=11 // pred_check
          %p210 = pneg %p108
        $region18: #{forward.9} parent=11 // pred_check_branch
          %212 = sbr.rel (%p210) target = $region20
        $region19: #{forward.9} parent=11 // pred_region
          _
        $region20: #{forward.9} parent=11 // pred_fallthru
          _
        // Predicated region
        $region21: #{forward.9} parent=11 // pred_check
          %p213 = pneg %p129
        $region22: #{forward.9} parent=11 // pred_check_branch
          %215 = sbr.rel (%p213) target = $region24
        $region23: #{forward.9} parent=11 // pred_region
          _
        $region24: #{forward.9} parent=11 // pred_fallthru
          _
        // Predicated region
        $region25: #{forward.9} parent=11 // pred_check
          %p216 = pneg %p150
        $region26: #{forward.9} parent=11 // pred_check_branch
          %218 = sbr.rel (%p216) target = $region28
        $region27: #{forward.9} parent=11 // pred_region
          _
        $region28: #{forward.9} parent=11 // pred_fallthru
          _
        // Predicated region
        $region29: #{forward.9} parent=11 // pred_check
          %p219 = pneg %p171
        $region30: #{forward.9} parent=11 // pred_check_branch
          %221 = sbr.rel (%p219) target = $region32
        $region31: #{forward.9} parent=11 // pred_region
          _
        $region32: #{forward.9} parent=11 // pred_fallthru
          _
      $region12: #{forward.9} parent=5 // pred_fallthru
        _
      %p222 = scmp.lt.s32.totalorder %s14, 7
      // Predicated region
      $region33: #{forward.9} parent=5 // pred_check
        %p223 = pneg %p222
      $region34: #{forward.9} parent=5 // pred_check_branch
        %225 = sbr.rel (%p223) target = $region36
      $region35: #{forward.9} parent=5 // pred_region
        // Predicated region
        $region37: #{forward.9} parent=35 // pred_check
          %p226 = pneg %p34
        $region38: #{forward.9} parent=35 // pred_check_branch
          %228 = sbr.rel (%p226) target = $region40
        $region39: #{forward.9} parent=35 // pred_region
          %s229 = smul.u32 28, %s14
          %p230 = scmp.lt.s32.totalorder %s229, 195
          %s231 = scalar_select %p230, %s229, 195
          %s232 = scalar_lea.vmem %s0, %s231
          %s233 = smul.u32 28, %s14
        $region40: #{forward.9} parent=35 // pred_fallthru
          _
        // Predicated region
        $region41: #{forward.9} parent=35 // pred_check
          %p234 = pneg %p60
        $region42: #{forward.9} parent=35 // pred_check_branch
          %236 = sbr.rel (%p234) target = $region44
        $region43: #{forward.9} parent=35 // pred_region
          %s237 = smul.u32 448, %s14
          %p238 = scmp.lt.s32.totalorder %s237, 3135
          %s239 = scalar_select %p238, %s237, 3135
          %s240 = smul.addr %s239, 4
          %s241 = scalar_lea.vmem %s1, %s240
          %s242 = smul.u32 448, %s14
        $region44: #{forward.9} parent=35 // pred_fallthru
          _
      $region36: #{forward.9} parent=5 // pred_fallthru
        _
      %p243 = scmp.le.s32.totalorder 1, %s14
      %p244 = scmp.lt.s32.totalorder %s14, 8
      %p245 = pnand %p243, %p244
      %p246 = pneg %p245
      // Predicated region
      $region45: #{forward.9} parent=5 // pred_check
        _
      $region46: #{forward.9} parent=5 // pred_check_branch
        %248 = sbr.rel (%p245) target = $region48
      $region47: #{forward.9} parent=5 // pred_region
        %s249 = ssub.s32 %s14, 1
        %s250 = smul.u32 28, %s19
        %p251 = scmp.lt.s32.totalorder %s250, 195
        %s252 = scalar_select %p251, %s250, 195
        %s253 = scalar_lea.vmem %s0, %s252
        %p254 = pneg %p40
        %p255 = pneg %p37
        %s256 = smul.u32 448, %s19
        %p257 = scmp.lt.s32.totalorder %s256, 3135
        %s258 = scalar_select %p257, %s256, 3135
        %s259 = smul.addr %s258, 4
        %s260 = scalar_lea.vmem %s1, %s259
        %p261 = pneg %p66
        %p262 = pneg %p63
        %p263 = pneg %p87
        %p264 = pneg %p84
        %p265 = pneg %p108
        %p266 = pneg %p105
        %p267 = pneg %p129
        %p268 = pneg %p126
        %p269 = pneg %p150
        %p270 = pneg %p147
        %p271 = pneg %p171
        %p272 = pneg %p168
        %p273 = pneg %p192
        %p274 = pneg %p189
        %s275 = smul.u32 28, %s19
        %p276 = scmp.lt.s32.totalorder %s275, 195
        %s277 = scalar_select %p276, %s275, 195
        %s278 = scalar_lea.vmem %s0, %s277
        %s279 = smul.u32 28, %s19
        %s280 = smul.u32 448, %s19
        %p281 = scmp.lt.s32.totalorder %s280, 3135
        %s282 = scalar_select %p281, %s280, 3135
        %s283 = smul.addr %s282, 4
        %s284 = scalar_lea.vmem %s1, %s283
        %s285 = smul.u32 448, %s19
        %p287 = scmp.eq.s32.totalorder %s19, 0
        // Predicated region
        $region49: #{forward.9} parent=47 // pred_check
          %p288 = pneg %p287
        $region50: #{forward.9} parent=47 // pred_check_branch
          %290 = sbr.rel (%p288) target = $region52
        $region51: #{forward.9} parent=47 // pred_region
          %291 = vst [vmem:[#allocation2] sm:$0x3] 0.0
        $region52: #{forward.9} parent=47 // pred_fallthru
          _
        %v292 = vld [vmem:[#allocation2] sm:$0x3]
        %v293 = vld [vmem:[%s278] sm:$0xff]
        %v294 = vld [vmem:[%s278 + $0x8] sm:$0xff]
        %v295 = vld [vmem:[%s278 + $0x10] sm:$0xff]
        %v296 = vld [vmem:[%s278 + $0x18] sm:$0xf]
        %v297 = vld [vmem:[%s284] sm:$0xf]
        %v298 = vld [vmem:[%s284 + $0x4] sm:$0xf]
        %v299 = vld [vmem:[%s284 + $0x8] sm:$0xf]
        %v300 = vld [vmem:[%s284 + $0xc] sm:$0xf]
        %v301 = vld [vmem:[%s284 + $0x10] sm:$0xf]
        %v302 = vld [vmem:[%s284 + $0x14] sm:$0xf]
        %v303 = vld [vmem:[%s284 + $0x18] sm:$0xf]
        %v304 = vld [vmem:[%s284 + $0x1c] sm:$0xf]
        %v305 = vld [vmem:[%s284 + $0x20] sm:$0xf]
        %v306 = vld [vmem:[%s284 + $0x24] sm:$0xf]
        %v307 = vld [vmem:[%s284 + $0x28] sm:$0xf]
        %v308 = vld [vmem:[%s284 + $0x2c] sm:$0xf]
        %v309 = vld [vmem:[%s284 + $0x30] sm:$0xf]
        %v310 = vld [vmem:[%s284 + $0x34] sm:$0xf]
        %v311 = vld [vmem:[%s284 + $0x38] sm:$0xf]
        %v312 = vld [vmem:[%s284 + $0x3c] sm:$0xf]
        %v313 = vld [vmem:[%s284 + $0x40] sm:$0xf]
        %v314 = vld [vmem:[%s284 + $0x44] sm:$0xf]
        %v315 = vld [vmem:[%s284 + $0x48] sm:$0xf]
        %v316 = vld [vmem:[%s284 + $0x4c] sm:$0xf]
        %v317 = vld [vmem:[%s284 + $0x50] sm:$0xf]
        %v318 = vld [vmem:[%s284 + $0x54] sm:$0xf]
        %v319 = vld [vmem:[%s284 + $0x58] sm:$0xf]
        %v320 = vld [vmem:[%s284 + $0x5c] sm:$0xf]
        %v321 = vld [vmem:[%s284 + $0x60] sm:$0xf]
        %v322 = vld [vmem:[%s284 + $0x64] sm:$0xf]
        %v323 = vld [vmem:[%s284 + $0x68] sm:$0xf]
        %v324 = vld [vmem:[%s284 + $0x6c] sm:$0xf]
        %v325 = vld [vmem:[%s284 + $0x70] sm:$0xf]
        %v326 = vld [vmem:[%s284 + $0x74] sm:$0xf]
        %v327 = vld [vmem:[%s284 + $0x78] sm:$0xf]
        %v328 = vld [vmem:[%s284 + $0x7c] sm:$0xf]
        %v329 = vld [vmem:[%s284 + $0x80] sm:$0xf]
        %v330 = vld [vmem:[%s284 + $0x84] sm:$0xf]
        %v331 = vld [vmem:[%s284 + $0x88] sm:$0xf]
        %v332 = vld [vmem:[%s284 + $0x8c] sm:$0xf]
        %v333 = vld [vmem:[%s284 + $0x90] sm:$0xf]
        %v334 = vld [vmem:[%s284 + $0x94] sm:$0xf]
        %v335 = vld [vmem:[%s284 + $0x98] sm:$0xf]
        %v336 = vld [vmem:[%s284 + $0x9c] sm:$0xf]
        %v337 = vld [vmem:[%s284 + $0xa0] sm:$0xf]
        %v338 = vld [vmem:[%s284 + $0xa4] sm:$0xf]
        %v339 = vld [vmem:[%s284 + $0xa8] sm:$0xf]
        %v340 = vld [vmem:[%s284 + $0xac] sm:$0xf]
        %v341 = vld [vmem:[%s284 + $0xb0] sm:$0xf]
        %v342 = vld [vmem:[%s284 + $0xb4] sm:$0xf]
        %v343 = vld [vmem:[%s284 + $0xb8] sm:$0xf]
        %v344 = vld [vmem:[%s284 + $0xbc] sm:$0xf]
        %v345 = vld [vmem:[%s284 + $0xc0] sm:$0xf]
        %v346 = vld [vmem:[%s284 + $0xc4] sm:$0xf]
        %v347 = vld [vmem:[%s284 + $0xc8] sm:$0xf]
        %v348 = vld [vmem:[%s284 + $0xcc] sm:$0xf]
        %v349 = vld [vmem:[%s284 + $0xd0] sm:$0xf]
        %v350 = vld [vmem:[%s284 + $0xd4] sm:$0xf]
        %v351 = vld [vmem:[%s284 + $0xd8] sm:$0xf]
        %v352 = vld [vmem:[%s284 + $0xdc] sm:$0xf]
        %v353 = vld [vmem:[%s284 + $0xe0] sm:$0xf]
        %v354 = vld [vmem:[%s284 + $0xe4] sm:$0xf]
        %v355 = vld [vmem:[%s284 + $0xe8] sm:$0xf]
        %v356 = vld [vmem:[%s284 + $0xec] sm:$0xf]
        %v357 = vld [vmem:[%s284 + $0xf0] sm:$0xf]
        %v358 = vld [vmem:[%s284 + $0xf4] sm:$0xf]
        %v359 = vld [vmem:[%s284 + $0xf8] sm:$0xf]
        %v360 = vld [vmem:[%s284 + $0xfc] sm:$0xf]
        %v361 = vld [vmem:[%s284 + $0x100] sm:$0xf]
        %v362 = vld [vmem:[%s284 + $0x104] sm:$0xf]
        %v363 = vld [vmem:[%s284 + $0x108] sm:$0xf]
        %v364 = vld [vmem:[%s284 + $0x10c] sm:$0xf]
        %v365 = vld [vmem:[%s284 + $0x110] sm:$0xf]
        %v366 = vld [vmem:[%s284 + $0x114] sm:$0xf]
        %v367 = vld [vmem:[%s284 + $0x118] sm:$0xf]
        %v368 = vld [vmem:[%s284 + $0x11c] sm:$0xf]
        %v369 = vld [vmem:[%s284 + $0x120] sm:$0xf]
        %v370 = vld [vmem:[%s284 + $0x124] sm:$0xf]
        %v371 = vld [vmem:[%s284 + $0x128] sm:$0xf]
        %v372 = vld [vmem:[%s284 + $0x12c] sm:$0xf]
        %v373 = vld [vmem:[%s284 + $0x130] sm:$0xf]
        %v374 = vld [vmem:[%s284 + $0x134] sm:$0xf]
        %v375 = vld [vmem:[%s284 + $0x138] sm:$0xf]
        %v376 = vld [vmem:[%s284 + $0x13c] sm:$0xf]
        %v377 = vld [vmem:[%s284 + $0x140] sm:$0xf]
        %v378 = vld [vmem:[%s284 + $0x144] sm:$0xf]
        %v379 = vld [vmem:[%s284 + $0x148] sm:$0xf]
        %v380 = vld [vmem:[%s284 + $0x14c] sm:$0xf]
        %v381 = vld [vmem:[%s284 + $0x150] sm:$0xf]
        %v382 = vld [vmem:[%s284 + $0x154] sm:$0xf]
        %v383 = vld [vmem:[%s284 + $0x158] sm:$0xf]
        %v384 = vld [vmem:[%s284 + $0x15c] sm:$0xf]
        %v385 = vld [vmem:[%s284 + $0x160] sm:$0xf]
        %v386 = vld [vmem:[%s284 + $0x164] sm:$0xf]
        %v387 = vld [vmem:[%s284 + $0x168] sm:$0xf]
        %v388 = vld [vmem:[%s284 + $0x16c] sm:$0xf]
        %v389 = vld [vmem:[%s284 + $0x170] sm:$0xf]
        %v390 = vld [vmem:[%s284 + $0x174] sm:$0xf]
        %v391 = vld [vmem:[%s284 + $0x178] sm:$0xf]
        %v392 = vld [vmem:[%s284 + $0x17c] sm:$0xf]
        %v393 = vld [vmem:[%s284 + $0x180] sm:$0xf]
        %v394 = vld [vmem:[%s284 + $0x184] sm:$0xf]
        %v395 = vld [vmem:[%s284 + $0x188] sm:$0xf]
        %v396 = vld [vmem:[%s284 + $0x18c] sm:$0xf]
        %v397 = vld [vmem:[%s284 + $0x190] sm:$0xf]
        %v398 = vld [vmem:[%s284 + $0x194] sm:$0xf]
        %v399 = vld [vmem:[%s284 + $0x198] sm:$0xf]
        %v400 = vld [vmem:[%s284 + $0x19c] sm:$0xf]
        %v401 = vld [vmem:[%s284 + $0x1a0] sm:$0xf]
        %v402 = vld [vmem:[%s284 + $0x1a4] sm:$0xf]
        %v403 = vld [vmem:[%s284 + $0x1a8] sm:$0xf]
        %v404 = vld [vmem:[%s284 + $0x1ac] sm:$0xf]
        %v405 = vld [vmem:[%s284 + $0x1b0] sm:$0xf]
        %v406 = vld [vmem:[%s284 + $0x1b4] sm:$0xf]
        %v407 = vld [vmem:[%s284 + $0x1b8] sm:$0xf]
        %v408 = vld [vmem:[%s284 + $0x1bc] sm:$0xf]
        %v409 = vld [vmem:[%s284 + $0x1c0] sm:$0xf]
        %v410 = vld [vmem:[%s284 + $0x1c4] sm:$0xf]
        %v411 = vld [vmem:[%s284 + $0x1c8] sm:$0xf]
        %v412 = vld [vmem:[%s284 + $0x1cc] sm:$0xf]
        %v413 = vld [vmem:[%s284 + $0x1d0] sm:$0xf]
        %v414 = vld [vmem:[%s284 + $0x1d4] sm:$0xf]
        %v415 = vld [vmem:[%s284 + $0x1d8] sm:$0xf]
        %v416 = vld [vmem:[%s284 + $0x1dc] sm:$0xf]
        %v417 = vld [vmem:[%s284 + $0x1e0] sm:$0xf]
        %v418 = vld [vmem:[%s284 + $0x1e4] sm:$0xf]
        %v419 = vld [vmem:[%s284 + $0x1e8] sm:$0xf]
        %v420 = vld [vmem:[%s284 + $0x1ec] sm:$0xf]
        %v421 = vld [vmem:[%s284 + $0x1f0] sm:$0xf]
        %v422 = vld [vmem:[%s284 + $0x1f4] sm:$0xf]
        %v423 = vld [vmem:[%s284 + $0x1f8] sm:$0xf]
        %v424 = vld [vmem:[%s284 + $0x1fc] sm:$0xf]
        %v425 = vld [vmem:[%s284 + $0x200] sm:$0xf]
        %v426 = vld [vmem:[%s284 + $0x204] sm:$0xf]
        %v427 = vld [vmem:[%s284 + $0x208] sm:$0xf]
        %v428 = vld [vmem:[%s284 + $0x20c] sm:$0xf]
        %v429 = vld [vmem:[%s284 + $0x210] sm:$0xf]
        %v430 = vld [vmem:[%s284 + $0x214] sm:$0xf]
        %v431 = vld [vmem:[%s284 + $0x218] sm:$0xf]
        %v432 = vld [vmem:[%s284 + $0x21c] sm:$0xf]
        %v433 = vld [vmem:[%s284 + $0x220] sm:$0xf]
        %v434 = vld [vmem:[%s284 + $0x224] sm:$0xf]
        %v435 = vld [vmem:[%s284 + $0x228] sm:$0xf]
        %v436 = vld [vmem:[%s284 + $0x22c] sm:$0xf]
        %v437 = vld [vmem:[%s284 + $0x230] sm:$0xf]
        %v438 = vld [vmem:[%s284 + $0x234] sm:$0xf]
        %v439 = vld [vmem:[%s284 + $0x238] sm:$0xf]
        %v440 = vld [vmem:[%s284 + $0x23c] sm:$0xf]
        %v441 = vld [vmem:[%s284 + $0x240] sm:$0xf]
        %v442 = vld [vmem:[%s284 + $0x244] sm:$0xf]
        %v443 = vld [vmem:[%s284 + $0x248] sm:$0xf]
        %v444 = vld [vmem:[%s284 + $0x24c] sm:$0xf]
        %v445 = vld [vmem:[%s284 + $0x250] sm:$0xf]
        %v446 = vld [vmem:[%s284 + $0x254] sm:$0xf]
        %v447 = vld [vmem:[%s284 + $0x258] sm:$0xf]
        %v448 = vld [vmem:[%s284 + $0x25c] sm:$0xf]
        %v449 = vld [vmem:[%s284 + $0x260] sm:$0xf]
        %v450 = vld [vmem:[%s284 + $0x264] sm:$0xf]
        %v451 = vld [vmem:[%s284 + $0x268] sm:$0xf]
        %v452 = vld [vmem:[%s284 + $0x26c] sm:$0xf]
        %v453 = vld [vmem:[%s284 + $0x270] sm:$0xf]
        %v454 = vld [vmem:[%s284 + $0x274] sm:$0xf]
        %v455 = vld [vmem:[%s284 + $0x278] sm:$0xf]
        %v456 = vld [vmem:[%s284 + $0x27c] sm:$0xf]
        %v457 = vld [vmem:[%s284 + $0x280] sm:$0xf]
        %v458 = vld [vmem:[%s284 + $0x284] sm:$0xf]
        %v459 = vld [vmem:[%s284 + $0x288] sm:$0xf]
        %v460 = vld [vmem:[%s284 + $0x28c] sm:$0xf]
        %v461 = vld [vmem:[%s284 + $0x290] sm:$0xf]
        %v462 = vld [vmem:[%s284 + $0x294] sm:$0xf]
        %v463 = vld [vmem:[%s284 + $0x298] sm:$0xf]
        %v464 = vld [vmem:[%s284 + $0x29c] sm:$0xf]
        %v465 = vld [vmem:[%s284 + $0x2a0] sm:$0xf]
        %v466 = vld [vmem:[%s284 + $0x2a4] sm:$0xf]
        %v467 = vld [vmem:[%s284 + $0x2a8] sm:$0xf]
        %v468 = vld [vmem:[%s284 + $0x2ac] sm:$0xf]
        %v469 = vld [vmem:[%s284 + $0x2b0] sm:$0xf]
        %v470 = vld [vmem:[%s284 + $0x2b4] sm:$0xf]
        %v471 = vld [vmem:[%s284 + $0x2b8] sm:$0xf]
        %v472 = vld [vmem:[%s284 + $0x2bc] sm:$0xf]
        %v473 = vld [vmem:[%s284 + $0x2c0] sm:$0xf]
        %v474 = vld [vmem:[%s284 + $0x2c4] sm:$0xf]
        %v475 = vld [vmem:[%s284 + $0x2c8] sm:$0xf]
        %v476 = vld [vmem:[%s284 + $0x2cc] sm:$0xf]
        %v477 = vld [vmem:[%s284 + $0x2d0] sm:$0xf]
        %v478 = vld [vmem:[%s284 + $0x2d4] sm:$0xf]
        %v479 = vld [vmem:[%s284 + $0x2d8] sm:$0xf]
        %v480 = vld [vmem:[%s284 + $0x2dc] sm:$0xf]
        %v481 = vld [vmem:[%s284 + $0x2e0] sm:$0xf]
        %v482 = vld [vmem:[%s284 + $0x2e4] sm:$0xf]
        %v483 = vld [vmem:[%s284 + $0x2e8] sm:$0xf]
        %v484 = vld [vmem:[%s284 + $0x2ec] sm:$0xf]
        %v485 = vld [vmem:[%s284 + $0x2f0] sm:$0xf]
        %v486 = vld [vmem:[%s284 + $0x2f4] sm:$0xf]
        %v487 = vld [vmem:[%s284 + $0x2f8] sm:$0xf]
        %v488 = vld [vmem:[%s284 + $0x2fc] sm:$0xf]
        %v489 = vld [vmem:[%s284 + $0x300] sm:$0xf]
        %v490 = vld [vmem:[%s284 + $0x304] sm:$0xf]
        %v491 = vld [vmem:[%s284 + $0x308] sm:$0xf]
        %v492 = vld [vmem:[%s284 + $0x30c] sm:$0xf]
        %v493 = vld [vmem:[%s284 + $0x310] sm:$0xf]
        %v494 = vld [vmem:[%s284 + $0x314] sm:$0xf]
        %v495 = vld [vmem:[%s284 + $0x318] sm:$0xf]
        %v496 = vld [vmem:[%s284 + $0x31c] sm:$0xf]
        %v497 = vld [vmem:[%s284 + $0x320] sm:$0xf]
        %v498 = vld [vmem:[%s284 + $0x324] sm:$0xf]
        %v499 = vld [vmem:[%s284 + $0x328] sm:$0xf]
        %v500 = vld [vmem:[%s284 + $0x32c] sm:$0xf]
        %v501 = vld [vmem:[%s284 + $0x330] sm:$0xf]
        %v502 = vld [vmem:[%s284 + $0x334] sm:$0xf]
        %v503 = vld [vmem:[%s284 + $0x338] sm:$0xf]
        %v504 = vld [vmem:[%s284 + $0x33c] sm:$0xf]
        %v505 = vld [vmem:[%s284 + $0x340] sm:$0xf]
        %v506 = vld [vmem:[%s284 + $0x344] sm:$0xf]
        %v507 = vld [vmem:[%s284 + $0x348] sm:$0xf]
        %v508 = vld [vmem:[%s284 + $0x34c] sm:$0xf]
        %v509 = vld [vmem:[%s284 + $0x350] sm:$0xf]
        %v510 = vld [vmem:[%s284 + $0x354] sm:$0xf]
        %v511 = vld [vmem:[%s284 + $0x358] sm:$0xf]
        %v512 = vld [vmem:[%s284 + $0x35c] sm:$0xf]
        %v513 = vld [vmem:[%s284 + $0x360] sm:$0xf]
        %v514 = vld [vmem:[%s284 + $0x364] sm:$0xf]
        %v515 = vld [vmem:[%s284 + $0x368] sm:$0xf]
        %v516 = vld [vmem:[%s284 + $0x36c] sm:$0xf]
        %v517 = vld [vmem:[%s284 + $0x370] sm:$0xf]
        %v518 = vld [vmem:[%s284 + $0x374] sm:$0xf]
        %v519 = vld [vmem:[%s284 + $0x378] sm:$0xf]
        %v520 = vld [vmem:[%s284 + $0x37c] sm:$0xf]
        %v521 = vld [vmem:[%s284 + $0x380] sm:$0xf]
        %v522 = vld [vmem:[%s284 + $0x384] sm:$0xf]
        %v523 = vld [vmem:[%s284 + $0x388] sm:$0xf]
        %v524 = vld [vmem:[%s284 + $0x38c] sm:$0xf]
        %v525 = vld [vmem:[%s284 + $0x390] sm:$0xf]
        %v526 = vld [vmem:[%s284 + $0x394] sm:$0xf]
        %v527 = vld [vmem:[%s284 + $0x398] sm:$0xf]
        %v528 = vld [vmem:[%s284 + $0x39c] sm:$0xf]
        %v529 = vld [vmem:[%s284 + $0x3a0] sm:$0xf]
        %v530 = vld [vmem:[%s284 + $0x3a4] sm:$0xf]
        %v531 = vld [vmem:[%s284 + $0x3a8] sm:$0xf]
        %v532 = vld [vmem:[%s284 + $0x3ac] sm:$0xf]
        %v533 = vld [vmem:[%s284 + $0x3b0] sm:$0xf]
        %v534 = vld [vmem:[%s284 + $0x3b4] sm:$0xf]
        %v535 = vld [vmem:[%s284 + $0x3b8] sm:$0xf]
        %v536 = vld [vmem:[%s284 + $0x3bc] sm:$0xf]
        %v537 = vld [vmem:[%s284 + $0x3c0] sm:$0xf]
        %v538 = vld [vmem:[%s284 + $0x3c4] sm:$0xf]
        %v539 = vld [vmem:[%s284 + $0x3c8] sm:$0xf]
        %v540 = vld [vmem:[%s284 + $0x3cc] sm:$0xf]
        %v541 = vld [vmem:[%s284 + $0x3d0] sm:$0xf]
        %v542 = vld [vmem:[%s284 + $0x3d4] sm:$0xf]
        %v543 = vld [vmem:[%s284 + $0x3d8] sm:$0xf]
        %v544 = vld [vmem:[%s284 + $0x3dc] sm:$0xf]
        %v545 = vld [vmem:[%s284 + $0x3e0] sm:$0xf]
        %v546 = vld [vmem:[%s284 + $0x3e4] sm:$0xf]
        %v547 = vld [vmem:[%s284 + $0x3e8] sm:$0xf]
        %v548 = vld [vmem:[%s284 + $0x3ec] sm:$0xf]
        %v549 = vld [vmem:[%s284 + $0x3f0] sm:$0xf]
        %v550 = vld [vmem:[%s284 + $0x3f4] sm:$0xf]
        %v551 = vld [vmem:[%s284 + $0x3f8] sm:$0xf]
        %v552 = vld [vmem:[%s284 + $0x3fc] sm:$0xf]
        %v553 = vld [vmem:[%s284 + $0x400] sm:$0xf]
        %v554 = vld [vmem:[%s284 + $0x404] sm:$0xf]
        %v555 = vld [vmem:[%s284 + $0x408] sm:$0xf]
        %v556 = vld [vmem:[%s284 + $0x40c] sm:$0xf]
        %v557 = vld [vmem:[%s284 + $0x410] sm:$0xf]
        %v558 = vld [vmem:[%s284 + $0x414] sm:$0xf]
        %v559 = vld [vmem:[%s284 + $0x418] sm:$0xf]
        %v560 = vld [vmem:[%s284 + $0x41c] sm:$0xf]
        %v561 = vld [vmem:[%s284 + $0x420] sm:$0xf]
        %v562 = vld [vmem:[%s284 + $0x424] sm:$0xf]
        %v563 = vld [vmem:[%s284 + $0x428] sm:$0xf]
        %v564 = vld [vmem:[%s284 + $0x42c] sm:$0xf]
        %v565 = vld [vmem:[%s284 + $0x430] sm:$0xf]
        %v566 = vld [vmem:[%s284 + $0x434] sm:$0xf]
        %v567 = vld [vmem:[%s284 + $0x438] sm:$0xf]
        %v568 = vld [vmem:[%s284 + $0x43c] sm:$0xf]
        %v569 = vld [vmem:[%s284 + $0x440] sm:$0xf]
        %v570 = vld [vmem:[%s284 + $0x444] sm:$0xf]
        %v571 = vld [vmem:[%s284 + $0x448] sm:$0xf]
        %v572 = vld [vmem:[%s284 + $0x44c] sm:$0xf]
        %v573 = vld [vmem:[%s284 + $0x450] sm:$0xf]
        %v574 = vld [vmem:[%s284 + $0x454] sm:$0xf]
        %v575 = vld [vmem:[%s284 + $0x458] sm:$0xf]
        %v576 = vld [vmem:[%s284 + $0x45c] sm:$0xf]
        %v577 = vld [vmem:[%s284 + $0x460] sm:$0xf]
        %v578 = vld [vmem:[%s284 + $0x464] sm:$0xf]
        %v579 = vld [vmem:[%s284 + $0x468] sm:$0xf]
        %v580 = vld [vmem:[%s284 + $0x46c] sm:$0xf]
        %v581 = vld [vmem:[%s284 + $0x470] sm:$0xf]
        %v582 = vld [vmem:[%s284 + $0x474] sm:$0xf]
        %v583 = vld [vmem:[%s284 + $0x478] sm:$0xf]
        %v584 = vld [vmem:[%s284 + $0x47c] sm:$0xf]
        %v585 = vld [vmem:[%s284 + $0x480] sm:$0xf]
        %v586 = vld [vmem:[%s284 + $0x484] sm:$0xf]
        %v587 = vld [vmem:[%s284 + $0x488] sm:$0xf]
        %v588 = vld [vmem:[%s284 + $0x48c] sm:$0xf]
        %v589 = vld [vmem:[%s284 + $0x490] sm:$0xf]
        %v590 = vld [vmem:[%s284 + $0x494] sm:$0xf]
        %v591 = vld [vmem:[%s284 + $0x498] sm:$0xf]
        %v592 = vld [vmem:[%s284 + $0x49c] sm:$0xf]
        %v593 = vld [vmem:[%s284 + $0x4a0] sm:$0xf]
        %v594 = vld [vmem:[%s284 + $0x4a4] sm:$0xf]
        %v595 = vld [vmem:[%s284 + $0x4a8] sm:$0xf]
        %v596 = vld [vmem:[%s284 + $0x4ac] sm:$0xf]
        %v597 = vld [vmem:[%s284 + $0x4b0] sm:$0xf]
        %v598 = vld [vmem:[%s284 + $0x4b4] sm:$0xf]
        %v599 = vld [vmem:[%s284 + $0x4b8] sm:$0xf]
        %v600 = vld [vmem:[%s284 + $0x4bc] sm:$0xf]
        %v601 = vld [vmem:[%s284 + $0x4c0] sm:$0xf]
        %v602 = vld [vmem:[%s284 + $0x4c4] sm:$0xf]
        %v603 = vld [vmem:[%s284 + $0x4c8] sm:$0xf]
        %v604 = vld [vmem:[%s284 + $0x4cc] sm:$0xf]
        %v605 = vld [vmem:[%s284 + $0x4d0] sm:$0xf]
        %v606 = vld [vmem:[%s284 + $0x4d4] sm:$0xf]
        %v607 = vld [vmem:[%s284 + $0x4d8] sm:$0xf]
        %v608 = vld [vmem:[%s284 + $0x4dc] sm:$0xf]
        %v609 = vld [vmem:[%s284 + $0x4e0] sm:$0xf]
        %v610 = vld [vmem:[%s284 + $0x4e4] sm:$0xf]
        %v611 = vld [vmem:[%s284 + $0x4e8] sm:$0xf]
        %v612 = vld [vmem:[%s284 + $0x4ec] sm:$0xf]
        %v613 = vld [vmem:[%s284 + $0x4f0] sm:$0xf]
        %v614 = vld [vmem:[%s284 + $0x4f4] sm:$0xf]
        %v615 = vld [vmem:[%s284 + $0x4f8] sm:$0xf]
        %v616 = vld [vmem:[%s284 + $0x4fc] sm:$0xf]
        %v617 = vld [vmem:[%s284 + $0x500] sm:$0xf]
        %v618 = vld [vmem:[%s284 + $0x504] sm:$0xf]
        %v619 = vld [vmem:[%s284 + $0x508] sm:$0xf]
        %v620 = vld [vmem:[%s284 + $0x50c] sm:$0xf]
        %v621 = vld [vmem:[%s284 + $0x510] sm:$0xf]
        %v622 = vld [vmem:[%s284 + $0x514] sm:$0xf]
        %v623 = vld [vmem:[%s284 + $0x518] sm:$0xf]
        %v624 = vld [vmem:[%s284 + $0x51c] sm:$0xf]
        %v625 = vld [vmem:[%s284 + $0x520] sm:$0xf]
        %v626 = vld [vmem:[%s284 + $0x524] sm:$0xf]
        %v627 = vld [vmem:[%s284 + $0x528] sm:$0xf]
        %v628 = vld [vmem:[%s284 + $0x52c] sm:$0xf]
        %v629 = vld [vmem:[%s284 + $0x530] sm:$0xf]
        %v630 = vld [vmem:[%s284 + $0x534] sm:$0xf]
        %v631 = vld [vmem:[%s284 + $0x538] sm:$0xf]
        %v632 = vld [vmem:[%s284 + $0x53c] sm:$0xf]
        %v633 = vld [vmem:[%s284 + $0x540] sm:$0xf]
        %v634 = vld [vmem:[%s284 + $0x544] sm:$0xf]
        %v635 = vld [vmem:[%s284 + $0x548] sm:$0xf]
        %v636 = vld [vmem:[%s284 + $0x54c] sm:$0xf]
        %v637 = vld [vmem:[%s284 + $0x550] sm:$0xf]
        %v638 = vld [vmem:[%s284 + $0x554] sm:$0xf]
        %v639 = vld [vmem:[%s284 + $0x558] sm:$0xf]
        %v640 = vld [vmem:[%s284 + $0x55c] sm:$0xf]
        %v641 = vld [vmem:[%s284 + $0x560] sm:$0xf]
        %v642 = vld [vmem:[%s284 + $0x564] sm:$0xf]
        %v643 = vld [vmem:[%s284 + $0x568] sm:$0xf]
        %v644 = vld [vmem:[%s284 + $0x56c] sm:$0xf]
        %v645 = vld [vmem:[%s284 + $0x570] sm:$0xf]
        %v646 = vld [vmem:[%s284 + $0x574] sm:$0xf]
        %v647 = vld [vmem:[%s284 + $0x578] sm:$0xf]
        %v648 = vld [vmem:[%s284 + $0x57c] sm:$0xf]
        %v649 = vld [vmem:[%s284 + $0x580] sm:$0xf]
        %v650 = vld [vmem:[%s284 + $0x584] sm:$0xf]
        %v651 = vld [vmem:[%s284 + $0x588] sm:$0xf]
        %v652 = vld [vmem:[%s284 + $0x58c] sm:$0xf]
        %v653 = vld [vmem:[%s284 + $0x590] sm:$0xf]
        %v654 = vld [vmem:[%s284 + $0x594] sm:$0xf]
        %v655 = vld [vmem:[%s284 + $0x598] sm:$0xf]
        %v656 = vld [vmem:[%s284 + $0x59c] sm:$0xf]
        %v657 = vld [vmem:[%s284 + $0x5a0] sm:$0xf]
        %v658 = vld [vmem:[%s284 + $0x5a4] sm:$0xf]
        %v659 = vld [vmem:[%s284 + $0x5a8] sm:$0xf]
        %v660 = vld [vmem:[%s284 + $0x5ac] sm:$0xf]
        %v661 = vld [vmem:[%s284 + $0x5b0] sm:$0xf]
        %v662 = vld [vmem:[%s284 + $0x5b4] sm:$0xf]
        %v663 = vld [vmem:[%s284 + $0x5b8] sm:$0xf]
        %v664 = vld [vmem:[%s284 + $0x5bc] sm:$0xf]
        %v665 = vld [vmem:[%s284 + $0x5c0] sm:$0xf]
        %v666 = vld [vmem:[%s284 + $0x5c4] sm:$0xf]
        %v667 = vld [vmem:[%s284 + $0x5c8] sm:$0xf]
        %v668 = vld [vmem:[%s284 + $0x5cc] sm:$0xf]
        %v669 = vld [vmem:[%s284 + $0x5d0] sm:$0xf]
        %v670 = vld [vmem:[%s284 + $0x5d4] sm:$0xf]
        %v671 = vld [vmem:[%s284 + $0x5d8] sm:$0xf]
        %v672 = vld [vmem:[%s284 + $0x5dc] sm:$0xf]
        %v673 = vld [vmem:[%s284 + $0x5e0] sm:$0xf]
        %v674 = vld [vmem:[%s284 + $0x5e4] sm:$0xf]
        %v675 = vld [vmem:[%s284 + $0x5e8] sm:$0xf]
        %v676 = vld [vmem:[%s284 + $0x5ec] sm:$0xf]
        %v677 = vld [vmem:[%s284 + $0x5f0] sm:$0xf]
        %v678 = vld [vmem:[%s284 + $0x5f4] sm:$0xf]
        %v679 = vld [vmem:[%s284 + $0x5f8] sm:$0xf]
        %v680 = vld [vmem:[%s284 + $0x5fc] sm:$0xf]
        %v681 = vld [vmem:[%s284 + $0x600] sm:$0xf]
        %v682 = vld [vmem:[%s284 + $0x604] sm:$0xf]
        %v683 = vld [vmem:[%s284 + $0x608] sm:$0xf]
        %v684 = vld [vmem:[%s284 + $0x60c] sm:$0xf]
        %v685 = vld [vmem:[%s284 + $0x610] sm:$0xf]
        %v686 = vld [vmem:[%s284 + $0x614] sm:$0xf]
        %v687 = vld [vmem:[%s284 + $0x618] sm:$0xf]
        %v688 = vld [vmem:[%s284 + $0x61c] sm:$0xf]
        %v689 = vld [vmem:[%s284 + $0x620] sm:$0xf]
        %v690 = vld [vmem:[%s284 + $0x624] sm:$0xf]
        %v691 = vld [vmem:[%s284 + $0x628] sm:$0xf]
        %v692 = vld [vmem:[%s284 + $0x62c] sm:$0xf]
        %v693 = vld [vmem:[%s284 + $0x630] sm:$0xf]
        %v694 = vld [vmem:[%s284 + $0x634] sm:$0xf]
        %v695 = vld [vmem:[%s284 + $0x638] sm:$0xf]
        %v696 = vld [vmem:[%s284 + $0x63c] sm:$0xf]
        %v697 = vld [vmem:[%s284 + $0x640] sm:$0xf]
        %v698 = vld [vmem:[%s284 + $0x644] sm:$0xf]
        %v699 = vld [vmem:[%s284 + $0x648] sm:$0xf]
        %v700 = vld [vmem:[%s284 + $0x64c] sm:$0xf]
        %v701 = vld [vmem:[%s284 + $0x650] sm:$0xf]
        %v702 = vld [vmem:[%s284 + $0x654] sm:$0xf]
        %v703 = vld [vmem:[%s284 + $0x658] sm:$0xf]
        %v704 = vld [vmem:[%s284 + $0x65c] sm:$0xf]
        %v705 = vld [vmem:[%s284 + $0x660] sm:$0xf]
        %v706 = vld [vmem:[%s284 + $0x664] sm:$0xf]
        %v707 = vld [vmem:[%s284 + $0x668] sm:$0xf]
        %v708 = vld [vmem:[%s284 + $0x66c] sm:$0xf]
        %v709 = vld [vmem:[%s284 + $0x670] sm:$0xf]
        %v710 = vld [vmem:[%s284 + $0x674] sm:$0xf]
        %v711 = vld [vmem:[%s284 + $0x678] sm:$0xf]
        %v712 = vld [vmem:[%s284 + $0x67c] sm:$0xf]
        %v713 = vld [vmem:[%s284 + $0x680] sm:$0xf]
        %v714 = vld [vmem:[%s284 + $0x684] sm:$0xf]
        %v715 = vld [vmem:[%s284 + $0x688] sm:$0xf]
        %v716 = vld [vmem:[%s284 + $0x68c] sm:$0xf]
        %v717 = vld [vmem:[%s284 + $0x690] sm:$0xf]
        %v718 = vld [vmem:[%s284 + $0x694] sm:$0xf]
        %v719 = vld [vmem:[%s284 + $0x698] sm:$0xf]
        %v720 = vld [vmem:[%s284 + $0x69c] sm:$0xf]
        %v721 = vld [vmem:[%s284 + $0x6a0] sm:$0xf]
        %v722 = vld [vmem:[%s284 + $0x6a4] sm:$0xf]
        %v723 = vld [vmem:[%s284 + $0x6a8] sm:$0xf]
        %v724 = vld [vmem:[%s284 + $0x6ac] sm:$0xf]
        %v725 = vld [vmem:[%s284 + $0x6b0] sm:$0xf]
        %v726 = vld [vmem:[%s284 + $0x6b4] sm:$0xf]
        %v727 = vld [vmem:[%s284 + $0x6b8] sm:$0xf]
        %v728 = vld [vmem:[%s284 + $0x6bc] sm:$0xf]
        %v729 = vld [vmem:[%s284 + $0x6c0] sm:$0xf]
        %v730 = vld [vmem:[%s284 + $0x6c4] sm:$0xf]
        %v731 = vld [vmem:[%s284 + $0x6c8] sm:$0xf]
        %v732 = vld [vmem:[%s284 + $0x6cc] sm:$0xf]
        %v733 = vld [vmem:[%s284 + $0x6d0] sm:$0xf]
        %v734 = vld [vmem:[%s284 + $0x6d4] sm:$0xf]
        %v735 = vld [vmem:[%s284 + $0x6d8] sm:$0xf]
        %v736 = vld [vmem:[%s284 + $0x6dc] sm:$0xf]
        %v737 = vld [vmem:[%s284 + $0x6e0] sm:$0xf]
        %v738 = vld [vmem:[%s284 + $0x6e4] sm:$0xf]
        %v739 = vld [vmem:[%s284 + $0x6e8] sm:$0xf]
        %v740 = vld [vmem:[%s284 + $0x6ec] sm:$0xf]
        %v741 = vld [vmem:[%s284 + $0x6f0] sm:$0xf]
        %v742 = vld [vmem:[%s284 + $0x6f4] sm:$0xf]
        %v743 = vld [vmem:[%s284 + $0x6f8] sm:$0xf]
        %v744 = vld [vmem:[%s284 + $0x6fc] sm:$0xf]
        %v749 = vcombine.high %v293, %v293
        %v751 = vunpack.c.l.s4 1966171168
        %v752 = vunpack.c.0.s8 %v751
        %v753 = vlaneseq
        %v754 = vshrl.u32 %v753, 7
        %v755 = vsub.s32 %v752, %v754
        %v756 = vrot.slane %v293, %v755
        %v758 = vunpack.c.l.s4 1966171168
        %v759 = vunpack.c.0.s8 %v758
        %v760 = vlaneseq
        %v761 = vshrl.u32 %v760, 7
        %v762 = vsub.s32 %v759, %v761
        %v763 = vrot.slane %v749, %v762
        %v764 = vcombine.high %v756, %v756
        %v765 = vcombine.high %v763, %v763
        %v767 = vunpack.c.l.s4 1966171168
        %v768 = vunpack.c.0.s8 %v767
        %v769 = vlaneseq
        %v770 = vshrl.u32 %v769, 7
        %v771 = vsub.s32 %v768, %v770
        %v772 = vrot.slane %v756, %v771
        %v774 = vunpack.c.l.s4 1966171168
        %v775 = vunpack.c.0.s8 %v774
        %v776 = vlaneseq
        %v777 = vshrl.u32 %v776, 7
        %v778 = vsub.s32 %v775, %v777
        %v779 = vrot.slane %v763, %v778
        %v781 = vunpack.c.l.s4 1966171168
        %v782 = vunpack.c.0.s8 %v781
        %v783 = vlaneseq
        %v784 = vshrl.u32 %v783, 7
        %v785 = vsub.s32 %v782, %v784
        %v786 = vrot.slane %v764, %v785
        %v788 = vunpack.c.l.s4 1966171168
        %v789 = vunpack.c.0.s8 %v788
        %v790 = vlaneseq
        %v791 = vshrl.u32 %v790, 7
        %v792 = vsub.s32 %v789, %v791
        %v793 = vrot.slane %v765, %v792
        %v794 = vcombine.high %v772, %v772
        %v795 = vcombine.high %v779, %v779
        %v796 = vcombine.high %v786, %v786
        %v797 = vcombine.high %v793, %v793
        %v798 = vcombine.high %v294, %v294
        %v800 = vunpack.c.l.s4 1966171168
        %v801 = vunpack.c.0.s8 %v800
        %v802 = vlaneseq
        %v803 = vshrl.u32 %v802, 7
        %v804 = vsub.s32 %v801, %v803
        %v805 = vrot.slane %v294, %v804
        %v807 = vunpack.c.l.s4 1966171168
        %v808 = vunpack.c.0.s8 %v807
        %v809 = vlaneseq
        %v810 = vshrl.u32 %v809, 7
        %v811 = vsub.s32 %v808, %v810
        %v812 = vrot.slane %v798, %v811
        %v813 = vcombine.high %v805, %v805
        %v814 = vcombine.high %v812, %v812
        %v816 = vunpack.c.l.s4 1966171168
        %v817 = vunpack.c.0.s8 %v816
        %v818 = vlaneseq
        %v819 = vshrl.u32 %v818, 7
        %v820 = vsub.s32 %v817, %v819
        %v821 = vrot.slane %v805, %v820
        %v823 = vunpack.c.l.s4 1966171168
        %v824 = vunpack.c.0.s8 %v823
        %v825 = vlaneseq
        %v826 = vshrl.u32 %v825, 7
        %v827 = vsub.s32 %v824, %v826
        %v828 = vrot.slane %v812, %v827
        %v830 = vunpack.c.l.s4 1966171168
        %v831 = vunpack.c.0.s8 %v830
        %v832 = vlaneseq
        %v833 = vshrl.u32 %v832, 7
        %v834 = vsub.s32 %v831, %v833
        %v835 = vrot.slane %v813, %v834
        %v837 = vunpack.c.l.s4 1966171168
        %v838 = vunpack.c.0.s8 %v837
        %v839 = vlaneseq
        %v840 = vshrl.u32 %v839, 7
        %v841 = vsub.s32 %v838, %v840
        %v842 = vrot.slane %v814, %v841
        %v843 = vcombine.high %v821, %v821
        %v844 = vcombine.high %v828, %v828
        %v845 = vcombine.high %v835, %v835
        %v846 = vcombine.high %v842, %v842
        %v847 = vcombine.high %v295, %v295
        %v849 = vunpack.c.l.s4 1966171168
        %v850 = vunpack.c.0.s8 %v849
        %v851 = vlaneseq
        %v852 = vshrl.u32 %v851, 7
        %v853 = vsub.s32 %v850, %v852
        %v854 = vrot.slane %v295, %v853
        %v856 = vunpack.c.l.s4 1966171168
        %v857 = vunpack.c.0.s8 %v856
        %v858 = vlaneseq
        %v859 = vshrl.u32 %v858, 7
        %v860 = vsub.s32 %v857, %v859
        %v861 = vrot.slane %v847, %v860
        %v862 = vcombine.high %v854, %v854
        %v863 = vcombine.high %v861, %v861
        %v865 = vunpack.c.l.s4 1966171168
        %v866 = vunpack.c.0.s8 %v865
        %v867 = vlaneseq
        %v868 = vshrl.u32 %v867, 7
        %v869 = vsub.s32 %v866, %v868
        %v870 = vrot.slane %v854, %v869
        %v872 = vunpack.c.l.s4 1966171168
        %v873 = vunpack.c.0.s8 %v872
        %v874 = vlaneseq
        %v875 = vshrl.u32 %v874, 7
        %v876 = vsub.s32 %v873, %v875
        %v877 = vrot.slane %v861, %v876
        %v879 = vunpack.c.l.s4 1966171168
        %v880 = vunpack.c.0.s8 %v879
        %v881 = vlaneseq
        %v882 = vshrl.u32 %v881, 7
        %v883 = vsub.s32 %v880, %v882
        %v884 = vrot.slane %v862, %v883
        %v886 = vunpack.c.l.s4 1966171168
        %v887 = vunpack.c.0.s8 %v886
        %v888 = vlaneseq
        %v889 = vshrl.u32 %v888, 7
        %v890 = vsub.s32 %v887, %v889
        %v891 = vrot.slane %v863, %v890
        %v892 = vcombine.high %v870, %v870
        %v893 = vcombine.high %v877, %v877
        %v894 = vcombine.high %v884, %v884
        %v895 = vcombine.high %v891, %v891
        %v897 = vunpack.c.l.s4 1966171168
        %v898 = vunpack.c.0.s8 %v897
        %v899 = vlaneseq
        %v900 = vshrl.u32 %v899, 7
        %v901 = vsub.s32 %v898, %v900
        %v902 = vrot.slane %v296, %v901
        %v903 = vcombine.high %v902, %v902
        %v905 = vunpack.c.l.s4 1966171168
        %v906 = vunpack.c.0.s8 %v905
        %v907 = vlaneseq
        %v908 = vshrl.u32 %v907, 7
        %v909 = vsub.s32 %v906, %v908
        %v910 = vrot.slane %v902, %v909
        %v912 = vunpack.c.l.s4 1966171168
        %v913 = vunpack.c.0.s8 %v912
        %v914 = vlaneseq
        %v915 = vshrl.u32 %v914, 7
        %v916 = vsub.s32 %v913, %v915
        %v917 = vrot.slane %v903, %v916
        %v918 = vcombine.high %v910, %v910
        %v919 = vcombine.high %v917, %v917
        %v1396 = vunpack.c.l.b16 %v297
        %v1397 = vunpack.c.l.b16 %v298
        %v1398 = vunpack.c.l.b16 %v299
        %v1399 = vunpack.c.l.b16 %v300
        %v1400 = vunpack.c.l.b16 %v301
        %v1401 = vunpack.c.l.b16 %v302
        %v1402 = vunpack.c.l.b16 %v303
        %v1403 = vunpack.c.l.b16 %v304
        %v1404 = vunpack.c.l.b16 %v305
        %v1405 = vunpack.c.l.b16 %v306
        %v1406 = vunpack.c.l.b16 %v307
        %v1407 = vunpack.c.l.b16 %v308
        %v1408 = vunpack.c.l.b16 %v309
        %v1409 = vunpack.c.l.b16 %v310
        %v1410 = vunpack.c.l.b16 %v311
        %v1411 = vunpack.c.l.b16 %v312
        %v1412 = vunpack.c.l.b16 %v313
        %v1413 = vunpack.c.l.b16 %v314
        %v1414 = vunpack.c.l.b16 %v315
        %v1415 = vunpack.c.l.b16 %v316
        %v1416 = vunpack.c.l.b16 %v317
        %v1417 = vunpack.c.l.b16 %v318
        %v1418 = vunpack.c.l.b16 %v319
        %v1419 = vunpack.c.l.b16 %v320
        %v1420 = vunpack.c.l.b16 %v321
        %v1421 = vunpack.c.l.b16 %v322
        %v1422 = vunpack.c.l.b16 %v323
        %v1423 = vunpack.c.l.b16 %v324
        %v1424 = vunpack.c.l.b16 %v325
        %v1425 = vunpack.c.l.b16 %v326
        %v1426 = vunpack.c.l.b16 %v327
        %v1427 = vunpack.c.l.b16 %v328
        %v1428 = vunpack.c.l.b16 %v329
        %v1429 = vunpack.c.l.b16 %v330
        %v1430 = vunpack.c.l.b16 %v331
        %v1431 = vunpack.c.l.b16 %v332
        %v1432 = vunpack.c.l.b16 %v333
        %v1433 = vunpack.c.l.b16 %v334
        %v1434 = vunpack.c.l.b16 %v335
        %v1435 = vunpack.c.l.b16 %v336
        %v1436 = vunpack.c.l.b16 %v337
        %v1437 = vunpack.c.l.b16 %v338
        %v1438 = vunpack.c.l.b16 %v339
        %v1439 = vunpack.c.l.b16 %v340
        %v1440 = vunpack.c.l.b16 %v341
        %v1441 = vunpack.c.l.b16 %v342
        %v1442 = vunpack.c.l.b16 %v343
        %v1443 = vunpack.c.l.b16 %v344
        %v1444 = vunpack.c.l.b16 %v345
        %v1445 = vunpack.c.l.b16 %v346
        %v1446 = vunpack.c.l.b16 %v347
        %v1447 = vunpack.c.l.b16 %v348
        %v1448 = vunpack.c.l.b16 %v349
        %v1449 = vunpack.c.l.b16 %v350
        %v1450 = vunpack.c.l.b16 %v351
        %v1451 = vunpack.c.l.b16 %v352
        %v1452 = vunpack.c.l.b16 %v353
        %v1453 = vunpack.c.l.b16 %v354
        %v1454 = vunpack.c.l.b16 %v355
        %v1455 = vunpack.c.l.b16 %v356
        %v1456 = vunpack.c.l.b16 %v357
        %v1457 = vunpack.c.l.b16 %v358
        %v1458 = vunpack.c.l.b16 %v359
        %v1459 = vunpack.c.l.b16 %v360
        %v1460 = vunpack.c.l.b16 %v361
        %v1461 = vunpack.c.l.b16 %v362
        %v1462 = vunpack.c.l.b16 %v363
        %v1463 = vunpack.c.l.b16 %v364
        %v1464 = vunpack.c.l.b16 %v365
        %v1465 = vunpack.c.l.b16 %v366
        %v1466 = vunpack.c.l.b16 %v367
        %v1467 = vunpack.c.l.b16 %v368
        %v1468 = vunpack.c.l.b16 %v369
        %v1469 = vunpack.c.l.b16 %v370
        %v1470 = vunpack.c.l.b16 %v371
        %v1471 = vunpack.c.l.b16 %v372
        %v1472 = vunpack.c.l.b16 %v373
        %v1473 = vunpack.c.l.b16 %v374
        %v1474 = vunpack.c.l.b16 %v375
        %v1475 = vunpack.c.l.b16 %v376
        %v1476 = vunpack.c.l.b16 %v377
        %v1477 = vunpack.c.l.b16 %v378
        %v1478 = vunpack.c.l.b16 %v379
        %v1479 = vunpack.c.l.b16 %v380
        %v1480 = vunpack.c.l.b16 %v381
        %v1481 = vunpack.c.l.b16 %v382
        %v1482 = vunpack.c.l.b16 %v383
        %v1483 = vunpack.c.l.b16 %v384
        %v1484 = vunpack.c.l.b16 %v385
        %v1485 = vunpack.c.l.b16 %v386
        %v1486 = vunpack.c.l.b16 %v387
        %v1487 = vunpack.c.l.b16 %v388
        %v1488 = vunpack.c.l.b16 %v389
        %v1489 = vunpack.c.l.b16 %v390
        %v1490 = vunpack.c.l.b16 %v391
        %v1491 = vunpack.c.l.b16 %v392
        %v1492 = vunpack.c.l.b16 %v393
        %v1493 = vunpack.c.l.b16 %v394
        %v1494 = vunpack.c.l.b16 %v395
        %v1495 = vunpack.c.l.b16 %v396
        %v1496 = vunpack.c.l.b16 %v397
        %v1497 = vunpack.c.l.b16 %v398
        %v1498 = vunpack.c.l.b16 %v399
        %v1499 = vunpack.c.l.b16 %v400
        %v1500 = vunpack.c.l.b16 %v401
        %v1501 = vunpack.c.l.b16 %v402
        %v1502 = vunpack.c.l.b16 %v403
        %v1503 = vunpack.c.l.b16 %v404
        %v1504 = vunpack.c.l.b16 %v405
        %v1505 = vunpack.c.l.b16 %v406
        %v1506 = vunpack.c.l.b16 %v407
        %v1507 = vunpack.c.l.b16 %v408
        %v1508 = vunpack.c.l.b16 %v409
        %v1509 = vunpack.c.l.b16 %v410
        %v1510 = vunpack.c.l.b16 %v411
        %v1511 = vunpack.c.l.b16 %v412
        %v1512 = vunpack.c.l.b16 %v413
        %v1513 = vunpack.c.l.b16 %v414
        %v1514 = vunpack.c.l.b16 %v415
        %v1515 = vunpack.c.l.b16 %v416
        %v1516 = vunpack.c.l.b16 %v417
        %v1517 = vunpack.c.l.b16 %v418
        %v1518 = vunpack.c.l.b16 %v419
        %v1519 = vunpack.c.l.b16 %v420
        %v1520 = vunpack.c.l.b16 %v421
        %v1521 = vunpack.c.l.b16 %v422
        %v1522 = vunpack.c.l.b16 %v423
        %v1523 = vunpack.c.l.b16 %v424
        %v1524 = vunpack.c.l.b16 %v425
        %v1525 = vunpack.c.l.b16 %v426
        %v1526 = vunpack.c.l.b16 %v427
        %v1527 = vunpack.c.l.b16 %v428
        %v1528 = vunpack.c.l.b16 %v429
        %v1529 = vunpack.c.l.b16 %v430
        %v1530 = vunpack.c.l.b16 %v431
        %v1531 = vunpack.c.l.b16 %v432
        %v1532 = vunpack.c.l.b16 %v433
        %v1533 = vunpack.c.l.b16 %v434
        %v1534 = vunpack.c.l.b16 %v435
        %v1535 = vunpack.c.l.b16 %v436
        %v1536 = vunpack.c.l.b16 %v437
        %v1537 = vunpack.c.l.b16 %v438
        %v1538 = vunpack.c.l.b16 %v439
        %v1539 = vunpack.c.l.b16 %v440
        %v1540 = vunpack.c.l.b16 %v441
        %v1541 = vunpack.c.l.b16 %v442
        %v1542 = vunpack.c.l.b16 %v443
        %v1543 = vunpack.c.l.b16 %v444
        %v1544 = vunpack.c.l.b16 %v445
        %v1545 = vunpack.c.l.b16 %v446
        %v1546 = vunpack.c.l.b16 %v447
        %v1547 = vunpack.c.l.b16 %v448
        %v1548 = vunpack.c.l.b16 %v449
        %v1549 = vunpack.c.l.b16 %v450
        %v1550 = vunpack.c.l.b16 %v451
        %v1551 = vunpack.c.l.b16 %v452
        %v1552 = vunpack.c.l.b16 %v453
        %v1553 = vunpack.c.l.b16 %v454
        %v1554 = vunpack.c.l.b16 %v455
        %v1555 = vunpack.c.l.b16 %v456
        %v1556 = vunpack.c.l.b16 %v457
        %v1557 = vunpack.c.l.b16 %v458
        %v1558 = vunpack.c.l.b16 %v459
        %v1559 = vunpack.c.l.b16 %v460
        %v1560 = vunpack.c.l.b16 %v461
        %v1561 = vunpack.c.l.b16 %v462
        %v1562 = vunpack.c.l.b16 %v463
        %v1563 = vunpack.c.l.b16 %v464
        %v1564 = vunpack.c.l.b16 %v465
        %v1565 = vunpack.c.l.b16 %v466
        %v1566 = vunpack.c.l.b16 %v467
        %v1567 = vunpack.c.l.b16 %v468
        %v1568 = vunpack.c.l.b16 %v469
        %v1569 = vunpack.c.l.b16 %v470
        %v1570 = vunpack.c.l.b16 %v471
        %v1571 = vunpack.c.l.b16 %v472
        %v1572 = vunpack.c.l.b16 %v473
        %v1573 = vunpack.c.l.b16 %v474
        %v1574 = vunpack.c.l.b16 %v475
        %v1575 = vunpack.c.l.b16 %v476
        %v1576 = vunpack.c.l.b16 %v477
        %v1577 = vunpack.c.l.b16 %v478
        %v1578 = vunpack.c.l.b16 %v479
        %v1579 = vunpack.c.l.b16 %v480
        %v1580 = vunpack.c.l.b16 %v481
        %v1581 = vunpack.c.l.b16 %v482
        %v1582 = vunpack.c.l.b16 %v483
        %v1583 = vunpack.c.l.b16 %v484
        %v1584 = vunpack.c.l.b16 %v485
        %v1585 = vunpack.c.l.b16 %v486
        %v1586 = vunpack.c.l.b16 %v487
        %v1587 = vunpack.c.l.b16 %v488
        %v1588 = vunpack.c.l.b16 %v489
        %v1589 = vunpack.c.l.b16 %v490
        %v1590 = vunpack.c.l.b16 %v491
        %v1591 = vunpack.c.l.b16 %v492
        %v1592 = vunpack.c.l.b16 %v493
        %v1593 = vunpack.c.l.b16 %v494
        %v1594 = vunpack.c.l.b16 %v495
        %v1595 = vunpack.c.l.b16 %v496
        %v1596 = vunpack.c.l.b16 %v497
        %v1597 = vunpack.c.l.b16 %v498
        %v1598 = vunpack.c.l.b16 %v499
        %v1599 = vunpack.c.l.b16 %v500
        %v1600 = vunpack.c.l.b16 %v501
        %v1601 = vunpack.c.l.b16 %v502
        %v1602 = vunpack.c.l.b16 %v503
        %v1603 = vunpack.c.l.b16 %v504
        %v1604 = vunpack.c.l.b16 %v505
        %v1605 = vunpack.c.l.b16 %v506
        %v1606 = vunpack.c.l.b16 %v507
        %v1607 = vunpack.c.l.b16 %v508
        %v1608 = vunpack.c.l.b16 %v509
        %v1609 = vunpack.c.l.b16 %v510
        %v1610 = vunpack.c.l.b16 %v511
        %v1611 = vunpack.c.l.b16 %v512
        %v1612 = vunpack.c.l.b16 %v513
        %v1613 = vunpack.c.l.b16 %v514
        %v1614 = vunpack.c.l.b16 %v515
        %v1615 = vunpack.c.l.b16 %v516
        %v1616 = vunpack.c.l.b16 %v517
        %v1617 = vunpack.c.l.b16 %v518
        %v1618 = vunpack.c.l.b16 %v519
        %v1619 = vunpack.c.l.b16 %v520
        %v1620 = vunpack.c.l.b16 %v521
        %v1621 = vunpack.c.l.b16 %v522
        %v1622 = vunpack.c.l.b16 %v523
        %v1623 = vunpack.c.l.b16 %v524
        %v1624 = vunpack.c.l.b16 %v525
        %v1625 = vunpack.c.l.b16 %v526
        %v1626 = vunpack.c.l.b16 %v527
        %v1627 = vunpack.c.l.b16 %v528
        %v1628 = vunpack.c.l.b16 %v529
        %v1629 = vunpack.c.l.b16 %v530
        %v1630 = vunpack.c.l.b16 %v531
        %v1631 = vunpack.c.l.b16 %v532
        %v1632 = vunpack.c.l.b16 %v533
        %v1633 = vunpack.c.l.b16 %v534
        %v1634 = vunpack.c.l.b16 %v535
        %v1635 = vunpack.c.l.b16 %v536
        %v1636 = vunpack.c.l.b16 %v537
        %v1637 = vunpack.c.l.b16 %v538
        %v1638 = vunpack.c.l.b16 %v539
        %v1639 = vunpack.c.l.b16 %v540
        %v1640 = vunpack.c.l.b16 %v541
        %v1641 = vunpack.c.l.b16 %v542
        %v1642 = vunpack.c.l.b16 %v543
        %v1643 = vunpack.c.l.b16 %v544
        %v1644 = vunpack.c.l.b16 %v545
        %v1645 = vunpack.c.l.b16 %v546
        %v1646 = vunpack.c.l.b16 %v547
        %v1647 = vunpack.c.l.b16 %v548
        %v1648 = vunpack.c.l.b16 %v549
        %v1649 = vunpack.c.l.b16 %v550
        %v1650 = vunpack.c.l.b16 %v551
        %v1651 = vunpack.c.l.b16 %v552
        %v1652 = vunpack.c.l.b16 %v553
        %v1653 = vunpack.c.l.b16 %v554
        %v1654 = vunpack.c.l.b16 %v555
        %v1655 = vunpack.c.l.b16 %v556
        %v1656 = vunpack.c.l.b16 %v557
        %v1657 = vunpack.c.l.b16 %v558
        %v1658 = vunpack.c.l.b16 %v559
        %v1659 = vunpack.c.l.b16 %v560
        %v1660 = vunpack.c.l.b16 %v561
        %v1661 = vunpack.c.l.b16 %v562
        %v1662 = vunpack.c.l.b16 %v563
        %v1663 = vunpack.c.l.b16 %v564
        %v1664 = vunpack.c.l.b16 %v565
        %v1665 = vunpack.c.l.b16 %v566
        %v1666 = vunpack.c.l.b16 %v567
        %v1667 = vunpack.c.l.b16 %v568
        %v1668 = vunpack.c.l.b16 %v569
        %v1669 = vunpack.c.l.b16 %v570
        %v1670 = vunpack.c.l.b16 %v571
        %v1671 = vunpack.c.l.b16 %v572
        %v1672 = vunpack.c.l.b16 %v573
        %v1673 = vunpack.c.l.b16 %v574
        %v1674 = vunpack.c.l.b16 %v575
        %v1675 = vunpack.c.l.b16 %v576
        %v1676 = vunpack.c.l.b16 %v577
        %v1677 = vunpack.c.l.b16 %v578
        %v1678 = vunpack.c.l.b16 %v579
        %v1679 = vunpack.c.l.b16 %v580
        %v1680 = vunpack.c.l.b16 %v581
        %v1681 = vunpack.c.l.b16 %v582
        %v1682 = vunpack.c.l.b16 %v583
        %v1683 = vunpack.c.l.b16 %v584
        %v1684 = vunpack.c.l.b16 %v585
        %v1685 = vunpack.c.l.b16 %v586
        %v1686 = vunpack.c.l.b16 %v587
        %v1687 = vunpack.c.l.b16 %v588
        %v1688 = vunpack.c.l.b16 %v589
        %v1689 = vunpack.c.l.b16 %v590
        %v1690 = vunpack.c.l.b16 %v591
        %v1691 = vunpack.c.l.b16 %v592
        %v1692 = vunpack.c.l.b16 %v593
        %v1693 = vunpack.c.l.b16 %v594
        %v1694 = vunpack.c.l.b16 %v595
        %v1695 = vunpack.c.l.b16 %v596
        %v1696 = vunpack.c.l.b16 %v597
        %v1697 = vunpack.c.l.b16 %v598
        %v1698 = vunpack.c.l.b16 %v599
        %v1699 = vunpack.c.l.b16 %v600
        %v1700 = vunpack.c.l.b16 %v601
        %v1701 = vunpack.c.l.b16 %v602
        %v1702 = vunpack.c.l.b16 %v603
        %v1703 = vunpack.c.l.b16 %v604
        %v1704 = vunpack.c.l.b16 %v605
        %v1705 = vunpack.c.l.b16 %v606
        %v1706 = vunpack.c.l.b16 %v607
        %v1707 = vunpack.c.l.b16 %v608
        %v1708 = vunpack.c.l.b16 %v609
        %v1709 = vunpack.c.l.b16 %v610
        %v1710 = vunpack.c.l.b16 %v611
        %v1711 = vunpack.c.l.b16 %v612
        %v1712 = vunpack.c.l.b16 %v613
        %v1713 = vunpack.c.l.b16 %v614
        %v1714 = vunpack.c.l.b16 %v615
        %v1715 = vunpack.c.l.b16 %v616
        %v1716 = vunpack.c.l.b16 %v617
        %v1717 = vunpack.c.l.b16 %v618
        %v1718 = vunpack.c.l.b16 %v619
        %v1719 = vunpack.c.l.b16 %v620
        %v1720 = vunpack.c.l.b16 %v621
        %v1721 = vunpack.c.l.b16 %v622
        %v1722 = vunpack.c.l.b16 %v623
        %v1723 = vunpack.c.l.b16 %v624
        %v1724 = vunpack.c.l.b16 %v625
        %v1725 = vunpack.c.l.b16 %v626
        %v1726 = vunpack.c.l.b16 %v627
        %v1727 = vunpack.c.l.b16 %v628
        %v1728 = vunpack.c.l.b16 %v629
        %v1729 = vunpack.c.l.b16 %v630
        %v1730 = vunpack.c.l.b16 %v631
        %v1731 = vunpack.c.l.b16 %v632
        %v1732 = vunpack.c.l.b16 %v633
        %v1733 = vunpack.c.l.b16 %v634
        %v1734 = vunpack.c.l.b16 %v635
        %v1735 = vunpack.c.l.b16 %v636
        %v1736 = vunpack.c.l.b16 %v637
        %v1737 = vunpack.c.l.b16 %v638
        %v1738 = vunpack.c.l.b16 %v639
        %v1739 = vunpack.c.l.b16 %v640
        %v1740 = vunpack.c.l.b16 %v641
        %v1741 = vunpack.c.l.b16 %v642
        %v1742 = vunpack.c.l.b16 %v643
        %v1743 = vunpack.c.l.b16 %v644
        %v1744 = vunpack.c.l.b16 %v645
        %v1745 = vunpack.c.l.b16 %v646
        %v1746 = vunpack.c.l.b16 %v647
        %v1747 = vunpack.c.l.b16 %v648
        %v1748 = vunpack.c.l.b16 %v649
        %v1749 = vunpack.c.l.b16 %v650
        %v1750 = vunpack.c.l.b16 %v651
        %v1751 = vunpack.c.l.b16 %v652
        %v1752 = vunpack.c.l.b16 %v653
        %v1753 = vunpack.c.l.b16 %v654
        %v1754 = vunpack.c.l.b16 %v655
        %v1755 = vunpack.c.l.b16 %v656
        %v1756 = vunpack.c.l.b16 %v657
        %v1757 = vunpack.c.l.b16 %v658
        %v1758 = vunpack.c.l.b16 %v659
        %v1759 = vunpack.c.l.b16 %v660
        %v1760 = vunpack.c.l.b16 %v661
        %v1761 = vunpack.c.l.b16 %v662
        %v1762 = vunpack.c.l.b16 %v663
        %v1763 = vunpack.c.l.b16 %v664
        %v1764 = vunpack.c.l.b16 %v665
        %v1765 = vunpack.c.l.b16 %v666
        %v1766 = vunpack.c.l.b16 %v667
        %v1767 = vunpack.c.l.b16 %v668
        %v1768 = vunpack.c.l.b16 %v669
        %v1769 = vunpack.c.l.b16 %v670
        %v1770 = vunpack.c.l.b16 %v671
        %v1771 = vunpack.c.l.b16 %v672
        %v1772 = vunpack.c.l.b16 %v673
        %v1773 = vunpack.c.l.b16 %v674
        %v1774 = vunpack.c.l.b16 %v675
        %v1775 = vunpack.c.l.b16 %v676
        %v1776 = vunpack.c.l.b16 %v677
        %v1777 = vunpack.c.l.b16 %v678
        %v1778 = vunpack.c.l.b16 %v679
        %v1779 = vunpack.c.l.b16 %v680
        %v1780 = vunpack.c.l.b16 %v681
        %v1781 = vunpack.c.l.b16 %v682
        %v1782 = vunpack.c.l.b16 %v683
        %v1783 = vunpack.c.l.b16 %v684
        %v1784 = vunpack.c.l.b16 %v685
        %v1785 = vunpack.c.l.b16 %v686
        %v1786 = vunpack.c.l.b16 %v687
        %v1787 = vunpack.c.l.b16 %v688
        %v1788 = vunpack.c.l.b16 %v689
        %v1789 = vunpack.c.l.b16 %v690
        %v1790 = vunpack.c.l.b16 %v691
        %v1791 = vunpack.c.l.b16 %v692
        %v1792 = vunpack.c.l.b16 %v693
        %v1793 = vunpack.c.l.b16 %v694
        %v1794 = vunpack.c.l.b16 %v695
        %v1795 = vunpack.c.l.b16 %v696
        %v1796 = vunpack.c.l.b16 %v697
        %v1797 = vunpack.c.l.b16 %v698
        %v1798 = vunpack.c.l.b16 %v699
        %v1799 = vunpack.c.l.b16 %v700
        %v1800 = vunpack.c.l.b16 %v701
        %v1801 = vunpack.c.l.b16 %v702
        %v1802 = vunpack.c.l.b16 %v703
        %v1803 = vunpack.c.l.b16 %v704
        %v1804 = vunpack.c.l.b16 %v705
        %v1805 = vunpack.c.l.b16 %v706
        %v1806 = vunpack.c.l.b16 %v707
        %v1807 = vunpack.c.l.b16 %v708
        %v1808 = vunpack.c.l.b16 %v709
        %v1809 = vunpack.c.l.b16 %v710
        %v1810 = vunpack.c.l.b16 %v711
        %v1811 = vunpack.c.l.b16 %v712
        %v1812 = vunpack.c.l.b16 %v713
        %v1813 = vunpack.c.l.b16 %v714
        %v1814 = vunpack.c.l.b16 %v715
        %v1815 = vunpack.c.l.b16 %v716
        %v1816 = vunpack.c.l.b16 %v717
        %v1817 = vunpack.c.l.b16 %v718
        %v1818 = vunpack.c.l.b16 %v719
        %v1819 = vunpack.c.l.b16 %v720
        %v1820 = vunpack.c.l.b16 %v721
        %v1821 = vunpack.c.l.b16 %v722
        %v1822 = vunpack.c.l.b16 %v723
        %v1823 = vunpack.c.l.b16 %v724
        %v1824 = vunpack.c.l.b16 %v725
        %v1825 = vunpack.c.l.b16 %v726
        %v1826 = vunpack.c.l.b16 %v727
        %v1827 = vunpack.c.l.b16 %v728
        %v1828 = vunpack.c.l.b16 %v729
        %v1829 = vunpack.c.l.b16 %v730
        %v1830 = vunpack.c.l.b16 %v731
        %v1831 = vunpack.c.l.b16 %v732
        %v1832 = vunpack.c.l.b16 %v733
        %v1833 = vunpack.c.l.b16 %v734
        %v1834 = vunpack.c.l.b16 %v735
        %v1835 = vunpack.c.l.b16 %v736
        %v1836 = vunpack.c.l.b16 %v737
        %v1837 = vunpack.c.l.b16 %v738
        %v1838 = vunpack.c.l.b16 %v739
        %v1839 = vunpack.c.l.b16 %v740
        %v1840 = vunpack.c.l.b16 %v741
        %v1841 = vunpack.c.l.b16 %v742
        %v1842 = vunpack.c.l.b16 %v743
        %v1843 = vunpack.c.l.b16 %v744
        %v1844 = vpack.c.b16 %v1397, %v1396
        %v1845 = vpack.c.b16 %v1399, %v1398
        %v1846 = vpack.c.b16 %v1401, %v1400
        %v1847 = vpack.c.b16 %v1403, %v1402
        %v1848 = vpack.c.b16 %v1405, %v1404
        %v1849 = vpack.c.b16 %v1407, %v1406
        %v1850 = vpack.c.b16 %v1409, %v1408
        %v1851 = vpack.c.b16 %v1411, %v1410
        %v1852 = vpack.c.b16 %v1413, %v1412
        %v1853 = vpack.c.b16 %v1415, %v1414
        %v1854 = vpack.c.b16 %v1417, %v1416
        %v1855 = vpack.c.b16 %v1419, %v1418
        %v1856 = vpack.c.b16 %v1421, %v1420
        %v1857 = vpack.c.b16 %v1423, %v1422
        %v1858 = vpack.c.b16 %v1425, %v1424
        %v1859 = vpack.c.b16 %v1427, %v1426
        %v1860 = vpack.c.b16 %v1429, %v1428
        %v1861 = vpack.c.b16 %v1431, %v1430
        %v1862 = vpack.c.b16 %v1433, %v1432
        %v1863 = vpack.c.b16 %v1435, %v1434
        %v1864 = vpack.c.b16 %v1437, %v1436
        %v1865 = vpack.c.b16 %v1439, %v1438
        %v1866 = vpack.c.b16 %v1441, %v1440
        %v1867 = vpack.c.b16 %v1443, %v1442
        %v1868 = vpack.c.b16 %v1445, %v1444
        %v1869 = vpack.c.b16 %v1447, %v1446
        %v1870 = vpack.c.b16 %v1449, %v1448
        %v1871 = vpack.c.b16 %v1451, %v1450
        %v1872 = vpack.c.b16 %v1453, %v1452
        %v1873 = vpack.c.b16 %v1455, %v1454
        %v1874 = vpack.c.b16 %v1457, %v1456
        %v1875 = vpack.c.b16 %v1459, %v1458
        %v1876 = vpack.c.b16 %v1461, %v1460
        %v1877 = vpack.c.b16 %v1463, %v1462
        %v1878 = vpack.c.b16 %v1465, %v1464
        %v1879 = vpack.c.b16 %v1467, %v1466
        %v1880 = vpack.c.b16 %v1469, %v1468
        %v1881 = vpack.c.b16 %v1471, %v1470
        %v1882 = vpack.c.b16 %v1473, %v1472
        %v1883 = vpack.c.b16 %v1475, %v1474
        %v1884 = vpack.c.b16 %v1477, %v1476
        %v1885 = vpack.c.b16 %v1479, %v1478
        %v1886 = vpack.c.b16 %v1481, %v1480
        %v1887 = vpack.c.b16 %v1483, %v1482
        %v1888 = vpack.c.b16 %v1485, %v1484
        %v1889 = vpack.c.b16 %v1487, %v1486
        %v1890 = vpack.c.b16 %v1489, %v1488
        %v1891 = vpack.c.b16 %v1491, %v1490
        %v1892 = vpack.c.b16 %v1493, %v1492
        %v1893 = vpack.c.b16 %v1495, %v1494
        %v1894 = vpack.c.b16 %v1497, %v1496
        %v1895 = vpack.c.b16 %v1499, %v1498
        %v1896 = vpack.c.b16 %v1501, %v1500
        %v1897 = vpack.c.b16 %v1503, %v1502
        %v1898 = vpack.c.b16 %v1505, %v1504
        %v1899 = vpack.c.b16 %v1507, %v1506
        %v1900 = vpack.c.b16 %v1509, %v1508
        %v1901 = vpack.c.b16 %v1511, %v1510
        %v1902 = vpack.c.b16 %v1513, %v1512
        %v1903 = vpack.c.b16 %v1515, %v1514
        %v1904 = vpack.c.b16 %v1517, %v1516
        %v1905 = vpack.c.b16 %v1519, %v1518
        %v1906 = vpack.c.b16 %v1521, %v1520
        %v1907 = vpack.c.b16 %v1523, %v1522
        %v1908 = vpack.c.b16 %v1525, %v1524
        %v1909 = vpack.c.b16 %v1527, %v1526
        %v1910 = vpack.c.b16 %v1529, %v1528
        %v1911 = vpack.c.b16 %v1531, %v1530
        %v1912 = vpack.c.b16 %v1533, %v1532
        %v1913 = vpack.c.b16 %v1535, %v1534
        %v1914 = vpack.c.b16 %v1537, %v1536
        %v1915 = vpack.c.b16 %v1539, %v1538
        %v1916 = vpack.c.b16 %v1541, %v1540
        %v1917 = vpack.c.b16 %v1543, %v1542
        %v1918 = vpack.c.b16 %v1545, %v1544
        %v1919 = vpack.c.b16 %v1547, %v1546
        %v1920 = vpack.c.b16 %v1549, %v1548
        %v1921 = vpack.c.b16 %v1551, %v1550
        %v1922 = vpack.c.b16 %v1553, %v1552
        %v1923 = vpack.c.b16 %v1555, %v1554
        %v1924 = vpack.c.b16 %v1557, %v1556
        %v1925 = vpack.c.b16 %v1559, %v1558
        %v1926 = vpack.c.b16 %v1561, %v1560
        %v1927 = vpack.c.b16 %v1563, %v1562
        %v1928 = vpack.c.b16 %v1565, %v1564
        %v1929 = vpack.c.b16 %v1567, %v1566
        %v1930 = vpack.c.b16 %v1569, %v1568
        %v1931 = vpack.c.b16 %v1571, %v1570
        %v1932 = vpack.c.b16 %v1573, %v1572
        %v1933 = vpack.c.b16 %v1575, %v1574
        %v1934 = vpack.c.b16 %v1577, %v1576
        %v1935 = vpack.c.b16 %v1579, %v1578
        %v1936 = vpack.c.b16 %v1581, %v1580
        %v1937 = vpack.c.b16 %v1583, %v1582
        %v1938 = vpack.c.b16 %v1585, %v1584
        %v1939 = vpack.c.b16 %v1587, %v1586
        %v1940 = vpack.c.b16 %v1589, %v1588
        %v1941 = vpack.c.b16 %v1591, %v1590
        %v1942 = vpack.c.b16 %v1593, %v1592
        %v1943 = vpack.c.b16 %v1595, %v1594
        %v1944 = vpack.c.b16 %v1597, %v1596
        %v1945 = vpack.c.b16 %v1599, %v1598
        %v1946 = vpack.c.b16 %v1601, %v1600
        %v1947 = vpack.c.b16 %v1603, %v1602
        %v1948 = vpack.c.b16 %v1605, %v1604
        %v1949 = vpack.c.b16 %v1607, %v1606
        %v1950 = vpack.c.b16 %v1609, %v1608
        %v1951 = vpack.c.b16 %v1611, %v1610
        %v1952 = vpack.c.b16 %v1613, %v1612
        %v1953 = vpack.c.b16 %v1615, %v1614
        %v1954 = vpack.c.b16 %v1617, %v1616
        %v1955 = vpack.c.b16 %v1619, %v1618
        %v1956 = vpack.c.b16 %v1621, %v1620
        %v1957 = vpack.c.b16 %v1623, %v1622
        %v1958 = vpack.c.b16 %v1625, %v1624
        %v1959 = vpack.c.b16 %v1627, %v1626
        %v1960 = vpack.c.b16 %v1629, %v1628
        %v1961 = vpack.c.b16 %v1631, %v1630
        %v1962 = vpack.c.b16 %v1633, %v1632
        %v1963 = vpack.c.b16 %v1635, %v1634
        %v1964 = vpack.c.b16 %v1637, %v1636
        %v1965 = vpack.c.b16 %v1639, %v1638
        %v1966 = vpack.c.b16 %v1641, %v1640
        %v1967 = vpack.c.b16 %v1643, %v1642
        %v1968 = vpack.c.b16 %v1645, %v1644
        %v1969 = vpack.c.b16 %v1647, %v1646
        %v1970 = vpack.c.b16 %v1649, %v1648
        %v1971 = vpack.c.b16 %v1651, %v1650
        %v1972 = vpack.c.b16 %v1653, %v1652
        %v1973 = vpack.c.b16 %v1655, %v1654
        %v1974 = vpack.c.b16 %v1657, %v1656
        %v1975 = vpack.c.b16 %v1659, %v1658
        %v1976 = vpack.c.b16 %v1661, %v1660
        %v1977 = vpack.c.b16 %v1663, %v1662
        %v1978 = vpack.c.b16 %v1665, %v1664
        %v1979 = vpack.c.b16 %v1667, %v1666
        %v1980 = vpack.c.b16 %v1669, %v1668
        %v1981 = vpack.c.b16 %v1671, %v1670
        %v1982 = vpack.c.b16 %v1673, %v1672
        %v1983 = vpack.c.b16 %v1675, %v1674
        %v1984 = vpack.c.b16 %v1677, %v1676
        %v1985 = vpack.c.b16 %v1679, %v1678
        %v1986 = vpack.c.b16 %v1681, %v1680
        %v1987 = vpack.c.b16 %v1683, %v1682
        %v1988 = vpack.c.b16 %v1685, %v1684
        %v1989 = vpack.c.b16 %v1687, %v1686
        %v1990 = vpack.c.b16 %v1689, %v1688
        %v1991 = vpack.c.b16 %v1691, %v1690
        %v1992 = vpack.c.b16 %v1693, %v1692
        %v1993 = vpack.c.b16 %v1695, %v1694
        %v1994 = vpack.c.b16 %v1697, %v1696
        %v1995 = vpack.c.b16 %v1699, %v1698
        %v1996 = vpack.c.b16 %v1701, %v1700
        %v1997 = vpack.c.b16 %v1703, %v1702
        %v1998 = vpack.c.b16 %v1705, %v1704
        %v1999 = vpack.c.b16 %v1707, %v1706
        %v2000 = vpack.c.b16 %v1709, %v1708
        %v2001 = vpack.c.b16 %v1711, %v1710
        %v2002 = vpack.c.b16 %v1713, %v1712
        %v2003 = vpack.c.b16 %v1715, %v1714
        %v2004 = vpack.c.b16 %v1717, %v1716
        %v2005 = vpack.c.b16 %v1719, %v1718
        %v2006 = vpack.c.b16 %v1721, %v1720
        %v2007 = vpack.c.b16 %v1723, %v1722
        %v2008 = vpack.c.b16 %v1725, %v1724
        %v2009 = vpack.c.b16 %v1727, %v1726
        %v2010 = vpack.c.b16 %v1729, %v1728
        %v2011 = vpack.c.b16 %v1731, %v1730
        %v2012 = vpack.c.b16 %v1733, %v1732
        %v2013 = vpack.c.b16 %v1735, %v1734
        %v2014 = vpack.c.b16 %v1737, %v1736
        %v2015 = vpack.c.b16 %v1739, %v1738
        %v2016 = vpack.c.b16 %v1741, %v1740
        %v2017 = vpack.c.b16 %v1743, %v1742
        %v2018 = vpack.c.b16 %v1745, %v1744
        %v2019 = vpack.c.b16 %v1747, %v1746
        %v2020 = vpack.c.b16 %v1749, %v1748
        %v2021 = vpack.c.b16 %v1751, %v1750
        %v2022 = vpack.c.b16 %v1753, %v1752
        %v2023 = vpack.c.b16 %v1755, %v1754
        %v2024 = vpack.c.b16 %v1757, %v1756
        %v2025 = vpack.c.b16 %v1759, %v1758
        %v2026 = vpack.c.b16 %v1761, %v1760
        %v2027 = vpack.c.b16 %v1763, %v1762
        %v2028 = vpack.c.b16 %v1765, %v1764
        %v2029 = vpack.c.b16 %v1767, %v1766
        %v2030 = vpack.c.b16 %v1769, %v1768
        %v2031 = vpack.c.b16 %v1771, %v1770
        %v2032 = vpack.c.b16 %v1773, %v1772
        %v2033 = vpack.c.b16 %v1775, %v1774
        %v2034 = vpack.c.b16 %v1777, %v1776
        %v2035 = vpack.c.b16 %v1779, %v1778
        %v2036 = vpack.c.b16 %v1781, %v1780
        %v2037 = vpack.c.b16 %v1783, %v1782
        %v2038 = vpack.c.b16 %v1785, %v1784
        %v2039 = vpack.c.b16 %v1787, %v1786
        %v2040 = vpack.c.b16 %v1789, %v1788
        %v2041 = vpack.c.b16 %v1791, %v1790
        %v2042 = vpack.c.b16 %v1793, %v1792
        %v2043 = vpack.c.b16 %v1795, %v1794
        %v2044 = vpack.c.b16 %v1797, %v1796
        %v2045 = vpack.c.b16 %v1799, %v1798
        %v2046 = vpack.c.b16 %v1801, %v1800
        %v2047 = vpack.c.b16 %v1803, %v1802
        %v2048 = vpack.c.b16 %v1805, %v1804
        %v2049 = vpack.c.b16 %v1807, %v1806
        %v2050 = vpack.c.b16 %v1809, %v1808
        %v2051 = vpack.c.b16 %v1811, %v1810
        %v2052 = vpack.c.b16 %v1813, %v1812
        %v2053 = vpack.c.b16 %v1815, %v1814
        %v2054 = vpack.c.b16 %v1817, %v1816
        %v2055 = vpack.c.b16 %v1819, %v1818
        %v2056 = vpack.c.b16 %v1821, %v1820
        %v2057 = vpack.c.b16 %v1823, %v1822
        %v2058 = vpack.c.b16 %v1825, %v1824
        %v2059 = vpack.c.b16 %v1827, %v1826
        %v2060 = vpack.c.b16 %v1829, %v1828
        %v2061 = vpack.c.b16 %v1831, %v1830
        %v2062 = vpack.c.b16 %v1833, %v1832
        %v2063 = vpack.c.b16 %v1835, %v1834
        %v2064 = vpack.c.b16 %v1837, %v1836
        %v2065 = vpack.c.b16 %v1839, %v1838
        %v2066 = vpack.c.b16 %v1841, %v1840
        %v2067 = vpack.c.b16 %v1843, %v1842
        %2292 = vmatprep.subr.bf16.mxu0 0
        %2293 = vmatpush1.bf16.msra.mxu0 %v1844
        %2294 = vmatprep.subr.bf16.mxu0 0
        %2295 = vmatpush1.bf16.msra.mxu0 %v1845
        %2296 = vmatprep.subr.bf16.mxu0 0
        %2297 = vmatpush1.bf16.msra.mxu0 %v1846
        %2298 = vmatprep.subr.bf16.mxu0 0
        %2299 = vmatpush1.bf16.msra.mxu0 %v1847
        %2300 = vmatprep.subr.bf16.mxu0 0
        %2301 = vmatpush1.bf16.msra.mxu0 %v1848
        %2302 = vmatprep.subr.bf16.mxu0 0
        %2303 = vmatpush1.bf16.msra.mxu0 %v1849
        %2304 = vmatprep.subr.bf16.mxu0 0
        %2305 = vmatpush1.bf16.msra.mxu0 %v1850
        %2306 = vmatprep.subr.bf16.mxu0 0
        %2307 = vmatpush1.bf16.msra.mxu0 %v1851
        %2308 = vmatprep.subr.bf16.mxu0 0
        %2309 = vmatpush1.bf16.msra.mxu0 %v1852
        %2310 = vmatprep.subr.bf16.mxu0 0
        %2311 = vmatpush1.bf16.msra.mxu0 %v1853
        %2312 = vmatprep.subr.bf16.mxu0 0
        %2313 = vmatpush1.bf16.msra.mxu0 %v1854
        %2314 = vmatprep.subr.bf16.mxu0 0
        %2315 = vmatpush1.bf16.msra.mxu0 %v1855
        %2316 = vmatprep.subr.bf16.mxu0 0
        %2317 = vmatpush1.bf16.msra.mxu0 %v1856
        %2318 = vmatprep.subr.bf16.mxu0 0
        %2319 = vmatpush1.bf16.msra.mxu0 %v1857
        %2320 = vmatprep.subr.bf16.mxu0 0
        %2321 = vmatpush1.bf16.msra.mxu0 %v1858
        %2322 = vmatprep.subr.bf16.mxu0 0
        %2323 = vmatpush1.bf16.msra.mxu0 %v1859
        %2324 = vmatprep.mubr.bf16.mxu0 %v786
        %2325 = vmatmul.mubr.bf16.gmra.mrb[0].mxu0 %v772
        %v2326 = vpop.f32.mrb[0].mxu0
        %v2327 = vadd.f32 0.0, %v2326
        %v2328 = vpop.f32.mrb[0].mxu0
        %v2329 = vpop.f32.mrb[0].mxu0
        %v2330 = vpop.f32.mrb[0].mxu0
        %2331 = vdwg.mxu0
        %2332 = vmatprep.subr.bf16.mxu0 0
        %2333 = vmatpush1.bf16.msra.mxu0 %v1860
        %2334 = vmatprep.subr.bf16.mxu0 0
        %2335 = vmatpush1.bf16.msra.mxu0 %v1861
        %2336 = vmatprep.subr.bf16.mxu0 0
        %2337 = vmatpush1.bf16.msra.mxu0 %v1862
        %2338 = vmatprep.subr.bf16.mxu0 0
        %2339 = vmatpush1.bf16.msra.mxu0 %v1863
        %2340 = vmatprep.subr.bf16.mxu0 0
        %2341 = vmatpush1.bf16.msra.mxu0 %v1864
        %2342 = vmatprep.subr.bf16.mxu0 0
        %2343 = vmatpush1.bf16.msra.mxu0 %v1865
        %2344 = vmatprep.subr.bf16.mxu0 0
        %2345 = vmatpush1.bf16.msra.mxu0 %v1866
        %2346 = vmatprep.subr.bf16.mxu0 0
        %2347 = vmatpush1.bf16.msra.mxu0 %v1867
        %2348 = vmatprep.subr.bf16.mxu0 0
        %2349 = vmatpush1.bf16.msra.mxu0 %v1868
        %2350 = vmatprep.subr.bf16.mxu0 0
        %2351 = vmatpush1.bf16.msra.mxu0 %v1869
        %2352 = vmatprep.subr.bf16.mxu0 0
        %2353 = vmatpush1.bf16.msra.mxu0 %v1870
        %2354 = vmatprep.subr.bf16.mxu0 0
        %2355 = vmatpush1.bf16.msra.mxu0 %v1871
        %2356 = vmatprep.subr.bf16.mxu0 0
        %2357 = vmatpush1.bf16.msra.mxu0 %v1872
        %2358 = vmatprep.subr.bf16.mxu0 0
        %2359 = vmatpush1.bf16.msra.mxu0 %v1873
        %2360 = vmatprep.subr.bf16.mxu0 0
        %2361 = vmatpush1.bf16.msra.mxu0 %v1874
        %2362 = vmatprep.subr.bf16.mxu0 0
        %2363 = vmatpush1.bf16.msra.mxu0 %v1875
        %2364 = vmatprep.mubr.bf16.mxu0 %v796
        %2365 = vmatmul.mubr.bf16.gmra.mrb[0].mxu0 %v794
        %v2366 = vpop.f32.mrb[0].mxu0
        %v2367 = vadd.f32 %v2327, %v2366
        %v2368 = vpop.f32.mrb[0].mxu0
        %v2369 = vpop.f32.mrb[0].mxu0
        %v2370 = vpop.f32.mrb[0].mxu0
        %2371 = vdwg.mxu0
        %2372 = vmatprep.subr.bf16.mxu0 0
        %2373 = vmatpush1.bf16.msra.mxu0 %v1876
        %2374 = vmatprep.subr.bf16.mxu0 0
        %2375 = vmatpush1.bf16.msra.mxu0 %v1877
        %2376 = vmatprep.subr.bf16.mxu0 0
        %2377 = vmatpush1.bf16.msra.mxu0 %v1878
        %2378 = vmatprep.subr.bf16.mxu0 0
        %2379 = vmatpush1.bf16.msra.mxu0 %v1879
        %2380 = vmatprep.subr.bf16.mxu0 0
        %2381 = vmatpush1.bf16.msra.mxu0 %v1880
        %2382 = vmatprep.subr.bf16.mxu0 0
        %2383 = vmatpush1.bf16.msra.mxu0 %v1881
        %2384 = vmatprep.subr.bf16.mxu0 0
        %2385 = vmatpush1.bf16.msra.mxu0 %v1882
        %2386 = vmatprep.subr.bf16.mxu0 0
        %2387 = vmatpush1.bf16.msra.mxu0 %v1883
        %2388 = vmatprep.subr.bf16.mxu0 0
        %2389 = vmatpush1.bf16.msra.mxu0 %v1884
        %2390 = vmatprep.subr.bf16.mxu0 0
        %2391 = vmatpush1.bf16.msra.mxu0 %v1885
        %2392 = vmatprep.subr.bf16.mxu0 0
        %2393 = vmatpush1.bf16.msra.mxu0 %v1886
        %2394 = vmatprep.subr.bf16.mxu0 0
        %2395 = vmatpush1.bf16.msra.mxu0 %v1887
        %2396 = vmatprep.subr.bf16.mxu0 0
        %2397 = vmatpush1.bf16.msra.mxu0 %v1888
        %2398 = vmatprep.subr.bf16.mxu0 0
        %2399 = vmatpush1.bf16.msra.mxu0 %v1889
        %2400 = vmatprep.subr.bf16.mxu0 0
        %2401 = vmatpush1.bf16.msra.mxu0 %v1890
        %2402 = vmatprep.subr.bf16.mxu0 0
        %2403 = vmatpush1.bf16.msra.mxu0 %v1891
        %2404 = vmatprep.mubr.bf16.mxu0 %v793
        %2405 = vmatmul.mubr.bf16.gmra.mrb[0].mxu0 %v779
        %v2406 = vpop.f32.mrb[0].mxu0
        %v2407 = vadd.f32 %v2367, %v2406
        %v2408 = vpop.f32.mrb[0].mxu0
        %v2409 = vpop.f32.mrb[0].mxu0
        %v2410 = vpop.f32.mrb[0].mxu0
        %2411 = vdwg.mxu0
        %2412 = vmatprep.subr.bf16.mxu0 0
        %2413 = vmatpush1.bf16.msra.mxu0 %v1892
        %2414 = vmatprep.subr.bf16.mxu0 0
        %2415 = vmatpush1.bf16.msra.mxu0 %v1893
        %2416 = vmatprep.subr.bf16.mxu0 0
        %2417 = vmatpush1.bf16.msra.mxu0 %v1894
        %2418 = vmatprep.subr.bf16.mxu0 0
        %2419 = vmatpush1.bf16.msra.mxu0 %v1895
        %2420 = vmatprep.subr.bf16.mxu0 0
        %2421 = vmatpush1.bf16.msra.mxu0 %v1896
        %2422 = vmatprep.subr.bf16.mxu0 0
        %2423 = vmatpush1.bf16.msra.mxu0 %v1897
        %2424 = vmatprep.subr.bf16.mxu0 0
        %2425 = vmatpush1.bf16.msra.mxu0 %v1898
        %2426 = vmatprep.subr.bf16.mxu0 0
        %2427 = vmatpush1.bf16.msra.mxu0 %v1899
        %2428 = vmatprep.subr.bf16.mxu0 0
        %2429 = vmatpush1.bf16.msra.mxu0 %v1900
        %2430 = vmatprep.subr.bf16.mxu0 0
        %2431 = vmatpush1.bf16.msra.mxu0 %v1901
        %2432 = vmatprep.subr.bf16.mxu0 0
        %2433 = vmatpush1.bf16.msra.mxu0 %v1902
        %2434 = vmatprep.subr.bf16.mxu0 0
        %2435 = vmatpush1.bf16.msra.mxu0 %v1903
        %2436 = vmatprep.subr.bf16.mxu0 0
        %2437 = vmatpush1.bf16.msra.mxu0 %v1904
        %2438 = vmatprep.subr.bf16.mxu0 0
        %2439 = vmatpush1.bf16.msra.mxu0 %v1905
        %2440 = vmatprep.subr.bf16.mxu0 0
        %2441 = vmatpush1.bf16.msra.mxu0 %v1906
        %2442 = vmatprep.subr.bf16.mxu0 0
        %2443 = vmatpush1.bf16.msra.mxu0 %v1907
        %2444 = vmatprep.mubr.bf16.mxu0 %v797
        %2445 = vmatmul.mubr.bf16.gmra.mrb[0].mxu0 %v795
        %v2446 = vpop.f32.mrb[0].mxu0
        %v2447 = vadd.f32 %v2407, %v2446
        %v2448 = vpop.f32.mrb[0].mxu0
        %v2449 = vpop.f32.mrb[0].mxu0
        %v2450 = vpop.f32.mrb[0].mxu0
        %2451 = vdwg.mxu0
        %2452 = vmatprep.subr.bf16.mxu0 0
        %2453 = vmatpush1.bf16.msra.mxu0 %v1908
        %2454 = vmatprep.subr.bf16.mxu0 0
        %2455 = vmatpush1.bf16.msra.mxu0 %v1909
        %2456 = vmatprep.subr.bf16.mxu0 0
        %2457 = vmatpush1.bf16.msra.mxu0 %v1910
        %2458 = vmatprep.subr.bf16.mxu0 0
        %2459 = vmatpush1.bf16.msra.mxu0 %v1911
        %2460 = vmatprep.subr.bf16.mxu0 0
        %2461 = vmatpush1.bf16.msra.mxu0 %v1912
        %2462 = vmatprep.subr.bf16.mxu0 0
        %2463 = vmatpush1.bf16.msra.mxu0 %v1913
        %2464 = vmatprep.subr.bf16.mxu0 0
        %2465 = vmatpush1.bf16.msra.mxu0 %v1914
        %2466 = vmatprep.subr.bf16.mxu0 0
        %2467 = vmatpush1.bf16.msra.mxu0 %v1915
        %2468 = vmatprep.subr.bf16.mxu0 0
        %2469 = vmatpush1.bf16.msra.mxu0 %v1916
        %2470 = vmatprep.subr.bf16.mxu0 0
        %2471 = vmatpush1.bf16.msra.mxu0 %v1917
        %2472 = vmatprep.subr.bf16.mxu0 0
        %2473 = vmatpush1.bf16.msra.mxu0 %v1918
        %2474 = vmatprep.subr.bf16.mxu0 0
        %2475 = vmatpush1.bf16.msra.mxu0 %v1919
        %2476 = vmatprep.subr.bf16.mxu0 0
        %2477 = vmatpush1.bf16.msra.mxu0 %v1920
        %2478 = vmatprep.subr.bf16.mxu0 0
        %2479 = vmatpush1.bf16.msra.mxu0 %v1921
        %2480 = vmatprep.subr.bf16.mxu0 0
        %2481 = vmatpush1.bf16.msra.mxu0 %v1922
        %2482 = vmatprep.subr.bf16.mxu0 0
        %2483 = vmatpush1.bf16.msra.mxu0 %v1923
        %2484 = vmatprep.mubr.bf16.mxu0 %v835
        %2485 = vmatmul.mubr.bf16.gmra.mrb[0].mxu0 %v821
        %v2486 = vpop.f32.mrb[0].mxu0
        %v2487 = vadd.f32 %v2447, %v2486
        %v2488 = vpop.f32.mrb[0].mxu0
        %v2489 = vpop.f32.mrb[0].mxu0
        %v2490 = vpop.f32.mrb[0].mxu0
        %2491 = vdwg.mxu0
        %2492 = vmatprep.subr.bf16.mxu0 0
        %2493 = vmatpush1.bf16.msra.mxu0 %v1924
        %2494 = vmatprep.subr.bf16.mxu0 0
        %2495 = vmatpush1.bf16.msra.mxu0 %v1925
        %2496 = vmatprep.subr.bf16.mxu0 0
        %2497 = vmatpush1.bf16.msra.mxu0 %v1926
        %2498 = vmatprep.subr.bf16.mxu0 0
        %2499 = vmatpush1.bf16.msra.mxu0 %v1927
        %2500 = vmatprep.subr.bf16.mxu0 0
        %2501 = vmatpush1.bf16.msra.mxu0 %v1928
        %2502 = vmatprep.subr.bf16.mxu0 0
        %2503 = vmatpush1.bf16.msra.mxu0 %v1929
        %2504 = vmatprep.subr.bf16.mxu0 0
        %2505 = vmatpush1.bf16.msra.mxu0 %v1930
        %2506 = vmatprep.subr.bf16.mxu0 0
        %2507 = vmatpush1.bf16.msra.mxu0 %v1931
        %2508 = vmatprep.subr.bf16.mxu0 0
        %2509 = vmatpush1.bf16.msra.mxu0 %v1932
        %2510 = vmatprep.subr.bf16.mxu0 0
        %2511 = vmatpush1.bf16.msra.mxu0 %v1933
        %2512 = vmatprep.subr.bf16.mxu0 0
        %2513 = vmatpush1.bf16.msra.mxu0 %v1934
        %2514 = vmatprep.subr.bf16.mxu0 0
        %2515 = vmatpush1.bf16.msra.mxu0 %v1935
        %2516 = vmatprep.subr.bf16.mxu0 0
        %2517 = vmatpush1.bf16.msra.mxu0 %v1936
        %2518 = vmatprep.subr.bf16.mxu0 0
        %2519 = vmatpush1.bf16.msra.mxu0 %v1937
        %2520 = vmatprep.subr.bf16.mxu0 0
        %2521 = vmatpush1.bf16.msra.mxu0 %v1938
        %2522 = vmatprep.subr.bf16.mxu0 0
        %2523 = vmatpush1.bf16.msra.mxu0 %v1939
        %2524 = vmatprep.mubr.bf16.mxu0 %v845
        %2525 = vmatmul.mubr.bf16.gmra.mrb[0].mxu0 %v843
        %v2526 = vpop.f32.mrb[0].mxu0
        %v2527 = vadd.f32 %v2487, %v2526
        %v2528 = vpop.f32.mrb[0].mxu0
        %v2529 = vpop.f32.mrb[0].mxu0
        %v2530 = vpop.f32.mrb[0].mxu0
        %2531 = vdwg.mxu0
        %2532 = vmatprep.subr.bf16.mxu0 0
        %2533 = vmatpush1.bf16.msra.mxu0 %v1940
        %2534 = vmatprep.subr.bf16.mxu0 0
        %2535 = vmatpush1.bf16.msra.mxu0 %v1941
        %2536 = vmatprep.subr.bf16.mxu0 0
        %2537 = vmatpush1.bf16.msra.mxu0 %v1942
        %2538 = vmatprep.subr.bf16.mxu0 0
        %2539 = vmatpush1.bf16.msra.mxu0 %v1943
        %2540 = vmatprep.subr.bf16.mxu0 0
        %2541 = vmatpush1.bf16.msra.mxu0 %v1944
        %2542 = vmatprep.subr.bf16.mxu0 0
        %2543 = vmatpush1.bf16.msra.mxu0 %v1945
        %2544 = vmatprep.subr.bf16.mxu0 0
        %2545 = vmatpush1.bf16.msra.mxu0 %v1946
        %2546 = vmatprep.subr.bf16.mxu0 0
        %2547 = vmatpush1.bf16.msra.mxu0 %v1947
        %2548 = vmatprep.subr.bf16.mxu0 0
        %2549 = vmatpush1.bf16.msra.mxu0 %v1948
        %2550 = vmatprep.subr.bf16.mxu0 0
        %2551 = vmatpush1.bf16.msra.mxu0 %v1949
        %2552 = vmatprep.subr.bf16.mxu0 0
        %2553 = vmatpush1.bf16.msra.mxu0 %v1950
        %2554 = vmatprep.subr.bf16.mxu0 0
        %2555 = vmatpush1.bf16.msra.mxu0 %v1951
        %2556 = vmatprep.subr.bf16.mxu0 0
        %2557 = vmatpush1.bf16.msra.mxu0 %v1952
        %2558 = vmatprep.subr.bf16.mxu0 0
        %2559 = vmatpush1.bf16.msra.mxu0 %v1953
        %2560 = vmatprep.subr.bf16.mxu0 0
        %2561 = vmatpush1.bf16.msra.mxu0 %v1954
        %2562 = vmatprep.subr.bf16.mxu0 0
        %2563 = vmatpush1.bf16.msra.mxu0 %v1955
        %2564 = vmatprep.mubr.bf16.mxu0 %v842
        %2565 = vmatmul.mubr.bf16.gmra.mrb[0].mxu0 %v828
        %v2566 = vpop.f32.mrb[0].mxu0
        %v2567 = vadd.f32 %v2527, %v2566
        %v2568 = vpop.f32.mrb[0].mxu0
        %v2569 = vpop.f32.mrb[0].mxu0
        %v2570 = vpop.f32.mrb[0].mxu0
        %2571 = vdwg.mxu0
        %2572 = vmatprep.subr.bf16.mxu0 0
        %2573 = vmatpush1.bf16.msra.mxu0 %v1956
        %2574 = vmatprep.subr.bf16.mxu0 0
        %2575 = vmatpush1.bf16.msra.mxu0 %v1957
        %2576 = vmatprep.subr.bf16.mxu0 0
        %2577 = vmatpush1.bf16.msra.mxu0 %v1958
        %2578 = vmatprep.subr.bf16.mxu0 0
        %2579 = vmatpush1.bf16.msra.mxu0 %v1959
        %2580 = vmatprep.subr.bf16.mxu0 0
        %2581 = vmatpush1.bf16.msra.mxu0 %v1960
        %2582 = vmatprep.subr.bf16.mxu0 0
        %2583 = vmatpush1.bf16.msra.mxu0 %v1961
        %2584 = vmatprep.subr.bf16.mxu0 0
        %2585 = vmatpush1.bf16.msra.mxu0 %v1962
        %2586 = vmatprep.subr.bf16.mxu0 0
        %2587 = vmatpush1.bf16.msra.mxu0 %v1963
        %2588 = vmatprep.subr.bf16.mxu0 0
        %2589 = vmatpush1.bf16.msra.mxu0 %v1964
        %2590 = vmatprep.subr.bf16.mxu0 0
        %2591 = vmatpush1.bf16.msra.mxu0 %v1965
        %2592 = vmatprep.subr.bf16.mxu0 0
        %2593 = vmatpush1.bf16.msra.mxu0 %v1966
        %2594 = vmatprep.subr.bf16.mxu0 0
        %2595 = vmatpush1.bf16.msra.mxu0 %v1967
        %2596 = vmatprep.subr.bf16.mxu0 0
        %2597 = vmatpush1.bf16.msra.mxu0 %v1968
        %2598 = vmatprep.subr.bf16.mxu0 0
        %2599 = vmatpush1.bf16.msra.mxu0 %v1969
        %2600 = vmatprep.subr.bf16.mxu0 0
        %2601 = vmatpush1.bf16.msra.mxu0 %v1970
        %2602 = vmatprep.subr.bf16.mxu0 0
        %2603 = vmatpush1.bf16.msra.mxu0 %v1971
        %2604 = vmatprep.mubr.bf16.mxu0 %v846
        %2605 = vmatmul.mubr.bf16.gmra.mrb[0].mxu0 %v844
        %v2606 = vpop.f32.mrb[0].mxu0
        %v2607 = vadd.f32 %v2567, %v2606
        %v2608 = vpop.f32.mrb[0].mxu0
        %v2609 = vpop.f32.mrb[0].mxu0
        %v2610 = vpop.f32.mrb[0].mxu0
        %2611 = vdwg.mxu0
        %2612 = vmatprep.subr.bf16.mxu0 0
        %2613 = vmatpush1.bf16.msra.mxu0 %v1972
        %2614 = vmatprep.subr.bf16.mxu0 0
        %2615 = vmatpush1.bf16.msra.mxu0 %v1973
        %2616 = vmatprep.subr.bf16.mxu0 0
        %2617 = vmatpush1.bf16.msra.mxu0 %v1974
        %2618 = vmatprep.subr.bf16.mxu0 0
        %2619 = vmatpush1.bf16.msra.mxu0 %v1975
        %2620 = vmatprep.subr.bf16.mxu0 0
        %2621 = vmatpush1.bf16.msra.mxu0 %v1976
        %2622 = vmatprep.subr.bf16.mxu0 0
        %2623 = vmatpush1.bf16.msra.mxu0 %v1977
        %2624 = vmatprep.subr.bf16.mxu0 0
        %2625 = vmatpush1.bf16.msra.mxu0 %v1978
        %2626 = vmatprep.subr.bf16.mxu0 0
        %2627 = vmatpush1.bf16.msra.mxu0 %v1979
        %2628 = vmatprep.subr.bf16.mxu0 0
        %2629 = vmatpush1.bf16.msra.mxu0 %v1980
        %2630 = vmatprep.subr.bf16.mxu0 0
        %2631 = vmatpush1.bf16.msra.mxu0 %v1981
        %2632 = vmatprep.subr.bf16.mxu0 0
        %2633 = vmatpush1.bf16.msra.mxu0 %v1982
        %2634 = vmatprep.subr.bf16.mxu0 0
        %2635 = vmatpush1.bf16.msra.mxu0 %v1983
        %2636 = vmatprep.subr.bf16.mxu0 0
        %2637 = vmatpush1.bf16.msra.mxu0 %v1984
        %2638 = vmatprep.subr.bf16.mxu0 0
        %2639 = vmatpush1.bf16.msra.mxu0 %v1985
        %2640 = vmatprep.subr.bf16.mxu0 0
        %2641 = vmatpush1.bf16.msra.mxu0 %v1986
        %2642 = vmatprep.subr.bf16.mxu0 0
        %2643 = vmatpush1.bf16.msra.mxu0 %v1987
        %2644 = vmatprep.mubr.bf16.mxu0 %v884
        %2645 = vmatmul.mubr.bf16.gmra.mrb[0].mxu0 %v870
        %v2646 = vpop.f32.mrb[0].mxu0
        %v2647 = vadd.f32 %v2607, %v2646
        %v2648 = vpop.f32.mrb[0].mxu0
        %v2649 = vpop.f32.mrb[0].mxu0
        %v2650 = vpop.f32.mrb[0].mxu0
        %2651 = vdwg.mxu0
        %2652 = vmatprep.subr.bf16.mxu0 0
        %2653 = vmatpush1.bf16.msra.mxu0 %v1988
        %2654 = vmatprep.subr.bf16.mxu0 0
        %2655 = vmatpush1.bf16.msra.mxu0 %v1989
        %2656 = vmatprep.subr.bf16.mxu0 0
        %2657 = vmatpush1.bf16.msra.mxu0 %v1990
        %2658 = vmatprep.subr.bf16.mxu0 0
        %2659 = vmatpush1.bf16.msra.mxu0 %v1991
        %2660 = vmatprep.subr.bf16.mxu0 0
        %2661 = vmatpush1.bf16.msra.mxu0 %v1992
        %2662 = vmatprep.subr.bf16.mxu0 0
        %2663 = vmatpush1.bf16.msra.mxu0 %v1993
        %2664 = vmatprep.subr.bf16.mxu0 0
        %2665 = vmatpush1.bf16.msra.mxu0 %v1994
        %2666 = vmatprep.subr.bf16.mxu0 0
        %2667 = vmatpush1.bf16.msra.mxu0 %v1995
        %2668 = vmatprep.subr.bf16.mxu0 0
        %2669 = vmatpush1.bf16.msra.mxu0 %v1996
        %2670 = vmatprep.subr.bf16.mxu0 0
        %2671 = vmatpush1.bf16.msra.mxu0 %v1997
        %2672 = vmatprep.subr.bf16.mxu0 0
        %2673 = vmatpush1.bf16.msra.mxu0 %v1998
        %2674 = vmatprep.subr.bf16.mxu0 0
        %2675 = vmatpush1.bf16.msra.mxu0 %v1999
        %2676 = vmatprep.subr.bf16.mxu0 0
        %2677 = vmatpush1.bf16.msra.mxu0 %v2000
        %2678 = vmatprep.subr.bf16.mxu0 0
        %2679 = vmatpush1.bf16.msra.mxu0 %v2001
        %2680 = vmatprep.subr.bf16.mxu0 0
        %2681 = vmatpush1.bf16.msra.mxu0 %v2002
        %2682 = vmatprep.subr.bf16.mxu0 0
        %2683 = vmatpush1.bf16.msra.mxu0 %v2003
        %2684 = vmatprep.mubr.bf16.mxu0 %v894
        %2685 = vmatmul.mubr.bf16.gmra.mrb[0].mxu0 %v892
        %v2686 = vpop.f32.mrb[0].mxu0
        %v2687 = vadd.f32 %v2647, %v2686
        %v2688 = vpop.f32.mrb[0].mxu0
        %v2689 = vpop.f32.mrb[0].mxu0
        %v2690 = vpop.f32.mrb[0].mxu0
        %2691 = vdwg.mxu0
        %2692 = vmatprep.subr.bf16.mxu0 0
        %2693 = vmatpush1.bf16.msra.mxu0 %v2004
        %2694 = vmatprep.subr.bf16.mxu0 0
        %2695 = vmatpush1.bf16.msra.mxu0 %v2005
        %2696 = vmatprep.subr.bf16.mxu0 0
        %2697 = vmatpush1.bf16.msra.mxu0 %v2006
        %2698 = vmatprep.subr.bf16.mxu0 0
        %2699 = vmatpush1.bf16.msra.mxu0 %v2007
        %2700 = vmatprep.subr.bf16.mxu0 0
        %2701 = vmatpush1.bf16.msra.mxu0 %v2008
        %2702 = vmatprep.subr.bf16.mxu0 0
        %2703 = vmatpush1.bf16.msra.mxu0 %v2009
        %2704 = vmatprep.subr.bf16.mxu0 0
        %2705 = vmatpush1.bf16.msra.mxu0 %v2010
        %2706 = vmatprep.subr.bf16.mxu0 0
        %2707 = vmatpush1.bf16.msra.mxu0 %v2011
        %2708 = vmatprep.subr.bf16.mxu0 0
        %2709 = vmatpush1.bf16.msra.mxu0 %v2012
        %2710 = vmatprep.subr.bf16.mxu0 0
        %2711 = vmatpush1.bf16.msra.mxu0 %v2013
        %2712 = vmatprep.subr.bf16.mxu0 0
        %2713 = vmatpush1.bf16.msra.mxu0 %v2014
        %2714 = vmatprep.subr.bf16.mxu0 0
        %2715 = vmatpush1.bf16.msra.mxu0 %v2015
        %2716 = vmatprep.subr.bf16.mxu0 0
        %2717 = vmatpush1.bf16.msra.mxu0 %v2016
        %2718 = vmatprep.subr.bf16.mxu0 0
        %2719 = vmatpush1.bf16.msra.mxu0 %v2017
        %2720 = vmatprep.subr.bf16.mxu0 0
        %2721 = vmatpush1.bf16.msra.mxu0 %v2018
        %2722 = vmatprep.subr.bf16.mxu0 0
        %2723 = vmatpush1.bf16.msra.mxu0 %v2019
        %2724 = vmatprep.mubr.bf16.mxu0 %v891
        %2725 = vmatmul.mubr.bf16.gmra.mrb[0].mxu0 %v877
        %v2726 = vpop.f32.mrb[0].mxu0
        %v2727 = vadd.f32 %v2687, %v2726
        %v2728 = vpop.f32.mrb[0].mxu0
        %v2729 = vpop.f32.mrb[0].mxu0
        %v2730 = vpop.f32.mrb[0].mxu0
        %2731 = vdwg.mxu0
        %2732 = vmatprep.subr.bf16.mxu0 0
        %2733 = vmatpush1.bf16.msra.mxu0 %v2020
        %2734 = vmatprep.subr.bf16.mxu0 0
        %2735 = vmatpush1.bf16.msra.mxu0 %v2021
        %2736 = vmatprep.subr.bf16.mxu0 0
        %2737 = vmatpush1.bf16.msra.mxu0 %v2022
        %2738 = vmatprep.subr.bf16.mxu0 0
        %2739 = vmatpush1.bf16.msra.mxu0 %v2023
        %2740 = vmatprep.subr.bf16.mxu0 0
        %2741 = vmatpush1.bf16.msra.mxu0 %v2024
        %2742 = vmatprep.subr.bf16.mxu0 0
        %2743 = vmatpush1.bf16.msra.mxu0 %v2025
        %2744 = vmatprep.subr.bf16.mxu0 0
        %2745 = vmatpush1.bf16.msra.mxu0 %v2026
        %2746 = vmatprep.subr.bf16.mxu0 0
        %2747 = vmatpush1.bf16.msra.mxu0 %v2027
        %2748 = vmatprep.subr.bf16.mxu0 0
        %2749 = vmatpush1.bf16.msra.mxu0 %v2028
        %2750 = vmatprep.subr.bf16.mxu0 0
        %2751 = vmatpush1.bf16.msra.mxu0 %v2029
        %2752 = vmatprep.subr.bf16.mxu0 0
        %2753 = vmatpush1.bf16.msra.mxu0 %v2030
        %2754 = vmatprep.subr.bf16.mxu0 0
        %2755 = vmatpush1.bf16.msra.mxu0 %v2031
        %2756 = vmatprep.subr.bf16.mxu0 0
        %2757 = vmatpush1.bf16.msra.mxu0 %v2032
        %2758 = vmatprep.subr.bf16.mxu0 0
        %2759 = vmatpush1.bf16.msra.mxu0 %v2033
        %2760 = vmatprep.subr.bf16.mxu0 0
        %2761 = vmatpush1.bf16.msra.mxu0 %v2034
        %2762 = vmatprep.subr.bf16.mxu0 0
        %2763 = vmatpush1.bf16.msra.mxu0 %v2035
        %2764 = vmatprep.mubr.bf16.mxu0 %v895
        %2765 = vmatmul.mubr.bf16.gmra.mrb[0].mxu0 %v893
        %v2766 = vpop.f32.mrb[0].mxu0
        %v2767 = vadd.f32 %v2727, %v2766
        %v2768 = vpop.f32.mrb[0].mxu0
        %v2769 = vpop.f32.mrb[0].mxu0
        %v2770 = vpop.f32.mrb[0].mxu0
        %2771 = vdwg.mxu0
        %2772 = vmatprep.subr.bf16.mxu0 0
        %2773 = vmatpush1.bf16.msra.mxu0 %v2036
        %2774 = vmatprep.subr.bf16.mxu0 0
        %2775 = vmatpush1.bf16.msra.mxu0 %v2037
        %2776 = vmatprep.subr.bf16.mxu0 0
        %2777 = vmatpush1.bf16.msra.mxu0 %v2038
        %2778 = vmatprep.subr.bf16.mxu0 0
        %2779 = vmatpush1.bf16.msra.mxu0 %v2039
        %2780 = vmatprep.subr.bf16.mxu0 0
        %2781 = vmatpush1.bf16.msra.mxu0 %v2040
        %2782 = vmatprep.subr.bf16.mxu0 0
        %2783 = vmatpush1.bf16.msra.mxu0 %v2041
        %2784 = vmatprep.subr.bf16.mxu0 0
        %2785 = vmatpush1.bf16.msra.mxu0 %v2042
        %2786 = vmatprep.subr.bf16.mxu0 0
        %2787 = vmatpush1.bf16.msra.mxu0 %v2043
        %2788 = vmatprep.subr.bf16.mxu0 0
        %2789 = vmatpush1.bf16.msra.mxu0 %v2044
        %2790 = vmatprep.subr.bf16.mxu0 0
        %2791 = vmatpush1.bf16.msra.mxu0 %v2045
        %2792 = vmatprep.subr.bf16.mxu0 0
        %2793 = vmatpush1.bf16.msra.mxu0 %v2046
        %2794 = vmatprep.subr.bf16.mxu0 0
        %2795 = vmatpush1.bf16.msra.mxu0 %v2047
        %2796 = vmatprep.subr.bf16.mxu0 0
        %2797 = vmatpush1.bf16.msra.mxu0 %v2048
        %2798 = vmatprep.subr.bf16.mxu0 0
        %2799 = vmatpush1.bf16.msra.mxu0 %v2049
        %2800 = vmatprep.subr.bf16.mxu0 0
        %2801 = vmatpush1.bf16.msra.mxu0 %v2050
        %2802 = vmatprep.subr.bf16.mxu0 0
        %2803 = vmatpush1.bf16.msra.mxu0 %v2051
        %2804 = vmatprep.mubr.bf16.mxu0 %v917
        %2805 = vmatmul.mubr.bf16.gmra.mrb[0].mxu0 %v910
        %v2806 = vpop.f32.mrb[0].mxu0
        %v2807 = vadd.f32 %v2767, %v2806
        %v2808 = vpop.f32.mrb[0].mxu0
        %v2809 = vpop.f32.mrb[0].mxu0
        %v2810 = vpop.f32.mrb[0].mxu0
        %2811 = vdwg.mxu0
        %2812 = vmatprep.subr.bf16.mxu0 0
        %2813 = vmatpush1.bf16.msra.mxu0 %v2052
        %2814 = vmatprep.subr.bf16.mxu0 0
        %2815 = vmatpush1.bf16.msra.mxu0 %v2053
        %2816 = vmatprep.subr.bf16.mxu0 0
        %2817 = vmatpush1.bf16.msra.mxu0 %v2054
        %2818 = vmatprep.subr.bf16.mxu0 0
        %2819 = vmatpush1.bf16.msra.mxu0 %v2055
        %2820 = vmatprep.subr.bf16.mxu0 0
        %2821 = vmatpush1.bf16.msra.mxu0 %v2056
        %2822 = vmatprep.subr.bf16.mxu0 0
        %2823 = vmatpush1.bf16.msra.mxu0 %v2057
        %2824 = vmatprep.subr.bf16.mxu0 0
        %2825 = vmatpush1.bf16.msra.mxu0 %v2058
        %2826 = vmatprep.subr.bf16.mxu0 0
        %2827 = vmatpush1.bf16.msra.mxu0 %v2059
        %2828 = vmatprep.subr.bf16.mxu0 0
        %2829 = vmatpush1.bf16.msra.mxu0 %v2060
        %2830 = vmatprep.subr.bf16.mxu0 0
        %2831 = vmatpush1.bf16.msra.mxu0 %v2061
        %2832 = vmatprep.subr.bf16.mxu0 0
        %2833 = vmatpush1.bf16.msra.mxu0 %v2062
        %2834 = vmatprep.subr.bf16.mxu0 0
        %2835 = vmatpush1.bf16.msra.mxu0 %v2063
        %2836 = vmatprep.subr.bf16.mxu0 0
        %2837 = vmatpush1.bf16.msra.mxu0 %v2064
        %2838 = vmatprep.subr.bf16.mxu0 0
        %2839 = vmatpush1.bf16.msra.mxu0 %v2065
        %2840 = vmatprep.subr.bf16.mxu0 0
        %2841 = vmatpush1.bf16.msra.mxu0 %v2066
        %2842 = vmatprep.subr.bf16.mxu0 0
        %2843 = vmatpush1.bf16.msra.mxu0 %v2067
        %2844 = vmatprep.mubr.bf16.mxu0 %v919
        %2845 = vmatmul.mubr.bf16.gmra.mrb[0].mxu0 %v918
        %v2846 = vpop.f32.mrb[0].mxu0
        %v2847 = vadd.f32 %v2807, %v2846
        %v2848 = vpop.f32.mrb[0].mxu0
        %v2849 = vpop.f32.mrb[0].mxu0
        %v2850 = vpop.f32.mrb[0].mxu0
        %2851 = vdwg.mxu0
        %v2852 = vadd.f32 %v292, %v2847
        %2853 = vst [vmem:[#allocation2] sm:$0x3] %v2852
        %p2854 = scmp.eq.s32.totalorder %s19, 6
        // Predicated region
        $region53: #{forward.9} parent=47 // pred_check
          %p2855 = pneg %p2854
        $region54: #{forward.9} parent=47 // pred_check_branch
          %2857 = sbr.rel (%p2855) target = $region56
        $region55: #{forward.9} parent=47 // pred_region
          %v2858 = vld [vmem:[#allocation2] sm:$0x3]
          %v2859 = vld [vmem:[%s2] sm:$0x1]
          %v2861 = vlaneseq
          %v2862 = vshrl.u32 %v2861, 7
          %v2863 = vsub.s32 0, %v2862
          %v2864 = vrot.slane %v2859, %v2863
          %v2866 = vadd.f32 %v2858, %v2864
          %v2867 = vmax.f32 %v2866, 0.0
          %v2868 = vpack.c.bf16 %v2867, %v2867
          %v2869 = vld [vmem:[%s3] sm:$0xf]
          %v2870 = vld [vmem:[%s3 + $0x4] sm:$0xf]
          %v2871 = vld [vmem:[%s3 + $0x8] sm:$0xf]
          %v2872 = vld [vmem:[%s3 + $0xc] sm:$0xf]
          %v2873 = vld [vmem:[%s3 + $0x10] sm:$0xf]
          %v2874 = vld [vmem:[%s3 + $0x14] sm:$0xf]
          %v2875 = vld [vmem:[%s3 + $0x18] sm:$0xf]
          %v2876 = vld [vmem:[%s3 + $0x1c] sm:$0xf]
          %v2877 = vld [vmem:[%s3 + $0x20] sm:$0xf]
          %v2878 = vld [vmem:[%s3 + $0x24] sm:$0xf]
          %v2879 = vld [vmem:[%s3 + $0x28] sm:$0xf]
          %v2880 = vld [vmem:[%s3 + $0x2c] sm:$0xf]
          %v2881 = vld [vmem:[%s3 + $0x30] sm:$0xf]
          %v2882 = vld [vmem:[%s3 + $0x34] sm:$0xf]
          %v2883 = vld [vmem:[%s3 + $0x38] sm:$0xf]
          %v2884 = vld [vmem:[%s3 + $0x3c] sm:$0xf]
          %v2885 = vld [vmem:[%s4] sm:$0x1]
          %v2887 = vlaneseq
          %v2888 = vshrl.u32 %v2887, 7
          %v2889 = vsub.s32 0, %v2888
          %v2890 = vrot.slane %v2885, %v2889
          %v2908 = vunpack.c.l.b16 %v2869
          %v2909 = vunpack.c.l.b16 %v2870
          %v2910 = vunpack.c.l.b16 %v2871
          %v2911 = vunpack.c.l.b16 %v2872
          %v2912 = vunpack.c.l.b16 %v2873
          %v2913 = vunpack.c.l.b16 %v2874
          %v2914 = vunpack.c.l.b16 %v2875
          %v2915 = vunpack.c.l.b16 %v2876
          %v2916 = vunpack.c.l.b16 %v2877
          %v2917 = vunpack.c.l.b16 %v2878
          %v2918 = vunpack.c.l.b16 %v2879
          %v2919 = vunpack.c.l.b16 %v2880
          %v2920 = vunpack.c.l.b16 %v2881
          %v2921 = vunpack.c.l.b16 %v2882
          %v2922 = vunpack.c.l.b16 %v2883
          %v2923 = vunpack.c.l.b16 %v2884
          %v2924 = vpack.c.b16 %v2909, %v2908
          %v2925 = vpack.c.b16 %v2911, %v2910
          %v2926 = vpack.c.b16 %v2913, %v2912
          %v2927 = vpack.c.b16 %v2915, %v2914
          %v2928 = vpack.c.b16 %v2917, %v2916
          %v2929 = vpack.c.b16 %v2919, %v2918
          %v2930 = vpack.c.b16 %v2921, %v2920
          %v2931 = vpack.c.b16 %v2923, %v2922
          %2940 = vmatprep.subr.bf16.mxu0 0
          %2941 = vmatpush1.bf16.msra.mxu0 %v2924
          %2942 = vmatprep.subr.bf16.mxu0 0
          %2943 = vmatpush1.bf16.msra.mxu0 %v2925
          %2944 = vmatprep.subr.bf16.mxu0 0
          %2945 = vmatpush1.bf16.msra.mxu0 %v2926
          %2946 = vmatprep.subr.bf16.mxu0 0
          %2947 = vmatpush1.bf16.msra.mxu0 %v2927
          %2948 = vmatprep.subr.bf16.mxu0 0
          %2949 = vmatpush1.bf16.msra.mxu0 %v2928
          %2950 = vmatprep.subr.bf16.mxu0 0
          %2951 = vmatpush1.bf16.msra.mxu0 %v2929
          %2952 = vmatprep.subr.bf16.mxu0 0
          %2953 = vmatpush1.bf16.msra.mxu0 %v2930
          %2954 = vmatprep.subr.bf16.mxu0 0
          %2955 = vmatpush1.bf16.msra.mxu0 %v2931
          %2956 = vmatprep.subr.bf16.mxu0 0
          %2957 = vmatpush1.bf16.msra.mxu0 0
          %2958 = vmatprep.subr.bf16.mxu0 0
          %2959 = vmatpush1.bf16.msra.mxu0 0
          %2960 = vmatprep.subr.bf16.mxu0 0
          %2961 = vmatpush1.bf16.msra.mxu0 0
          %2962 = vmatprep.subr.bf16.mxu0 0
          %2963 = vmatpush1.bf16.msra.mxu0 0
          %2964 = vmatprep.subr.bf16.mxu0 0
          %2965 = vmatpush1.bf16.msra.mxu0 0
          %2966 = vmatprep.subr.bf16.mxu0 0
          %2967 = vmatpush1.bf16.msra.mxu0 0
          %2968 = vmatprep.subr.bf16.mxu0 0
          %2969 = vmatpush1.bf16.msra.mxu0 0
          %2970 = vmatprep.subr.bf16.mxu0 0
          %2971 = vmatpush1.bf16.msra.mxu0 0
          %2972 = vmatprep.mubr.bf16.mxu0 0
          %2973 = vmatmul.mubr.bf16.gmra.mrb[0].mxu0 %v2868
          %v2974 = vpop.f32.mrb[0].mxu0
          %v2975 = vadd.f32 %v2890, %v2974
          %v2976 = vpop.f32.mrb[0].mxu0
          %v2977 = vpop.f32.mrb[0].mxu0
          %v2978 = vpop.f32.mrb[0].mxu0
          %2979 = vdwg.mxu0
          %v2980 = vmax.f32 %v2975, 0.0
          %v2981 = vpack.c.bf16 %v2980, %v2980
          %v2982 = vld [vmem:[%s5] sm:$0xf]
          %v2983 = vld [vmem:[%s5 + $0x4] sm:$0xf]
          %v2984 = vld [vmem:[%s5 + $0x8] sm:$0xf]
          %v2985 = vld [vmem:[%s5 + $0xc] sm:$0xf]
          %v2986 = vld [vmem:[%s5 + $0x10] sm:$0xf]
          %v2987 = vld [vmem:[%s5 + $0x14] sm:$0xf]
          %v2988 = vld [vmem:[%s5 + $0x18] sm:$0xf]
          %v2989 = vld [vmem:[%s5 + $0x1c] sm:$0xf]
          %v2990 = vld [vmem:[%s6] sm:$0x1]
          %v2992 = vlaneseq
          %v2993 = vshrl.u32 %v2992, 7
          %v2994 = vsub.s32 0, %v2993
          %v2995 = vrot.slane %v2990, %v2994
          %v3005 = vunpack.c.l.b16 %v2982
          %v3006 = vunpack.c.l.b16 %v2983
          %v3007 = vunpack.c.l.b16 %v2984
          %v3008 = vunpack.c.l.b16 %v2985
          %v3009 = vunpack.c.l.b16 %v2986
          %v3010 = vunpack.c.l.b16 %v2987
          %v3011 = vunpack.c.l.b16 %v2988
          %v3012 = vunpack.c.l.b16 %v2989
          %v3013 = vpack.c.b16 %v3006, %v3005
          %v3014 = vpack.c.b16 %v3008, %v3007
          %v3015 = vpack.c.b16 %v3010, %v3009
          %v3016 = vpack.c.b16 %v3012, %v3011
          %vm3021 = vcmask 523264
          %v3023 = vsel %vm3021, %v2981, 0
          %3025 = vmatprep.subr.bf16.mxu0 0
          %3026 = vmatpush1.bf16.msra.mxu0 %v3013
          %3027 = vmatprep.subr.bf16.mxu0 0
          %3028 = vmatpush1.bf16.msra.mxu0 %v3014
          %3029 = vmatprep.subr.bf16.mxu0 0
          %3030 = vmatpush1.bf16.msra.mxu0 %v3015
          %3031 = vmatprep.subr.bf16.mxu0 0
          %3032 = vmatpush1.bf16.msra.mxu0 %v3016
          %3033 = vmatprep.subr.bf16.mxu0 0
          %3034 = vmatpush1.bf16.msra.mxu0 0
          %3035 = vmatprep.subr.bf16.mxu0 0
          %3036 = vmatpush1.bf16.msra.mxu0 0
          %3037 = vmatprep.subr.bf16.mxu0 0
          %3038 = vmatpush1.bf16.msra.mxu0 0
          %3039 = vmatprep.subr.bf16.mxu0 0
          %3040 = vmatpush1.bf16.msra.mxu0 0
          %3041 = vmatprep.subr.bf16.mxu0 0
          %3042 = vmatpush1.bf16.msra.mxu0 0
          %3043 = vmatprep.subr.bf16.mxu0 0
          %3044 = vmatpush1.bf16.msra.mxu0 0
          %3045 = vmatprep.subr.bf16.mxu0 0
          %3046 = vmatpush1.bf16.msra.mxu0 0
          %3047 = vmatprep.subr.bf16.mxu0 0
          %3048 = vmatpush1.bf16.msra.mxu0 0
          %3049 = vmatprep.subr.bf16.mxu0 0
          %3050 = vmatpush1.bf16.msra.mxu0 0
          %3051 = vmatprep.subr.bf16.mxu0 0
          %3052 = vmatpush1.bf16.msra.mxu0 0
          %3053 = vmatprep.subr.bf16.mxu0 0
          %3054 = vmatpush1.bf16.msra.mxu0 0
          %3055 = vmatprep.subr.bf16.mxu0 0
          %3056 = vmatpush1.bf16.msra.mxu0 0
          %3057 = vmatprep.mubr.bf16.mxu0 0
          %3058 = vmatmul.mubr.bf16.gmra.mrb[0].mxu0 %v3023
          %v3059 = vpop.f32.mrb[0].mxu0
          %v3060 = vadd.f32 %v2995, %v3059
          %v3061 = vpop.f32.mrb[0].mxu0
          %v3062 = vpop.f32.mrb[0].mxu0
          %v3063 = vpop.f32.mrb[0].mxu0
          %3064 = vdwg.mxu0
          %vm3065 = vcmask 9216
          %3066 = vst.msk [vmem:[#allocation3] sm:$0x3] %vm3065, %v3060
        $region56: #{forward.9} parent=47 // pred_fallthru
          _
        // Predicated region
        $region57: #{forward.9} parent=47 // pred_check
          %p3067 = pneg %p189
        $region58: #{forward.9} parent=47 // pred_check_branch
          %3069 = sbr.rel (%p3067) target = $region60
        $region59: #{forward.9} parent=47 // pred_region
          %s3071 = ssub.s32 32, 32
          %3072 = vsyncadd [#allocation4], %s3071
          %s3074 = sshll.u32 [#allocation3], 4
          %s3075 = int_to_ptr.vmem [resolvable:$true] %s3074
          %3077 = dma.vmem_to_hbm [thread:$0]  %s3075, 32, %s7, [#allocation4]
        $region60: #{forward.9} parent=47 // pred_fallthru
          _
        // Predicated region
        $region61: #{forward.9} parent=47 // pred_check
          %p3078 = pneg %p189
        $region62: #{forward.9} parent=47 // pred_check_branch
          %3080 = sbr.rel (%p3078) target = $region64
        $region63: #{forward.9} parent=47 // pred_region
          %3081 = dma.done [#allocation4], 32
        $region64: #{forward.9} parent=47 // pred_fallthru
          _
      $region48: #{forward.9} parent=5 // pred_fallthru
        _
      %p3082 = scmp.le.s32.totalorder 2, %s14
      // Predicated region
      $region65: #{forward.9} parent=5 // pred_check
        %p3083 = pneg %p3082
      $region66: #{forward.9} parent=5 // pred_check_branch
        %3085 = sbr.rel (%p3083) target = $region68
      $region67: #{forward.9} parent=5 // pred_region
        %s3086 = ssub.s32 %s14, 2
      $region68: #{forward.9} parent=5 // pred_fallthru
        _
    $region6: #{forward.9} parent=1 // loop_footer
      %s18 = sadd.s32 1, %s14
    $region7: #{forward.9} parent=1 // loop_footer_branch
      %13 = sbr.rel target = $region3
    $region8: #{forward.9} parent=1 // loop_exit
      _
    %3087 = vsyncpa [#allocation4], 1
    %s3088 = scalar_lea.sflag [#allocation4], 1
    %3089 = vsyncpa %s3088, 1

</llo_original>
